<compile_context>
chip_gen: v7x
topology: tpu7x:2x2x1
jax: 0.10.0
libtpu: 0.0.40
codegen_flags: <defaults>
</compile_context>

<pallas_src>
import functools
import math

import jax
import jax.numpy as jnp
from jax import lax
from jax.experimental import pallas as pl
from jax.experimental.pallas import tpu as pltpu

F32 = jnp.float32


def _leaky(x):
    # negative_slope=0.1 as specified in the PyTorch ResidualBlock
    return jnp.where(x >= 0, x, 0.1 * x)


def _ln(x, g, b, eps=1e-5):
    mu = jnp.mean(x, axis=-1, keepdims=True)
    xc = x - mu
    var = jnp.mean(xc * xc, axis=-1, keepdims=True)
    return xc * lax.rsqrt(var + eps) * g + b


# ---------------------------------------------------------------------------
# 1) CNN stage: conv + BN + ReLU + maxpool + skip, both strands, + cnn_projection
# ---------------------------------------------------------------------------

def _cnn_stage_kernel(xf_ref, xr_ref, w_ref, b_ref, pw_ref, pb_ref,
                      cw_ref, cb_ref, o_ref, *, L, K, pad, F):
    w = w_ref[...].astype(F32)        # (K, C, F)  BN scale already folded in
    b = b_ref[...].astype(F32)        # (1, F)     conv bias + BN shift folded
    pw = pw_ref[...].astype(F32)      # (C, F)     1x1-conv input projection
    pb = pb_ref[...].astype(F32)      # (1, F)
    cw = cw_ref[...].astype(F32)      # (2F, E)    cnn_projection weight
    cb = cb_ref[...].astype(F32)      # (1, E)

    def branch(xp):                   # xp: (L + 2*pad, C), already zero padded
        # Conv1d as a sum of K shifted (L,C)@(C,F) matmuls (im2col stays in VMEM).
        acc = jnp.dot(xp[0:L, :], w[0], preferred_element_type=F32)
        for k in range(1, K):
            acc = acc + jnp.dot(xp[k:k + L, :], w[k], preferred_element_type=F32)
        y = jnp.maximum(acc + b, 0.0)                       # folded BN + ReLU
        # MaxPool1d(k=3, s=1, p=1): zero padding is exact post-ReLU.  Shifts go
        # through the XLU roll slot; circular wrap is masked at the boundaries.
        up = pltpu.roll(y, shift=L - 1, axis=0)             # up[i] = y[i+1] (wraps at L-1)
        dn = pltpu.roll(y, shift=1, axis=0)                 # dn[i] = y[i-1] (wraps at 0)
        row = lax.broadcasted_iota(jnp.int32, y.shape, 0)
        up = jnp.where(row == L - 1, 0.0, up)
        dn = jnp.where(row == 0, 0.0, dn)
        pooled = jnp.maximum(jnp.maximum(y, up), dn)
        skip = jnp.dot(xp[pad:pad + L, :], pw, preferred_element_type=F32) + pb
        return pooled + skip

    hf = branch(xf_ref[0].astype(F32))                      # forward strand
    hr = branch(xr_ref[0].astype(F32))                      # reverse complement strand
    # concat([hf, hr], -1) @ cw  ==  hf @ cw[:F] + hr @ cw[F:]  (no concat needed)
    out = (jnp.dot(hf, cw[:F, :], preferred_element_type=F32)
           + jnp.dot(hr, cw[F:, :], preferred_element_type=F32) + cb)
    o_ref[0] = out.astype(o_ref.dtype)


def cnn_stage(x_nlc, p):
    """x_nlc: (N, L, C) one-hot batch -> (N, L, E) projected CNN features."""
    N, L, C = x_nlc.shape
    K, _, F = p["conv_w"].shape
    E = p["cnn_proj_w"].shape[1]
    pad = (K - 1) // 2
    # TODO(synk): reverse_complement() is not given in the source; assumed to be the
    # standard one-hot DNA reverse complement = flip along L and along the channel axis.
    x_rc = x_nlc[:, ::-1, ::-1]
    xp_f = jnp.pad(x_nlc, ((0, 0), (pad, pad), (0, 0)))
    xp_r = jnp.pad(x_rc, ((0, 0), (pad, pad), (0, 0)))

    eps = 1e-5
    scale = p["bn_gamma"] / jnp.sqrt(p["bn_var"] + eps)             # (F,)
    w_fold = p["conv_w"] * scale[None, None, :]                     # fold BN scale
    b_fold = (p["conv_b"] - p["bn_mean"]) * scale + p["bn_beta"]    # fold BN shift

    Lp = L + 2 * pad
    kern = functools.partial(_cnn_stage_kernel, L=L, K=K, pad=pad, F=F)
    return pl.pallas_call(
        kern,
        out_shape=jax.ShapeDtypeStruct((N, L, E), F32),
        grid=(N,),
        in_specs=[
            pl.BlockSpec((1, Lp, C), lambda n: (n, 0, 0)),
            pl.BlockSpec((1, Lp, C), lambda n: (n, 0, 0)),
            pl.BlockSpec((K, C, F), lambda n: (0, 0, 0)),
            pl.BlockSpec((1, F), lambda n: (0, 0)),
            pl.BlockSpec((C, F), lambda n: (0, 0)),
            pl.BlockSpec((1, F), lambda n: (0, 0)),
            pl.BlockSpec((2 * F, E), lambda n: (0, 0)),
            pl.BlockSpec((1, E), lambda n: (0, 0)),
        ],
        out_specs=pl.BlockSpec((1, L, E), lambda n: (n, 0, 0)),
        compiler_params=pltpu.CompilerParams(
            dimension_semantics=("parallel",),
            vmem_limit_bytes=32 * 1024 * 1024),
    )(xp_f, xp_r, w_fold, b_fold.reshape(1, F),
      p["proj_w"], p["proj_b"].reshape(1, F),
      p["cnn_proj_w"], p["cnn_proj_b"].reshape(1, E))


# ---------------------------------------------------------------------------
# 2) Early residual block (LayerNorm variant), fully fused
# ---------------------------------------------------------------------------

def _early_block_kernel(x_ref, g1_ref, b1_ref, w1_ref, c1_ref,
                        g2_ref, b2_ref, w2_ref, c2_ref, o_ref):
    x = x_ref[...].astype(F32)
    h = _leaky(_ln(x, g1_ref[...], b1_ref[...]))
    h = jnp.dot(h, w1_ref[...].astype(F32), preferred_element_type=F32) + c1_ref[...]
    h = _leaky(_ln(h, g2_ref[...], b2_ref[...]))
    h = jnp.dot(h, w2_ref[...].astype(F32), preferred_element_type=F32) + c2_ref[...]
    o_ref[...] = (x + h).astype(o_ref.dtype)


def _pick_row_tile(m, target=512):
    """Largest row tile <= target that is a multiple of 8 and divides m (else m)."""
    if m <= target:
        return m
    for t in range(target - target % 8, 7, -8):
        if m % t == 0:
            return t
    return m


def early_block(x2d, bp):
    M, E = x2d.shape
    EH = bp["w1"].shape[1]
    tile = _pick_row_tile(M)
    wspec = lambda shape: pl.BlockSpec(shape, lambda i: (0, 0))
    return pl.pallas_call(
        _early_block_kernel,
        out_shape=jax.ShapeDtypeStruct((M, E), F32),
        grid=(M // tile,),
        in_specs=[
            pl.BlockSpec((tile, E), lambda i: (i, 0)),
            wspec((1, E)), wspec((1, E)), wspec((E, EH)), wspec((1, EH)),
            wspec((1, EH)), wspec((1, EH)), wspec((EH, E)), wspec((1, E)),
        ],
        out_specs=pl.BlockSpec((tile, E), lambda i: (i, 0)),
        compiler_params=pltpu.CompilerParams(dimension_semantics=("parallel",)),
    )(x2d,
      bp["ln1_g"].reshape(1, E), bp["ln1_b"].reshape(1, E),
      bp["w1"], bp["b1"].reshape(1, EH),
      bp["ln2_g"].reshape(1, EH), bp["ln2_b"].reshape(1, EH),
      bp["w2"], bp["b2"].reshape(1, E))


# ---------------------------------------------------------------------------
# 3) Transformer block (SwigluAttentionBlock), fully fused, grid over batch
# ---------------------------------------------------------------------------

def _tsfm_block_kernel(x_ref, g1_ref, b1_ref, inw_ref, inb_ref, outw_ref, outb_ref,
                       g2_ref, b2_ref, fw1_ref, fb1_ref, fw2_ref, fb2_ref, o_ref,
                       *, num_heads):
    x = x_ref[0].astype(F32)                               # (S, E)
    S, E = x.shape
    Dh = E // num_heads
    scale = 1.0 / math.sqrt(Dh)

    # --- multi-head self-attention ---
    h = _ln(x, g1_ref[...], b1_ref[...])
    qkv = jnp.dot(h, inw_ref[...].astype(F32), preferred_element_type=F32) + inb_ref[...]
    q = qkv[:, :E]
    k = qkv[:, E:2 * E]
    v = qkv[:, 2 * E:]
    ow = outw_ref[...].astype(F32)                         # (E, E) output projection

    # All heads handled inside the kernel.  Each head's output is folded straight
    # through the matching rows of the output projection, so there is no per-head
    # (S, Dh) concat, no XLA-level head split/merge transpose, and the attention
    # contribution accumulates directly into a lane-dense (S, E) slab.
    attn = jnp.zeros((S, E), F32)
    for hh in range(num_heads):
        lo, hi = hh * Dh, (hh + 1) * Dh
        qh = q[:, lo:hi] * scale
        s = jnp.einsum("qd,kd->qk", qh, k[:, lo:hi], preferred_element_type=F32)
        m = jnp.max(s, axis=-1, keepdims=True)
        p = jnp.exp(s - m)
        p = p * pl.reciprocal(jnp.sum(p, axis=-1, keepdims=True), approx=True)
        oh = jnp.einsum("qk,kd->qd", p, v[:, lo:hi], preferred_element_type=F32)
        attn = attn + jnp.dot(oh, ow[lo:hi, :], preferred_element_type=F32)
    x = x + attn + outb_ref[...]                           # attention residual

    # --- SwiGLU FFN ---
    h2 = _ln(x, g2_ref[...], b2_ref[...])
    g = jnp.dot(h2, fw1_ref[...].astype(F32), preferred_element_type=F32) + fb1_ref[...]
    half = g.shape[-1] // 2
    x1 = g[:, :half]
    x2 = g[:, half:]
    ff = (x1 * jax.nn.sigmoid(x1)) * x2
    ff = jnp.dot(ff, fw2_ref[...].astype(F32), preferred_element_type=F32) + fb2_ref[...]
    o_ref[0] = (x + ff).astype(o_ref.dtype)


def tsfm_block(x3d, bp, num_heads):
    N, S, E = x3d.shape
    TH = bp["ffn_w2"].shape[0]
    kern = functools.partial(_tsfm_block_kernel, num_heads=num_heads)
    wspec = lambda shape: pl.BlockSpec(shape, lambda n: (0, 0))
    return pl.pallas_call(
        kern,
        out_shape=jax.ShapeDtypeStruct((N, S, E), F32),
        grid=(N,),
        in_specs=[
            pl.BlockSpec((1, S, E), lambda n: (n, 0, 0)),
            wspec((1, E)), wspec((1, E)),
            wspec((E, 3 * E)), wspec((1, 3 * E)),
            wspec((E, E)), wspec((1, E)),
            wspec((1, E)), wspec((1, E)),
            wspec((E, 2 * TH)), wspec((1, 2 * TH)),
            wspec((TH, E)), wspec((1, E)),
        ],
        out_specs=pl.BlockSpec((1, S, E), lambda n: (n, 0, 0)),
        compiler_params=pltpu.CompilerParams(
            dimension_semantics=("parallel",),
            vmem_limit_bytes=32 * 1024 * 1024),
    )(x3d,
      bp["ln1_g"].reshape(1, E), bp["ln1_b"].reshape(1, E),
      bp["in_w"], bp["in_b"].reshape(1, 3 * E),
      bp["out_w"], bp["out_b"].reshape(1, E),
      bp["ln2_g"].reshape(1, E), bp["ln2_b"].reshape(1, E),
      bp["ffn_w1"], bp["ffn_b1"].reshape(1, 2 * TH),
      bp["ffn_w2"], bp["ffn_b2"].reshape(1, E))


# ---------------------------------------------------------------------------
# 4) Output head: 2x ResidualBlock(use_norm=False) + final Linear, one kernel
# ---------------------------------------------------------------------------

def _head_kernel(x_ref, w1_ref, b1_ref, w2_ref, b2_ref, bw_ref, bb_ref,
                 u1_ref, c1_ref, u2_ref, c2_ref, fw_ref, fb_ref, o_ref):
    x = x_ref[...].astype(F32)                             # (N, E) cls tokens
    # ResidualBlock(E -> TH, hidden TH, no norm): Linear bypass
    h = _leaky(x)
    h = jnp.dot(h, w1_ref[...].astype(F32), preferred_element_type=F32) + b1_ref[...]
    h = _leaky(h)
    h = jnp.dot(h, w2_ref[...].astype(F32), preferred_element_type=F32) + b2_ref[...]
    y = h + jnp.dot(x, bw_ref[...].astype(F32), preferred_element_type=F32) + bb_ref[...]
    # ResidualBlock(TH -> TH, no norm): identity bypass
    h = _leaky(y)
    h = jnp.dot(h, u1_ref[...].astype(F32), preferred_element_type=F32) + c1_ref[...]
    h = _leaky(h)
    h = jnp.dot(h, u2_ref[...].astype(F32), preferred_element_type=F32) + c2_ref[...]
    y = y + h
    out = jnp.dot(y, fw_ref[...].astype(F32), preferred_element_type=F32) + fb_ref[...]
    o_ref[...] = out.astype(o_ref.dtype)


def output_head(pred, p):
    N, _ = pred.shape
    b0 = p["out_block0"]
    b1 = p["out_block1"]
    TH = b0["w1"].shape[1]
    out_dim = p["final_w"].shape[1]
    return pl.pallas_call(
        _head_kernel,
        out_shape=jax.ShapeDtypeStruct((N, out_dim), F32),
    )(pred,
      b0["w1"], b0["b1"].reshape(1, TH), b0["w2"], b0["b2"].reshape(1, TH),
      b0["bw"], b0["bb"].reshape(1, TH),
      b1["w1"], b1["b1"].reshape(1, TH), b1["w2"], b1["b2"].reshape(1, TH),
      p["final_w"], p["final_b"].reshape(1, out_dim))


# ---------------------------------------------------------------------------
# model forward
# ---------------------------------------------------------------------------

def deep_msn_forward(params, x_in, *, num_heads=8):
    N, L, C = x_in.shape
    x = cnn_stage(x_in, params)                            # (N, L, E)
    E = x.shape[-1]

    cls = jnp.broadcast_to(params["cls_token"],
                           (N,) + params["cls_token"].shape[1:])
    x = jnp.concatenate([cls, x], axis=1)                  # (N, S, E)
    S = x.shape[1]

    x2d = x.reshape(N * S, E)
    for bp in params["early"]:
        x2d = early_block(x2d, bp)
    x = x2d.reshape(N, S, E)

    x = x + params["pos_enc"][:, :S, :]                    # input_dropout = identity (eval)

    for bp in params["tsfm"]:
        x = tsfm_block(x, bp, num_heads)

    pred = x[:, 0, :]                                      # cls token
    return output_head(pred, params)


# ---------------------------------------------------------------------------
# parameter init (small shapes for the test)
# ---------------------------------------------------------------------------

def init_params(key, *, C=4, F=64, K=15, E=64, EH=64, TH=128,
                n_early=2, n_tsfm=2, n_reg=1, out_dim=3):
    keys = iter(jax.random.split(key, 256))

    def w(shape, scale=0.05):
        return scale * jax.random.normal(next(keys), shape, F32)

    p = {
        "conv_w": w((K, C, F)), "conv_b": w((F,)),
        "bn_gamma": 1.0 + 0.1 * jax.random.normal(next(keys), (F,), F32),
        "bn_beta": 0.1 * jax.random.normal(next(keys), (F,), F32),
        "bn_mean": 0.1 * jax.random.normal(next(keys), (F,), F32),
        "bn_var": 1.0 + 0.1 * jnp.abs(jax.random.normal(next(keys), (F,), F32)),
        "proj_w": w((C, F)), "proj_b": w((F,)),
        "cnn_proj_w": w((2 * F, E)), "cnn_proj_b": w((E,)),
        "cls_token": jax.random.normal(next(keys), (1, n_reg + 1, E), F32) / math.sqrt(E),
        "pos_enc": 0.01 * jax.random.normal(next(keys), (1, 502, E), F32),
        "final_w": w((TH, out_dim)), "final_b": w((out_dim,)),
    }
    p["early"] = [dict(
        ln1_g=jnp.ones((E,), F32), ln1_b=jnp.zeros((E,), F32),
        w1=w((E, EH)), b1=w((EH,)),
        ln2_g=jnp.ones((EH,), F32), ln2_b=jnp.zeros((EH,), F32),
        w2=w((EH, E)), b2=w((E,)),
    ) for _ in range(n_early)]
    p["tsfm"] = [dict(
        ln1_g=jnp.ones((E,), F32), ln1_b=jnp.zeros((E,), F32),
        in_w=w((E, 3 * E)), in_b=w((3 * E,)),
        out_w=w((E, E)), out_b=w((E,)),
        ln2_g=jnp.ones((E,), F32), ln2_b=jnp.zeros((E,), F32),
        ffn_w1=w((E, 2 * TH)), ffn_b1=w((2 * TH,)),
        ffn_w2=w((TH, E)), ffn_b2=w((E,)),
    ) for _ in range(n_tsfm)]
    p["out_block0"] = dict(w1=w((E, TH)), b1=w((TH,)),
                           w2=w((TH, TH)), b2=w((TH,)),
                           bw=w((E, TH)), bb=w((TH,)))
    p["out_block1"] = dict(w1=w((TH, TH)), b1=w((TH,)),
                           w2=w((TH, TH)), b2=w((TH,)))
    return p


if __name__ == "__main__":
    key = jax.random.PRNGKey(0)
    pkey, xkey = jax.random.split(key)
    params = init_params(pkey)

    N, L, C = 2, 16, 4
    idx = jax.random.randint(xkey, (N, L), 0, C)
    x_in = jax.nn.one_hot(idx, C, dtype=F32)      # (N, L, C) one-hot DNA batch

    fwd = jax.jit(functools.partial(deep_msn_forward, num_heads=8))
    out = fwd(params, x_in)
    jax.block_until_ready(out)
    assert out.shape == (N, 3), out.shape
    print("KERNEL_OK")
</pallas_src>

<mosaic_0001>
module attributes {stable_mosaic.version = 11 : i64} {
  func.func @_early_block_kernel(%arg0: i32, %arg1: memref<36x64xf32, #tpu.memory_space<vmem>>, %arg2: memref<1x64xf32, #tpu.memory_space<vmem>>, %arg3: memref<1x64xf32, #tpu.memory_space<vmem>>, %arg4: memref<64x64xf32, #tpu.memory_space<vmem>>, %arg5: memref<1x64xf32, #tpu.memory_space<vmem>>, %arg6: memref<1x64xf32, #tpu.memory_space<vmem>>, %arg7: memref<1x64xf32, #tpu.memory_space<vmem>>, %arg8: memref<64x64xf32, #tpu.memory_space<vmem>>, %arg9: memref<1x64xf32, #tpu.memory_space<vmem>>, %arg10: memref<36x64xf32, #tpu.memory_space<vmem>>) attributes {dimension_semantics = [#tpu.dimension_semantics<parallel>], iteration_bounds = array<i64: 1>, scalar_prefetch = 0 : i64, scratch_operands = 0 : i64, tpu.core_type = #tpu.core_type<tc>, window_params = [{transform_indices = @transform_0, window_bounds = array<i64: 36, 64>}, {pipeline_mode = #tpu.pipeline_mode<synchronous>, transform_indices = @transform_1, window_bounds = array<i64: 1, 64>}, {pipeline_mode = #tpu.pipeline_mode<synchronous>, transform_indices = @transform_2, window_bounds = array<i64: 1, 64>}, {pipeline_mode = #tpu.pipeline_mode<synchronous>, transform_indices = @transform_3, window_bounds = array<i64: 64, 64>}, {pipeline_mode = #tpu.pipeline_mode<synchronous>, transform_indices = @transform_4, window_bounds = array<i64: 1, 64>}, {pipeline_mode = #tpu.pipeline_mode<synchronous>, transform_indices = @transform_5, window_bounds = array<i64: 1, 64>}, {pipeline_mode = #tpu.pipeline_mode<synchronous>, transform_indices = @transform_6, window_bounds = array<i64: 1, 64>}, {pipeline_mode = #tpu.pipeline_mode<synchronous>, transform_indices = @transform_7, window_bounds = array<i64: 64, 64>}, {pipeline_mode = #tpu.pipeline_mode<synchronous>, transform_indices = @transform_8, window_bounds = array<i64: 1, 64>}, {transform_indices = @transform_9, window_bounds = array<i64: 36, 64>}]} {
    %c0 = arith.constant 0 : index
    %c0_0 = arith.constant 0 : index
    %0 = vector.load %arg1[%c0, %c0_0] : memref<36x64xf32, #tpu.memory_space<vmem>>, vector<36x64xf32>
    %c0_1 = arith.constant 0 : index
    %c0_2 = arith.constant 0 : index
    %1 = vector.load %arg2[%c0_1, %c0_2] : memref<1x64xf32, #tpu.memory_space<vmem>>, vector<1x64xf32>
    %c0_3 = arith.constant 0 : index
    %c0_4 = arith.constant 0 : index
    %2 = vector.load %arg3[%c0_3, %c0_4] : memref<1x64xf32, #tpu.memory_space<vmem>>, vector<1x64xf32>
    %cst = arith.constant dense<0.000000e+00> : vector<36xf32>
    %3 = vector.multi_reduction <add>, %0, %cst [1] : vector<36x64xf32> to vector<36xf32>
    %4 = vector.shape_cast %3 : vector<36xf32> to vector<36x1xf32>
    %cst_5 = arith.constant 6.400000e+01 : f32
    %5 = vector.broadcast %cst_5 : f32 to vector<36x1xf32>
    %6 = arith.divf %4, %5 : vector<36x1xf32>
    %7 = vector.broadcast %6 : vector<36x1xf32> to vector<36x64xf32>
    %8 = arith.subf %0, %7 : vector<36x64xf32>
    %9 = arith.mulf %8, %8 : vector<36x64xf32>
    %cst_6 = arith.constant dense<0.000000e+00> : vector<36xf32>
    %10 = vector.multi_reduction <add>, %9, %cst_6 [1] : vector<36x64xf32> to vector<36xf32>
    %11 = vector.shape_cast %10 : vector<36xf32> to vector<36x1xf32>
    %cst_7 = arith.constant 6.400000e+01 : f32
    %12 = vector.broadcast %cst_7 : f32 to vector<36x1xf32>
    %13 = arith.divf %11, %12 : vector<36x1xf32>
    %cst_8 = arith.constant 9.99999974E-6 : f32
    %14 = vector.broadcast %cst_8 : f32 to vector<36x1xf32>
    %15 = arith.addf %13, %14 : vector<36x1xf32>
    %16 = math.rsqrt %15 : vector<36x1xf32>
    %17 = vector.broadcast %16 : vector<36x1xf32> to vector<36x64xf32>
    %18 = arith.mulf %8, %17 : vector<36x64xf32>
    %19 = vector.broadcast %1 : vector<1x64xf32> to vector<36x64xf32>
    %20 = arith.mulf %18, %19 : vector<36x64xf32>
    %21 = vector.broadcast %2 : vector<1x64xf32> to vector<36x64xf32>
    %22 = arith.addf %20, %21 : vector<36x64xf32>
    %cst_9 = arith.constant 0.000000e+00 : f32
    %23 = vector.broadcast %cst_9 : f32 to vector<36x64xf32>
    %24 = arith.cmpf oge, %22, %23 : vector<36x64xf32>
    %cst_10 = arith.constant 1.000000e-01 : f32
    %25 = vector.broadcast %cst_10 : f32 to vector<36x64xf32>
    %26 = arith.mulf %25, %22 : vector<36x64xf32>
    %27 = arith.select %24, %22, %26 : vector<36x64xi1>, vector<36x64xf32>
    %c0_11 = arith.constant 0 : index
    %c0_12 = arith.constant 0 : index
    %28 = vector.load %arg4[%c0_11, %c0_12] : memref<64x64xf32, #tpu.memory_space<vmem>>, vector<64x64xf32>
    %cst_13 = arith.constant dense<0.000000e+00> : vector<36x64xf32>
    %29 = tpu.matmul %27, %28, %cst_13 {dimension_numbers = #tpu.dot_dimension_numbers<[1], [0], [0], [1], [0, 0, 1, 1], [], []>} : vector<36x64xf32>, vector<64x64xf32>, vector<36x64xf32> -> vector<36x64xf32>
    %c0_14 = arith.constant 0 : index
    %c0_15 = arith.constant 0 : index
    %30 = vector.load %arg5[%c0_14, %c0_15] : memref<1x64xf32, #tpu.memory_space<vmem>>, vector<1x64xf32>
    %31 = vector.broadcast %30 : vector<1x64xf32> to vector<36x64xf32>
    %32 = arith.addf %29, %31 : vector<36x64xf32>
    %c0_16 = arith.constant 0 : index
    %c0_17 = arith.constant 0 : index
    %33 = vector.load %arg6[%c0_16, %c0_17] : memref<1x64xf32, #tpu.memory_space<vmem>>, vector<1x64xf32>
    %c0_18 = arith.constant 0 : index
    %c0_19 = arith.constant 0 : index
    %34 = vector.load %arg7[%c0_18, %c0_19] : memref<1x64xf32, #tpu.memory_space<vmem>>, vector<1x64xf32>
    %cst_20 = arith.constant dense<0.000000e+00> : vector<36xf32>
    %35 = vector.multi_reduction <add>, %32, %cst_20 [1] : vector<36x64xf32> to vector<36xf32>
    %36 = vector.shape_cast %35 : vector<36xf32> to vector<36x1xf32>
    %cst_21 = arith.constant 6.400000e+01 : f32
    %37 = vector.broadcast %cst_21 : f32 to vector<36x1xf32>
    %38 = arith.divf %36, %37 : vector<36x1xf32>
    %39 = vector.broadcast %38 : vector<36x1xf32> to vector<36x64xf32>
    %40 = arith.subf %32, %39 : vector<36x64xf32>
    %41 = arith.mulf %40, %40 : vector<36x64xf32>
    %cst_22 = arith.constant dense<0.000000e+00> : vector<36xf32>
    %42 = vector.multi_reduction <add>, %41, %cst_22 [1] : vector<36x64xf32> to vector<36xf32>
    %43 = vector.shape_cast %42 : vector<36xf32> to vector<36x1xf32>
    %cst_23 = arith.constant 6.400000e+01 : f32
    %44 = vector.broadcast %cst_23 : f32 to vector<36x1xf32>
    %45 = arith.divf %43, %44 : vector<36x1xf32>
    %cst_24 = arith.constant 9.99999974E-6 : f32
    %46 = vector.broadcast %cst_24 : f32 to vector<36x1xf32>
    %47 = arith.addf %45, %46 : vector<36x1xf32>
    %48 = math.rsqrt %47 : vector<36x1xf32>
    %49 = vector.broadcast %48 : vector<36x1xf32> to vector<36x64xf32>
    %50 = arith.mulf %40, %49 : vector<36x64xf32>
    %51 = vector.broadcast %33 : vector<1x64xf32> to vector<36x64xf32>
    %52 = arith.mulf %50, %51 : vector<36x64xf32>
    %53 = vector.broadcast %34 : vector<1x64xf32> to vector<36x64xf32>
    %54 = arith.addf %52, %53 : vector<36x64xf32>
    %cst_25 = arith.constant 0.000000e+00 : f32
    %55 = vector.broadcast %cst_25 : f32 to vector<36x64xf32>
    %56 = arith.cmpf oge, %54, %55 : vector<36x64xf32>
    %cst_26 = arith.constant 1.000000e-01 : f32
    %57 = vector.broadcast %cst_26 : f32 to vector<36x64xf32>
    %58 = arith.mulf %57, %54 : vector<36x64xf32>
    %59 = arith.select %56, %54, %58 : vector<36x64xi1>, vector<36x64xf32>
    %c0_27 = arith.constant 0 : index
    %c0_28 = arith.constant 0 : index
    %60 = vector.load %arg8[%c0_27, %c0_28] : memref<64x64xf32, #tpu.memory_space<vmem>>, vector<64x64xf32>
    %cst_29 = arith.constant dense<0.000000e+00> : vector<36x64xf32>
    %61 = tpu.matmul %59, %60, %cst_29 {dimension_numbers = #tpu.dot_dimension_numbers<[1], [0], [0], [1], [0, 0, 1, 1], [], []>} : vector<36x64xf32>, vector<64x64xf32>, vector<36x64xf32> -> vector<36x64xf32>
    %c0_30 = arith.constant 0 : index
    %c0_31 = arith.constant 0 : index
    %62 = vector.load %arg9[%c0_30, %c0_31] : memref<1x64xf32, #tpu.memory_space<vmem>>, vector<1x64xf32>
    %63 = vector.broadcast %62 : vector<1x64xf32> to vector<36x64xf32>
    %64 = arith.addf %61, %63 : vector<36x64xf32>
    %65 = arith.addf %0, %64 : vector<36x64xf32>
    %c0_32 = arith.constant 0 : index
    %c0_33 = arith.constant 0 : index
    %66 = vector.load %arg10[%c0_32, %c0_33] : memref<36x64xf32, #tpu.memory_space<vmem>>, vector<36x64xf32>
    tpu.vector_store %arg10[%c0_32, %c0_33], %65 {strides = array<i32>} : memref<36x64xf32, #tpu.memory_space<vmem>>, vector<36x64xf32>,
    return
  }
  func.func @transform_0(%arg0: i32) -> (i32, i32) {
    %c0_i32 = arith.constant 0 : i32
    %c0_i32_0 = arith.constant 0 : i32
    return %arg0, %c0_i32 : i32, i32
  }
  func.func @transform_1(%arg0: i32) -> (i32, i32) {
    %c0_i32 = arith.constant 0 : i32
    %c0_i32_0 = arith.constant 0 : i32
    %c0_i32_1 = arith.constant 0 : i32
    return %c0_i32, %c0_i32_0 : i32, i32
  }
  func.func @transform_2(%arg0: i32) -> (i32, i32) {
    %c0_i32 = arith.constant 0 : i32
    %c0_i32_0 = arith.constant 0 : i32
    %c0_i32_1 = arith.constant 0 : i32
    return %c0_i32, %c0_i32_0 : i32, i32
  }
  func.func @transform_3(%arg0: i32) -> (i32, i32) {
    %c0_i32 = arith.constant 0 : i32
    %c0_i32_0 = arith.constant 0 : i32
    %c0_i32_1 = arith.constant 0 : i32
    return %c0_i32, %c0_i32_0 : i32, i32
  }
  func.func @transform_4(%arg0: i32) -> (i32, i32) {
    %c0_i32 = arith.constant 0 : i32
    %c0_i32_0 = arith.constant 0 : i32
    %c0_i32_1 = arith.constant 0 : i32
    return %c0_i32, %c0_i32_0 : i32, i32
  }
  func.func @transform_5(%arg0: i32) -> (i32, i32) {
    %c0_i32 = arith.constant 0 : i32
    %c0_i32_0 = arith.constant 0 : i32
    %c0_i32_1 = arith.constant 0 : i32
    return %c0_i32, %c0_i32_0 : i32, i32
  }
  func.func @transform_6(%arg0: i32) -> (i32, i32) {
    %c0_i32 = arith.constant 0 : i32
    %c0_i32_0 = arith.constant 0 : i32
    %c0_i32_1 = arith.constant 0 : i32
    return %c0_i32, %c0_i32_0 : i32, i32
  }
  func.func @transform_7(%arg0: i32) -> (i32, i32) {
    %c0_i32 = arith.constant 0 : i32
    %c0_i32_0 = arith.constant 0 : i32
    %c0_i32_1 = arith.constant 0 : i32
    return %c0_i32, %c0_i32_0 : i32, i32
  }
  func.func @transform_8(%arg0: i32) -> (i32, i32) {
    %c0_i32 = arith.constant 0 : i32
    %c0_i32_0 = arith.constant 0 : i32
    %c0_i32_1 = arith.constant 0 : i32
    return %c0_i32, %c0_i32_0 : i32, i32
  }
  func.func @transform_9(%arg0: i32) -> (i32, i32) {
    %c0_i32 = arith.constant 0 : i32
    %c0_i32_0 = arith.constant 0 : i32
    return %arg0, %c0_i32 : i32, i32
  }
}

module attributes {stable_mosaic.version = 11 : i64} {
  func.func @_cnn_stage_kernel(%arg0: i32, %arg1: memref<1x30x4xf32, #tpu.memory_space<vmem>>, %arg2: memref<1x30x4xf32, #tpu.memory_space<vmem>>, %arg3: memref<15x4x64xf32, #tpu.memory_space<vmem>>, %arg4: memref<1x64xf32, #tpu.memory_space<vmem>>, %arg5: memref<4x64xf32, #tpu.memory_space<vmem>>, %arg6: memref<1x64xf32, #tpu.memory_space<vmem>>, %arg7: memref<128x64xf32, #tpu.memory_space<vmem>>, %arg8: memref<1x64xf32, #tpu.memory_space<vmem>>, %arg9: memref<1x16x64xf32, #tpu.memory_space<vmem>>) attributes {dimension_semantics = [#tpu.dimension_semantics<parallel>], iteration_bounds = array<i64: 2>, scalar_prefetch = 0 : i64, scratch_operands = 0 : i64, tpu.core_type = #tpu.core_type<tc>, window_params = [{transform_indices = @transform_0, window_bounds = array<i64: 1, 30, 4>}, {transform_indices = @transform_1, window_bounds = array<i64: 1, 30, 4>}, {pipeline_mode = #tpu.pipeline_mode<synchronous>, transform_indices = @transform_2, window_bounds = array<i64: 15, 4, 64>}, {pipeline_mode = #tpu.pipeline_mode<synchronous>, transform_indices = @transform_3, window_bounds = array<i64: 1, 64>}, {pipeline_mode = #tpu.pipeline_mode<synchronous>, transform_indices = @transform_4, window_bounds = array<i64: 4, 64>}, {pipeline_mode = #tpu.pipeline_mode<synchronous>, transform_indices = @transform_5, window_bounds = array<i64: 1, 64>}, {pipeline_mode = #tpu.pipeline_mode<synchronous>, transform_indices = @transform_6, window_bounds = array<i64: 128, 64>}, {pipeline_mode = #tpu.pipeline_mode<synchronous>, transform_indices = @transform_7, window_bounds = array<i64: 1, 64>}, {transform_indices = @transform_8, window_bounds = array<i64: 1, 16, 64>}]} {
    %c0 = arith.constant 0 : index
    %c0_0 = arith.constant 0 : index
    %c0_1 = arith.constant 0 : index
    %0 = vector.load %arg3[%c0, %c0_0, %c0_1] : memref<15x4x64xf32, #tpu.memory_space<vmem>>, vector<15x4x64xf32>
    %c0_2 = arith.constant 0 : index
    %c0_3 = arith.constant 0 : index
    %1 = vector.load %arg4[%c0_2, %c0_3] : memref<1x64xf32, #tpu.memory_space<vmem>>, vector<1x64xf32>
    %c0_4 = arith.constant 0 : index
    %c0_5 = arith.constant 0 : index
    %2 = vector.load %arg5[%c0_4, %c0_5] : memref<4x64xf32, #tpu.memory_space<vmem>>, vector<4x64xf32>
    %c0_6 = arith.constant 0 : index
    %c0_7 = arith.constant 0 : index
    %3 = vector.load %arg6[%c0_6, %c0_7] : memref<1x64xf32, #tpu.memory_space<vmem>>, vector<1x64xf32>
    %c0_8 = arith.constant 0 : index
    %c0_9 = arith.constant 0 : index
    %4 = vector.load %arg7[%c0_8, %c0_9] : memref<128x64xf32, #tpu.memory_space<vmem>>, vector<128x64xf32>
    %c0_10 = arith.constant 0 : index
    %c0_11 = arith.constant 0 : index
    %5 = vector.load %arg8[%c0_10, %c0_11] : memref<1x64xf32, #tpu.memory_space<vmem>>, vector<1x64xf32>
    %c0_12 = arith.constant 0 : index
    %c0_13 = arith.constant 0 : index
    %c0_14 = arith.constant 0 : index
    %6 = vector.load %arg1[%c0_12, %c0_13, %c0_14] : memref<1x30x4xf32, #tpu.memory_space<vmem>>, vector<1x30x4xf32>
    %7 = vector.shape_cast %6 : vector<1x30x4xf32> to vector<30x4xf32>
    %8 = vector.extract_strided_slice %7 {offsets = [0, 0], sizes = [16, 4], strides = [1, 1]} : vector<30x4xf32> to vector<16x4xf32>
    %9 = vector.extract_strided_slice %0 {offsets = [0, 0, 0], sizes = [1, 4, 64], strides = [1, 1, 1]} : vector<15x4x64xf32> to vector<1x4x64xf32>
    %10 = vector.shape_cast %9 : vector<1x4x64xf32> to vector<4x64xf32>
    %cst = arith.constant dense<0.000000e+00> : vector<16x64xf32>
    %11 = tpu.matmul %8, %10, %cst {dimension_numbers = #tpu.dot_dimension_numbers<[1], [0], [0], [1], [0, 0, 1, 1], [], []>} : vector<16x4xf32>, vector<4x64xf32>, vector<16x64xf32> -> vector<16x64xf32>
    %12 = vector.extract_strided_slice %7 {offsets = [1, 0], sizes = [16, 4], strides = [1, 1]} : vector<30x4xf32> to vector<16x4xf32>
    %13 = vector.extract_strided_slice %0 {offsets = [1, 0, 0], sizes = [1, 4, 64], strides = [1, 1, 1]} : vector<15x4x64xf32> to vector<1x4x64xf32>
    %14 = vector.shape_cast %13 : vector<1x4x64xf32> to vector<4x64xf32>
    %cst_15 = arith.constant dense<0.000000e+00> : vector<16x64xf32>
    %15 = tpu.matmul %12, %14, %cst_15 {dimension_numbers = #tpu.dot_dimension_numbers<[1], [0], [0], [1], [0, 0, 1, 1], [], []>} : vector<16x4xf32>, vector<4x64xf32>, vector<16x64xf32> -> vector<16x64xf32>
    %16 = arith.addf %11, %15 : vector<16x64xf32>
    %17 = vector.extract_strided_slice %7 {offsets = [2, 0], sizes = [16, 4], strides = [1, 1]} : vector<30x4xf32> to vector<16x4xf32>
    %18 = vector.extract_strided_slice %0 {offsets = [2, 0, 0], sizes = [1, 4, 64], strides = [1, 1, 1]} : vector<15x4x64xf32> to vector<1x4x64xf32>
    %19 = vector.shape_cast %18 : vector<1x4x64xf32> to vector<4x64xf32>
    %cst_16 = arith.constant dense<0.000000e+00> : vector<16x64xf32>
    %20 = tpu.matmul %17, %19, %cst_16 {dimension_numbers = #tpu.dot_dimension_numbers<[1], [0], [0], [1], [0, 0, 1, 1], [], []>} : vector<16x4xf32>, vector<4x64xf32>, vector<16x64xf32> -> vector<16x64xf32>
    %21 = arith.addf %16, %20 : vector<16x64xf32>
    %22 = vector.extract_strided_slice %7 {offsets = [3, 0], sizes = [16, 4], strides = [1, 1]} : vector<30x4xf32> to vector<16x4xf32>
    %23 = vector.extract_strided_slice %0 {offsets = [3, 0, 0], sizes = [1, 4, 64], strides = [1, 1, 1]} : vector<15x4x64xf32> to vector<1x4x64xf32>
    %24 = vector.shape_cast %23 : vector<1x4x64xf32> to vector<4x64xf32>
    %cst_17 = arith.constant dense<0.000000e+00> : vector<16x64xf32>
    %25 = tpu.matmul %22, %24, %cst_17 {dimension_numbers = #tpu.dot_dimension_numbers<[1], [0], [0], [1], [0, 0, 1, 1], [], []>} : vector<16x4xf32>, vector<4x64xf32>, vector<16x64xf32> -> vector<16x64xf32>
    %26 = arith.addf %21, %25 : vector<16x64xf32>
    %27 = vector.extract_strided_slice %7 {offsets = [4, 0], sizes = [16, 4], strides = [1, 1]} : vector<30x4xf32> to vector<16x4xf32>
    %28 = vector.extract_strided_slice %0 {offsets = [4, 0, 0], sizes = [1, 4, 64], strides = [1, 1, 1]} : vector<15x4x64xf32> to vector<1x4x64xf32>
    %29 = vector.shape_cast %28 : vector<1x4x64xf32> to vector<4x64xf32>
    %cst_18 = arith.constant dense<0.000000e+00> : vector<16x64xf32>
    %30 = tpu.matmul %27, %29, %cst_18 {dimension_numbers = #tpu.dot_dimension_numbers<[1], [0], [0], [1], [0, 0, 1, 1], [], []>} : vector<16x4xf32>, vector<4x64xf32>, vector<16x64xf32> -> vector<16x64xf32>
    %31 = arith.addf %26, %30 : vector<16x64xf32>
    %32 = vector.extract_strided_slice %7 {offsets = [5, 0], sizes = [16, 4], strides = [1, 1]} : vector<30x4xf32> to vector<16x4xf32>
    %33 = vector.extract_strided_slice %0 {offsets = [5, 0, 0], sizes = [1, 4, 64], strides = [1, 1, 1]} : vector<15x4x64xf32> to vector<1x4x64xf32>
    %34 = vector.shape_cast %33 : vector<1x4x64xf32> to vector<4x64xf32>
    %cst_19 = arith.constant dense<0.000000e+00> : vector<16x64xf32>
    %35 = tpu.matmul %32, %34, %cst_19 {dimension_numbers = #tpu.dot_dimension_numbers<[1], [0], [0], [1], [0, 0, 1, 1], [], []>} : vector<16x4xf32>, vector<4x64xf32>, vector<16x64xf32> -> vector<16x64xf32>
    %36 = arith.addf %31, %35 : vector<16x64xf32>
    %37 = vector.extract_strided_slice %7 {offsets = [6, 0], sizes = [16, 4], strides = [1, 1]} : vector<30x4xf32> to vector<16x4xf32>
    %38 = vector.extract_strided_slice %0 {offsets = [6, 0, 0], sizes = [1, 4, 64], strides = [1, 1, 1]} : vector<15x4x64xf32> to vector<1x4x64xf32>
    %39 = vector.shape_cast %38 : vector<1x4x64xf32> to vector<4x64xf32>
    %cst_20 = arith.constant dense<0.000000e+00> : vector<16x64xf32>
    %40 = tpu.matmul %37, %39, %cst_20 {dimension_numbers = #tpu.dot_dimension_numbers<[1], [0], [0], [1], [0, 0, 1, 1], [], []>} : vector<16x4xf32>, vector<4x64xf32>, vector<16x64xf32> -> vector<16x64xf32>
    %41 = arith.addf %36, %40 : vector<16x64xf32>
    %42 = vector.extract_strided_slice %7 {offsets = [7, 0], sizes = [16, 4], strides = [1, 1]} : vector<30x4xf32> to vector<16x4xf32>
    %43 = vector.extract_strided_slice %0 {offsets = [7, 0, 0], sizes = [1, 4, 64], strides = [1, 1, 1]} : vector<15x4x64xf32> to vector<1x4x64xf32>
    %44 = vector.shape_cast %43 : vector<1x4x64xf32> to vector<4x64xf32>
    %cst_21 = arith.constant dense<0.000000e+00> : vector<16x64xf32>
    %45 = tpu.matmul %42, %44, %cst_21 {dimension_numbers = #tpu.dot_dimension_numbers<[1], [0], [0], [1], [0, 0, 1, 1], [], []>} : vector<16x4xf32>, vector<4x64xf32>, vector<16x64xf32> -> vector<16x64xf32>
    %46 = arith.addf %41, %45 : vector<16x64xf32>
    %47 = vector.extract_strided_slice %7 {offsets = [8, 0], sizes = [16, 4], strides = [1, 1]} : vector<30x4xf32> to vector<16x4xf32>
    %48 = vector.extract_strided_slice %0 {offsets = [8, 0, 0], sizes = [1, 4, 64], strides = [1, 1, 1]} : vector<15x4x64xf32> to vector<1x4x64xf32>
    %49 = vector.shape_cast %48 : vector<1x4x64xf32> to vector<4x64xf32>
    %cst_22 = arith.constant dense<0.000000e+00> : vector<16x64xf32>
    %50 = tpu.matmul %47, %49, %cst_22 {dimension_numbers = #tpu.dot_dimension_numbers<[1], [0], [0], [1], [0, 0, 1, 1], [], []>} : vector<16x4xf32>, vector<4x64xf32>, vector<16x64xf32> -> vector<16x64xf32>
    %51 = arith.addf %46, %50 : vector<16x64xf32>
    %52 = vector.extract_strided_slice %7 {offsets = [9, 0], sizes = [16, 4], strides = [1, 1]} : vector<30x4xf32> to vector<16x4xf32>
    %53 = vector.extract_strided_slice %0 {offsets = [9, 0, 0], sizes = [1, 4, 64], strides = [1, 1, 1]} : vector<15x4x64xf32> to vector<1x4x64xf32>
    %54 = vector.shape_cast %53 : vector<1x4x64xf32> to vector<4x64xf32>
    %cst_23 = arith.constant dense<0.000000e+00> : vector<16x64xf32>
    %55 = tpu.matmul %52, %54, %cst_23 {dimension_numbers = #tpu.dot_dimension_numbers<[1], [0], [0], [1], [0, 0, 1, 1], [], []>} : vector<16x4xf32>, vector<4x64xf32>, vector<16x64xf32> -> vector<16x64xf32>
    %56 = arith.addf %51, %55 : vector<16x64xf32>
    %57 = vector.extract_strided_slice %7 {offsets = [10, 0], sizes = [16, 4], strides = [1, 1]} : vector<30x4xf32> to vector<16x4xf32>
    %58 = vector.extract_strided_slice %0 {offsets = [10, 0, 0], sizes = [1, 4, 64], strides = [1, 1, 1]} : vector<15x4x64xf32> to vector<1x4x64xf32>
    %59 = vector.shape_cast %58 : vector<1x4x64xf32> to vector<4x64xf32>
    %cst_24 = arith.constant dense<0.000000e+00> : vector<16x64xf32>
    %60 = tpu.matmul %57, %59, %cst_24 {dimension_numbers = #tpu.dot_dimension_numbers<[1], [0], [0], [1], [0, 0, 1, 1], [], []>} : vector<16x4xf32>, vector<4x64xf32>, vector<16x64xf32> -> vector<16x64xf32>
    %61 = arith.addf %56, %60 : vector<16x64xf32>
    %62 = vector.extract_strided_slice %7 {offsets = [11, 0], sizes = [16, 4], strides = [1, 1]} : vector<30x4xf32> to vector<16x4xf32>
    %63 = vector.extract_strided_slice %0 {offsets = [11, 0, 0], sizes = [1, 4, 64], strides = [1, 1, 1]} : vector<15x4x64xf32> to vector<1x4x64xf32>
    %64 = vector.shape_cast %63 : vector<1x4x64xf32> to vector<4x64xf32>
    %cst_25 = arith.constant dense<0.000000e+00> : vector<16x64xf32>
    %65 = tpu.matmul %62, %64, %cst_25 {dimension_numbers = #tpu.dot_dimension_numbers<[1], [0], [0], [1], [0, 0, 1, 1], [], []>} : vector<16x4xf32>, vector<4x64xf32>, vector<16x64xf32> -> vector<16x64xf32>
    %66 = arith.addf %61, %65 : vector<16x64xf32>
    %67 = vector.extract_strided_slice %7 {offsets = [12, 0], sizes = [16, 4], strides = [1, 1]} : vector<30x4xf32> to vector<16x4xf32>
    %68 = vector.extract_strided_slice %0 {offsets = [12, 0, 0], sizes = [1, 4, 64], strides = [1, 1, 1]} : vector<15x4x64xf32> to vector<1x4x64xf32>
    %69 = vector.shape_cast %68 : vector<1x4x64xf32> to vector<4x64xf32>
    %cst_26 = arith.constant dense<0.000000e+00> : vector<16x64xf32>
    %70 = tpu.matmul %67, %69, %cst_26 {dimension_numbers = #tpu.dot_dimension_numbers<[1], [0], [0], [1], [0, 0, 1, 1], [], []>} : vector<16x4xf32>, vector<4x64xf32>, vector<16x64xf32> -> vector<16x64xf32>
    %71 = arith.addf %66, %70 : vector<16x64xf32>
    %72 = vector.extract_strided_slice %7 {offsets = [13, 0], sizes = [16, 4], strides = [1, 1]} : vector<30x4xf32> to vector<16x4xf32>
    %73 = vector.extract_strided_slice %0 {offsets = [13, 0, 0], sizes = [1, 4, 64], strides = [1, 1, 1]} : vector<15x4x64xf32> to vector<1x4x64xf32>
    %74 = vector.shape_cast %73 : vector<1x4x64xf32> to vector<4x64xf32>
    %cst_27 = arith.constant dense<0.000000e+00> : vector<16x64xf32>
    %75 = tpu.matmul %72, %74, %cst_27 {dimension_numbers = #tpu.dot_dimension_numbers<[1], [0], [0], [1], [0, 0, 1, 1], [], []>} : vector<16x4xf32>, vector<4x64xf32>, vector<16x64xf32> -> vector<16x64xf32>
    %76 = arith.addf %71, %75 : vector<16x64xf32>
    %77 = vector.extract_strided_slice %7 {offsets = [14, 0], sizes = [16, 4], strides = [1, 1]} : vector<30x4xf32> to vector<16x4xf32>
    %78 = vector.extract_strided_slice %0 {offsets = [14, 0, 0], sizes = [1, 4, 64], strides = [1, 1, 1]} : vector<15x4x64xf32> to vector<1x4x64xf32>
    %79 = vector.shape_cast %78 : vector<1x4x64xf32> to vector<4x64xf32>
    %cst_28 = arith.constant dense<0.000000e+00> : vector<16x64xf32>
    %80 = tpu.matmul %77, %79, %cst_28 {dimension_numbers = #tpu.dot_dimension_numbers<[1], [0], [0], [1], [0, 0, 1, 1], [], []>} : vector<16x4xf32>, vector<4x64xf32>, vector<16x64xf32> -> vector<16x64xf32>
    %81 = arith.addf %76, %80 : vector<16x64xf32>
    %82 = vector.broadcast %1 : vector<1x64xf32> to vector<16x64xf32>
    %83 = arith.addf %81, %82 : vector<16x64xf32>
    %cst_29 = arith.constant 0.000000e+00 : f32
    %84 = vector.broadcast %cst_29 : f32 to vector<16x64xf32>
    %85 = arith.maximumf %83, %84 : vector<16x64xf32>
    %c15_i32 = arith.constant 15 : i32
    %86 = tpu.dynamic_rotate %85 by %c15_i32 dim 0 : vector<16x64xf32>, i32 -> vector<16x64xf32>
    %c1_i32 = arith.constant 1 : i32
    %87 = tpu.dynamic_rotate %85 by %c1_i32 dim 0 : vector<16x64xf32>, i32 -> vector<16x64xf32>
    %88 = tpu.iota {dimensions = array<i32: 0>} : vector<16x64xi32>
    %c15_i32_30 = arith.constant 15 : i32
    %89 = vector.broadcast %c15_i32_30 : i32 to vector<16x64xi32>
    %90 = arith.cmpi eq, %88, %89 : vector<16x64xi32>
    %cst_31 = arith.constant 0.000000e+00 : f32
    %91 = vector.broadcast %cst_31 : f32 to vector<16x64xf32>
    %92 = arith.select %90, %91, %86 : vector<16x64xi1>, vector<16x64xf32>
    %c0_i32 = arith.constant 0 : i32
    %93 = vector.broadcast %c0_i32 : i32 to vector<16x64xi32>
    %94 = arith.cmpi eq, %88, %93 : vector<16x64xi32>
    %cst_32 = arith.constant 0.000000e+00 : f32
    %95 = vector.broadcast %cst_32 : f32 to vector<16x64xf32>
    %96 = arith.select %94, %95, %87 : vector<16x64xi1>, vector<16x64xf32>
    %97 = arith.maximumf %85, %92 : vector<16x64xf32>
    %98 = arith.maximumf %97, %96 : vector<16x64xf32>
    %99 = vector.extract_strided_slice %7 {offsets = [7, 0], sizes = [16, 4], strides = [1, 1]} : vector<30x4xf32> to vector<16x4xf32>
    %cst_33 = arith.constant dense<0.000000e+00> : vector<16x64xf32>
    %100 = tpu.matmul %99, %2, %cst_33 {dimension_numbers = #tpu.dot_dimension_numbers<[1], [0], [0], [1], [0, 0, 1, 1], [], []>} : vector<16x4xf32>, vector<4x64xf32>, vector<16x64xf32> -> vector<16x64xf32>
    %101 = vector.broadcast %3 : vector<1x64xf32> to vector<16x64xf32>
    %102 = arith.addf %100, %101 : vector<16x64xf32>
    %103 = arith.addf %98, %102 : vector<16x64xf32>
    %c0_34 = arith.constant 0 : index
    %c0_35 = arith.constant 0 : index
    %c0_36 = arith.constant 0 : index
    %104 = vector.load %arg2[%c0_34, %c0_35, %c0_36] : memref<1x30x4xf32, #tpu.memory_space<vmem>>, vector<1x30x4xf32>
    %105 = vector.shape_cast %104 : vector<1x30x4xf32> to vector<30x4xf32>
    %106 = vector.extract_strided_slice %105 {offsets = [0, 0], sizes = [16, 4], strides = [1, 1]} : vector<30x4xf32> to vector<16x4xf32>
    %107 = vector.extract_strided_slice %0 {offsets = [0, 0, 0], sizes = [1, 4, 64], strides = [1, 1, 1]} : vector<15x4x64xf32> to vector<1x4x64xf32>
    %108 = vector.shape_cast %107 : vector<1x4x64xf32> to vector<4x64xf32>
    %cst_37 = arith.constant dense<0.000000e+00> : vector<16x64xf32>
    %109 = tpu.matmul %106, %108, %cst_37 {dimension_numbers = #tpu.dot_dimension_numbers<[1], [0], [0], [1], [0, 0, 1, 1], [], []>} : vector<16x4xf32>, vector<4x64xf32>, vector<16x64xf32> -> vector<16x64xf32>
    %110 = vector.extract_strided_slice %105 {offsets = [1, 0], sizes = [16, 4], strides = [1, 1]} : vector<30x4xf32> to vector<16x4xf32>
    %111 = vector.extract_strided_slice %0 {offsets = [1, 0, 0], sizes = [1, 4, 64], strides = [1, 1, 1]} : vector<15x4x64xf32> to vector<1x4x64xf32>
    %112 = vector.shape_cast %111 : vector<1x4x64xf32> to vector<4x64xf32>
    %cst_38 = arith.constant dense<0.000000e+00> : vector<16x64xf32>
    %113 = tpu.matmul %110, %112, %cst_38 {dimension_numbers = #tpu.dot_dimension_numbers<[1], [0], [0], [1], [0, 0, 1, 1], [], []>} : vector<16x4xf32>, vector<4x64xf32>, vector<16x64xf32> -> vector<16x64xf32>
    %114 = arith.addf %109, %113 : vector<16x64xf32>
    %115 = vector.extract_strided_slice %105 {offsets = [2, 0], sizes = [16, 4], strides = [1, 1]} : vector<30x4xf32> to vector<16x4xf32>
    %116 = vector.extract_strided_slice %0 {offsets = [2, 0, 0], sizes = [1, 4, 64], strides = [1, 1, 1]} : vector<15x4x64xf32> to vector<1x4x64xf32>
    %117 = vector.shape_cast %116 : vector<1x4x64xf32> to vector<4x64xf32>
    %cst_39 = arith.constant dense<0.000000e+00> : vector<16x64xf32>
    %118 = tpu.matmul %115, %117, %cst_39 {dimension_numbers = #tpu.dot_dimension_numbers<[1], [0], [0], [1], [0, 0, 1, 1], [], []>} : vector<16x4xf32>, vector<4x64xf32>, vector<16x64xf32> -> vector<16x64xf32>
    %119 = arith.addf %114, %118 : vector<16x64xf32>
    %120 = vector.extract_strided_slice %105 {offsets = [3, 0], sizes = [16, 4], strides = [1, 1]} : vector<30x4xf32> to vector<16x4xf32>
    %121 = vector.extract_strided_slice %0 {offsets = [3, 0, 0], sizes = [1, 4, 64], strides = [1, 1, 1]} : vector<15x4x64xf32> to vector<1x4x64xf32>
    %122 = vector.shape_cast %121 : vector<1x4x64xf32> to vector<4x64xf32>
    %cst_40 = arith.constant dense<0.000000e+00> : vector<16x64xf32>
    %123 = tpu.matmul %120, %122, %cst_40 {dimension_numbers = #tpu.dot_dimension_numbers<[1], [0], [0], [1], [0, 0, 1, 1], [], []>} : vector<16x4xf32>, vector<4x64xf32>, vector<16x64xf32> -> vector<16x64xf32>
    %124 = arith.addf %119, %123 : vector<16x64xf32>
    %125 = vector.extract_strided_slice %105 {offsets = [4, 0], sizes = [16, 4], strides = [1, 1]} : vector<30x4xf32> to vector<16x4xf32>
    %126 = vector.extract_strided_slice %0 {offsets = [4, 0, 0], sizes = [1, 4, 64], strides = [1, 1, 1]} : vector<15x4x64xf32> to vector<1x4x64xf32>
    %127 = vector.shape_cast %126 : vector<1x4x64xf32> to vector<4x64xf32>
    %cst_41 = arith.constant dense<0.000000e+00> : vector<16x64xf32>
    %128 = tpu.matmul %125, %127, %cst_41 {dimension_numbers = #tpu.dot_dimension_numbers<[1], [0], [0], [1], [0, 0, 1, 1], [], []>} : vector<16x4xf32>, vector<4x64xf32>, vector<16x64xf32> -> vector<16x64xf32>
    %129 = arith.addf %124, %128 : vector<16x64xf32>
    %130 = vector.extract_strided_slice %105 {offsets = [5, 0], sizes = [16, 4], strides = [1, 1]} : vector<30x4xf32> to vector<16x4xf32>
    %131 = vector.extract_strided_slice %0 {offsets = [5, 0, 0], sizes = [1, 4, 64], strides = [1, 1, 1]} : vector<15x4x64xf32> to vector<1x4x64xf32>
    %132 = vector.shape_cast %131 : vector<1x4x64xf32> to vector<4x64xf32>
    %cst_42 = arith.constant dense<0.000000e+00> : vector<16x64xf32>
    %133 = tpu.matmul %130, %132, %cst_42 {dimension_numbers = #tpu.dot_dimension_numbers<[1], [0], [0], [1], [0, 0, 1, 1], [], []>} : vector<16x4xf32>, vector<4x64xf32>, vector<16x64xf32> -> vector<16x64xf32>
    %134 = arith.addf %129, %133 : vector<16x64xf32>
    %135 = vector.extract_strided_slice %105 {offsets = [6, 0], sizes = [16, 4], strides = [1, 1]} : vector<30x4xf32> to vector<16x4xf32>
    %136 = vector.extract_strided_slice %0 {offsets = [6, 0, 0], sizes = [1, 4, 64], strides = [1, 1, 1]} : vector<15x4x64xf32> to vector<1x4x64xf32>
    %137 = vector.shape_cast %136 : vector<1x4x64xf32> to vector<4x64xf32>
    %cst_43 = arith.constant dense<0.000000e+00> : vector<16x64xf32>
    %138 = tpu.matmul %135, %137, %cst_43 {dimension_numbers = #tpu.dot_dimension_numbers<[1], [0], [0], [1], [0, 0, 1, 1], [], []>} : vector<16x4xf32>, vector<4x64xf32>, vector<16x64xf32> -> vector<16x64xf32>
    %139 = arith.addf %134, %138 : vector<16x64xf32>
    %140 = vector.extract_strided_slice %105 {offsets = [7, 0], sizes = [16, 4], strides = [1, 1]} : vector<30x4xf32> to vector<16x4xf32>
    %141 = vector.extract_strided_slice %0 {offsets = [7, 0, 0], sizes = [1, 4, 64], strides = [1, 1, 1]} : vector<15x4x64xf32> to vector<1x4x64xf32>
    %142 = vector.shape_cast %141 : vector<1x4x64xf32> to vector<4x64xf32>
    %cst_44 = arith.constant dense<0.000000e+00> : vector<16x64xf32>
    %143 = tpu.matmul %140, %142, %cst_44 {dimension_numbers = #tpu.dot_dimension_numbers<[1], [0], [0], [1], [0, 0, 1, 1], [], []>} : vector<16x4xf32>, vector<4x64xf32>, vector<16x64xf32> -> vector<16x64xf32>
    %144 = arith.addf %139, %143 : vector<16x64xf32>
    %145 = vector.extract_strided_slice %105 {offsets = [8, 0], sizes = [16, 4], strides = [1, 1]} : vector<30x4xf32> to vector<16x4xf32>
    %146 = vector.extract_strided_slice %0 {offsets = [8, 0, 0], sizes = [1, 4, 64], strides = [1, 1, 1]} : vector<15x4x64xf32> to vector<1x4x64xf32>
    %147 = vector.shape_cast %146 : vector<1x4x64xf32> to vector<4x64xf32>
    %cst_45 = arith.constant dense<0.000000e+00> : vector<16x64xf32>
    %148 = tpu.matmul %145, %147, %cst_45 {dimension_numbers = #tpu.dot_dimension_numbers<[1], [0], [0], [1], [0, 0, 1, 1], [], []>} : vector<16x4xf32>, vector<4x64xf32>, vector<16x64xf32> -> vector<16x64xf32>
    %149 = arith.addf %144, %148 : vector<16x64xf32>
    %150 = vector.extract_strided_slice %105 {offsets = [9, 0], sizes = [16, 4], strides = [1, 1]} : vector<30x4xf32> to vector<16x4xf32>
    %151 = vector.extract_strided_slice %0 {offsets = [9, 0, 0], sizes = [1, 4, 64], strides = [1, 1, 1]} : vector<15x4x64xf32> to vector<1x4x64xf32>
    %152 = vector.shape_cast %151 : vector<1x4x64xf32> to vector<4x64xf32>
    %cst_46 = arith.constant dense<0.000000e+00> : vector<16x64xf32>
    %153 = tpu.matmul %150, %152, %cst_46 {dimension_numbers = #tpu.dot_dimension_numbers<[1], [0], [0], [1], [0, 0, 1, 1], [], []>} : vector<16x4xf32>, vector<4x64xf32>, vector<16x64xf32> -> vector<16x64xf32>
    %154 = arith.addf %149, %153 : vector<16x64xf32>
    %155 = vector.extract_strided_slice %105 {offsets = [10, 0], sizes = [16, 4], strides = [1, 1]} : vector<30x4xf32> to vector<16x4xf32>
    %156 = vector.extract_strided_slice %0 {offsets = [10, 0, 0], sizes = [1, 4, 64], strides = [1, 1, 1]} : vector<15x4x64xf32> to vector<1x4x64xf32>
    %157 = vector.shape_cast %156 : vector<1x4x64xf32> to vector<4x64xf32>
    %cst_47 = arith.constant dense<0.000000e+00> : vector<16x64xf32>
    %158 = tpu.matmul %155, %157, %cst_47 {dimension_numbers = #tpu.dot_dimension_numbers<[1], [0], [0], [1], [0, 0, 1, 1], [], []>} : vector<16x4xf32>, vector<4x64xf32>, vector<16x64xf32> -> vector<16x64xf32>
    %159 = arith.addf %154, %158 : vector<16x64xf32>
    %160 = vector.extract_strided_slice %105 {offsets = [11, 0], sizes = [16, 4], strides = [1, 1]} : vector<30x4xf32> to vector<16x4xf32>
    %161 = vector.extract_strided_slice %0 {offsets = [11, 0, 0], sizes = [1, 4, 64], strides = [1, 1, 1]} : vector<15x4x64xf32> to vector<1x4x64xf32>
    %162 = vector.shape_cast %161 : vector<1x4x64xf32> to vector<4x64xf32>
    %cst_48 = arith.constant dense<0.000000e+00> : vector<16x64xf32>
    %163 = tpu.matmul %160, %162, %cst_48 {dimension_numbers = #tpu.dot_dimension_numbers<[1], [0], [0], [1], [0, 0, 1, 1], [], []>} : vector<16x4xf32>, vector<4x64xf32>, vector<16x64xf32> -> vector<16x64xf32>
    %164 = arith.addf %159, %163 : vector<16x64xf32>
    %165 = vector.extract_strided_slice %105 {offsets = [12, 0], sizes = [16, 4], strides = [1, 1]} : vector<30x4xf32> to vector<16x4xf32>
    %166 = vector.extract_strided_slice %0 {offsets = [12, 0, 0], sizes = [1, 4, 64], strides = [1, 1, 1]} : vector<15x4x64xf32> to vector<1x4x64xf32>
    %167 = vector.shape_cast %166 : vector<1x4x64xf32> to vector<4x64xf32>
    %cst_49 = arith.constant dense<0.000000e+00> : vector<16x64xf32>
    %168 = tpu.matmul %165, %167, %cst_49 {dimension_numbers = #tpu.dot_dimension_numbers<[1], [0], [0], [1], [0, 0, 1, 1], [], []>} : vector<16x4xf32>, vector<4x64xf32>, vector<16x64xf32> -> vector<16x64xf32>
    %169 = arith.addf %164, %168 : vector<16x64xf32>
    %170 = vector.extract_strided_slice %105 {offsets = [13, 0], sizes = [16, 4], strides = [1, 1]} : vector<30x4xf32> to vector<16x4xf32>
    %171 = vector.extract_strided_slice %0 {offsets = [13, 0, 0], sizes = [1, 4, 64], strides = [1, 1, 1]} : vector<15x4x64xf32> to vector<1x4x64xf32>
    %172 = vector.shape_cast %171 : vector<1x4x64xf32> to vector<4x64xf32>
    %cst_50 = arith.constant dense<0.000000e+00> : vector<16x64xf32>
    %173 = tpu.matmul %170, %172, %cst_50 {dimension_numbers = #tpu.dot_dimension_numbers<[1], [0], [0], [1], [0, 0, 1, 1], [], []>} : vector<16x4xf32>, vector<4x64xf32>, vector<16x64xf32> -> vector<16x64xf32>
    %174 = arith.addf %169, %173 : vector<16x64xf32>
    %175 = vector.extract_strided_slice %105 {offsets = [14, 0], sizes = [16, 4], strides = [1, 1]} : vector<30x4xf32> to vector<16x4xf32>
    %176 = vector.extract_strided_slice %0 {offsets = [14, 0, 0], sizes = [1, 4, 64], strides = [1, 1, 1]} : vector<15x4x64xf32> to vector<1x4x64xf32>
    %177 = vector.shape_cast %176 : vector<1x4x64xf32> to vector<4x64xf32>
    %cst_51 = arith.constant dense<0.000000e+00> : vector<16x64xf32>
    %178 = tpu.matmul %175, %177, %cst_51 {dimension_numbers = #tpu.dot_dimension_numbers<[1], [0], [0], [1], [0, 0, 1, 1], [], []>} : vector<16x4xf32>, vector<4x64xf32>, vector<16x64xf32> -> vector<16x64xf32>
    %179 = arith.addf %174, %178 : vector<16x64xf32>
    %180 = vector.broadcast %1 : vector<1x64xf32> to vector<16x64xf32>
    %181 = arith.addf %179, %180 : vector<16x64xf32>
    %cst_52 = arith.constant 0.000000e+00 : f32
    %182 = vector.broadcast %cst_52 : f32 to vector<16x64xf32>
    %183 = arith.maximumf %181, %182 : vector<16x64xf32>
    %c15_i32_53 = arith.constant 15 : i32
    %184 = tpu.dynamic_rotate %183 by %c15_i32_53 dim 0 : vector<16x64xf32>, i32 -> vector<16x64xf32>
    %c1_i32_54 = arith.constant 1 : i32
    %185 = tpu.dynamic_rotate %183 by %c1_i32_54 dim 0 : vector<16x64xf32>, i32 -> vector<16x64xf32>
    %186 = tpu.iota {dimensions = array<i32: 0>} : vector<16x64xi32>
    %c15_i32_55 = arith.constant 15 : i32
    %187 = vector.broadcast %c15_i32_55 : i32 to vector<16x64xi32>
    %188 = arith.cmpi eq, %186, %187 : vector<16x64xi32>
    %cst_56 = arith.constant 0.000000e+00 : f32
    %189 = vector.broadcast %cst_56 : f32 to vector<16x64xf32>
    %190 = arith.select %188, %189, %184 : vector<16x64xi1>, vector<16x64xf32>
    %c0_i32_57 = arith.constant 0 : i32
    %191 = vector.broadcast %c0_i32_57 : i32 to vector<16x64xi32>
    %192 = arith.cmpi eq, %186, %191 : vector<16x64xi32>
    %cst_58 = arith.constant 0.000000e+00 : f32
    %193 = vector.broadcast %cst_58 : f32 to vector<16x64xf32>
    %194 = arith.select %192, %193, %185 : vector<16x64xi1>, vector<16x64xf32>
    %195 = arith.maximumf %183, %190 : vector<16x64xf32>
    %196 = arith.maximumf %195, %194 : vector<16x64xf32>
    %197 = vector.extract_strided_slice %105 {offsets = [7, 0], sizes = [16, 4], strides = [1, 1]} : vector<30x4xf32> to vector<16x4xf32>
    %cst_59 = arith.constant dense<0.000000e+00> : vector<16x64xf32>
    %198 = tpu.matmul %197, %2, %cst_59 {dimension_numbers = #tpu.dot_dimension_numbers<[1], [0], [0], [1], [0, 0, 1, 1], [], []>} : vector<16x4xf32>, vector<4x64xf32>, vector<16x64xf32> -> vector<16x64xf32>
    %199 = vector.broadcast %3 : vector<1x64xf32> to vector<16x64xf32>
    %200 = arith.addf %198, %199 : vector<16x64xf32>
    %201 = arith.addf %196, %200 : vector<16x64xf32>
    %202 = vector.extract_strided_slice %4 {offsets = [0, 0], sizes = [64, 64], strides = [1, 1]} : vector<128x64xf32> to vector<64x64xf32>
    %cst_60 = arith.constant dense<0.000000e+00> : vector<16x64xf32>
    %203 = tpu.matmul %103, %202, %cst_60 {dimension_numbers = #tpu.dot_dimension_numbers<[1], [0], [0], [1], [0, 0, 1, 1], [], []>} : vector<16x64xf32>, vector<64x64xf32>, vector<16x64xf32> -> vector<16x64xf32>
    %204 = vector.extract_strided_slice %4 {offsets = [64, 0], sizes = [64, 64], strides = [1, 1]} : vector<128x64xf32> to vector<64x64xf32>
    %cst_61 = arith.constant dense<0.000000e+00> : vector<16x64xf32>
    %205 = tpu.matmul %201, %204, %cst_61 {dimension_numbers = #tpu.dot_dimension_numbers<[1], [0], [0], [1], [0, 0, 1, 1], [], []>} : vector<16x64xf32>, vector<64x64xf32>, vector<16x64xf32> -> vector<16x64xf32>
    %206 = arith.addf %203, %205 : vector<16x64xf32>
    %207 = vector.broadcast %5 : vector<1x64xf32> to vector<16x64xf32>
    %208 = arith.addf %206, %207 : vector<16x64xf32>
    %c0_62 = arith.constant 0 : index
    %c0_63 = arith.constant 0 : index
    %c0_64 = arith.constant 0 : index
    %209 = vector.load %arg9[%c0_62, %c0_63, %c0_64] : memref<1x16x64xf32, #tpu.memory_space<vmem>>, vector<1x16x64xf32>
    %210 = vector.shape_cast %209 : vector<1x16x64xf32> to vector<16x64xf32>
    %211 = vector.shape_cast %208 : vector<16x64xf32> to vector<1x16x64xf32>
    tpu.vector_store %arg9[%c0_62, %c0_63, %c0_64], %211 {strides = array<i32>} : memref<1x16x64xf32, #tpu.memory_space<vmem>>, vector<1x16x64xf32>,
    return
  }
  func.func @transform_0(%arg0: i32) -> (i32, i32, i32) {
    %c0_i32 = arith.constant 0 : i32
    %c0_i32_0 = arith.constant 0 : i32
    %c0_i32_1 = arith.constant 0 : i32
    return %arg0, %c0_i32, %c0_i32_0 : i32, i32, i32
  }
  func.func @transform_1(%arg0: i32) -> (i32, i32, i32) {
    %c0_i32 = arith.constant 0 : i32
    %c0_i32_0 = arith.constant 0 : i32
    %c0_i32_1 = arith.constant 0 : i32
    return %arg0, %c0_i32, %c0_i32_0 : i32, i32, i32
  }
  func.func @transform_2(%arg0: i32) -> (i32, i32, i32) {
    %c0_i32 = arith.constant 0 : i32
    %c0_i32_0 = arith.constant 0 : i32
    %c0_i32_1 = arith.constant 0 : i32
    %c0_i32_2 = arith.constant 0 : i32
    return %c0_i32, %c0_i32_0, %c0_i32_1 : i32, i32, i32
  }
  func.func @transform_3(%arg0: i32) -> (i32, i32) {
    %c0_i32 = arith.constant 0 : i32
    %c0_i32_0 = arith.constant 0 : i32
    %c0_i32_1 = arith.constant 0 : i32
    return %c0_i32, %c0_i32_0 : i32, i32
  }
  func.func @transform_4(%arg0: i32) -> (i32, i32) {
    %c0_i32 = arith.constant 0 : i32
    %c0_i32_0 = arith.constant 0 : i32
    %c0_i32_1 = arith.constant 0 : i32
    return %c0_i32, %c0_i32_0 : i32, i32
  }
  func.func @transform_5(%arg0: i32) -> (i32, i32) {
    %c0_i32 = arith.constant 0 : i32
    %c0_i32_0 = arith.constant 0 : i32
    %c0_i32_1 = arith.constant 0 : i32
    return %c0_i32, %c0_i32_0 : i32, i32
  }
  func.func @transform_6(%arg0: i32) -> (i32, i32) {
    %c0_i32 = arith.constant 0 : i32
    %c0_i32_0 = arith.constant 0 : i32
    %c0_i32_1 = arith.constant 0 : i32
    return %c0_i32, %c0_i32_0 : i32, i32
  }
  func.func @transform_7(%arg0: i32) -> (i32, i32) {
    %c0_i32 = arith.constant 0 : i32
    %c0_i32_0 = arith.constant 0 : i32
    %c0_i32_1 = arith.constant 0 : i32
    return %c0_i32, %c0_i32_0 : i32, i32
  }
  func.func @transform_8(%arg0: i32) -> (i32, i32, i32) {
    %c0_i32 = arith.constant 0 : i32
    %c0_i32_0 = arith.constant 0 : i32
    %c0_i32_1 = arith.constant 0 : i32
    return %arg0, %c0_i32, %c0_i32_0 : i32, i32, i32
  }
}

module attributes {stable_mosaic.version = 11 : i64} {
  func.func @_tsfm_block_kernel(%arg0: i32, %arg1: memref<1x18x64xf32, #tpu.memory_space<vmem>>, %arg2: memref<1x64xf32, #tpu.memory_space<vmem>>, %arg3: memref<1x64xf32, #tpu.memory_space<vmem>>, %arg4: memref<64x192xf32, #tpu.memory_space<vmem>>, %arg5: memref<1x192xf32, #tpu.memory_space<vmem>>, %arg6: memref<64x64xf32, #tpu.memory_space<vmem>>, %arg7: memref<1x64xf32, #tpu.memory_space<vmem>>, %arg8: memref<1x64xf32, #tpu.memory_space<vmem>>, %arg9: memref<1x64xf32, #tpu.memory_space<vmem>>, %arg10: memref<64x256xf32, #tpu.memory_space<vmem>>, %arg11: memref<1x256xf32, #tpu.memory_space<vmem>>, %arg12: memref<128x64xf32, #tpu.memory_space<vmem>>, %arg13: memref<1x64xf32, #tpu.memory_space<vmem>>, %arg14: memref<1x18x64xf32, #tpu.memory_space<vmem>>) attributes {dimension_semantics = [#tpu.dimension_semantics<parallel>], iteration_bounds = array<i64: 2>, scalar_prefetch = 0 : i64, scratch_operands = 0 : i64, tpu.core_type = #tpu.core_type<tc>, window_params = [{transform_indices = @transform_0, window_bounds = array<i64: 1, 18, 64>}, {pipeline_mode = #tpu.pipeline_mode<synchronous>, transform_indices = @transform_1, window_bounds = array<i64: 1, 64>}, {pipeline_mode = #tpu.pipeline_mode<synchronous>, transform_indices = @transform_2, window_bounds = array<i64: 1, 64>}, {pipeline_mode = #tpu.pipeline_mode<synchronous>, transform_indices = @transform_3, window_bounds = array<i64: 64, 192>}, {pipeline_mode = #tpu.pipeline_mode<synchronous>, transform_indices = @transform_4, window_bounds = array<i64: 1, 192>}, {pipeline_mode = #tpu.pipeline_mode<synchronous>, transform_indices = @transform_5, window_bounds = array<i64: 64, 64>}, {pipeline_mode = #tpu.pipeline_mode<synchronous>, transform_indices = @transform_6, window_bounds = array<i64: 1, 64>}, {pipeline_mode = #tpu.pipeline_mode<synchronous>, transform_indices = @transform_7, window_bounds = array<i64: 1, 64>}, {pipeline_mode = #tpu.pipeline_mode<synchronous>, transform_indices = @transform_8, window_bounds = array<i64: 1, 64>}, {pipeline_mode = #tpu.pipeline_mode<synchronous>, transform_indices = @transform_9, window_bounds = array<i64: 64, 256>}, {pipeline_mode = #tpu.pipeline_mode<synchronous>, transform_indices = @transform_10, window_bounds = array<i64: 1, 256>}, {pipeline_mode = #tpu.pipeline_mode<synchronous>, transform_indices = @transform_11, window_bounds = array<i64: 128, 64>}, {pipeline_mode = #tpu.pipeline_mode<synchronous>, transform_indices = @transform_12, window_bounds = array<i64: 1, 64>}, {transform_indices = @transform_13, window_bounds = array<i64: 1, 18, 64>}]} {
    %c0 = arith.constant 0 : index
    %c0_0 = arith.constant 0 : index
    %c0_1 = arith.constant 0 : index
    %0 = vector.load %arg1[%c0, %c0_0, %c0_1] : memref<1x18x64xf32, #tpu.memory_space<vmem>>, vector<1x18x64xf32>
    %1 = vector.shape_cast %0 : vector<1x18x64xf32> to vector<18x64xf32>
    %c0_2 = arith.constant 0 : index
    %c0_3 = arith.constant 0 : index
    %2 = vector.load %arg2[%c0_2, %c0_3] : memref<1x64xf32, #tpu.memory_space<vmem>>, vector<1x64xf32>
    %c0_4 = arith.constant 0 : index
    %c0_5 = arith.constant 0 : index
    %3 = vector.load %arg3[%c0_4, %c0_5] : memref<1x64xf32, #tpu.memory_space<vmem>>, vector<1x64xf32>
    %cst = arith.constant dense<0.000000e+00> : vector<18xf32>
    %4 = vector.multi_reduction <add>, %1, %cst [1] : vector<18x64xf32> to vector<18xf32>
    %5 = vector.shape_cast %4 : vector<18xf32> to vector<18x1xf32>
    %cst_6 = arith.constant 6.400000e+01 : f32
    %6 = vector.broadcast %cst_6 : f32 to vector<18x1xf32>
    %7 = arith.divf %5, %6 : vector<18x1xf32>
    %8 = vector.broadcast %7 : vector<18x1xf32> to vector<18x64xf32>
    %9 = arith.subf %1, %8 : vector<18x64xf32>
    %10 = arith.mulf %9, %9 : vector<18x64xf32>
    %cst_7 = arith.constant dense<0.000000e+00> : vector<18xf32>
    %11 = vector.multi_reduction <add>, %10, %cst_7 [1] : vector<18x64xf32> to vector<18xf32>
    %12 = vector.shape_cast %11 : vector<18xf32> to vector<18x1xf32>
    %cst_8 = arith.constant 6.400000e+01 : f32
    %13 = vector.broadcast %cst_8 : f32 to vector<18x1xf32>
    %14 = arith.divf %12, %13 : vector<18x1xf32>
    %cst_9 = arith.constant 9.99999974E-6 : f32
    %15 = vector.broadcast %cst_9 : f32 to vector<18x1xf32>
    %16 = arith.addf %14, %15 : vector<18x1xf32>
    %17 = math.rsqrt %16 : vector<18x1xf32>
    %18 = vector.broadcast %17 : vector<18x1xf32> to vector<18x64xf32>
    %19 = arith.mulf %9, %18 : vector<18x64xf32>
    %20 = vector.broadcast %2 : vector<1x64xf32> to vector<18x64xf32>
    %21 = arith.mulf %19, %20 : vector<18x64xf32>
    %22 = vector.broadcast %3 : vector<1x64xf32> to vector<18x64xf32>
    %23 = arith.addf %21, %22 : vector<18x64xf32>
    %c0_10 = arith.constant 0 : index
    %c0_11 = arith.constant 0 : index
    %24 = vector.load %arg4[%c0_10, %c0_11] : memref<64x192xf32, #tpu.memory_space<vmem>>, vector<64x192xf32>
    %cst_12 = arith.constant dense<0.000000e+00> : vector<18x192xf32>
    %25 = tpu.matmul %23, %24, %cst_12 {dimension_numbers = #tpu.dot_dimension_numbers<[1], [0], [0], [1], [0, 0, 1, 1], [], []>} : vector<18x64xf32>, vector<64x192xf32>, vector<18x192xf32> -> vector<18x192xf32>
    %c0_13 = arith.constant 0 : index
    %c0_14 = arith.constant 0 : index
    %26 = vector.load %arg5[%c0_13, %c0_14] : memref<1x192xf32, #tpu.memory_space<vmem>>, vector<1x192xf32>
    %27 = vector.broadcast %26 : vector<1x192xf32> to vector<18x192xf32>
    %28 = arith.addf %25, %27 : vector<18x192xf32>
    %29 = vector.extract_strided_slice %28 {offsets = [0, 0], sizes = [18, 64], strides = [1, 1]} : vector<18x192xf32> to vector<18x64xf32>
    %30 = vector.extract_strided_slice %28 {offsets = [0, 64], sizes = [18, 64], strides = [1, 1]} : vector<18x192xf32> to vector<18x64xf32>
    %31 = vector.extract_strided_slice %28 {offsets = [0, 128], sizes = [18, 64], strides = [1, 1]} : vector<18x192xf32> to vector<18x64xf32>
    %c0_15 = arith.constant 0 : index
    %c0_16 = arith.constant 0 : index
    %32 = vector.load %arg6[%c0_15, %c0_16] : memref<64x64xf32, #tpu.memory_space<vmem>>, vector<64x64xf32>
    %cst_17 = arith.constant 0.000000e+00 : f32
    %33 = vector.broadcast %cst_17 : f32 to vector<18x64xf32>
    %34 = vector.extract_strided_slice %29 {offsets = [0, 0], sizes = [18, 8], strides = [1, 1]} : vector<18x64xf32> to vector<18x8xf32>
    %cst_18 = arith.constant 0.353553385 : f32
    %35 = vector.broadcast %cst_18 : f32 to vector<18x8xf32>
    %36 = arith.mulf %34, %35 : vector<18x8xf32>
    %37 = vector.extract_strided_slice %30 {offsets = [0, 0], sizes = [18, 8], strides = [1, 1]} : vector<18x64xf32> to vector<18x8xf32>
    "tpu.trace_start"() <{level = 10 : i32, message = "qd,kd->qk"}> : () -> ()
    %cst_19 = arith.constant dense<0.000000e+00> : vector<18x18xf32>
    %38 = tpu.matmul %36, %37, %cst_19 {dimension_numbers = #tpu.dot_dimension_numbers<[1], [1], [0], [0], [0, 0, 1, 0], [], []>} : vector<18x8xf32>, vector<18x8xf32>, vector<18x18xf32> -> vector<18x18xf32>
    "tpu.trace_stop"() : () -> ()
    %cst_20 = arith.constant dense<0xFF800000> : vector<18xf32>
    %39 = vector.multi_reduction <maximumf>, %38, %cst_20 [1] : vector<18x18xf32> to vector<18xf32>
    %40 = vector.shape_cast %39 : vector<18xf32> to vector<18x1xf32>
    %41 = vector.broadcast %40 : vector<18x1xf32> to vector<18x18xf32>
    %42 = arith.subf %38, %41 : vector<18x18xf32>
    %43 = math.exp %42 : vector<18x18xf32>
    %cst_21 = arith.constant dense<0.000000e+00> : vector<18xf32>
    %44 = vector.multi_reduction <add>, %43, %cst_21 [1] : vector<18x18xf32> to vector<18xf32>
    %45 = vector.shape_cast %44 : vector<18xf32> to vector<18x1xf32>
    %46 = tpu.reciprocal %45 {approx = true} : vector<18x1xf32> -> vector<18x1xf32>
    %47 = vector.broadcast %46 : vector<18x1xf32> to vector<18x18xf32>
    %48 = arith.mulf %43, %47 : vector<18x18xf32>
    %49 = vector.extract_strided_slice %31 {offsets = [0, 0], sizes = [18, 8], strides = [1, 1]} : vector<18x64xf32> to vector<18x8xf32>
    "tpu.trace_start"() <{level = 10 : i32, message = "qk,kd->qd"}> : () -> ()
    %cst_22 = arith.constant dense<0.000000e+00> : vector<18x8xf32>
    %50 = tpu.matmul %48, %49, %cst_22 {dimension_numbers = #tpu.dot_dimension_numbers<[1], [0], [0], [1], [0, 0, 1, 1], [], []>} : vector<18x18xf32>, vector<18x8xf32>, vector<18x8xf32> -> vector<18x8xf32>
    "tpu.trace_stop"() : () -> ()
    %51 = vector.extract_strided_slice %32 {offsets = [0, 0], sizes = [8, 64], strides = [1, 1]} : vector<64x64xf32> to vector<8x64xf32>
    %cst_23 = arith.constant dense<0.000000e+00> : vector<18x64xf32>
    %52 = tpu.matmul %50, %51, %cst_23 {dimension_numbers = #tpu.dot_dimension_numbers<[1], [0], [0], [1], [0, 0, 1, 1], [], []>} : vector<18x8xf32>, vector<8x64xf32>, vector<18x64xf32> -> vector<18x64xf32>
    %53 = arith.addf %33, %52 : vector<18x64xf32>
    %54 = vector.extract_strided_slice %29 {offsets = [0, 8], sizes = [18, 8], strides = [1, 1]} : vector<18x64xf32> to vector<18x8xf32>
    %cst_24 = arith.constant 0.353553385 : f32
    %55 = vector.broadcast %cst_24 : f32 to vector<18x8xf32>
    %56 = arith.mulf %54, %55 : vector<18x8xf32>
    %57 = vector.extract_strided_slice %30 {offsets = [0, 8], sizes = [18, 8], strides = [1, 1]} : vector<18x64xf32> to vector<18x8xf32>
    "tpu.trace_start"() <{level = 10 : i32, message = "qd,kd->qk"}> : () -> ()
    %cst_25 = arith.constant dense<0.000000e+00> : vector<18x18xf32>
    %58 = tpu.matmul %56, %57, %cst_25 {dimension_numbers = #tpu.dot_dimension_numbers<[1], [1], [0], [0], [0, 0, 1, 0], [], []>} : vector<18x8xf32>, vector<18x8xf32>, vector<18x18xf32> -> vector<18x18xf32>
    "tpu.trace_stop"() : () -> ()
    %cst_26 = arith.constant dense<0xFF800000> : vector<18xf32>
    %59 = vector.multi_reduction <maximumf>, %58, %cst_26 [1] : vector<18x18xf32> to vector<18xf32>
    %60 = vector.shape_cast %59 : vector<18xf32> to vector<18x1xf32>
    %61 = vector.broadcast %60 : vector<18x1xf32> to vector<18x18xf32>
    %62 = arith.subf %58, %61 : vector<18x18xf32>
    %63 = math.exp %62 : vector<18x18xf32>
    %cst_27 = arith.constant dense<0.000000e+00> : vector<18xf32>
    %64 = vector.multi_reduction <add>, %63, %cst_27 [1] : vector<18x18xf32> to vector<18xf32>
    %65 = vector.shape_cast %64 : vector<18xf32> to vector<18x1xf32>
    %66 = tpu.reciprocal %65 {approx = true} : vector<18x1xf32> -> vector<18x1xf32>
    %67 = vector.broadcast %66 : vector<18x1xf32> to vector<18x18xf32>
    %68 = arith.mulf %63, %67 : vector<18x18xf32>
    %69 = vector.extract_strided_slice %31 {offsets = [0, 8], sizes = [18, 8], strides = [1, 1]} : vector<18x64xf32> to vector<18x8xf32>
    "tpu.trace_start"() <{level = 10 : i32, message = "qk,kd->qd"}> : () -> ()
    %cst_28 = arith.constant dense<0.000000e+00> : vector<18x8xf32>
    %70 = tpu.matmul %68, %69, %cst_28 {dimension_numbers = #tpu.dot_dimension_numbers<[1], [0], [0], [1], [0, 0, 1, 1], [], []>} : vector<18x18xf32>, vector<18x8xf32>, vector<18x8xf32> -> vector<18x8xf32>
    "tpu.trace_stop"() : () -> ()
    %71 = vector.extract_strided_slice %32 {offsets = [8, 0], sizes = [8, 64], strides = [1, 1]} : vector<64x64xf32> to vector<8x64xf32>
    %cst_29 = arith.constant dense<0.000000e+00> : vector<18x64xf32>
    %72 = tpu.matmul %70, %71, %cst_29 {dimension_numbers = #tpu.dot_dimension_numbers<[1], [0], [0], [1], [0, 0, 1, 1], [], []>} : vector<18x8xf32>, vector<8x64xf32>, vector<18x64xf32> -> vector<18x64xf32>
    %73 = arith.addf %53, %72 : vector<18x64xf32>
    %74 = vector.extract_strided_slice %29 {offsets = [0, 16], sizes = [18, 8], strides = [1, 1]} : vector<18x64xf32> to vector<18x8xf32>
    %cst_30 = arith.constant 0.353553385 : f32
    %75 = vector.broadcast %cst_30 : f32 to vector<18x8xf32>
    %76 = arith.mulf %74, %75 : vector<18x8xf32>
    %77 = vector.extract_strided_slice %30 {offsets = [0, 16], sizes = [18, 8], strides = [1, 1]} : vector<18x64xf32> to vector<18x8xf32>
    "tpu.trace_start"() <{level = 10 : i32, message = "qd,kd->qk"}> : () -> ()
    %cst_31 = arith.constant dense<0.000000e+00> : vector<18x18xf32>
    %78 = tpu.matmul %76, %77, %cst_31 {dimension_numbers = #tpu.dot_dimension_numbers<[1], [1], [0], [0], [0, 0, 1, 0], [], []>} : vector<18x8xf32>, vector<18x8xf32>, vector<18x18xf32> -> vector<18x18xf32>
    "tpu.trace_stop"() : () -> ()
    %cst_32 = arith.constant dense<0xFF800000> : vector<18xf32>
    %79 = vector.multi_reduction <maximumf>, %78, %cst_32 [1] : vector<18x18xf32> to vector<18xf32>
    %80 = vector.shape_cast %79 : vector<18xf32> to vector<18x1xf32>
    %81 = vector.broadcast %80 : vector<18x1xf32> to vector<18x18xf32>
    %82 = arith.subf %78, %81 : vector<18x18xf32>
    %83 = math.exp %82 : vector<18x18xf32>
    %cst_33 = arith.constant dense<0.000000e+00> : vector<18xf32>
    %84 = vector.multi_reduction <add>, %83, %cst_33 [1] : vector<18x18xf32> to vector<18xf32>
    %85 = vector.shape_cast %84 : vector<18xf32> to vector<18x1xf32>
    %86 = tpu.reciprocal %85 {approx = true} : vector<18x1xf32> -> vector<18x1xf32>
    %87 = vector.broadcast %86 : vector<18x1xf32> to vector<18x18xf32>
    %88 = arith.mulf %83, %87 : vector<18x18xf32>
    %89 = vector.extract_strided_slice %31 {offsets = [0, 16], sizes = [18, 8], strides = [1, 1]} : vector<18x64xf32> to vector<18x8xf32>
    "tpu.trace_start"() <{level = 10 : i32, message = "qk,kd->qd"}> : () -> ()
    %cst_34 = arith.constant dense<0.000000e+00> : vector<18x8xf32>
    %90 = tpu.matmul %88, %89, %cst_34 {dimension_numbers = #tpu.dot_dimension_numbers<[1], [0], [0], [1], [0, 0, 1, 1], [], []>} : vector<18x18xf32>, vector<18x8xf32>, vector<18x8xf32> -> vector<18x8xf32>
    "tpu.trace_stop"() : () -> ()
    %91 = vector.extract_strided_slice %32 {offsets = [16, 0], sizes = [8, 64], strides = [1, 1]} : vector<64x64xf32> to vector<8x64xf32>
    %cst_35 = arith.constant dense<0.000000e+00> : vector<18x64xf32>
    %92 = tpu.matmul %90, %91, %cst_35 {dimension_numbers = #tpu.dot_dimension_numbers<[1], [0], [0], [1], [0, 0, 1, 1], [], []>} : vector<18x8xf32>, vector<8x64xf32>, vector<18x64xf32> -> vector<18x64xf32>
    %93 = arith.addf %73, %92 : vector<18x64xf32>
    %94 = vector.extract_strided_slice %29 {offsets = [0, 24], sizes = [18, 8], strides = [1, 1]} : vector<18x64xf32> to vector<18x8xf32>
    %cst_36 = arith.constant 0.353553385 : f32
    %95 = vector.broadcast %cst_36 : f32 to vector<18x8xf32>
    %96 = arith.mulf %94, %95 : vector<18x8xf32>
    %97 = vector.extract_strided_slice %30 {offsets = [0, 24], sizes = [18, 8], strides = [1, 1]} : vector<18x64xf32> to vector<18x8xf32>
    "tpu.trace_start"() <{level = 10 : i32, message = "qd,kd->qk"}> : () -> ()
    %cst_37 = arith.constant dense<0.000000e+00> : vector<18x18xf32>
    %98 = tpu.matmul %96, %97, %cst_37 {dimension_numbers = #tpu.dot_dimension_numbers<[1], [1], [0], [0], [0, 0, 1, 0], [], []>} : vector<18x8xf32>, vector<18x8xf32>, vector<18x18xf32> -> vector<18x18xf32>
    "tpu.trace_stop"() : () -> ()
    %cst_38 = arith.constant dense<0xFF800000> : vector<18xf32>
    %99 = vector.multi_reduction <maximumf>, %98, %cst_38 [1] : vector<18x18xf32> to vector<18xf32>
    %100 = vector.shape_cast %99 : vector<18xf32> to vector<18x1xf32>
    %101 = vector.broadcast %100 : vector<18x1xf32> to vector<18x18xf32>
    %102 = arith.subf %98, %101 : vector<18x18xf32>
    %103 = math.exp %102 : vector<18x18xf32>
    %cst_39 = arith.constant dense<0.000000e+00> : vector<18xf32>
    %104 = vector.multi_reduction <add>, %103, %cst_39 [1] : vector<18x18xf32> to vector<18xf32>
    %105 = vector.shape_cast %104 : vector<18xf32> to vector<18x1xf32>
    %106 = tpu.reciprocal %105 {approx = true} : vector<18x1xf32> -> vector<18x1xf32>
    %107 = vector.broadcast %106 : vector<18x1xf32> to vector<18x18xf32>
    %108 = arith.mulf %103, %107 : vector<18x18xf32>
    %109 = vector.extract_strided_slice %31 {offsets = [0, 24], sizes = [18, 8], strides = [1, 1]} : vector<18x64xf32> to vector<18x8xf32>
    "tpu.trace_start"() <{level = 10 : i32, message = "qk,kd->qd"}> : () -> ()
    %cst_40 = arith.constant dense<0.000000e+00> : vector<18x8xf32>
    %110 = tpu.matmul %108, %109, %cst_40 {dimension_numbers = #tpu.dot_dimension_numbers<[1], [0], [0], [1], [0, 0, 1, 1], [], []>} : vector<18x18xf32>, vector<18x8xf32>, vector<18x8xf32> -> vector<18x8xf32>
    "tpu.trace_stop"() : () -> ()
    %111 = vector.extract_strided_slice %32 {offsets = [24, 0], sizes = [8, 64], strides = [1, 1]} : vector<64x64xf32> to vector<8x64xf32>
    %cst_41 = arith.constant dense<0.000000e+00> : vector<18x64xf32>
    %112 = tpu.matmul %110, %111, %cst_41 {dimension_numbers = #tpu.dot_dimension_numbers<[1], [0], [0], [1], [0, 0, 1, 1], [], []>} : vector<18x8xf32>, vector<8x64xf32>, vector<18x64xf32> -> vector<18x64xf32>
    %113 = arith.addf %93, %112 : vector<18x64xf32>
    %114 = vector.extract_strided_slice %29 {offsets = [0, 32], sizes = [18, 8], strides = [1, 1]} : vector<18x64xf32> to vector<18x8xf32>
    %cst_42 = arith.constant 0.353553385 : f32
    %115 = vector.broadcast %cst_42 : f32 to vector<18x8xf32>
    %116 = arith.mulf %114, %115 : vector<18x8xf32>
    %117 = vector.extract_strided_slice %30 {offsets = [0, 32], sizes = [18, 8], strides = [1, 1]} : vector<18x64xf32> to vector<18x8xf32>
    "tpu.trace_start"() <{level = 10 : i32, message = "qd,kd->qk"}> : () -> ()
    %cst_43 = arith.constant dense<0.000000e+00> : vector<18x18xf32>
    %118 = tpu.matmul %116, %117, %cst_43 {dimension_numbers = #tpu.dot_dimension_numbers<[1], [1], [0], [0], [0, 0, 1, 0], [], []>} : vector<18x8xf32>, vector<18x8xf32>, vector<18x18xf32> -> vector<18x18xf32>
    "tpu.trace_stop"() : () -> ()
    %cst_44 = arith.constant dense<0xFF800000> : vector<18xf32>
    %119 = vector.multi_reduction <maximumf>, %118, %cst_44 [1] : vector<18x18xf32> to vector<18xf32>
    %120 = vector.shape_cast %119 : vector<18xf32> to vector<18x1xf32>
    %121 = vector.broadcast %120 : vector<18x1xf32> to vector<18x18xf32>
    %122 = arith.subf %118, %121 : vector<18x18xf32>
    %123 = math.exp %122 : vector<18x18xf32>
    %cst_45 = arith.constant dense<0.000000e+00> : vector<18xf32>
    %124 = vector.multi_reduction <add>, %123, %cst_45 [1] : vector<18x18xf32> to vector<18xf32>
    %125 = vector.shape_cast %124 : vector<18xf32> to vector<18x1xf32>
    %126 = tpu.reciprocal %125 {approx = true} : vector<18x1xf32> -> vector<18x1xf32>
    %127 = vector.broadcast %126 : vector<18x1xf32> to vector<18x18xf32>
    %128 = arith.mulf %123, %127 : vector<18x18xf32>
    %129 = vector.extract_strided_slice %31 {offsets = [0, 32], sizes = [18, 8], strides = [1, 1]} : vector<18x64xf32> to vector<18x8xf32>
    "tpu.trace_start"() <{level = 10 : i32, message = "qk,kd->qd"}> : () -> ()
    %cst_46 = arith.constant dense<0.000000e+00> : vector<18x8xf32>
    %130 = tpu.matmul %128, %129, %cst_46 {dimension_numbers = #tpu.dot_dimension_numbers<[1], [0], [0], [1], [0, 0, 1, 1], [], []>} : vector<18x18xf32>, vector<18x8xf32>, vector<18x8xf32> -> vector<18x8xf32>
    "tpu.trace_stop"() : () -> ()
    %131 = vector.extract_strided_slice %32 {offsets = [32, 0], sizes = [8, 64], strides = [1, 1]} : vector<64x64xf32> to vector<8x64xf32>
    %cst_47 = arith.constant dense<0.000000e+00> : vector<18x64xf32>
    %132 = tpu.matmul %130, %131, %cst_47 {dimension_numbers = #tpu.dot_dimension_numbers<[1], [0], [0], [1], [0, 0, 1, 1], [], []>} : vector<18x8xf32>, vector<8x64xf32>, vector<18x64xf32> -> vector<18x64xf32>
    %133 = arith.addf %113, %132 : vector<18x64xf32>
    %134 = vector.extract_strided_slice %29 {offsets = [0, 40], sizes = [18, 8], strides = [1, 1]} : vector<18x64xf32> to vector<18x8xf32>
    %cst_48 = arith.constant 0.353553385 : f32
    %135 = vector.broadcast %cst_48 : f32 to vector<18x8xf32>
    %136 = arith.mulf %134, %135 : vector<18x8xf32>
    %137 = vector.extract_strided_slice %30 {offsets = [0, 40], sizes = [18, 8], strides = [1, 1]} : vector<18x64xf32> to vector<18x8xf32>
    "tpu.trace_start"() <{level = 10 : i32, message = "qd,kd->qk"}> : () -> ()
    %cst_49 = arith.constant dense<0.000000e+00> : vector<18x18xf32>
    %138 = tpu.matmul %136, %137, %cst_49 {dimension_numbers = #tpu.dot_dimension_numbers<[1], [1], [0], [0], [0, 0, 1, 0], [], []>} : vector<18x8xf32>, vector<18x8xf32>, vector<18x18xf32> -> vector<18x18xf32>
    "tpu.trace_stop"() : () -> ()
    %cst_50 = arith.constant dense<0xFF800000> : vector<18xf32>
    %139 = vector.multi_reduction <maximumf>, %138, %cst_50 [1] : vector<18x18xf32> to vector<18xf32>
    %140 = vector.shape_cast %139 : vector<18xf32> to vector<18x1xf32>
    %141 = vector.broadcast %140 : vector<18x1xf32> to vector<18x18xf32>
    %142 = arith.subf %138, %141 : vector<18x18xf32>
    %143 = math.exp %142 : vector<18x18xf32>
    %cst_51 = arith.constant dense<0.000000e+00> : vector<18xf32>
    %144 = vector.multi_reduction <add>, %143, %cst_51 [1] : vector<18x18xf32> to vector<18xf32>
    %145 = vector.shape_cast %144 : vector<18xf32> to vector<18x1xf32>
    %146 = tpu.reciprocal %145 {approx = true} : vector<18x1xf32> -> vector<18x1xf32>
    %147 = vector.broadcast %146 : vector<18x1xf32> to vector<18x18xf32>
    %148 = arith.mulf %143, %147 : vector<18x18xf32>
    %149 = vector.extract_strided_slice %31 {offsets = [0, 40], sizes = [18, 8], strides = [1, 1]} : vector<18x64xf32> to vector<18x8xf32>
    "tpu.trace_start"() <{level = 10 : i32, message = "qk,kd->qd"}> : () -> ()
    %cst_52 = arith.constant dense<0.000000e+00> : vector<18x8xf32>
    %150 = tpu.matmul %148, %149, %cst_52 {dimension_numbers = #tpu.dot_dimension_numbers<[1], [0], [0], [1], [0, 0, 1, 1], [], []>} : vector<18x18xf32>, vector<18x8xf32>, vector<18x8xf32> -> vector<18x8xf32>
    "tpu.trace_stop"() : () -> ()
    %151 = vector.extract_strided_slice %32 {offsets = [40, 0], sizes = [8, 64], strides = [1, 1]} : vector<64x64xf32> to vector<8x64xf32>
    %cst_53 = arith.constant dense<0.000000e+00> : vector<18x64xf32>
    %152 = tpu.matmul %150, %151, %cst_53 {dimension_numbers = #tpu.dot_dimension_numbers<[1], [0], [0], [1], [0, 0, 1, 1], [], []>} : vector<18x8xf32>, vector<8x64xf32>, vector<18x64xf32> -> vector<18x64xf32>
    %153 = arith.addf %133, %152 : vector<18x64xf32>
    %154 = vector.extract_strided_slice %29 {offsets = [0, 48], sizes = [18, 8], strides = [1, 1]} : vector<18x64xf32> to vector<18x8xf32>
    %cst_54 = arith.constant 0.353553385 : f32
    %155 = vector.broadcast %cst_54 : f32 to vector<18x8xf32>
    %156 = arith.mulf %154, %155 : vector<18x8xf32>
    %157 = vector.extract_strided_slice %30 {offsets = [0, 48], sizes = [18, 8], strides = [1, 1]} : vector<18x64xf32> to vector<18x8xf32>
    "tpu.trace_start"() <{level = 10 : i32, message = "qd,kd->qk"}> : () -> ()
    %cst_55 = arith.constant dense<0.000000e+00> : vector<18x18xf32>
    %158 = tpu.matmul %156, %157, %cst_55 {dimension_numbers = #tpu.dot_dimension_numbers<[1], [1], [0], [0], [0, 0, 1, 0], [], []>} : vector<18x8xf32>, vector<18x8xf32>, vector<18x18xf32> -> vector<18x18xf32>
    "tpu.trace_stop"() : () -> ()
    %cst_56 = arith.constant dense<0xFF800000> : vector<18xf32>
    %159 = vector.multi_reduction <maximumf>, %158, %cst_56 [1] : vector<18x18xf32> to vector<18xf32>
    %160 = vector.shape_cast %159 : vector<18xf32> to vector<18x1xf32>
    %161 = vector.broadcast %160 : vector<18x1xf32> to vector<18x18xf32>
    %162 = arith.subf %158, %161 : vector<18x18xf32>
    %163 = math.exp %162 : vector<18x18xf32>
    %cst_57 = arith.constant dense<0.000000e+00> : vector<18xf32>
    %164 = vector.multi_reduction <add>, %163, %cst_57 [1] : vector<18x18xf32> to vector<18xf32>
    %165 = vector.shape_cast %164 : vector<18xf32> to vector<18x1xf32>
    %166 = tpu.reciprocal %165 {approx = true} : vector<18x1xf32> -> vector<18x1xf32>
    %167 = vector.broadcast %166 : vector<18x1xf32> to vector<18x18xf32>
    %168 = arith.mulf %163, %167 : vector<18x18xf32>
    %169 = vector.extract_strided_slice %31 {offsets = [0, 48], sizes = [18, 8], strides = [1, 1]} : vector<18x64xf32> to vector<18x8xf32>
    "tpu.trace_start"() <{level = 10 : i32, message = "qk,kd->qd"}> : () -> ()
    %cst_58 = arith.constant dense<0.000000e+00> : vector<18x8xf32>
    %170 = tpu.matmul %168, %169, %cst_58 {dimension_numbers = #tpu.dot_dimension_numbers<[1], [0], [0], [1], [0, 0, 1, 1], [], []>} : vector<18x18xf32>, vector<18x8xf32>, vector<18x8xf32> -> vector<18x8xf32>
    "tpu.trace_stop"() : () -> ()
    %171 = vector.extract_strided_slice %32 {offsets = [48, 0], sizes = [8, 64], strides = [1, 1]} : vector<64x64xf32> to vector<8x64xf32>
    %cst_59 = arith.constant dense<0.000000e+00> : vector<18x64xf32>
    %172 = tpu.matmul %170, %171, %cst_59 {dimension_numbers = #tpu.dot_dimension_numbers<[1], [0], [0], [1], [0, 0, 1, 1], [], []>} : vector<18x8xf32>, vector<8x64xf32>, vector<18x64xf32> -> vector<18x64xf32>
    %173 = arith.addf %153, %172 : vector<18x64xf32>
    %174 = vector.extract_strided_slice %29 {offsets = [0, 56], sizes = [18, 8], strides = [1, 1]} : vector<18x64xf32> to vector<18x8xf32>
    %cst_60 = arith.constant 0.353553385 : f32
    %175 = vector.broadcast %cst_60 : f32 to vector<18x8xf32>
    %176 = arith.mulf %174, %175 : vector<18x8xf32>
    %177 = vector.extract_strided_slice %30 {offsets = [0, 56], sizes = [18, 8], strides = [1, 1]} : vector<18x64xf32> to vector<18x8xf32>
    "tpu.trace_start"() <{level = 10 : i32, message = "qd,kd->qk"}> : () -> ()
    %cst_61 = arith.constant dense<0.000000e+00> : vector<18x18xf32>
    %178 = tpu.matmul %176, %177, %cst_61 {dimension_numbers = #tpu.dot_dimension_numbers<[1], [1], [0], [0], [0, 0, 1, 0], [], []>} : vector<18x8xf32>, vector<18x8xf32>, vector<18x18xf32> -> vector<18x18xf32>
    "tpu.trace_stop"() : () -> ()
    %cst_62 = arith.constant dense<0xFF800000> : vector<18xf32>
    %179 = vector.multi_reduction <maximumf>, %178, %cst_62 [1] : vector<18x18xf32> to vector<18xf32>
    %180 = vector.shape_cast %179 : vector<18xf32> to vector<18x1xf32>
    %181 = vector.broadcast %180 : vector<18x1xf32> to vector<18x18xf32>
    %182 = arith.subf %178, %181 : vector<18x18xf32>
    %183 = math.exp %182 : vector<18x18xf32>
    %cst_63 = arith.constant dense<0.000000e+00> : vector<18xf32>
    %184 = vector.multi_reduction <add>, %183, %cst_63 [1] : vector<18x18xf32> to vector<18xf32>
    %185 = vector.shape_cast %184 : vector<18xf32> to vector<18x1xf32>
    %186 = tpu.reciprocal %185 {approx = true} : vector<18x1xf32> -> vector<18x1xf32>
    %187 = vector.broadcast %186 : vector<18x1xf32> to vector<18x18xf32>
    %188 = arith.mulf %183, %187 : vector<18x18xf32>
    %189 = vector.extract_strided_slice %31 {offsets = [0, 56], sizes = [18, 8], strides = [1, 1]} : vector<18x64xf32> to vector<18x8xf32>
    "tpu.trace_start"() <{level = 10 : i32, message = "qk,kd->qd"}> : () -> ()
    %cst_64 = arith.constant dense<0.000000e+00> : vector<18x8xf32>
    %190 = tpu.matmul %188, %189, %cst_64 {dimension_numbers = #tpu.dot_dimension_numbers<[1], [0], [0], [1], [0, 0, 1, 1], [], []>} : vector<18x18xf32>, vector<18x8xf32>, vector<18x8xf32> -> vector<18x8xf32>
    "tpu.trace_stop"() : () -> ()
    %191 = vector.extract_strided_slice %32 {offsets = [56, 0], sizes = [8, 64], strides = [1, 1]} : vector<64x64xf32> to vector<8x64xf32>
    %cst_65 = arith.constant dense<0.000000e+00> : vector<18x64xf32>
    %192 = tpu.matmul %190, %191, %cst_65 {dimension_numbers = #tpu.dot_dimension_numbers<[1], [0], [0], [1], [0, 0, 1, 1], [], []>} : vector<18x8xf32>, vector<8x64xf32>, vector<18x64xf32> -> vector<18x64xf32>
    %193 = arith.addf %173, %192 : vector<18x64xf32>
    %194 = arith.addf %1, %193 : vector<18x64xf32>
    %c0_66 = arith.constant 0 : index
    %c0_67 = arith.constant 0 : index
    %195 = vector.load %arg7[%c0_66, %c0_67] : memref<1x64xf32, #tpu.memory_space<vmem>>, vector<1x64xf32>
    %196 = vector.broadcast %195 : vector<1x64xf32> to vector<18x64xf32>
    %197 = arith.addf %194, %196 : vector<18x64xf32>
    %c0_68 = arith.constant 0 : index
    %c0_69 = arith.constant 0 : index
    %198 = vector.load %arg8[%c0_68, %c0_69] : memref<1x64xf32, #tpu.memory_space<vmem>>, vector<1x64xf32>
    %c0_70 = arith.constant 0 : index
    %c0_71 = arith.constant 0 : index
    %199 = vector.load %arg9[%c0_70, %c0_71] : memref<1x64xf32, #tpu.memory_space<vmem>>, vector<1x64xf32>
    %cst_72 = arith.constant dense<0.000000e+00> : vector<18xf32>
    %200 = vector.multi_reduction <add>, %197, %cst_72 [1] : vector<18x64xf32> to vector<18xf32>
    %201 = vector.shape_cast %200 : vector<18xf32> to vector<18x1xf32>
    %cst_73 = arith.constant 6.400000e+01 : f32
    %202 = vector.broadcast %cst_73 : f32 to vector<18x1xf32>
    %203 = arith.divf %201, %202 : vector<18x1xf32>
    %204 = vector.broadcast %203 : vector<18x1xf32> to vector<18x64xf32>
    %205 = arith.subf %197, %204 : vector<18x64xf32>
    %206 = arith.mulf %205, %205 : vector<18x64xf32>
    %cst_74 = arith.constant dense<0.000000e+00> : vector<18xf32>
    %207 = vector.multi_reduction <add>, %206, %cst_74 [1] : vector<18x64xf32> to vector<18xf32>
    %208 = vector.shape_cast %207 : vector<18xf32> to vector<18x1xf32>
    %cst_75 = arith.constant 6.400000e+01 : f32
    %209 = vector.broadcast %cst_75 : f32 to vector<18x1xf32>
    %210 = arith.divf %208, %209 : vector<18x1xf32>
    %cst_76 = arith.constant 9.99999974E-6 : f32
    %211 = vector.broadcast %cst_76 : f32 to vector<18x1xf32>
    %212 = arith.addf %210, %211 : vector<18x1xf32>
    %213 = math.rsqrt %212 : vector<18x1xf32>
    %214 = vector.broadcast %213 : vector<18x1xf32> to vector<18x64xf32>
    %215 = arith.mulf %205, %214 : vector<18x64xf32>
    %216 = vector.broadcast %198 : vector<1x64xf32> to vector<18x64xf32>
    %217 = arith.mulf %215, %216 : vector<18x64xf32>
    %218 = vector.broadcast %199 : vector<1x64xf32> to vector<18x64xf32>
    %219 = arith.addf %217, %218 : vector<18x64xf32>
    %c0_77 = arith.constant 0 : index
    %c0_78 = arith.constant 0 : index
    %220 = vector.load %arg10[%c0_77, %c0_78] : memref<64x256xf32, #tpu.memory_space<vmem>>, vector<64x256xf32>
    %cst_79 = arith.constant dense<0.000000e+00> : vector<18x256xf32>
    %221 = tpu.matmul %219, %220, %cst_79 {dimension_numbers = #tpu.dot_dimension_numbers<[1], [0], [0], [1], [0, 0, 1, 1], [], []>} : vector<18x64xf32>, vector<64x256xf32>, vector<18x256xf32> -> vector<18x256xf32>
    %c0_80 = arith.constant 0 : index
    %c0_81 = arith.constant 0 : index
    %222 = vector.load %arg11[%c0_80, %c0_81] : memref<1x256xf32, #tpu.memory_space<vmem>>, vector<1x256xf32>
    %223 = vector.broadcast %222 : vector<1x256xf32> to vector<18x256xf32>
    %224 = arith.addf %221, %223 : vector<18x256xf32>
    %225 = vector.extract_strided_slice %224 {offsets = [0, 0], sizes = [18, 128], strides = [1, 1]} : vector<18x256xf32> to vector<18x128xf32>
    %226 = vector.extract_strided_slice %224 {offsets = [0, 128], sizes = [18, 128], strides = [1, 1]} : vector<18x256xf32> to vector<18x128xf32>
    %227 = arith.negf %225 : vector<18x128xf32>
    %228 = math.exp %227 : vector<18x128xf32>
    %cst_82 = arith.constant 1.000000e+00 : f32
    %229 = vector.broadcast %cst_82 : f32 to vector<18x128xf32>
    %230 = arith.addf %229, %228 : vector<18x128xf32>
    %231 = arith.divf %229, %230 : vector<18x128xf32>
    %232 = arith.mulf %225, %231 : vector<18x128xf32>
    %233 = arith.mulf %232, %226 : vector<18x128xf32>
    %c0_83 = arith.constant 0 : index
    %c0_84 = arith.constant 0 : index
    %234 = vector.load %arg12[%c0_83, %c0_84] : memref<128x64xf32, #tpu.memory_space<vmem>>, vector<128x64xf32>
    %cst_85 = arith.constant dense<0.000000e+00> : vector<18x64xf32>
    %235 = tpu.matmul %233, %234, %cst_85 {dimension_numbers = #tpu.dot_dimension_numbers<[1], [0], [0], [1], [0, 0, 1, 1], [], []>} : vector<18x128xf32>, vector<128x64xf32>, vector<18x64xf32> -> vector<18x64xf32>
    %c0_86 = arith.constant 0 : index
    %c0_87 = arith.constant 0 : index
    %236 = vector.load %arg13[%c0_86, %c0_87] : memref<1x64xf32, #tpu.memory_space<vmem>>, vector<1x64xf32>
    %237 = vector.broadcast %236 : vector<1x64xf32> to vector<18x64xf32>
    %238 = arith.addf %235, %237 : vector<18x64xf32>
    %239 = arith.addf %197, %238 : vector<18x64xf32>
    %c0_88 = arith.constant 0 : index
    %c0_89 = arith.constant 0 : index
    %c0_90 = arith.constant 0 : index
    %240 = vector.load %arg14[%c0_88, %c0_89, %c0_90] : memref<1x18x64xf32, #tpu.memory_space<vmem>>, vector<1x18x64xf32>
    %241 = vector.shape_cast %240 : vector<1x18x64xf32> to vector<18x64xf32>
    %242 = vector.shape_cast %239 : vector<18x64xf32> to vector<1x18x64xf32>
    tpu.vector_store %arg14[%c0_88, %c0_89, %c0_90], %242 {strides = array<i32>} : memref<1x18x64xf32, #tpu.memory_space<vmem>>, vector<1x18x64xf32>,
    return
  }
  func.func @transform_0(%arg0: i32) -> (i32, i32, i32) {
    %c0_i32 = arith.constant 0 : i32
    %c0_i32_0 = arith.constant 0 : i32
    %c0_i32_1 = arith.constant 0 : i32
    return %arg0, %c0_i32, %c0_i32_0 : i32, i32, i32
  }
  func.func @transform_1(%arg0: i32) -> (i32, i32) {
    %c0_i32 = arith.constant 0 : i32
    %c0_i32_0 = arith.constant 0 : i32
    %c0_i32_1 = arith.constant 0 : i32
    return %c0_i32, %c0_i32_0 : i32, i32
  }
  func.func @transform_2(%arg0: i32) -> (i32, i32) {
    %c0_i32 = arith.constant 0 : i32
    %c0_i32_0 = arith.constant 0 : i32
    %c0_i32_1 = arith.constant 0 : i32
    return %c0_i32, %c0_i32_0 : i32, i32
  }
  func.func @transform_3(%arg0: i32) -> (i32, i32) {
    %c0_i32 = arith.constant 0 : i32
    %c0_i32_0 = arith.constant 0 : i32
    %c0_i32_1 = arith.constant 0 : i32
    return %c0_i32, %c0_i32_0 : i32, i32
  }
  func.func @transform_4(%arg0: i32) -> (i32, i32) {
    %c0_i32 = arith.constant 0 : i32
    %c0_i32_0 = arith.constant 0 : i32
    %c0_i32_1 = arith.constant 0 : i32
    return %c0_i32, %c0_i32_0 : i32, i32
  }
  func.func @transform_5(%arg0: i32) -> (i32, i32) {
    %c0_i32 = arith.constant 0 : i32
    %c0_i32_0 = arith.constant 0 : i32
    %c0_i32_1 = arith.constant 0 : i32
    return %c0_i32, %c0_i32_0 : i32, i32
  }
  func.func @transform_6(%arg0: i32) -> (i32, i32) {
    %c0_i32 = arith.constant 0 : i32
    %c0_i32_0 = arith.constant 0 : i32
    %c0_i32_1 = arith.constant 0 : i32
    return %c0_i32, %c0_i32_0 : i32, i32
  }
  func.func @transform_7(%arg0: i32) -> (i32, i32) {
    %c0_i32 = arith.constant 0 : i32
    %c0_i32_0 = arith.constant 0 : i32
    %c0_i32_1 = arith.constant 0 : i32
    return %c0_i32, %c0_i32_0 : i32, i32
  }
  func.func @transform_8(%arg0: i32) -> (i32, i32) {
    %c0_i32 = arith.constant 0 : i32
    %c0_i32_0 = arith.constant 0 : i32
    %c0_i32_1 = arith.constant 0 : i32
    return %c0_i32, %c0_i32_0 : i32, i32
  }
  func.func @transform_9(%arg0: i32) -> (i32, i32) {
    %c0_i32 = arith.constant 0 : i32
    %c0_i32_0 = arith.constant 0 : i32
    %c0_i32_1 = arith.constant 0 : i32
    return %c0_i32, %c0_i32_0 : i32, i32
  }
  func.func @transform_10(%arg0: i32) -> (i32, i32) {
    %c0_i32 = arith.constant 0 : i32
    %c0_i32_0 = arith.constant 0 : i32
    %c0_i32_1 = arith.constant 0 : i32
    return %c0_i32, %c0_i32_0 : i32, i32
  }
  func.func @transform_11(%arg0: i32) -> (i32, i32) {
    %c0_i32 = arith.constant 0 : i32
    %c0_i32_0 = arith.constant 0 : i32
    %c0_i32_1 = arith.constant 0 : i32
    return %c0_i32, %c0_i32_0 : i32, i32
  }
  func.func @transform_12(%arg0: i32) -> (i32, i32) {
    %c0_i32 = arith.constant 0 : i32
    %c0_i32_0 = arith.constant 0 : i32
    %c0_i32_1 = arith.constant 0 : i32
    return %c0_i32, %c0_i32_0 : i32, i32
  }
  func.func @transform_13(%arg0: i32) -> (i32, i32, i32) {
    %c0_i32 = arith.constant 0 : i32
    %c0_i32_0 = arith.constant 0 : i32
    %c0_i32_1 = arith.constant 0 : i32
    return %arg0, %c0_i32, %c0_i32_0 : i32, i32, i32
  }
}

module attributes {stable_mosaic.version = 11 : i64} {
  func.func @_head_kernel(%arg0: memref<2x64xf32, #tpu.memory_space<vmem>>, %arg1: memref<64x128xf32, #tpu.memory_space<vmem>>, %arg2: memref<1x128xf32, #tpu.memory_space<vmem>>, %arg3: memref<128x128xf32, #tpu.memory_space<vmem>>, %arg4: memref<1x128xf32, #tpu.memory_space<vmem>>, %arg5: memref<64x128xf32, #tpu.memory_space<vmem>>, %arg6: memref<1x128xf32, #tpu.memory_space<vmem>>, %arg7: memref<128x128xf32, #tpu.memory_space<vmem>>, %arg8: memref<1x128xf32, #tpu.memory_space<vmem>>, %arg9: memref<128x128xf32, #tpu.memory_space<vmem>>, %arg10: memref<1x128xf32, #tpu.memory_space<vmem>>, %arg11: memref<128x3xf32, #tpu.memory_space<vmem>>, %arg12: memref<1x3xf32, #tpu.memory_space<vmem>>, %arg13: memref<2x3xf32, #tpu.memory_space<vmem>>) attributes {dimension_semantics = [], scalar_prefetch = 0 : i64, scratch_operands = 0 : i64, tpu.core_type = #tpu.core_type<tc>} {
    %c0 = arith.constant 0 : index
    %c0_0 = arith.constant 0 : index
    %0 = vector.load %arg0[%c0, %c0_0] : memref<2x64xf32, #tpu.memory_space<vmem>>, vector<2x64xf32>
    %cst = arith.constant 0.000000e+00 : f32
    %1 = vector.broadcast %cst : f32 to vector<2x64xf32>
    %2 = arith.cmpf oge, %0, %1 : vector<2x64xf32>
    %cst_1 = arith.constant 1.000000e-01 : f32
    %3 = vector.broadcast %cst_1 : f32 to vector<2x64xf32>
    %4 = arith.mulf %3, %0 : vector<2x64xf32>
    %5 = arith.select %2, %0, %4 : vector<2x64xi1>, vector<2x64xf32>
    %c0_2 = arith.constant 0 : index
    %c0_3 = arith.constant 0 : index
    %6 = vector.load %arg1[%c0_2, %c0_3] : memref<64x128xf32, #tpu.memory_space<vmem>>, vector<64x128xf32>
    %cst_4 = arith.constant dense<0.000000e+00> : vector<2x128xf32>
    %7 = tpu.matmul %5, %6, %cst_4 {dimension_numbers = #tpu.dot_dimension_numbers<[1], [0], [0], [1], [0, 0, 1, 1], [], []>} : vector<2x64xf32>, vector<64x128xf32>, vector<2x128xf32> -> vector<2x128xf32>
    %c0_5 = arith.constant 0 : index
    %c0_6 = arith.constant 0 : index
    %8 = vector.load %arg2[%c0_5, %c0_6] : memref<1x128xf32, #tpu.memory_space<vmem>>, vector<1x128xf32>
    %9 = vector.broadcast %8 : vector<1x128xf32> to vector<2x128xf32>
    %10 = arith.addf %7, %9 : vector<2x128xf32>
    %cst_7 = arith.constant 0.000000e+00 : f32
    %11 = vector.broadcast %cst_7 : f32 to vector<2x128xf32>
    %12 = arith.cmpf oge, %10, %11 : vector<2x128xf32>
    %cst_8 = arith.constant 1.000000e-01 : f32
    %13 = vector.broadcast %cst_8 : f32 to vector<2x128xf32>
    %14 = arith.mulf %13, %10 : vector<2x128xf32>
    %15 = arith.select %12, %10, %14 : vector<2x128xi1>, vector<2x128xf32>
    %c0_9 = arith.constant 0 : index
    %c0_10 = arith.constant 0 : index
    %16 = vector.load %arg3[%c0_9, %c0_10] : memref<128x128xf32, #tpu.memory_space<vmem>>, vector<128x128xf32>
    %cst_11 = arith.constant dense<0.000000e+00> : vector<2x128xf32>
    %17 = tpu.matmul %15, %16, %cst_11 {dimension_numbers = #tpu.dot_dimension_numbers<[1], [0], [0], [1], [0, 0, 1, 1], [], []>} : vector<2x128xf32>, vector<128x128xf32>, vector<2x128xf32> -> vector<2x128xf32>
    %c0_12 = arith.constant 0 : index
    %c0_13 = arith.constant 0 : index
    %18 = vector.load %arg4[%c0_12, %c0_13] : memref<1x128xf32, #tpu.memory_space<vmem>>, vector<1x128xf32>
    %19 = vector.broadcast %18 : vector<1x128xf32> to vector<2x128xf32>
    %20 = arith.addf %17, %19 : vector<2x128xf32>
    %c0_14 = arith.constant 0 : index
    %c0_15 = arith.constant 0 : index
    %21 = vector.load %arg5[%c0_14, %c0_15] : memref<64x128xf32, #tpu.memory_space<vmem>>, vector<64x128xf32>
    %cst_16 = arith.constant dense<0.000000e+00> : vector<2x128xf32>
    %22 = tpu.matmul %0, %21, %cst_16 {dimension_numbers = #tpu.dot_dimension_numbers<[1], [0], [0], [1], [0, 0, 1, 1], [], []>} : vector<2x64xf32>, vector<64x128xf32>, vector<2x128xf32> -> vector<2x128xf32>
    %23 = arith.addf %20, %22 : vector<2x128xf32>
    %c0_17 = arith.constant 0 : index
    %c0_18 = arith.constant 0 : index
    %24 = vector.load %arg6[%c0_17, %c0_18] : memref<1x128xf32, #tpu.memory_space<vmem>>, vector<1x128xf32>
    %25 = vector.broadcast %24 : vector<1x128xf32> to vector<2x128xf32>
    %26 = arith.addf %23, %25 : vector<2x128xf32>
    %cst_19 = arith.constant 0.000000e+00 : f32
    %27 = vector.broadcast %cst_19 : f32 to vector<2x128xf32>
    %28 = arith.cmpf oge, %26, %27 : vector<2x128xf32>
    %cst_20 = arith.constant 1.000000e-01 : f32
    %29 = vector.broadcast %cst_20 : f32 to vector<2x128xf32>
    %30 = arith.mulf %29, %26 : vector<2x128xf32>
    %31 = arith.select %28, %26, %30 : vector<2x128xi1>, vector<2x128xf32>
    %c0_21 = arith.constant 0 : index
    %c0_22 = arith.constant 0 : index
    %32 = vector.load %arg7[%c0_21, %c0_22] : memref<128x128xf32, #tpu.memory_space<vmem>>, vector<128x128xf32>
    %cst_23 = arith.constant dense<0.000000e+00> : vector<2x128xf32>
    %33 = tpu.matmul %31, %32, %cst_23 {dimension_numbers = #tpu.dot_dimension_numbers<[1], [0], [0], [1], [0, 0, 1, 1], [], []>} : vector<2x128xf32>, vector<128x128xf32>, vector<2x128xf32> -> vector<2x128xf32>
    %c0_24 = arith.constant 0 : index
    %c0_25 = arith.constant 0 : index
    %34 = vector.load %arg8[%c0_24, %c0_25] : memref<1x128xf32, #tpu.memory_space<vmem>>, vector<1x128xf32>
    %35 = vector.broadcast %34 : vector<1x128xf32> to vector<2x128xf32>
    %36 = arith.addf %33, %35 : vector<2x128xf32>
    %cst_26 = arith.constant 0.000000e+00 : f32
    %37 = vector.broadcast %cst_26 : f32 to vector<2x128xf32>
    %38 = arith.cmpf oge, %36, %37 : vector<2x128xf32>
    %cst_27 = arith.constant 1.000000e-01 : f32
    %39 = vector.broadcast %cst_27 : f32 to vector<2x128xf32>
    %40 = arith.mulf %39, %36 : vector<2x128xf32>
    %41 = arith.select %38, %36, %40 : vector<2x128xi1>, vector<2x128xf32>
    %c0_28 = arith.constant 0 : index
    %c0_29 = arith.constant 0 : index
    %42 = vector.load %arg9[%c0_28, %c0_29] : memref<128x128xf32, #tpu.memory_space<vmem>>, vector<128x128xf32>
    %cst_30 = arith.constant dense<0.000000e+00> : vector<2x128xf32>
    %43 = tpu.matmul %41, %42, %cst_30 {dimension_numbers = #tpu.dot_dimension_numbers<[1], [0], [0], [1], [0, 0, 1, 1], [], []>} : vector<2x128xf32>, vector<128x128xf32>, vector<2x128xf32> -> vector<2x128xf32>
    %c0_31 = arith.constant 0 : index
    %c0_32 = arith.constant 0 : index
    %44 = vector.load %arg10[%c0_31, %c0_32] : memref<1x128xf32, #tpu.memory_space<vmem>>, vector<1x128xf32>
    %45 = vector.broadcast %44 : vector<1x128xf32> to vector<2x128xf32>
    %46 = arith.addf %43, %45 : vector<2x128xf32>
    %47 = arith.addf %26, %46 : vector<2x128xf32>
    %c0_33 = arith.constant 0 : index
    %c0_34 = arith.constant 0 : index
    %48 = vector.load %arg11[%c0_33, %c0_34] : memref<128x3xf32, #tpu.memory_space<vmem>>, vector<128x3xf32>
    %cst_35 = arith.constant dense<0.000000e+00> : vector<2x3xf32>
    %49 = tpu.matmul %47, %48, %cst_35 {dimension_numbers = #tpu.dot_dimension_numbers<[1], [0], [0], [1], [0, 0, 1, 1], [], []>} : vector<2x128xf32>, vector<128x3xf32>, vector<2x3xf32> -> vector<2x3xf32>
    %c0_36 = arith.constant 0 : index
    %c0_37 = arith.constant 0 : index
    %50 = vector.load %arg12[%c0_36, %c0_37] : memref<1x3xf32, #tpu.memory_space<vmem>>, vector<1x3xf32>
    %51 = vector.broadcast %50 : vector<1x3xf32> to vector<2x3xf32>
    %52 = arith.addf %49, %51 : vector<2x3xf32>
    %c0_38 = arith.constant 0 : index
    %c0_39 = arith.constant 0 : index
    %53 = vector.load %arg13[%c0_38, %c0_39] : memref<2x3xf32, #tpu.memory_space<vmem>>, vector<2x3xf32>
    tpu.vector_store %arg13[%c0_38, %c0_39], %52 {strides = array<i32>} : memref<2x3xf32, #tpu.memory_space<vmem>>, vector<2x3xf32>,
    return
  }
}

</mosaic_0001>

<llo_original>
// kernel: deep_msn_forward.11
$region0: #{deep_msn_forward.11}
  #allocation0 [shape = 'u32[]', space=smem, size = 0x4, offset = 0x4, fixed_abs, tag = 'smem constant byte address 0x4 - core index']
  #allocation1 [shape = 'u32[144,128]{1,0:T(1,128)}', space=vmem, size = 0x12000, scoped, tag = 'internal scratch']
  %s0 = inlined_call_operand.vmem [shape: f32[2,64], index: 0, kind: input, shape index: {}]
  %s1 = inlined_call_operand.vmem [shape: f32[64,128], index: 1, kind: input, shape index: {}]
  %s2 = inlined_call_operand.vmem [shape: f32[1,128], index: 2, kind: input, shape index: {}]
  %s3 = inlined_call_operand.vmem [shape: f32[128,128], index: 3, kind: input, shape index: {}]
  %s4 = inlined_call_operand.vmem [shape: f32[1,128], index: 4, kind: input, shape index: {}]
  %s5 = inlined_call_operand.vmem [shape: f32[64,128], index: 5, kind: input, shape index: {}]
  %s6 = inlined_call_operand.vmem [shape: f32[1,128], index: 6, kind: input, shape index: {}]
  %s7 = inlined_call_operand.vmem [shape: f32[128,128], index: 7, kind: input, shape index: {}]
  %s8 = inlined_call_operand.vmem [shape: f32[1,128], index: 8, kind: input, shape index: {}]
  %s9 = inlined_call_operand.vmem [shape: f32[128,128], index: 9, kind: input, shape index: {}]
  %s10 = inlined_call_operand.vmem [shape: f32[1,128], index: 10, kind: input, shape index: {}]
  %s11 = inlined_call_operand.vmem [shape: f32[128,3], index: 11, kind: input, shape index: {}]
  %s12 = inlined_call_operand.vmem [shape: f32[1,3], index: 12, kind: input, shape index: {}]
  %s13 = inlined_call_operand.hbm [shape: f32[2,3], index: 13, kind: output, shape index: {}]
  %s14 = sld [smem:[#allocation0]]
  $region62: #{deep_msn_forward.11} parent=0
    _
  %s16 = ssub.s32 1, %s14
  %s17 = scalar_select 0, %s16, %s14
  $region1: #{deep_msn_forward.11} parent=0
    #allocation2 [shape = 'u8[1024]{0}', space=vmem, size = 0x400, scoped, tag = 'output window, operand 0, single buffered']
    #allocation3 [shape = 's32[1]{0}', space=sflag, size = 0x4, scoped, tag = 'scoped memory for deep_msn_forward.11']
    %18 = vsyncpa [#allocation3], 0
    // Predicated region
    $region2: #{deep_msn_forward.11} parent=1 // pred_check
      _
    $region3: #{deep_msn_forward.11} parent=1 // pred_check_branch
      %20 = sbr.rel (0) target = $region5
    $region4: #{deep_msn_forward.11} parent=1 // pred_region
      _
    $region5: #{deep_msn_forward.11} parent=1 // pred_fallthru
      _
    // Predicated region
    $region6: #{deep_msn_forward.11} parent=1 // pred_check
      _
    $region7: #{deep_msn_forward.11} parent=1 // pred_check_branch
      %22 = sbr.rel (0) target = $region9
    $region8: #{deep_msn_forward.11} parent=1 // pred_region
      _
    $region9: #{deep_msn_forward.11} parent=1 // pred_fallthru
      _
    // Predicated region
    $region10: #{deep_msn_forward.11} parent=1 // pred_check
      _
    $region11: #{deep_msn_forward.11} parent=1 // pred_check_branch
      %24 = sbr.rel (0) target = $region13
    $region12: #{deep_msn_forward.11} parent=1 // pred_region
      _
    $region13: #{deep_msn_forward.11} parent=1 // pred_fallthru
      _
    // Predicated region
    $region14: #{deep_msn_forward.11} parent=1 // pred_check
      _
    $region15: #{deep_msn_forward.11} parent=1 // pred_check_branch
      %26 = sbr.rel (0) target = $region17
    $region16: #{deep_msn_forward.11} parent=1 // pred_region
      _
    $region17: #{deep_msn_forward.11} parent=1 // pred_fallthru
      _
    // Predicated region
    $region18: #{deep_msn_forward.11} parent=1 // pred_check
      _
    $region19: #{deep_msn_forward.11} parent=1 // pred_check_branch
      %28 = sbr.rel (0) target = $region21
    $region20: #{deep_msn_forward.11} parent=1 // pred_region
      _
    $region21: #{deep_msn_forward.11} parent=1 // pred_fallthru
      _
    // Predicated region
    $region22: #{deep_msn_forward.11} parent=1 // pred_check
      _
    $region23: #{deep_msn_forward.11} parent=1 // pred_check_branch
      %30 = sbr.rel (0) target = $region25
    $region24: #{deep_msn_forward.11} parent=1 // pred_region
      _
    $region25: #{deep_msn_forward.11} parent=1 // pred_fallthru
      _
    // Predicated region
    $region26: #{deep_msn_forward.11} parent=1 // pred_check
      _
    $region27: #{deep_msn_forward.11} parent=1 // pred_check_branch
      %32 = sbr.rel (0) target = $region29
    $region28: #{deep_msn_forward.11} parent=1 // pred_region
      _
    $region29: #{deep_msn_forward.11} parent=1 // pred_fallthru
      _
    // Predicated region
    $region30: #{deep_msn_forward.11} parent=1 // pred_check
      _
    $region31: #{deep_msn_forward.11} parent=1 // pred_check_branch
      %34 = sbr.rel (0) target = $region33
    $region32: #{deep_msn_forward.11} parent=1 // pred_region
      _
    $region33: #{deep_msn_forward.11} parent=1 // pred_fallthru
      _
    // Predicated region
    $region34: #{deep_msn_forward.11} parent=1 // pred_check
      _
    $region35: #{deep_msn_forward.11} parent=1 // pred_check_branch
      %36 = sbr.rel (0) target = $region37
    $region36: #{deep_msn_forward.11} parent=1 // pred_region
      _
    $region37: #{deep_msn_forward.11} parent=1 // pred_fallthru
      _
    // Predicated region
    $region38: #{deep_msn_forward.11} parent=1 // pred_check
      _
    $region39: #{deep_msn_forward.11} parent=1 // pred_check_branch
      %38 = sbr.rel (0) target = $region41
    $region40: #{deep_msn_forward.11} parent=1 // pred_region
      _
    $region41: #{deep_msn_forward.11} parent=1 // pred_fallthru
      _
    // Predicated region
    $region42: #{deep_msn_forward.11} parent=1 // pred_check
      _
    $region43: #{deep_msn_forward.11} parent=1 // pred_check_branch
      %40 = sbr.rel (0) target = $region45
    $region44: #{deep_msn_forward.11} parent=1 // pred_region
      _
    $region45: #{deep_msn_forward.11} parent=1 // pred_fallthru
      _
    // Predicated region
    $region46: #{deep_msn_forward.11} parent=1 // pred_check
      _
    $region47: #{deep_msn_forward.11} parent=1 // pred_check_branch
      %42 = sbr.rel (0) target = $region49
    $region48: #{deep_msn_forward.11} parent=1 // pred_region
      _
    $region49: #{deep_msn_forward.11} parent=1 // pred_fallthru
      _
    // Predicated region
    $region50: #{deep_msn_forward.11} parent=1 // pred_check
      _
    $region51: #{deep_msn_forward.11} parent=1 // pred_check_branch
      %44 = sbr.rel (0) target = $region53
    $region52: #{deep_msn_forward.11} parent=1 // pred_region
      _
    $region53: #{deep_msn_forward.11} parent=1 // pred_fallthru
      _
    %v45 = vld [vmem:[%s0] sm:$0x3]
    %vm46 = vcmp.ge.f32.partialorder %v45, 0.0
    %v47 = vmul.f32 %v45, 0.1
    %v48 = vsel %vm46, %v45, %v47
    %v49 = vld [vmem:[%s1] sm:$0xff]
    %v50 = vld [vmem:[%s1 + $0x8] sm:$0xff]
    %v51 = vld [vmem:[%s1 + $0x10] sm:$0xff]
    %v52 = vld [vmem:[%s1 + $0x18] sm:$0xff]
    %v53 = vld [vmem:[%s1 + $0x20] sm:$0xff]
    %v54 = vld [vmem:[%s1 + $0x28] sm:$0xff]
    %v55 = vld [vmem:[%s1 + $0x30] sm:$0xff]
    %v56 = vld [vmem:[%s1 + $0x38] sm:$0xff]
    %v57 = vld [vmem:[%s2] sm:$0x1]
    %v59 = vlaneseq
    %v60 = vshrl.u32 %v59, 7
    %v61 = vsub.s32 0, %v60
    %v62 = vrot.slane %v57, %v61
    %vm64 = vcmask 523264
    %v66 = vsel %vm64, %v48, 0
    %68 = vmatprep.subr.mxu0 0.0
    %69 = vmatpush1.msra.mxu0 %v49
    %70 = vmatprep.subr.mxu0 0.0
    %71 = vmatpush1.msra.mxu0 %v50
    %72 = vmatprep.subr.mxu0 0.0
    %73 = vmatpush1.msra.mxu0 %v51
    %74 = vmatprep.subr.mxu0 0.0
    %75 = vmatpush1.msra.mxu0 %v52
    %76 = vmatprep.subr.mxu0 0.0
    %77 = vmatpush1.msra.mxu0 %v53
    %78 = vmatprep.subr.mxu0 0.0
    %79 = vmatpush1.msra.mxu0 %v54
    %80 = vmatprep.subr.mxu0 0.0
    %81 = vmatpush1.msra.mxu0 %v55
    %82 = vmatprep.subr.mxu0 0.0
    %83 = vmatpush1.msra.mxu0 %v56
    %84 = vmatprep.subr.mxu0 0.0
    %85 = vmatpush1.msra.mxu0 0.0
    %86 = vmatprep.subr.mxu0 0.0
    %87 = vmatpush1.msra.mxu0 0.0
    %88 = vmatprep.subr.mxu0 0.0
    %89 = vmatpush1.msra.mxu0 0.0
    %90 = vmatprep.subr.mxu0 0.0
    %91 = vmatpush1.msra.mxu0 0.0
    %92 = vmatprep.subr.mxu0 0.0
    %93 = vmatpush1.msra.mxu0 0.0
    %94 = vmatprep.subr.mxu0 0.0
    %95 = vmatpush1.msra.mxu0 0.0
    %96 = vmatprep.subr.mxu0 0.0
    %97 = vmatpush1.msra.mxu0 0.0
    %98 = vmatprep.subr.mxu0 0.0
    %99 = vmatpush1.msra.mxu0 0.0
    %100 = vmatprep.subr.mxu0 0.0
    %101 = vmatpush1.msra.mxu0 0.0
    %102 = vmatprep.subr.mxu0 0.0
    %103 = vmatpush1.msra.mxu0 0.0
    %104 = vmatprep.subr.mxu0 0.0
    %105 = vmatpush1.msra.mxu0 0.0
    %106 = vmatprep.subr.mxu0 0.0
    %107 = vmatpush1.msra.mxu0 0.0
    %108 = vmatprep.subr.mxu0 0.0
    %109 = vmatpush1.msra.mxu0 0.0
    %110 = vmatprep.subr.mxu0 0.0
    %111 = vmatpush1.msra.mxu0 0.0
    %112 = vmatprep.subr.mxu0 0.0
    %113 = vmatpush1.msra.mxu0 0.0
    %114 = vmatprep.subr.mxu0 0.0
    %115 = vmatpush1.msra.mxu0 0.0
    %116 = vmatprep.subr.mxu0 0.0
    %117 = vmatpush1.msra.mxu0 0.0
    %118 = vmatprep.subr.mxu0 0.0
    %119 = vmatpush1.msra.mxu0 0.0
    %120 = vmatprep.subr.mxu0 0.0
    %121 = vmatpush1.msra.mxu0 0.0
    %122 = vmatprep.subr.mxu0 0.0
    %123 = vmatpush1.msra.mxu0 0.0
    %124 = vmatprep.subr.mxu0 0.0
    %125 = vmatpush1.msra.mxu0 0.0
    %126 = vmatprep.subr.mxu0 0.0
    %127 = vmatpush1.msra.mxu0 0.0
    %128 = vmatprep.subr.mxu0 0.0
    %129 = vmatpush1.msra.mxu0 0.0
    %130 = vmatprep.subr.mxu0 0.0
    %131 = vmatpush1.msra.mxu0 0.0
    %132 = vmatprep.mubr.f32.mxu0 0.0
    %133 = vmatmul.mubr.f32.gmra.mrb[0].mxu0 %v66
    %v134 = vpop.f32.mrb[0].mxu0
    %v135 = vadd.f32 %v62, %v134
    %v136 = vpop.f32.mrb[0].mxu0
    %137 = vdwg.mxu0
    %vm138 = vcmp.ge.f32.partialorder %v135, 0.0
    %v139 = vmul.f32 %v135, 0.1
    %v140 = vsel %vm138, %v135, %v139
    %v141 = vld [vmem:[%s3] sm:$0xff]
    %v142 = vld [vmem:[%s3 + $0x8] sm:$0xff]
    %v143 = vld [vmem:[%s3 + $0x10] sm:$0xff]
    %v144 = vld [vmem:[%s3 + $0x18] sm:$0xff]
    %v145 = vld [vmem:[%s3 + $0x20] sm:$0xff]
    %v146 = vld [vmem:[%s3 + $0x28] sm:$0xff]
    %v147 = vld [vmem:[%s3 + $0x30] sm:$0xff]
    %v148 = vld [vmem:[%s3 + $0x38] sm:$0xff]
    %v149 = vld [vmem:[%s3 + $0x40] sm:$0xff]
    %v150 = vld [vmem:[%s3 + $0x48] sm:$0xff]
    %v151 = vld [vmem:[%s3 + $0x50] sm:$0xff]
    %v152 = vld [vmem:[%s3 + $0x58] sm:$0xff]
    %v153 = vld [vmem:[%s3 + $0x60] sm:$0xff]
    %v154 = vld [vmem:[%s3 + $0x68] sm:$0xff]
    %v155 = vld [vmem:[%s3 + $0x70] sm:$0xff]
    %v156 = vld [vmem:[%s3 + $0x78] sm:$0xff]
    %v157 = vld [vmem:[%s4] sm:$0x1]
    %v159 = vlaneseq
    %v160 = vshrl.u32 %v159, 7
    %v161 = vsub.s32 0, %v160
    %v162 = vrot.slane %v157, %v161
    %164 = vmatprep.subr.mxu0 0.0
    %165 = vmatpush1.msra.mxu0 %v141
    %166 = vmatprep.subr.mxu0 0.0
    %167 = vmatpush1.msra.mxu0 %v142
    %168 = vmatprep.subr.mxu0 0.0
    %169 = vmatpush1.msra.mxu0 %v143
    %170 = vmatprep.subr.mxu0 0.0
    %171 = vmatpush1.msra.mxu0 %v144
    %172 = vmatprep.subr.mxu0 0.0
    %173 = vmatpush1.msra.mxu0 %v145
    %174 = vmatprep.subr.mxu0 0.0
    %175 = vmatpush1.msra.mxu0 %v146
    %176 = vmatprep.subr.mxu0 0.0
    %177 = vmatpush1.msra.mxu0 %v147
    %178 = vmatprep.subr.mxu0 0.0
    %179 = vmatpush1.msra.mxu0 %v148
    %180 = vmatprep.subr.mxu0 0.0
    %181 = vmatpush1.msra.mxu0 %v149
    %182 = vmatprep.subr.mxu0 0.0
    %183 = vmatpush1.msra.mxu0 %v150
    %184 = vmatprep.subr.mxu0 0.0
    %185 = vmatpush1.msra.mxu0 %v151
    %186 = vmatprep.subr.mxu0 0.0
    %187 = vmatpush1.msra.mxu0 %v152
    %188 = vmatprep.subr.mxu0 0.0
    %189 = vmatpush1.msra.mxu0 %v153
    %190 = vmatprep.subr.mxu0 0.0
    %191 = vmatpush1.msra.mxu0 %v154
    %192 = vmatprep.subr.mxu0 0.0
    %193 = vmatpush1.msra.mxu0 %v155
    %194 = vmatprep.subr.mxu0 0.0
    %195 = vmatpush1.msra.mxu0 %v156
    %196 = vmatprep.subr.mxu0 0.0
    %197 = vmatpush1.msra.mxu0 0.0
    %198 = vmatprep.subr.mxu0 0.0
    %199 = vmatpush1.msra.mxu0 0.0
    %200 = vmatprep.subr.mxu0 0.0
    %201 = vmatpush1.msra.mxu0 0.0
    %202 = vmatprep.subr.mxu0 0.0
    %203 = vmatpush1.msra.mxu0 0.0
    %204 = vmatprep.subr.mxu0 0.0
    %205 = vmatpush1.msra.mxu0 0.0
    %206 = vmatprep.subr.mxu0 0.0
    %207 = vmatpush1.msra.mxu0 0.0
    %208 = vmatprep.subr.mxu0 0.0
    %209 = vmatpush1.msra.mxu0 0.0
    %210 = vmatprep.subr.mxu0 0.0
    %211 = vmatpush1.msra.mxu0 0.0
    %212 = vmatprep.subr.mxu0 0.0
    %213 = vmatpush1.msra.mxu0 0.0
    %214 = vmatprep.subr.mxu0 0.0
    %215 = vmatpush1.msra.mxu0 0.0
    %216 = vmatprep.subr.mxu0 0.0
    %217 = vmatpush1.msra.mxu0 0.0
    %218 = vmatprep.subr.mxu0 0.0
    %219 = vmatpush1.msra.mxu0 0.0
    %220 = vmatprep.subr.mxu0 0.0
    %221 = vmatpush1.msra.mxu0 0.0
    %222 = vmatprep.subr.mxu0 0.0
    %223 = vmatpush1.msra.mxu0 0.0
    %224 = vmatprep.subr.mxu0 0.0
    %225 = vmatpush1.msra.mxu0 0.0
    %226 = vmatprep.subr.mxu0 0.0
    %227 = vmatpush1.msra.mxu0 0.0
    %228 = vmatprep.mubr.f32.mxu0 0.0
    %229 = vmatmul.mubr.f32.gmra.mrb[0].mxu0 %v140
    %v230 = vpop.f32.mrb[0].mxu0
    %v231 = vadd.f32 %v162, %v230
    %v232 = vpop.f32.mrb[0].mxu0
    %233 = vdwg.mxu0
    %v234 = vld [vmem:[%s5] sm:$0xff]
    %v235 = vld [vmem:[%s5 + $0x8] sm:$0xff]
    %v236 = vld [vmem:[%s5 + $0x10] sm:$0xff]
    %v237 = vld [vmem:[%s5 + $0x18] sm:$0xff]
    %v238 = vld [vmem:[%s5 + $0x20] sm:$0xff]
    %v239 = vld [vmem:[%s5 + $0x28] sm:$0xff]
    %v240 = vld [vmem:[%s5 + $0x30] sm:$0xff]
    %v241 = vld [vmem:[%s5 + $0x38] sm:$0xff]
    %v243 = vsel %vm64, %v45, 0
    %245 = vmatprep.subr.mxu0 0.0
    %246 = vmatpush1.msra.mxu0 %v234
    %247 = vmatprep.subr.mxu0 0.0
    %248 = vmatpush1.msra.mxu0 %v235
    %249 = vmatprep.subr.mxu0 0.0
    %250 = vmatpush1.msra.mxu0 %v236
    %251 = vmatprep.subr.mxu0 0.0
    %252 = vmatpush1.msra.mxu0 %v237
    %253 = vmatprep.subr.mxu0 0.0
    %254 = vmatpush1.msra.mxu0 %v238
    %255 = vmatprep.subr.mxu0 0.0
    %256 = vmatpush1.msra.mxu0 %v239
    %257 = vmatprep.subr.mxu0 0.0
    %258 = vmatpush1.msra.mxu0 %v240
    %259 = vmatprep.subr.mxu0 0.0
    %260 = vmatpush1.msra.mxu0 %v241
    %261 = vmatprep.subr.mxu0 0.0
    %262 = vmatpush1.msra.mxu0 0.0
    %263 = vmatprep.subr.mxu0 0.0
    %264 = vmatpush1.msra.mxu0 0.0
    %265 = vmatprep.subr.mxu0 0.0
    %266 = vmatpush1.msra.mxu0 0.0
    %267 = vmatprep.subr.mxu0 0.0
    %268 = vmatpush1.msra.mxu0 0.0
    %269 = vmatprep.subr.mxu0 0.0
    %270 = vmatpush1.msra.mxu0 0.0
    %271 = vmatprep.subr.mxu0 0.0
    %272 = vmatpush1.msra.mxu0 0.0
    %273 = vmatprep.subr.mxu0 0.0
    %274 = vmatpush1.msra.mxu0 0.0
    %275 = vmatprep.subr.mxu0 0.0
    %276 = vmatpush1.msra.mxu0 0.0
    %277 = vmatprep.subr.mxu0 0.0
    %278 = vmatpush1.msra.mxu0 0.0
    %279 = vmatprep.subr.mxu0 0.0
    %280 = vmatpush1.msra.mxu0 0.0
    %281 = vmatprep.subr.mxu0 0.0
    %282 = vmatpush1.msra.mxu0 0.0
    %283 = vmatprep.subr.mxu0 0.0
    %284 = vmatpush1.msra.mxu0 0.0
    %285 = vmatprep.subr.mxu0 0.0
    %286 = vmatpush1.msra.mxu0 0.0
    %287 = vmatprep.subr.mxu0 0.0
    %288 = vmatpush1.msra.mxu0 0.0
    %289 = vmatprep.subr.mxu0 0.0
    %290 = vmatpush1.msra.mxu0 0.0
    %291 = vmatprep.subr.mxu0 0.0
    %292 = vmatpush1.msra.mxu0 0.0
    %293 = vmatprep.subr.mxu0 0.0
    %294 = vmatpush1.msra.mxu0 0.0
    %295 = vmatprep.subr.mxu0 0.0
    %296 = vmatpush1.msra.mxu0 0.0
    %297 = vmatprep.subr.mxu0 0.0
    %298 = vmatpush1.msra.mxu0 0.0
    %299 = vmatprep.subr.mxu0 0.0
    %300 = vmatpush1.msra.mxu0 0.0
    %301 = vmatprep.subr.mxu0 0.0
    %302 = vmatpush1.msra.mxu0 0.0
    %303 = vmatprep.subr.mxu0 0.0
    %304 = vmatpush1.msra.mxu0 0.0
    %305 = vmatprep.subr.mxu0 0.0
    %306 = vmatpush1.msra.mxu0 0.0
    %307 = vmatprep.subr.mxu0 0.0
    %308 = vmatpush1.msra.mxu0 0.0
    %309 = vmatprep.mubr.f32.mxu0 0.0
    %310 = vmatmul.mubr.f32.gmra.mrb[0].mxu0 %v243
    %v311 = vpop.f32.mrb[0].mxu0
    %v312 = vadd.f32 0.0, %v311
    %v313 = vpop.f32.mrb[0].mxu0
    %314 = vdwg.mxu0
    %v315 = vadd.f32 %v231, %v312
    %v316 = vld [vmem:[%s6] sm:$0x1]
    %v318 = vlaneseq
    %v319 = vshrl.u32 %v318, 7
    %v320 = vsub.s32 0, %v319
    %v321 = vrot.slane %v316, %v320
    %v323 = vadd.f32 %v315, %v321
    %vm324 = vcmp.ge.f32.partialorder %v323, 0.0
    %v325 = vmul.f32 %v323, 0.1
    %v326 = vsel %vm324, %v323, %v325
    %v327 = vld [vmem:[%s7] sm:$0xff]
    %v328 = vld [vmem:[%s7 + $0x8] sm:$0xff]
    %v329 = vld [vmem:[%s7 + $0x10] sm:$0xff]
    %v330 = vld [vmem:[%s7 + $0x18] sm:$0xff]
    %v331 = vld [vmem:[%s7 + $0x20] sm:$0xff]
    %v332 = vld [vmem:[%s7 + $0x28] sm:$0xff]
    %v333 = vld [vmem:[%s7 + $0x30] sm:$0xff]
    %v334 = vld [vmem:[%s7 + $0x38] sm:$0xff]
    %v335 = vld [vmem:[%s7 + $0x40] sm:$0xff]
    %v336 = vld [vmem:[%s7 + $0x48] sm:$0xff]
    %v337 = vld [vmem:[%s7 + $0x50] sm:$0xff]
    %v338 = vld [vmem:[%s7 + $0x58] sm:$0xff]
    %v339 = vld [vmem:[%s7 + $0x60] sm:$0xff]
    %v340 = vld [vmem:[%s7 + $0x68] sm:$0xff]
    %v341 = vld [vmem:[%s7 + $0x70] sm:$0xff]
    %v342 = vld [vmem:[%s7 + $0x78] sm:$0xff]
    %v343 = vld [vmem:[%s8] sm:$0x1]
    %v345 = vlaneseq
    %v346 = vshrl.u32 %v345, 7
    %v347 = vsub.s32 0, %v346
    %v348 = vrot.slane %v343, %v347
    %350 = vmatprep.subr.mxu0 0.0
    %351 = vmatpush1.msra.mxu0 %v327
    %352 = vmatprep.subr.mxu0 0.0
    %353 = vmatpush1.msra.mxu0 %v328
    %354 = vmatprep.subr.mxu0 0.0
    %355 = vmatpush1.msra.mxu0 %v329
    %356 = vmatprep.subr.mxu0 0.0
    %357 = vmatpush1.msra.mxu0 %v330
    %358 = vmatprep.subr.mxu0 0.0
    %359 = vmatpush1.msra.mxu0 %v331
    %360 = vmatprep.subr.mxu0 0.0
    %361 = vmatpush1.msra.mxu0 %v332
    %362 = vmatprep.subr.mxu0 0.0
    %363 = vmatpush1.msra.mxu0 %v333
    %364 = vmatprep.subr.mxu0 0.0
    %365 = vmatpush1.msra.mxu0 %v334
    %366 = vmatprep.subr.mxu0 0.0
    %367 = vmatpush1.msra.mxu0 %v335
    %368 = vmatprep.subr.mxu0 0.0
    %369 = vmatpush1.msra.mxu0 %v336
    %370 = vmatprep.subr.mxu0 0.0
    %371 = vmatpush1.msra.mxu0 %v337
    %372 = vmatprep.subr.mxu0 0.0
    %373 = vmatpush1.msra.mxu0 %v338
    %374 = vmatprep.subr.mxu0 0.0
    %375 = vmatpush1.msra.mxu0 %v339
    %376 = vmatprep.subr.mxu0 0.0
    %377 = vmatpush1.msra.mxu0 %v340
    %378 = vmatprep.subr.mxu0 0.0
    %379 = vmatpush1.msra.mxu0 %v341
    %380 = vmatprep.subr.mxu0 0.0
    %381 = vmatpush1.msra.mxu0 %v342
    %382 = vmatprep.subr.mxu0 0.0
    %383 = vmatpush1.msra.mxu0 0.0
    %384 = vmatprep.subr.mxu0 0.0
    %385 = vmatpush1.msra.mxu0 0.0
    %386 = vmatprep.subr.mxu0 0.0
    %387 = vmatpush1.msra.mxu0 0.0
    %388 = vmatprep.subr.mxu0 0.0
    %389 = vmatpush1.msra.mxu0 0.0
    %390 = vmatprep.subr.mxu0 0.0
    %391 = vmatpush1.msra.mxu0 0.0
    %392 = vmatprep.subr.mxu0 0.0
    %393 = vmatpush1.msra.mxu0 0.0
    %394 = vmatprep.subr.mxu0 0.0
    %395 = vmatpush1.msra.mxu0 0.0
    %396 = vmatprep.subr.mxu0 0.0
    %397 = vmatpush1.msra.mxu0 0.0
    %398 = vmatprep.subr.mxu0 0.0
    %399 = vmatpush1.msra.mxu0 0.0
    %400 = vmatprep.subr.mxu0 0.0
    %401 = vmatpush1.msra.mxu0 0.0
    %402 = vmatprep.subr.mxu0 0.0
    %403 = vmatpush1.msra.mxu0 0.0
    %404 = vmatprep.subr.mxu0 0.0
    %405 = vmatpush1.msra.mxu0 0.0
    %406 = vmatprep.subr.mxu0 0.0
    %407 = vmatpush1.msra.mxu0 0.0
    %408 = vmatprep.subr.mxu0 0.0
    %409 = vmatpush1.msra.mxu0 0.0
    %410 = vmatprep.subr.mxu0 0.0
    %411 = vmatpush1.msra.mxu0 0.0
    %412 = vmatprep.subr.mxu0 0.0
    %413 = vmatpush1.msra.mxu0 0.0
    %414 = vmatprep.mubr.f32.mxu0 0.0
    %415 = vmatmul.mubr.f32.gmra.mrb[0].mxu0 %v326
    %v416 = vpop.f32.mrb[0].mxu0
    %v417 = vadd.f32 %v348, %v416
    %v418 = vpop.f32.mrb[0].mxu0
    %419 = vdwg.mxu0
    %vm420 = vcmp.ge.f32.partialorder %v417, 0.0
    %v421 = vmul.f32 %v417, 0.1
    %v422 = vsel %vm420, %v417, %v421
    %v423 = vld [vmem:[%s9] sm:$0xff]
    %v424 = vld [vmem:[%s9 + $0x8] sm:$0xff]
    %v425 = vld [vmem:[%s9 + $0x10] sm:$0xff]
    %v426 = vld [vmem:[%s9 + $0x18] sm:$0xff]
    %v427 = vld [vmem:[%s9 + $0x20] sm:$0xff]
    %v428 = vld [vmem:[%s9 + $0x28] sm:$0xff]
    %v429 = vld [vmem:[%s9 + $0x30] sm:$0xff]
    %v430 = vld [vmem:[%s9 + $0x38] sm:$0xff]
    %v431 = vld [vmem:[%s9 + $0x40] sm:$0xff]
    %v432 = vld [vmem:[%s9 + $0x48] sm:$0xff]
    %v433 = vld [vmem:[%s9 + $0x50] sm:$0xff]
    %v434 = vld [vmem:[%s9 + $0x58] sm:$0xff]
    %v435 = vld [vmem:[%s9 + $0x60] sm:$0xff]
    %v436 = vld [vmem:[%s9 + $0x68] sm:$0xff]
    %v437 = vld [vmem:[%s9 + $0x70] sm:$0xff]
    %v438 = vld [vmem:[%s9 + $0x78] sm:$0xff]
    %v439 = vld [vmem:[%s10] sm:$0x1]
    %v441 = vlaneseq
    %v442 = vshrl.u32 %v441, 7
    %v443 = vsub.s32 0, %v442
    %v444 = vrot.slane %v439, %v443
    %446 = vmatprep.subr.mxu0 0.0
    %447 = vmatpush1.msra.mxu0 %v423
    %448 = vmatprep.subr.mxu0 0.0
    %449 = vmatpush1.msra.mxu0 %v424
    %450 = vmatprep.subr.mxu0 0.0
    %451 = vmatpush1.msra.mxu0 %v425
    %452 = vmatprep.subr.mxu0 0.0
    %453 = vmatpush1.msra.mxu0 %v426
    %454 = vmatprep.subr.mxu0 0.0
    %455 = vmatpush1.msra.mxu0 %v427
    %456 = vmatprep.subr.mxu0 0.0
    %457 = vmatpush1.msra.mxu0 %v428
    %458 = vmatprep.subr.mxu0 0.0
    %459 = vmatpush1.msra.mxu0 %v429
    %460 = vmatprep.subr.mxu0 0.0
    %461 = vmatpush1.msra.mxu0 %v430
    %462 = vmatprep.subr.mxu0 0.0
    %463 = vmatpush1.msra.mxu0 %v431
    %464 = vmatprep.subr.mxu0 0.0
    %465 = vmatpush1.msra.mxu0 %v432
    %466 = vmatprep.subr.mxu0 0.0
    %467 = vmatpush1.msra.mxu0 %v433
    %468 = vmatprep.subr.mxu0 0.0
    %469 = vmatpush1.msra.mxu0 %v434
    %470 = vmatprep.subr.mxu0 0.0
    %471 = vmatpush1.msra.mxu0 %v435
    %472 = vmatprep.subr.mxu0 0.0
    %473 = vmatpush1.msra.mxu0 %v436
    %474 = vmatprep.subr.mxu0 0.0
    %475 = vmatpush1.msra.mxu0 %v437
    %476 = vmatprep.subr.mxu0 0.0
    %477 = vmatpush1.msra.mxu0 %v438
    %478 = vmatprep.subr.mxu0 0.0
    %479 = vmatpush1.msra.mxu0 0.0
    %480 = vmatprep.subr.mxu0 0.0
    %481 = vmatpush1.msra.mxu0 0.0
    %482 = vmatprep.subr.mxu0 0.0
    %483 = vmatpush1.msra.mxu0 0.0
    %484 = vmatprep.subr.mxu0 0.0
    %485 = vmatpush1.msra.mxu0 0.0
    %486 = vmatprep.subr.mxu0 0.0
    %487 = vmatpush1.msra.mxu0 0.0
    %488 = vmatprep.subr.mxu0 0.0
    %489 = vmatpush1.msra.mxu0 0.0
    %490 = vmatprep.subr.mxu0 0.0
    %491 = vmatpush1.msra.mxu0 0.0
    %492 = vmatprep.subr.mxu0 0.0
    %493 = vmatpush1.msra.mxu0 0.0
    %494 = vmatprep.subr.mxu0 0.0
    %495 = vmatpush1.msra.mxu0 0.0
    %496 = vmatprep.subr.mxu0 0.0
    %497 = vmatpush1.msra.mxu0 0.0
    %498 = vmatprep.subr.mxu0 0.0
    %499 = vmatpush1.msra.mxu0 0.0
    %500 = vmatprep.subr.mxu0 0.0
    %501 = vmatpush1.msra.mxu0 0.0
    %502 = vmatprep.subr.mxu0 0.0
    %503 = vmatpush1.msra.mxu0 0.0
    %504 = vmatprep.subr.mxu0 0.0
    %505 = vmatpush1.msra.mxu0 0.0
    %506 = vmatprep.subr.mxu0 0.0
    %507 = vmatpush1.msra.mxu0 0.0
    %508 = vmatprep.subr.mxu0 0.0
    %509 = vmatpush1.msra.mxu0 0.0
    %510 = vmatprep.mubr.f32.mxu0 0.0
    %511 = vmatmul.mubr.f32.gmra.mrb[0].mxu0 %v422
    %v512 = vpop.f32.mrb[0].mxu0
    %v513 = vadd.f32 %v444, %v512
    %v514 = vpop.f32.mrb[0].mxu0
    %515 = vdwg.mxu0
    %v516 = vadd.f32 %v323, %v513
    %v517 = vld [vmem:[%s11] sm:$0xff]
    %v518 = vld [vmem:[%s11 + $0x8] sm:$0xff]
    %v519 = vld [vmem:[%s11 + $0x10] sm:$0xff]
    %v520 = vld [vmem:[%s11 + $0x18] sm:$0xff]
    %v521 = vld [vmem:[%s11 + $0x20] sm:$0xff]
    %v522 = vld [vmem:[%s11 + $0x28] sm:$0xff]
    %v523 = vld [vmem:[%s11 + $0x30] sm:$0xff]
    %v524 = vld [vmem:[%s11 + $0x38] sm:$0xff]
    %v525 = vld [vmem:[%s11 + $0x40] sm:$0xff]
    %v526 = vld [vmem:[%s11 + $0x48] sm:$0xff]
    %v527 = vld [vmem:[%s11 + $0x50] sm:$0xff]
    %v528 = vld [vmem:[%s11 + $0x58] sm:$0xff]
    %v529 = vld [vmem:[%s11 + $0x60] sm:$0xff]
    %v530 = vld [vmem:[%s11 + $0x68] sm:$0xff]
    %v531 = vld [vmem:[%s11 + $0x70] sm:$0xff]
    %v532 = vld [vmem:[%s11 + $0x78] sm:$0xff]
    %v533 = vld [vmem:[%s12] sm:$0x1]
    %v535 = vlaneseq
    %v536 = vshrl.u32 %v535, 7
    %v537 = vsub.s32 0, %v536
    %v538 = vrot.slane %v533, %v537
    %540 = vmatprep.subr.mxu0 0.0
    %541 = vmatpush1.msra.mxu0 %v517
    %542 = vmatprep.subr.mxu0 0.0
    %543 = vmatpush1.msra.mxu0 %v518
    %544 = vmatprep.subr.mxu0 0.0
    %545 = vmatpush1.msra.mxu0 %v519
    %546 = vmatprep.subr.mxu0 0.0
    %547 = vmatpush1.msra.mxu0 %v520
    %548 = vmatprep.subr.mxu0 0.0
    %549 = vmatpush1.msra.mxu0 %v521
    %550 = vmatprep.subr.mxu0 0.0
    %551 = vmatpush1.msra.mxu0 %v522
    %552 = vmatprep.subr.mxu0 0.0
    %553 = vmatpush1.msra.mxu0 %v523
    %554 = vmatprep.subr.mxu0 0.0
    %555 = vmatpush1.msra.mxu0 %v524
    %556 = vmatprep.subr.mxu0 0.0
    %557 = vmatpush1.msra.mxu0 %v525
    %558 = vmatprep.subr.mxu0 0.0
    %559 = vmatpush1.msra.mxu0 %v526
    %560 = vmatprep.subr.mxu0 0.0
    %561 = vmatpush1.msra.mxu0 %v527
    %562 = vmatprep.subr.mxu0 0.0
    %563 = vmatpush1.msra.mxu0 %v528
    %564 = vmatprep.subr.mxu0 0.0
    %565 = vmatpush1.msra.mxu0 %v529
    %566 = vmatprep.subr.mxu0 0.0
    %567 = vmatpush1.msra.mxu0 %v530
    %568 = vmatprep.subr.mxu0 0.0
    %569 = vmatpush1.msra.mxu0 %v531
    %570 = vmatprep.subr.mxu0 0.0
    %571 = vmatpush1.msra.mxu0 %v532
    %572 = vmatprep.subr.mxu0 0.0
    %573 = vmatpush1.msra.mxu0 0.0
    %574 = vmatprep.subr.mxu0 0.0
    %575 = vmatpush1.msra.mxu0 0.0
    %576 = vmatprep.subr.mxu0 0.0
    %577 = vmatpush1.msra.mxu0 0.0
    %578 = vmatprep.subr.mxu0 0.0
    %579 = vmatpush1.msra.mxu0 0.0
    %580 = vmatprep.subr.mxu0 0.0
    %581 = vmatpush1.msra.mxu0 0.0
    %582 = vmatprep.subr.mxu0 0.0
    %583 = vmatpush1.msra.mxu0 0.0
    %584 = vmatprep.subr.mxu0 0.0
    %585 = vmatpush1.msra.mxu0 0.0
    %586 = vmatprep.subr.mxu0 0.0
    %587 = vmatpush1.msra.mxu0 0.0
    %588 = vmatprep.subr.mxu0 0.0
    %589 = vmatpush1.msra.mxu0 0.0
    %590 = vmatprep.subr.mxu0 0.0
    %591 = vmatpush1.msra.mxu0 0.0
    %592 = vmatprep.subr.mxu0 0.0
    %593 = vmatpush1.msra.mxu0 0.0
    %594 = vmatprep.subr.mxu0 0.0
    %595 = vmatpush1.msra.mxu0 0.0
    %596 = vmatprep.subr.mxu0 0.0
    %597 = vmatpush1.msra.mxu0 0.0
    %598 = vmatprep.subr.mxu0 0.0
    %599 = vmatpush1.msra.mxu0 0.0
    %600 = vmatprep.subr.mxu0 0.0
    %601 = vmatpush1.msra.mxu0 0.0
    %602 = vmatprep.subr.mxu0 0.0
    %603 = vmatpush1.msra.mxu0 0.0
    %604 = vmatprep.mubr.f32.mxu0 0.0
    %605 = vmatmul.mubr.f32.gmra.mrb[0].mxu0 %v516
    %v606 = vpop.f32.mrb[0].mxu0
    %v607 = vadd.f32 %v538, %v606
    %v608 = vpop.f32.mrb[0].mxu0
    %609 = vdwg.mxu0
    %vm610 = vcmask 17408
    %611 = vst.msk [vmem:[#allocation2] sm:$0x3] %vm610, %v607
    // Predicated region
    $region54: #{deep_msn_forward.11} parent=1 // pred_check
      _
    $region55: #{deep_msn_forward.11} parent=1 // pred_check_branch
      %613 = sbr.rel (0) target = $region57
    $region56: #{deep_msn_forward.11} parent=1 // pred_region
      %s615 = ssub.s32 32, 32
      %616 = vsyncadd [#allocation3], %s615
      %s618 = sshll.u32 [#allocation2], 4
      %s619 = int_to_ptr.vmem [resolvable:$true] %s618
      %621 = dma.vmem_to_hbm [thread:$0]  %s619, 32, %s13, [#allocation3]
    $region57: #{deep_msn_forward.11} parent=1 // pred_fallthru
      _
    // Predicated region
    $region58: #{deep_msn_forward.11} parent=1 // pred_check
      _
    $region59: #{deep_msn_forward.11} parent=1 // pred_check_branch
      %623 = sbr.rel (0) target = $region61
    $region60: #{deep_msn_forward.11} parent=1 // pred_region
      %624 = dma.done [#allocation3], 32
    $region61: #{deep_msn_forward.11} parent=1 // pred_fallthru
      _
    %625 = vsyncpa [#allocation3], 1

// kernel: deep_msn_forward.7
$region0: #{deep_msn_forward.7}
  #allocation0 [shape = 'u32[]', space=smem, size = 0x4, offset = 0x4, fixed_abs, tag = 'smem constant byte address 0x4 - core index']
  #allocation1 [shape = 'u32[144,128]{1,0:T(1,128)}', space=vmem, size = 0x12000, scoped, tag = 'internal scratch']
  %s0 = inlined_call_operand.vmem [shape: f32[36,64], index: 0, kind: input, shape index: {}]
  %s1 = inlined_call_operand.vmem [shape: f32[1,64], index: 1, kind: input, shape index: {}]
  %s2 = inlined_call_operand.vmem [shape: f32[1,64], index: 2, kind: input, shape index: {}]
  %s3 = inlined_call_operand.vmem [shape: f32[64,64], index: 3, kind: input, shape index: {}]
  %s4 = inlined_call_operand.vmem [shape: f32[1,64], index: 4, kind: input, shape index: {}]
  %s5 = inlined_call_operand.vmem [shape: f32[1,64], index: 5, kind: input, shape index: {}]
  %s6 = inlined_call_operand.vmem [shape: f32[1,64], index: 6, kind: input, shape index: {}]
  %s7 = inlined_call_operand.vmem [shape: f32[64,64], index: 7, kind: input, shape index: {}]
  %s8 = inlined_call_operand.vmem [shape: f32[1,64], index: 8, kind: input, shape index: {}]
  %s9 = inlined_call_operand.vmem [shape: f32[36,64], index: 9, kind: output, shape index: {}]
  %s10 = sld [smem:[#allocation0]]
  $region46: #{deep_msn_forward.7} parent=0
    _
  %s12 = ssub.s32 1, %s10
  %s13 = scalar_select 0, %s12, %s10
  // Predicated region
  $region2: #{deep_msn_forward.7} parent=0 // pred_check
    _
  $region3: #{deep_msn_forward.7} parent=0 // pred_check_branch
    %15 = sbr.rel (0) target = $region5
  $region4: #{deep_msn_forward.7} parent=0 // pred_region
    _
  $region5: #{deep_msn_forward.7} parent=0 // pred_fallthru
    _
  // Predicated region
  $region6: #{deep_msn_forward.7} parent=0 // pred_check
    _
  $region7: #{deep_msn_forward.7} parent=0 // pred_check_branch
    %17 = sbr.rel (0) target = $region9
  $region8: #{deep_msn_forward.7} parent=0 // pred_region
    _
  $region9: #{deep_msn_forward.7} parent=0 // pred_fallthru
    _
  // Predicated region
  $region10: #{deep_msn_forward.7} parent=0 // pred_check
    _
  $region11: #{deep_msn_forward.7} parent=0 // pred_check_branch
    %19 = sbr.rel (0) target = $region13
  $region12: #{deep_msn_forward.7} parent=0 // pred_region
    _
  $region13: #{deep_msn_forward.7} parent=0 // pred_fallthru
    _
  // Predicated region
  $region14: #{deep_msn_forward.7} parent=0 // pred_check
    _
  $region15: #{deep_msn_forward.7} parent=0 // pred_check_branch
    %21 = sbr.rel (0) target = $region17
  $region16: #{deep_msn_forward.7} parent=0 // pred_region
    _
  $region17: #{deep_msn_forward.7} parent=0 // pred_fallthru
    _
  // Predicated region
  $region18: #{deep_msn_forward.7} parent=0 // pred_check
    _
  $region19: #{deep_msn_forward.7} parent=0 // pred_check_branch
    %23 = sbr.rel (0) target = $region21
  $region20: #{deep_msn_forward.7} parent=0 // pred_region
    _
  $region21: #{deep_msn_forward.7} parent=0 // pred_fallthru
    _
  // Predicated region
  $region22: #{deep_msn_forward.7} parent=0 // pred_check
    _
  $region23: #{deep_msn_forward.7} parent=0 // pred_check_branch
    %25 = sbr.rel (0) target = $region25
  $region24: #{deep_msn_forward.7} parent=0 // pred_region
    _
  $region25: #{deep_msn_forward.7} parent=0 // pred_fallthru
    _
  // Predicated region
  $region26: #{deep_msn_forward.7} parent=0 // pred_check
    _
  $region27: #{deep_msn_forward.7} parent=0 // pred_check_branch
    %27 = sbr.rel (0) target = $region29
  $region28: #{deep_msn_forward.7} parent=0 // pred_region
    _
  $region29: #{deep_msn_forward.7} parent=0 // pred_fallthru
    _
  // Predicated region
  $region30: #{deep_msn_forward.7} parent=0 // pred_check
    _
  $region31: #{deep_msn_forward.7} parent=0 // pred_check_branch
    %29 = sbr.rel (0) target = $region33
  $region32: #{deep_msn_forward.7} parent=0 // pred_region
    _
  $region33: #{deep_msn_forward.7} parent=0 // pred_fallthru
    _
  // Predicated region
  $region34: #{deep_msn_forward.7} parent=0 // pred_check
    _
  $region35: #{deep_msn_forward.7} parent=0 // pred_check_branch
    %31 = sbr.rel (0) target = $region37
  $region36: #{deep_msn_forward.7} parent=0 // pred_region
    _
  $region37: #{deep_msn_forward.7} parent=0 // pred_fallthru
    _
  %v32 = vld [vmem:[%s0] sm:$0xff]
  %v33 = vld [vmem:[%s0 + $0x8] sm:$0xff]
  %v34 = vld [vmem:[%s0 + $0x10] sm:$0xff]
  %v35 = vld [vmem:[%s0 + $0x18] sm:$0xff]
  %v36 = vld [vmem:[%s0 + $0x20] sm:$0xf]
  %v37 = vld [vmem:[%s1] sm:$0x1]
  %v38 = vld [vmem:[%s2] sm:$0x1]
  %vm39 = vcmask 523264
  %v40 = vsel %vm39, %v32, 0.0
  %41 = vadd.xlane.f32.xlu0 %v40
  %v42 = vpop.xlane.xlu0 %41
  %v43 = vsel %vm39, %v33, 0.0
  %44 = vadd.xlane.f32.xlu0 %v43
  %v45 = vpop.xlane.xlu0 %44
  %v46 = vsel %vm39, %v34, 0.0
  %47 = vadd.xlane.f32.xlu0 %v46
  %v48 = vpop.xlane.xlu0 %47
  %v49 = vsel %vm39, %v35, 0.0
  %50 = vadd.xlane.f32.xlu0 %v49
  %v51 = vpop.xlane.xlu0 %50
  %vm52 = vcmask 519168
  %v53 = vsel %vm52, %v36, 0.0
  %54 = vadd.xlane.f32.xlu0 %v53
  %v55 = vpop.xlane.xlu0 %54
  %v56 = vrcp.pop 64.0
  %v57 = vmul.f32 %v42, %v56
  %v58 = vmul.f32 %v45, %v56
  %v59 = vmul.f32 %v48, %v56
  %v60 = vmul.f32 %v51, %v56
  %v61 = vmul.f32 %v55, %v56
  %v62 = vsub.f32 %v32, %v57
  %v63 = vsub.f32 %v33, %v58
  %v64 = vsub.f32 %v34, %v59
  %v65 = vsub.f32 %v35, %v60
  %v66 = vsub.f32 %v36, %v61
  %v67 = vmul.f32 %v62, %v62
  %v68 = vmul.f32 %v63, %v63
  %v69 = vmul.f32 %v64, %v64
  %v70 = vmul.f32 %v65, %v65
  %v71 = vmul.f32 %v66, %v66
  %v72 = vsel %vm39, %v67, 0.0
  %73 = vadd.xlane.f32.xlu0 %v72
  %v74 = vpop.xlane.xlu0 %73
  %v75 = vsel %vm39, %v68, 0.0
  %76 = vadd.xlane.f32.xlu0 %v75
  %v77 = vpop.xlane.xlu0 %76
  %v78 = vsel %vm39, %v69, 0.0
  %79 = vadd.xlane.f32.xlu0 %v78
  %v80 = vpop.xlane.xlu0 %79
  %v81 = vsel %vm39, %v70, 0.0
  %82 = vadd.xlane.f32.xlu0 %v81
  %v83 = vpop.xlane.xlu0 %82
  %v84 = vsel %vm52, %v71, 0.0
  %85 = vadd.xlane.f32.xlu0 %v84
  %v86 = vpop.xlane.xlu0 %85
  %v87 = vmul.f32 %v74, %v56
  %v88 = vmul.f32 %v77, %v56
  %v89 = vmul.f32 %v80, %v56
  %v90 = vmul.f32 %v83, %v56
  %v91 = vmul.f32 %v86, %v56
  %v92 = vadd.f32 %v87, 1e-05
  %v93 = vadd.f32 %v88, 1e-05
  %v94 = vadd.f32 %v89, 1e-05
  %v95 = vadd.f32 %v90, 1e-05
  %v96 = vadd.f32 %v91, 1e-05
  %v97 = vrsqrt.pop %v92
  %v98 = vrsqrt.pop %v93
  %v99 = vrsqrt.pop %v94
  %v100 = vrsqrt.pop %v95
  %v101 = vrsqrt.pop %v96
  %v102 = vmul.f32 %v62, %v97
  %v103 = vmul.f32 %v63, %v98
  %v104 = vmul.f32 %v64, %v99
  %v105 = vmul.f32 %v65, %v100
  %v106 = vmul.f32 %v66, %v101
  %v108 = vlaneseq
  %v109 = vshrl.u32 %v108, 7
  %v110 = vsub.s32 0, %v109
  %v111 = vrot.slane %v37, %v110
  %v113 = vmul.f32 %v102, %v111
  %v114 = vmul.f32 %v103, %v111
  %v115 = vmul.f32 %v104, %v111
  %v116 = vmul.f32 %v105, %v111
  %v117 = vmul.f32 %v106, %v111
  %v119 = vlaneseq
  %v120 = vshrl.u32 %v119, 7
  %v121 = vsub.s32 0, %v120
  %v122 = vrot.slane %v38, %v121
  %v124 = vadd.f32 %v113, %v122
  %v125 = vadd.f32 %v114, %v122
  %v126 = vadd.f32 %v115, %v122
  %v127 = vadd.f32 %v116, %v122
  %v128 = vadd.f32 %v117, %v122
  %vm129 = vcmp.ge.f32.partialorder %v124, 0.0
  %vm130 = vcmp.ge.f32.partialorder %v125, 0.0
  %vm131 = vcmp.ge.f32.partialorder %v126, 0.0
  %vm132 = vcmp.ge.f32.partialorder %v127, 0.0
  %vm133 = vcmp.ge.f32.partialorder %v128, 0.0
  %v134 = vmul.f32 %v124, 0.1
  %v135 = vmul.f32 %v125, 0.1
  %v136 = vmul.f32 %v126, 0.1
  %v137 = vmul.f32 %v127, 0.1
  %v138 = vmul.f32 %v128, 0.1
  %v139 = vsel %vm129, %v124, %v134
  %v140 = vsel %vm130, %v125, %v135
  %v141 = vsel %vm131, %v126, %v136
  %v142 = vsel %vm132, %v127, %v137
  %v143 = vsel %vm133, %v128, %v138
  %v144 = vld [vmem:[%s3] sm:$0xff]
  %v145 = vld [vmem:[%s3 + $0x8] sm:$0xff]
  %v146 = vld [vmem:[%s3 + $0x10] sm:$0xff]
  %v147 = vld [vmem:[%s3 + $0x18] sm:$0xff]
  %v148 = vld [vmem:[%s3 + $0x20] sm:$0xff]
  %v149 = vld [vmem:[%s3 + $0x28] sm:$0xff]
  %v150 = vld [vmem:[%s3 + $0x30] sm:$0xff]
  %v151 = vld [vmem:[%s3 + $0x38] sm:$0xff]
  %v152 = vld [vmem:[%s4] sm:$0x1]
  %v154 = vlaneseq
  %v155 = vshrl.u32 %v154, 7
  %v156 = vsub.s32 0, %v155
  %v157 = vrot.slane %v152, %v156
  %v160 = vsel %vm39, %v139, 0
  %v163 = vsel %vm39, %v140, 0
  %v166 = vsel %vm39, %v141, 0
  %v169 = vsel %vm39, %v142, 0
  %v172 = vsel %vm39, %v143, 0
  %174 = vmatprep.subr.mxu0 0.0
  %175 = vmatpush1.msra.mxu0 %v144
  %176 = vmatprep.subr.mxu0 0.0
  %177 = vmatpush1.msra.mxu0 %v145
  %178 = vmatprep.subr.mxu0 0.0
  %179 = vmatpush1.msra.mxu0 %v146
  %180 = vmatprep.subr.mxu0 0.0
  %181 = vmatpush1.msra.mxu0 %v147
  %182 = vmatprep.subr.mxu0 0.0
  %183 = vmatpush1.msra.mxu0 %v148
  %184 = vmatprep.subr.mxu0 0.0
  %185 = vmatpush1.msra.mxu0 %v149
  %186 = vmatprep.subr.mxu0 0.0
  %187 = vmatpush1.msra.mxu0 %v150
  %188 = vmatprep.subr.mxu0 0.0
  %189 = vmatpush1.msra.mxu0 %v151
  %190 = vmatprep.subr.mxu0 0.0
  %191 = vmatpush1.msra.mxu0 0.0
  %192 = vmatprep.subr.mxu0 0.0
  %193 = vmatpush1.msra.mxu0 0.0
  %194 = vmatprep.subr.mxu0 0.0
  %195 = vmatpush1.msra.mxu0 0.0
  %196 = vmatprep.subr.mxu0 0.0
  %197 = vmatpush1.msra.mxu0 0.0
  %198 = vmatprep.subr.mxu0 0.0
  %199 = vmatpush1.msra.mxu0 0.0
  %200 = vmatprep.subr.mxu0 0.0
  %201 = vmatpush1.msra.mxu0 0.0
  %202 = vmatprep.subr.mxu0 0.0
  %203 = vmatpush1.msra.mxu0 0.0
  %204 = vmatprep.subr.mxu0 0.0
  %205 = vmatpush1.msra.mxu0 0.0
  %206 = vmatprep.subr.mxu0 0.0
  %207 = vmatpush1.msra.mxu0 0.0
  %208 = vmatprep.subr.mxu0 0.0
  %209 = vmatpush1.msra.mxu0 0.0
  %210 = vmatprep.subr.mxu0 0.0
  %211 = vmatpush1.msra.mxu0 0.0
  %212 = vmatprep.subr.mxu0 0.0
  %213 = vmatpush1.msra.mxu0 0.0
  %214 = vmatprep.subr.mxu0 0.0
  %215 = vmatpush1.msra.mxu0 0.0
  %216 = vmatprep.subr.mxu0 0.0
  %217 = vmatpush1.msra.mxu0 0.0
  %218 = vmatprep.subr.mxu0 0.0
  %219 = vmatpush1.msra.mxu0 0.0
  %220 = vmatprep.subr.mxu0 0.0
  %221 = vmatpush1.msra.mxu0 0.0
  %222 = vmatprep.subr.mxu0 0.0
  %223 = vmatpush1.msra.mxu0 0.0
  %224 = vmatprep.subr.mxu0 0.0
  %225 = vmatpush1.msra.mxu0 0.0
  %226 = vmatprep.subr.mxu0 0.0
  %227 = vmatpush1.msra.mxu0 0.0
  %228 = vmatprep.subr.mxu0 0.0
  %229 = vmatpush1.msra.mxu0 0.0
  %230 = vmatprep.subr.mxu0 0.0
  %231 = vmatpush1.msra.mxu0 0.0
  %232 = vmatprep.subr.mxu0 0.0
  %233 = vmatpush1.msra.mxu0 0.0
  %234 = vmatprep.subr.mxu0 0.0
  %235 = vmatpush1.msra.mxu0 0.0
  %236 = vmatprep.subr.mxu0 0.0
  %237 = vmatpush1.msra.mxu0 0.0
  %238 = vmatprep.mubr.f32.mxu0 0.0
  %239 = vmatmul.mubr.f32.gmra.mrb[0].mxu0 %v160
  %v240 = vpop.f32.mrb[0].mxu0
  %v241 = vadd.f32 %v157, %v240
  %v242 = vpop.f32.mrb[0].mxu0
  %243 = vmatprep.mubr.f32.mxu0 0.0
  %244 = vmatmul.mubr.f32.gmra.mrb[0].mxu0 %v163
  %v245 = vpop.f32.mrb[0].mxu0
  %v246 = vadd.f32 %v157, %v245
  %v247 = vpop.f32.mrb[0].mxu0
  %248 = vmatprep.mubr.f32.mxu0 0.0
  %249 = vmatmul.mubr.f32.gmra.mrb[0].mxu0 %v166
  %v250 = vpop.f32.mrb[0].mxu0
  %v251 = vadd.f32 %v157, %v250
  %v252 = vpop.f32.mrb[0].mxu0
  %253 = vmatprep.mubr.f32.mxu0 0.0
  %254 = vmatmul.mubr.f32.gmra.mrb[0].mxu0 %v169
  %v255 = vpop.f32.mrb[0].mxu0
  %v256 = vadd.f32 %v157, %v255
  %v257 = vpop.f32.mrb[0].mxu0
  %258 = vmatprep.mubr.f32.mxu0 0.0
  %259 = vmatmul.mubr.f32.gmra.mrb[0].mxu0 %v172
  %v260 = vpop.f32.mrb[0].mxu0
  %v261 = vadd.f32 %v157, %v260
  %v262 = vpop.f32.mrb[0].mxu0
  %263 = vdwg.mxu0
  %v264 = vld [vmem:[%s5] sm:$0x1]
  %v265 = vld [vmem:[%s6] sm:$0x1]
  %v266 = vsel %vm39, %v241, 0.0
  %267 = vadd.xlane.f32.xlu0 %v266
  %v268 = vpop.xlane.xlu0 %267
  %v269 = vsel %vm39, %v246, 0.0
  %270 = vadd.xlane.f32.xlu0 %v269
  %v271 = vpop.xlane.xlu0 %270
  %v272 = vsel %vm39, %v251, 0.0
  %273 = vadd.xlane.f32.xlu0 %v272
  %v274 = vpop.xlane.xlu0 %273
  %v275 = vsel %vm39, %v256, 0.0
  %276 = vadd.xlane.f32.xlu0 %v275
  %v277 = vpop.xlane.xlu0 %276
  %v278 = vsel %vm52, %v261, 0.0
  %279 = vadd.xlane.f32.xlu0 %v278
  %v280 = vpop.xlane.xlu0 %279
  %v281 = vmul.f32 %v268, %v56
  %v282 = vmul.f32 %v271, %v56
  %v283 = vmul.f32 %v274, %v56
  %v284 = vmul.f32 %v277, %v56
  %v285 = vmul.f32 %v280, %v56
  %v286 = vsub.f32 %v241, %v281
  %v287 = vsub.f32 %v246, %v282
  %v288 = vsub.f32 %v251, %v283
  %v289 = vsub.f32 %v256, %v284
  %v290 = vsub.f32 %v261, %v285
  %v291 = vmul.f32 %v286, %v286
  %v292 = vmul.f32 %v287, %v287
  %v293 = vmul.f32 %v288, %v288
  %v294 = vmul.f32 %v289, %v289
  %v295 = vmul.f32 %v290, %v290
  %v296 = vsel %vm39, %v291, 0.0
  %297 = vadd.xlane.f32.xlu0 %v296
  %v298 = vpop.xlane.xlu0 %297
  %v299 = vsel %vm39, %v292, 0.0
  %300 = vadd.xlane.f32.xlu0 %v299
  %v301 = vpop.xlane.xlu0 %300
  %v302 = vsel %vm39, %v293, 0.0
  %303 = vadd.xlane.f32.xlu0 %v302
  %v304 = vpop.xlane.xlu0 %303
  %v305 = vsel %vm39, %v294, 0.0
  %306 = vadd.xlane.f32.xlu0 %v305
  %v307 = vpop.xlane.xlu0 %306
  %v308 = vsel %vm52, %v295, 0.0
  %309 = vadd.xlane.f32.xlu0 %v308
  %v310 = vpop.xlane.xlu0 %309
  %v311 = vmul.f32 %v298, %v56
  %v312 = vmul.f32 %v301, %v56
  %v313 = vmul.f32 %v304, %v56
  %v314 = vmul.f32 %v307, %v56
  %v315 = vmul.f32 %v310, %v56
  %v316 = vadd.f32 %v311, 1e-05
  %v317 = vadd.f32 %v312, 1e-05
  %v318 = vadd.f32 %v313, 1e-05
  %v319 = vadd.f32 %v314, 1e-05
  %v320 = vadd.f32 %v315, 1e-05
  %v321 = vrsqrt.pop %v316
  %v322 = vrsqrt.pop %v317
  %v323 = vrsqrt.pop %v318
  %v324 = vrsqrt.pop %v319
  %v325 = vrsqrt.pop %v320
  %v326 = vmul.f32 %v286, %v321
  %v327 = vmul.f32 %v287, %v322
  %v328 = vmul.f32 %v288, %v323
  %v329 = vmul.f32 %v289, %v324
  %v330 = vmul.f32 %v290, %v325
  %v332 = vlaneseq
  %v333 = vshrl.u32 %v332, 7
  %v334 = vsub.s32 0, %v333
  %v335 = vrot.slane %v264, %v334
  %v337 = vmul.f32 %v326, %v335
  %v338 = vmul.f32 %v327, %v335
  %v339 = vmul.f32 %v328, %v335
  %v340 = vmul.f32 %v329, %v335
  %v341 = vmul.f32 %v330, %v335
  %v343 = vlaneseq
  %v344 = vshrl.u32 %v343, 7
  %v345 = vsub.s32 0, %v344
  %v346 = vrot.slane %v265, %v345
  %v348 = vadd.f32 %v337, %v346
  %v349 = vadd.f32 %v338, %v346
  %v350 = vadd.f32 %v339, %v346
  %v351 = vadd.f32 %v340, %v346
  %v352 = vadd.f32 %v341, %v346
  %vm353 = vcmp.ge.f32.partialorder %v348, 0.0
  %vm354 = vcmp.ge.f32.partialorder %v349, 0.0
  %vm355 = vcmp.ge.f32.partialorder %v350, 0.0
  %vm356 = vcmp.ge.f32.partialorder %v351, 0.0
  %vm357 = vcmp.ge.f32.partialorder %v352, 0.0
  %v358 = vmul.f32 %v348, 0.1
  %v359 = vmul.f32 %v349, 0.1
  %v360 = vmul.f32 %v350, 0.1
  %v361 = vmul.f32 %v351, 0.1
  %v362 = vmul.f32 %v352, 0.1
  %v363 = vsel %vm353, %v348, %v358
  %v364 = vsel %vm354, %v349, %v359
  %v365 = vsel %vm355, %v350, %v360
  %v366 = vsel %vm356, %v351, %v361
  %v367 = vsel %vm357, %v352, %v362
  %v368 = vld [vmem:[%s7] sm:$0xff]
  %v369 = vld [vmem:[%s7 + $0x8] sm:$0xff]
  %v370 = vld [vmem:[%s7 + $0x10] sm:$0xff]
  %v371 = vld [vmem:[%s7 + $0x18] sm:$0xff]
  %v372 = vld [vmem:[%s7 + $0x20] sm:$0xff]
  %v373 = vld [vmem:[%s7 + $0x28] sm:$0xff]
  %v374 = vld [vmem:[%s7 + $0x30] sm:$0xff]
  %v375 = vld [vmem:[%s7 + $0x38] sm:$0xff]
  %v376 = vld [vmem:[%s8] sm:$0x1]
  %v378 = vlaneseq
  %v379 = vshrl.u32 %v378, 7
  %v380 = vsub.s32 0, %v379
  %v381 = vrot.slane %v376, %v380
  %v384 = vsel %vm39, %v363, 0
  %v387 = vsel %vm39, %v364, 0
  %v390 = vsel %vm39, %v365, 0
  %v393 = vsel %vm39, %v366, 0
  %v396 = vsel %vm39, %v367, 0
  %398 = vmatprep.subr.mxu0 0.0
  %399 = vmatpush1.msra.mxu0 %v368
  %400 = vmatprep.subr.mxu0 0.0
  %401 = vmatpush1.msra.mxu0 %v369
  %402 = vmatprep.subr.mxu0 0.0
  %403 = vmatpush1.msra.mxu0 %v370
  %404 = vmatprep.subr.mxu0 0.0
  %405 = vmatpush1.msra.mxu0 %v371
  %406 = vmatprep.subr.mxu0 0.0
  %407 = vmatpush1.msra.mxu0 %v372
  %408 = vmatprep.subr.mxu0 0.0
  %409 = vmatpush1.msra.mxu0 %v373
  %410 = vmatprep.subr.mxu0 0.0
  %411 = vmatpush1.msra.mxu0 %v374
  %412 = vmatprep.subr.mxu0 0.0
  %413 = vmatpush1.msra.mxu0 %v375
  %414 = vmatprep.subr.mxu0 0.0
  %415 = vmatpush1.msra.mxu0 0.0
  %416 = vmatprep.subr.mxu0 0.0
  %417 = vmatpush1.msra.mxu0 0.0
  %418 = vmatprep.subr.mxu0 0.0
  %419 = vmatpush1.msra.mxu0 0.0
  %420 = vmatprep.subr.mxu0 0.0
  %421 = vmatpush1.msra.mxu0 0.0
  %422 = vmatprep.subr.mxu0 0.0
  %423 = vmatpush1.msra.mxu0 0.0
  %424 = vmatprep.subr.mxu0 0.0
  %425 = vmatpush1.msra.mxu0 0.0
  %426 = vmatprep.subr.mxu0 0.0
  %427 = vmatpush1.msra.mxu0 0.0
  %428 = vmatprep.subr.mxu0 0.0
  %429 = vmatpush1.msra.mxu0 0.0
  %430 = vmatprep.subr.mxu0 0.0
  %431 = vmatpush1.msra.mxu0 0.0
  %432 = vmatprep.subr.mxu0 0.0
  %433 = vmatpush1.msra.mxu0 0.0
  %434 = vmatprep.subr.mxu0 0.0
  %435 = vmatpush1.msra.mxu0 0.0
  %436 = vmatprep.subr.mxu0 0.0
  %437 = vmatpush1.msra.mxu0 0.0
  %438 = vmatprep.subr.mxu0 0.0
  %439 = vmatpush1.msra.mxu0 0.0
  %440 = vmatprep.subr.mxu0 0.0
  %441 = vmatpush1.msra.mxu0 0.0
  %442 = vmatprep.subr.mxu0 0.0
  %443 = vmatpush1.msra.mxu0 0.0
  %444 = vmatprep.subr.mxu0 0.0
  %445 = vmatpush1.msra.mxu0 0.0
  %446 = vmatprep.subr.mxu0 0.0
  %447 = vmatpush1.msra.mxu0 0.0
  %448 = vmatprep.subr.mxu0 0.0
  %449 = vmatpush1.msra.mxu0 0.0
  %450 = vmatprep.subr.mxu0 0.0
  %451 = vmatpush1.msra.mxu0 0.0
  %452 = vmatprep.subr.mxu0 0.0
  %453 = vmatpush1.msra.mxu0 0.0
  %454 = vmatprep.subr.mxu0 0.0
  %455 = vmatpush1.msra.mxu0 0.0
  %456 = vmatprep.subr.mxu0 0.0
  %457 = vmatpush1.msra.mxu0 0.0
  %458 = vmatprep.subr.mxu0 0.0
  %459 = vmatpush1.msra.mxu0 0.0
  %460 = vmatprep.subr.mxu0 0.0
  %461 = vmatpush1.msra.mxu0 0.0
  %462 = vmatprep.mubr.f32.mxu0 0.0
  %463 = vmatmul.mubr.f32.gmra.mrb[0].mxu0 %v384
  %v464 = vpop.f32.mrb[0].mxu0
  %v465 = vadd.f32 %v381, %v464
  %v466 = vpop.f32.mrb[0].mxu0
  %467 = vmatprep.mubr.f32.mxu0 0.0
  %468 = vmatmul.mubr.f32.gmra.mrb[0].mxu0 %v387
  %v469 = vpop.f32.mrb[0].mxu0
  %v470 = vadd.f32 %v381, %v469
  %v471 = vpop.f32.mrb[0].mxu0
  %472 = vmatprep.mubr.f32.mxu0 0.0
  %473 = vmatmul.mubr.f32.gmra.mrb[0].mxu0 %v390
  %v474 = vpop.f32.mrb[0].mxu0
  %v475 = vadd.f32 %v381, %v474
  %v476 = vpop.f32.mrb[0].mxu0
  %477 = vmatprep.mubr.f32.mxu0 0.0
  %478 = vmatmul.mubr.f32.gmra.mrb[0].mxu0 %v393
  %v479 = vpop.f32.mrb[0].mxu0
  %v480 = vadd.f32 %v381, %v479
  %v481 = vpop.f32.mrb[0].mxu0
  %482 = vmatprep.mubr.f32.mxu0 0.0
  %483 = vmatmul.mubr.f32.gmra.mrb[0].mxu0 %v396
  %v484 = vpop.f32.mrb[0].mxu0
  %v485 = vadd.f32 %v381, %v484
  %v486 = vpop.f32.mrb[0].mxu0
  %487 = vdwg.mxu0
  %v488 = vadd.f32 %v32, %v465
  %v489 = vadd.f32 %v33, %v470
  %v490 = vadd.f32 %v34, %v475
  %v491 = vadd.f32 %v35, %v480
  %v492 = vadd.f32 %v36, %v485
  %493 = vst.msk [vmem:[%s9] sm:$0xff] %vm39, %v488
  %494 = vst.msk [vmem:[%s9 + $0x8] sm:$0xff] %vm39, %v489
  %495 = vst.msk [vmem:[%s9 + $0x10] sm:$0xff] %vm39, %v490
  %496 = vst.msk [vmem:[%s9 + $0x18] sm:$0xff] %vm39, %v491
  %497 = vst.msk [vmem:[%s9 + $0x20] sm:$0xf] %vm52, %v492
  // Predicated region
  $region38: #{deep_msn_forward.7} parent=0 // pred_check
    _
  $region39: #{deep_msn_forward.7} parent=0 // pred_check_branch
    %499 = sbr.rel (0) target = $region41
  $region40: #{deep_msn_forward.7} parent=0 // pred_region
    _
  $region41: #{deep_msn_forward.7} parent=0 // pred_fallthru
    _
  // Predicated region
  $region42: #{deep_msn_forward.7} parent=0 // pred_check
    _
  $region43: #{deep_msn_forward.7} parent=0 // pred_check_branch
    %501 = sbr.rel (0) target = $region45
  $region44: #{deep_msn_forward.7} parent=0 // pred_region
    _
  $region45: #{deep_msn_forward.7} parent=0 // pred_fallthru
    _

// kernel: deep_msn_forward.9
$region0: #{deep_msn_forward.9}
  #allocation0 [shape = 'u32[]', space=smem, size = 0x4, offset = 0x4, fixed_abs, tag = 'smem constant byte address 0x4 - core index']
  #allocation1 [shape = 'u32[144,128]{1,0:T(1,128)}', space=vmem, size = 0x12000, scoped, tag = 'internal scratch']
  %s0 = inlined_call_operand.vmem [shape: f32[2,18,64], index: 0, kind: input, shape index: {}]
  %s1 = inlined_call_operand.vmem [shape: f32[1,64], index: 1, kind: input, shape index: {}]
  %s2 = inlined_call_operand.vmem [shape: f32[1,64], index: 2, kind: input, shape index: {}]
  %s3 = inlined_call_operand.vmem [shape: f32[64,192], index: 3, kind: input, shape index: {}]
  %s4 = inlined_call_operand.vmem [shape: f32[1,192], index: 4, kind: input, shape index: {}]
  %s5 = inlined_call_operand.vmem [shape: f32[64,64], index: 5, kind: input, shape index: {}]
  %s6 = inlined_call_operand.vmem [shape: f32[1,64], index: 6, kind: input, shape index: {}]
  %s7 = inlined_call_operand.vmem [shape: f32[1,64], index: 7, kind: input, shape index: {}]
  %s8 = inlined_call_operand.vmem [shape: f32[1,64], index: 8, kind: input, shape index: {}]
  %s9 = inlined_call_operand.vmem [shape: f32[64,256], index: 9, kind: input, shape index: {}]
  %s10 = inlined_call_operand.vmem [shape: f32[1,256], index: 10, kind: input, shape index: {}]
  %s11 = inlined_call_operand.vmem [shape: f32[128,64], index: 11, kind: input, shape index: {}]
  %s12 = inlined_call_operand.vmem [shape: f32[1,64], index: 12, kind: input, shape index: {}]
  %s13 = inlined_call_operand.vmem [shape: f32[2,18,64], index: 13, kind: output, shape index: {}]
  %s14 = sld [smem:[#allocation0]]
  $region85: #{deep_msn_forward.9} parent=0
    _
  %s16 = ssub.s32 1, %s14
  %s17 = scalar_select 0, %s16, %s14
  loop: start=0, step=1, limit=4
  $region2: #{deep_msn_forward.9} parent=0 // loop_pre_header
    _
  $region3: #{deep_msn_forward.9} parent=0 // loop_header
    %s19 = sphi 0, %s23
    %p20 = scmp.ge.s32.totalorder %s19, 4
    %s29 = sphi 0, %s31
    %s32 = sphi 0, %s29
    %s33 = sphi 0, %s32
    %s49 = sphi 0, %s33
    %s53 = sphi 0, %s53
    %s55 = sphi 0, %s53
    %s56 = sphi 0, %s55
    %s70 = sphi 0, %s56
    %s74 = sphi 0, %s74
    %s76 = sphi 0, %s74
    %s77 = sphi 0, %s76
    %s91 = sphi 0, %s77
    %s95 = sphi 0, %s95
    %s97 = sphi 0, %s95
    %s98 = sphi 0, %s97
    %s112 = sphi 0, %s98
    %s116 = sphi 0, %s116
    %s118 = sphi 0, %s116
    %s119 = sphi 0, %s118
    %s133 = sphi 0, %s119
    %s137 = sphi 0, %s137
    %s139 = sphi 0, %s137
    %s140 = sphi 0, %s139
    %s154 = sphi 0, %s140
    %s158 = sphi 0, %s158
    %s160 = sphi 0, %s158
    %s161 = sphi 0, %s160
    %s175 = sphi 0, %s161
    %s179 = sphi 0, %s179
    %s181 = sphi 0, %s179
    %s182 = sphi 0, %s181
    %s196 = sphi 0, %s182
    %s200 = sphi 0, %s200
    %s202 = sphi 0, %s200
    %s203 = sphi 0, %s202
    %s217 = sphi 0, %s203
    %s221 = sphi 0, %s221
    %s223 = sphi 0, %s221
    %s224 = sphi 0, %s223
    %s238 = sphi 0, %s224
    %s242 = sphi 0, %s242
    %s244 = sphi 0, %s242
    %s245 = sphi 0, %s244
    %s259 = sphi 0, %s245
    %s263 = sphi 0, %s263
    %s265 = sphi 0, %s263
    %s266 = sphi 0, %s265
    %s280 = sphi 0, %s266
    %s284 = sphi 0, %s284
    %s286 = sphi 0, %s284
    %s287 = sphi 0, %s286
    %s301 = sphi 0, %s287
    %s307 = sphi 0, %s309
    %s310 = sphi 0, %s307
    %s311 = sphi 0, %s310
    %s327 = sphi 0, %s311
  $region4: #{deep_msn_forward.9} parent=0 // loop_header_branch
    %22 = sbr.rel (%p20) target = $region8
  $region5: #{deep_msn_forward.9} parent=0 // loop_body
    %s24 = ssub.s32 %s19, 1
    %s25 = ssub.s32 %s19, 2
    %s26 = sadd.s32 %s19, 1
    %s27 = ssub.s32 %s19, %s26
    %p28 = scmp.eq.s32.totalorder %s27, 0
    %s30 = sadd.s32 %s29, 1
    %s31 = scalar_select %p28, %s29, %s30
    %p34 = pneg %p28
    %p35 = scmp.eq.s32.totalorder %s19, 1
    %p36 = por %p34, %p35
    %p37 = scmp.ne.s32.totalorder %s29, %s32
    %p38 = scmp.eq.s32.totalorder %s19, 0
    %p39 = por %p37, %p38
    %p40 = scmp.ne.s32.totalorder %s29, %s32
    %p41 = scmp.eq.s32.totalorder %s24, 1
    %p42 = por %p40, %p41
    %p43 = scmp.ne.s32.totalorder %s32, %s33
    %p44 = scmp.eq.s32.totalorder %s24, 0
    %p45 = por %p43, %p44
    %p46 = scmp.ne.s32.totalorder %s32, %s33
    %p47 = scmp.eq.s32.totalorder %s25, 1
    %p48 = por %p46, %p47
    %p50 = scmp.ne.s32.totalorder %s33, %s49
    %p51 = scmp.eq.s32.totalorder %s25, 0
    %p52 = por %p50, %p51
    %s54 = sadd.s32 %s53, 1
    %p57 = scmp.eq.s32.totalorder %s19, 1
    %p58 = scmp.ne.s32.totalorder %s53, %s55
    %p59 = scmp.eq.s32.totalorder %s19, 0
    %p60 = por %p58, %p59
    %p61 = scmp.ne.s32.totalorder %s53, %s55
    %p62 = scmp.eq.s32.totalorder %s24, 1
    %p63 = por %p61, %p62
    %p64 = scmp.ne.s32.totalorder %s55, %s56
    %p65 = scmp.eq.s32.totalorder %s24, 0
    %p66 = por %p64, %p65
    %p67 = scmp.ne.s32.totalorder %s55, %s56
    %p68 = scmp.eq.s32.totalorder %s25, 1
    %p69 = por %p67, %p68
    %p71 = scmp.ne.s32.totalorder %s56, %s70
    %p72 = scmp.eq.s32.totalorder %s25, 0
    %p73 = por %p71, %p72
    %s75 = sadd.s32 %s74, 1
    %p78 = scmp.eq.s32.totalorder %s19, 1
    %p79 = scmp.ne.s32.totalorder %s74, %s76
    %p80 = scmp.eq.s32.totalorder %s19, 0
    %p81 = por %p79, %p80
    %p82 = scmp.ne.s32.totalorder %s74, %s76
    %p83 = scmp.eq.s32.totalorder %s24, 1
    %p84 = por %p82, %p83
    %p85 = scmp.ne.s32.totalorder %s76, %s77
    %p86 = scmp.eq.s32.totalorder %s24, 0
    %p87 = por %p85, %p86
    %p88 = scmp.ne.s32.totalorder %s76, %s77
    %p89 = scmp.eq.s32.totalorder %s25, 1
    %p90 = por %p88, %p89
    %p92 = scmp.ne.s32.totalorder %s77, %s91
    %p93 = scmp.eq.s32.totalorder %s25, 0
    %p94 = por %p92, %p93
    %s96 = sadd.s32 %s95, 1
    %p99 = scmp.eq.s32.totalorder %s19, 1
    %p100 = scmp.ne.s32.totalorder %s95, %s97
    %p101 = scmp.eq.s32.totalorder %s19, 0
    %p102 = por %p100, %p101
    %p103 = scmp.ne.s32.totalorder %s95, %s97
    %p104 = scmp.eq.s32.totalorder %s24, 1
    %p105 = por %p103, %p104
    %p106 = scmp.ne.s32.totalorder %s97, %s98
    %p107 = scmp.eq.s32.totalorder %s24, 0
    %p108 = por %p106, %p107
    %p109 = scmp.ne.s32.totalorder %s97, %s98
    %p110 = scmp.eq.s32.totalorder %s25, 1
    %p111 = por %p109, %p110
    %p113 = scmp.ne.s32.totalorder %s98, %s112
    %p114 = scmp.eq.s32.totalorder %s25, 0
    %p115 = por %p113, %p114
    %s117 = sadd.s32 %s116, 1
    %p120 = scmp.eq.s32.totalorder %s19, 1
    %p121 = scmp.ne.s32.totalorder %s116, %s118
    %p122 = scmp.eq.s32.totalorder %s19, 0
    %p123 = por %p121, %p122
    %p124 = scmp.ne.s32.totalorder %s116, %s118
    %p125 = scmp.eq.s32.totalorder %s24, 1
    %p126 = por %p124, %p125
    %p127 = scmp.ne.s32.totalorder %s118, %s119
    %p128 = scmp.eq.s32.totalorder %s24, 0
    %p129 = por %p127, %p128
    %p130 = scmp.ne.s32.totalorder %s118, %s119
    %p131 = scmp.eq.s32.totalorder %s25, 1
    %p132 = por %p130, %p131
    %p134 = scmp.ne.s32.totalorder %s119, %s133
    %p135 = scmp.eq.s32.totalorder %s25, 0
    %p136 = por %p134, %p135
    %s138 = sadd.s32 %s137, 1
    %p141 = scmp.eq.s32.totalorder %s19, 1
    %p142 = scmp.ne.s32.totalorder %s137, %s139
    %p143 = scmp.eq.s32.totalorder %s19, 0
    %p144 = por %p142, %p143
    %p145 = scmp.ne.s32.totalorder %s137, %s139
    %p146 = scmp.eq.s32.totalorder %s24, 1
    %p147 = por %p145, %p146
    %p148 = scmp.ne.s32.totalorder %s139, %s140
    %p149 = scmp.eq.s32.totalorder %s24, 0
    %p150 = por %p148, %p149
    %p151 = scmp.ne.s32.totalorder %s139, %s140
    %p152 = scmp.eq.s32.totalorder %s25, 1
    %p153 = por %p151, %p152
    %p155 = scmp.ne.s32.totalorder %s140, %s154
    %p156 = scmp.eq.s32.totalorder %s25, 0
    %p157 = por %p155, %p156
    %s159 = sadd.s32 %s158, 1
    %p162 = scmp.eq.s32.totalorder %s19, 1
    %p163 = scmp.ne.s32.totalorder %s158, %s160
    %p164 = scmp.eq.s32.totalorder %s19, 0
    %p165 = por %p163, %p164
    %p166 = scmp.ne.s32.totalorder %s158, %s160
    %p167 = scmp.eq.s32.totalorder %s24, 1
    %p168 = por %p166, %p167
    %p169 = scmp.ne.s32.totalorder %s160, %s161
    %p170 = scmp.eq.s32.totalorder %s24, 0
    %p171 = por %p169, %p170
    %p172 = scmp.ne.s32.totalorder %s160, %s161
    %p173 = scmp.eq.s32.totalorder %s25, 1
    %p174 = por %p172, %p173
    %p176 = scmp.ne.s32.totalorder %s161, %s175
    %p177 = scmp.eq.s32.totalorder %s25, 0
    %p178 = por %p176, %p177
    %s180 = sadd.s32 %s179, 1
    %p183 = scmp.eq.s32.totalorder %s19, 1
    %p184 = scmp.ne.s32.totalorder %s179, %s181
    %p185 = scmp.eq.s32.totalorder %s19, 0
    %p186 = por %p184, %p185
    %p187 = scmp.ne.s32.totalorder %s179, %s181
    %p188 = scmp.eq.s32.totalorder %s24, 1
    %p189 = por %p187, %p188
    %p190 = scmp.ne.s32.totalorder %s181, %s182
    %p191 = scmp.eq.s32.totalorder %s24, 0
    %p192 = por %p190, %p191
    %p193 = scmp.ne.s32.totalorder %s181, %s182
    %p194 = scmp.eq.s32.totalorder %s25, 1
    %p195 = por %p193, %p194
    %p197 = scmp.ne.s32.totalorder %s182, %s196
    %p198 = scmp.eq.s32.totalorder %s25, 0
    %p199 = por %p197, %p198
    %s201 = sadd.s32 %s200, 1
    %p204 = scmp.eq.s32.totalorder %s19, 1
    %p205 = scmp.ne.s32.totalorder %s200, %s202
    %p206 = scmp.eq.s32.totalorder %s19, 0
    %p207 = por %p205, %p206
    %p208 = scmp.ne.s32.totalorder %s200, %s202
    %p209 = scmp.eq.s32.totalorder %s24, 1
    %p210 = por %p208, %p209
    %p211 = scmp.ne.s32.totalorder %s202, %s203
    %p212 = scmp.eq.s32.totalorder %s24, 0
    %p213 = por %p211, %p212
    %p214 = scmp.ne.s32.totalorder %s202, %s203
    %p215 = scmp.eq.s32.totalorder %s25, 1
    %p216 = por %p214, %p215
    %p218 = scmp.ne.s32.totalorder %s203, %s217
    %p219 = scmp.eq.s32.totalorder %s25, 0
    %p220 = por %p218, %p219
    %s222 = sadd.s32 %s221, 1
    %p225 = scmp.eq.s32.totalorder %s19, 1
    %p226 = scmp.ne.s32.totalorder %s221, %s223
    %p227 = scmp.eq.s32.totalorder %s19, 0
    %p228 = por %p226, %p227
    %p229 = scmp.ne.s32.totalorder %s221, %s223
    %p230 = scmp.eq.s32.totalorder %s24, 1
    %p231 = por %p229, %p230
    %p232 = scmp.ne.s32.totalorder %s223, %s224
    %p233 = scmp.eq.s32.totalorder %s24, 0
    %p234 = por %p232, %p233
    %p235 = scmp.ne.s32.totalorder %s223, %s224
    %p236 = scmp.eq.s32.totalorder %s25, 1
    %p237 = por %p235, %p236
    %p239 = scmp.ne.s32.totalorder %s224, %s238
    %p240 = scmp.eq.s32.totalorder %s25, 0
    %p241 = por %p239, %p240
    %s243 = sadd.s32 %s242, 1
    %p246 = scmp.eq.s32.totalorder %s19, 1
    %p247 = scmp.ne.s32.totalorder %s242, %s244
    %p248 = scmp.eq.s32.totalorder %s19, 0
    %p249 = por %p247, %p248
    %p250 = scmp.ne.s32.totalorder %s242, %s244
    %p251 = scmp.eq.s32.totalorder %s24, 1
    %p252 = por %p250, %p251
    %p253 = scmp.ne.s32.totalorder %s244, %s245
    %p254 = scmp.eq.s32.totalorder %s24, 0
    %p255 = por %p253, %p254
    %p256 = scmp.ne.s32.totalorder %s244, %s245
    %p257 = scmp.eq.s32.totalorder %s25, 1
    %p258 = por %p256, %p257
    %p260 = scmp.ne.s32.totalorder %s245, %s259
    %p261 = scmp.eq.s32.totalorder %s25, 0
    %p262 = por %p260, %p261
    %s264 = sadd.s32 %s263, 1
    %p267 = scmp.eq.s32.totalorder %s19, 1
    %p268 = scmp.ne.s32.totalorder %s263, %s265
    %p269 = scmp.eq.s32.totalorder %s19, 0
    %p270 = por %p268, %p269
    %p271 = scmp.ne.s32.totalorder %s263, %s265
    %p272 = scmp.eq.s32.totalorder %s24, 1
    %p273 = por %p271, %p272
    %p274 = scmp.ne.s32.totalorder %s265, %s266
    %p275 = scmp.eq.s32.totalorder %s24, 0
    %p276 = por %p274, %p275
    %p277 = scmp.ne.s32.totalorder %s265, %s266
    %p278 = scmp.eq.s32.totalorder %s25, 1
    %p279 = por %p277, %p278
    %p281 = scmp.ne.s32.totalorder %s266, %s280
    %p282 = scmp.eq.s32.totalorder %s25, 0
    %p283 = por %p281, %p282
    %s285 = sadd.s32 %s284, 1
    %p288 = scmp.eq.s32.totalorder %s19, 1
    %p289 = scmp.ne.s32.totalorder %s284, %s286
    %p290 = scmp.eq.s32.totalorder %s19, 0
    %p291 = por %p289, %p290
    %p292 = scmp.ne.s32.totalorder %s284, %s286
    %p293 = scmp.eq.s32.totalorder %s24, 1
    %p294 = por %p292, %p293
    %p295 = scmp.ne.s32.totalorder %s286, %s287
    %p296 = scmp.eq.s32.totalorder %s24, 0
    %p297 = por %p295, %p296
    %p298 = scmp.ne.s32.totalorder %s286, %s287
    %p299 = scmp.eq.s32.totalorder %s25, 1
    %p300 = por %p298, %p299
    %p302 = scmp.ne.s32.totalorder %s287, %s301
    %p303 = scmp.eq.s32.totalorder %s25, 0
    %p304 = por %p302, %p303
    %s305 = ssub.s32 %s19, %s26
    %p306 = scmp.eq.s32.totalorder %s305, 0
    %s308 = sadd.s32 %s307, 1
    %s309 = scalar_select %p306, %s307, %s308
    %p312 = pneg %p306
    %p313 = scmp.eq.s32.totalorder %s19, 1
    %p314 = por %p312, %p313
    %p315 = scmp.ne.s32.totalorder %s307, %s310
    %p316 = scmp.eq.s32.totalorder %s19, 0
    %p317 = por %p315, %p316
    %p318 = scmp.ne.s32.totalorder %s307, %s310
    %p319 = scmp.eq.s32.totalorder %s24, 1
    %p320 = por %p318, %p319
    %p321 = scmp.ne.s32.totalorder %s310, %s311
    %p322 = scmp.eq.s32.totalorder %s24, 0
    %p323 = por %p321, %p322
    %p324 = scmp.ne.s32.totalorder %s310, %s311
    %p325 = scmp.eq.s32.totalorder %s25, 1
    %p326 = por %p324, %p325
    %p328 = scmp.ne.s32.totalorder %s311, %s327
    %p329 = scmp.eq.s32.totalorder %s25, 0
    %p330 = por %p328, %p329
    %p331 = scmp.le.s32.totalorder 1, %s19
    %p332 = scmp.lt.s32.totalorder %s19, 3
    %p333 = pnand %p331, %p332
    %p334 = pneg %p333
    // Predicated region
    $region9: #{deep_msn_forward.9} parent=5 // pred_check
      _
    $region10: #{deep_msn_forward.9} parent=5 // pred_check_branch
      %336 = sbr.rel (%p333) target = $region12
    $region11: #{deep_msn_forward.9} parent=5 // pred_region
      %s337 = ssub.s32 %s19, 1
      // Predicated region
      $region13: #{deep_msn_forward.9} parent=11 // pred_check
        %p338 = pneg %p66
      $region14: #{deep_msn_forward.9} parent=11 // pred_check_branch
        %340 = sbr.rel (%p338) target = $region16
      $region15: #{deep_msn_forward.9} parent=11 // pred_region
        _
      $region16: #{deep_msn_forward.9} parent=11 // pred_fallthru
        _
      // Predicated region
      $region17: #{deep_msn_forward.9} parent=11 // pred_check
        %p341 = pneg %p87
      $region18: #{deep_msn_forward.9} parent=11 // pred_check_branch
        %343 = sbr.rel (%p341) target = $region20
      $region19: #{deep_msn_forward.9} parent=11 // pred_region
        _
      $region20: #{deep_msn_forward.9} parent=11 // pred_fallthru
        _
      // Predicated region
      $region21: #{deep_msn_forward.9} parent=11 // pred_check
        %p344 = pneg %p108
      $region22: #{deep_msn_forward.9} parent=11 // pred_check_branch
        %346 = sbr.rel (%p344) target = $region24
      $region23: #{deep_msn_forward.9} parent=11 // pred_region
        _
      $region24: #{deep_msn_forward.9} parent=11 // pred_fallthru
        _
      // Predicated region
      $region25: #{deep_msn_forward.9} parent=11 // pred_check
        %p347 = pneg %p129
      $region26: #{deep_msn_forward.9} parent=11 // pred_check_branch
        %349 = sbr.rel (%p347) target = $region28
      $region27: #{deep_msn_forward.9} parent=11 // pred_region
        _
      $region28: #{deep_msn_forward.9} parent=11 // pred_fallthru
        _
      // Predicated region
      $region29: #{deep_msn_forward.9} parent=11 // pred_check
        %p350 = pneg %p150
      $region30: #{deep_msn_forward.9} parent=11 // pred_check_branch
        %352 = sbr.rel (%p350) target = $region32
      $region31: #{deep_msn_forward.9} parent=11 // pred_region
        _
      $region32: #{deep_msn_forward.9} parent=11 // pred_fallthru
        _
      // Predicated region
      $region33: #{deep_msn_forward.9} parent=11 // pred_check
        %p353 = pneg %p171
      $region34: #{deep_msn_forward.9} parent=11 // pred_check_branch
        %355 = sbr.rel (%p353) target = $region36
      $region35: #{deep_msn_forward.9} parent=11 // pred_region
        _
      $region36: #{deep_msn_forward.9} parent=11 // pred_fallthru
        _
      // Predicated region
      $region37: #{deep_msn_forward.9} parent=11 // pred_check
        %p356 = pneg %p192
      $region38: #{deep_msn_forward.9} parent=11 // pred_check_branch
        %358 = sbr.rel (%p356) target = $region40
      $region39: #{deep_msn_forward.9} parent=11 // pred_region
        _
      $region40: #{deep_msn_forward.9} parent=11 // pred_fallthru
        _
      // Predicated region
      $region41: #{deep_msn_forward.9} parent=11 // pred_check
        %p359 = pneg %p213
      $region42: #{deep_msn_forward.9} parent=11 // pred_check_branch
        %361 = sbr.rel (%p359) target = $region44
      $region43: #{deep_msn_forward.9} parent=11 // pred_region
        _
      $region44: #{deep_msn_forward.9} parent=11 // pred_fallthru
        _
      // Predicated region
      $region45: #{deep_msn_forward.9} parent=11 // pred_check
        %p362 = pneg %p234
      $region46: #{deep_msn_forward.9} parent=11 // pred_check_branch
        %364 = sbr.rel (%p362) target = $region48
      $region47: #{deep_msn_forward.9} parent=11 // pred_region
        _
      $region48: #{deep_msn_forward.9} parent=11 // pred_fallthru
        _
      // Predicated region
      $region49: #{deep_msn_forward.9} parent=11 // pred_check
        %p365 = pneg %p255
      $region50: #{deep_msn_forward.9} parent=11 // pred_check_branch
        %367 = sbr.rel (%p365) target = $region52
      $region51: #{deep_msn_forward.9} parent=11 // pred_region
        _
      $region52: #{deep_msn_forward.9} parent=11 // pred_fallthru
        _
      // Predicated region
      $region53: #{deep_msn_forward.9} parent=11 // pred_check
        %p368 = pneg %p276
      $region54: #{deep_msn_forward.9} parent=11 // pred_check_branch
        %370 = sbr.rel (%p368) target = $region56
      $region55: #{deep_msn_forward.9} parent=11 // pred_region
        _
      $region56: #{deep_msn_forward.9} parent=11 // pred_fallthru
        _
      // Predicated region
      $region57: #{deep_msn_forward.9} parent=11 // pred_check
        %p371 = pneg %p297
      $region58: #{deep_msn_forward.9} parent=11 // pred_check_branch
        %373 = sbr.rel (%p371) target = $region60
      $region59: #{deep_msn_forward.9} parent=11 // pred_region
        _
      $region60: #{deep_msn_forward.9} parent=11 // pred_fallthru
        _
    $region12: #{deep_msn_forward.9} parent=5 // pred_fallthru
      _
    %p374 = scmp.lt.s32.totalorder %s19, 2
    // Predicated region
    $region61: #{deep_msn_forward.9} parent=5 // pred_check
      %p375 = pneg %p374
    $region62: #{deep_msn_forward.9} parent=5 // pred_check_branch
      %377 = sbr.rel (%p375) target = $region64
    $region63: #{deep_msn_forward.9} parent=5 // pred_region
      // Predicated region
      $region65: #{deep_msn_forward.9} parent=63 // pred_check
        %p378 = pneg %p39
      $region66: #{deep_msn_forward.9} parent=63 // pred_check_branch
        %380 = sbr.rel (%p378) target = $region68
      $region67: #{deep_msn_forward.9} parent=63 // pred_region
        %p381 = scmp.lt.s32.totalorder %s19, 1
        %s382 = scalar_select %p381, %s19, 1
        %s383 = smul.addr %s382, 3
        %s384 = smul.addr %s383, 8
        %s385 = scalar_lea.vmem %s0, %s384
      $region68: #{deep_msn_forward.9} parent=63 // pred_fallthru
        _
    $region64: #{deep_msn_forward.9} parent=5 // pred_fallthru
      _
    %p386 = scmp.le.s32.totalorder 1, %s19
    %p387 = scmp.lt.s32.totalorder %s19, 3
    %p388 = pnand %p386, %p387
    %p389 = pneg %p388
    // Predicated region
    $region69: #{deep_msn_forward.9} parent=5 // pred_check
      _
    $region70: #{deep_msn_forward.9} parent=5 // pred_check_branch
      %391 = sbr.rel (%p388) target = $region72
    $region71: #{deep_msn_forward.9} parent=5 // pred_region
      %s392 = ssub.s32 %s19, 1
      %p393 = scmp.lt.s32.totalorder %s24, 1
      %s394 = scalar_select %p393, %s24, 1
      %s395 = smul.addr %s394, 3
      %s396 = smul.addr %s395, 8
      %s397 = scalar_lea.vmem %s0, %s396
      %p398 = pneg %p45
      %p399 = pneg %p42
      %p400 = pneg %p66
      %p401 = pneg %p63
      %p402 = pneg %p87
      %p403 = pneg %p84
      %p404 = pneg %p108
      %p405 = pneg %p105
      %p406 = pneg %p129
      %p407 = pneg %p126
      %p408 = pneg %p150
      %p409 = pneg %p147
      %p410 = pneg %p171
      %p411 = pneg %p168
      %p412 = pneg %p192
      %p413 = pneg %p189
      %p414 = pneg %p213
      %p415 = pneg %p210
      %p416 = pneg %p234
      %p417 = pneg %p231
      %p418 = pneg %p255
      %p419 = pneg %p252
      %p420 = pneg %p276
      %p421 = pneg %p273
      %p422 = pneg %p297
      %p423 = pneg %p294
      %p424 = pneg %p323
      %p425 = pneg %p320
      %p426 = scmp.lt.s32.totalorder %s24, 1
      %s427 = scalar_select %p426, %s24, 1
      %s428 = smul.addr %s427, 3
      %s429 = smul.addr %s428, 8
      %s430 = scalar_lea.vmem %s13, %s429
      %p431 = scmp.lt.s32.totalorder %s24, 1
      %s432 = scalar_select %p431, %s24, 1
      %s433 = smul.addr %s432, 3
      %s434 = smul.addr %s433, 8
      %s435 = scalar_lea.vmem %s0, %s434
      %p436 = scmp.lt.s32.totalorder %s24, 1
      %s437 = scalar_select %p436, %s24, 1
      %s438 = smul.addr %s437, 3
      %s439 = smul.addr %s438, 8
      %s440 = scalar_lea.vmem %s13, %s439
      %v441 = vld [vmem:[%s435] sm:$0xff]
      %v442 = vld [vmem:[%s435 + $0x8] sm:$0xff]
      %v443 = vld [vmem:[%s435 + $0x10] sm:$0x3]
      %v444 = vld [vmem:[%s1] sm:$0x1]
      %v445 = vld [vmem:[%s2] sm:$0x1]
      %vm446 = vcmask 523264
      %v447 = vsel %vm446, %v441, 0.0
      %448 = vadd.xlane.f32.xlu0 %v447
      %v449 = vpop.xlane.xlu0 %448
      %v450 = vsel %vm446, %v442, 0.0
      %451 = vadd.xlane.f32.xlu0 %v450
      %v452 = vpop.xlane.xlu0 %451
      %vm453 = vcmask 517120
      %v454 = vsel %vm453, %v443, 0.0
      %455 = vadd.xlane.f32.xlu0 %v454
      %v456 = vpop.xlane.xlu0 %455
      %v457 = vrcp.pop 64.0
      %v458 = vmul.f32 %v449, %v457
      %v459 = vmul.f32 %v452, %v457
      %v460 = vmul.f32 %v456, %v457
      %v461 = vsub.f32 %v441, %v458
      %v462 = vsub.f32 %v442, %v459
      %v463 = vsub.f32 %v443, %v460
      %v464 = vmul.f32 %v461, %v461
      %v465 = vmul.f32 %v462, %v462
      %v466 = vmul.f32 %v463, %v463
      %v467 = vsel %vm446, %v464, 0.0
      %468 = vadd.xlane.f32.xlu0 %v467
      %v469 = vpop.xlane.xlu0 %468
      %v470 = vsel %vm446, %v465, 0.0
      %471 = vadd.xlane.f32.xlu0 %v470
      %v472 = vpop.xlane.xlu0 %471
      %v473 = vsel %vm453, %v466, 0.0
      %474 = vadd.xlane.f32.xlu0 %v473
      %v475 = vpop.xlane.xlu0 %474
      %v476 = vmul.f32 %v469, %v457
      %v477 = vmul.f32 %v472, %v457
      %v478 = vmul.f32 %v475, %v457
      %v479 = vadd.f32 %v476, 1e-05
      %v480 = vadd.f32 %v477, 1e-05
      %v481 = vadd.f32 %v478, 1e-05
      %v482 = vrsqrt.pop %v479
      %v483 = vrsqrt.pop %v480
      %v484 = vrsqrt.pop %v481
      %v485 = vmul.f32 %v461, %v482
      %v486 = vmul.f32 %v462, %v483
      %v487 = vmul.f32 %v463, %v484
      %v489 = vlaneseq
      %v490 = vshrl.u32 %v489, 7
      %v491 = vsub.s32 0, %v490
      %v492 = vrot.slane %v444, %v491
      %v494 = vmul.f32 %v485, %v492
      %v495 = vmul.f32 %v486, %v492
      %v496 = vmul.f32 %v487, %v492
      %v498 = vlaneseq
      %v499 = vshrl.u32 %v498, 7
      %v500 = vsub.s32 0, %v499
      %v501 = vrot.slane %v445, %v500
      %v503 = vadd.f32 %v494, %v501
      %v504 = vadd.f32 %v495, %v501
      %v505 = vadd.f32 %v496, %v501
      %v506 = vld [vmem:[%s3] sm:$0xff]
      %v507 = vld [vmem:[%s3 + $0x8] sm:$0xff]
      %v508 = vld [vmem:[%s3 + $0x10] sm:$0xff]
      %v509 = vld [vmem:[%s3 + $0x18] sm:$0xff]
      %v510 = vld [vmem:[%s3 + $0x20] sm:$0xff]
      %v511 = vld [vmem:[%s3 + $0x28] sm:$0xff]
      %v512 = vld [vmem:[%s3 + $0x30] sm:$0xff]
      %v513 = vld [vmem:[%s3 + $0x38] sm:$0xff]
      %v514 = vld [vmem:[%s3 + $0x40] sm:$0xff]
      %v515 = vld [vmem:[%s3 + $0x48] sm:$0xff]
      %v516 = vld [vmem:[%s3 + $0x50] sm:$0xff]
      %v517 = vld [vmem:[%s3 + $0x58] sm:$0xff]
      %v518 = vld [vmem:[%s3 + $0x60] sm:$0xff]
      %v519 = vld [vmem:[%s3 + $0x68] sm:$0xff]
      %v520 = vld [vmem:[%s3 + $0x70] sm:$0xff]
      %v521 = vld [vmem:[%s3 + $0x78] sm:$0xff]
      %v522 = vld [vmem:[%s4] sm:$0x3]
      %v524 = vlaneseq
      %v525 = vshrl.u32 %v524, 7
      %v526 = vsub.s32 0, %v525
      %v527 = vrot.slane %v522, %v526
      %v528 = vlaneseq
      %v529 = vshrl.u32 %v528, 7
      %v530 = vsub.s32 1, %v529
      %v531 = vrot.slane %v522, %v530
      %v535 = vsel %vm446, %v503, 0
      %v538 = vsel %vm446, %v504, 0
      %v541 = vsel %vm446, %v505, 0
      %543 = vmatprep.subr.mxu0 %v507
      %544 = vmatpush1.msra.mxu0 %v506
      %545 = vmatprep.subr.mxu0 %v509
      %546 = vmatpush1.msra.mxu0 %v508
      %547 = vmatprep.subr.mxu0 %v511
      %548 = vmatpush1.msra.mxu0 %v510
      %549 = vmatprep.subr.mxu0 %v513
      %550 = vmatpush1.msra.mxu0 %v512
      %551 = vmatprep.subr.mxu0 %v515
      %552 = vmatpush1.msra.mxu0 %v514
      %553 = vmatprep.subr.mxu0 %v517
      %554 = vmatpush1.msra.mxu0 %v516
      %555 = vmatprep.subr.mxu0 %v519
      %556 = vmatpush1.msra.mxu0 %v518
      %557 = vmatprep.subr.mxu0 %v521
      %558 = vmatpush1.msra.mxu0 %v520
      %559 = vmatprep.subr.mxu0 0.0
      %560 = vmatpush1.msra.mxu0 0.0
      %561 = vmatprep.subr.mxu0 0.0
      %562 = vmatpush1.msra.mxu0 0.0
      %563 = vmatprep.subr.mxu0 0.0
      %564 = vmatpush1.msra.mxu0 0.0
      %565 = vmatprep.subr.mxu0 0.0
      %566 = vmatpush1.msra.mxu0 0.0
      %567 = vmatprep.subr.mxu0 0.0
      %568 = vmatpush1.msra.mxu0 0.0
      %569 = vmatprep.subr.mxu0 0.0
      %570 = vmatpush1.msra.mxu0 0.0
      %571 = vmatprep.subr.mxu0 0.0
      %572 = vmatpush1.msra.mxu0 0.0
      %573 = vmatprep.subr.mxu0 0.0
      %574 = vmatpush1.msra.mxu0 0.0
      %575 = vmatprep.subr.mxu0 0.0
      %576 = vmatpush1.msra.mxu0 0.0
      %577 = vmatprep.subr.mxu0 0.0
      %578 = vmatpush1.msra.mxu0 0.0
      %579 = vmatprep.subr.mxu0 0.0
      %580 = vmatpush1.msra.mxu0 0.0
      %581 = vmatprep.subr.mxu0 0.0
      %582 = vmatpush1.msra.mxu0 0.0
      %583 = vmatprep.subr.mxu0 0.0
      %584 = vmatpush1.msra.mxu0 0.0
      %585 = vmatprep.subr.mxu0 0.0
      %586 = vmatpush1.msra.mxu0 0.0
      %587 = vmatprep.subr.mxu0 0.0
      %588 = vmatpush1.msra.mxu0 0.0
      %589 = vmatprep.subr.mxu0 0.0
      %590 = vmatpush1.msra.mxu0 0.0
      %591 = vmatprep.subr.mxu0 0.0
      %592 = vmatpush1.msra.mxu0 0.0
      %593 = vmatprep.subr.mxu0 0.0
      %594 = vmatpush1.msra.mxu0 0.0
      %595 = vmatprep.subr.mxu0 0.0
      %596 = vmatpush1.msra.mxu0 0.0
      %597 = vmatprep.subr.mxu0 0.0
      %598 = vmatpush1.msra.mxu0 0.0
      %599 = vmatprep.subr.mxu0 0.0
      %600 = vmatpush1.msra.mxu0 0.0
      %601 = vmatprep.subr.mxu0 0.0
      %602 = vmatpush1.msra.mxu0 0.0
      %603 = vmatprep.subr.mxu0 0.0
      %604 = vmatpush1.msra.mxu0 0.0
      %605 = vmatprep.subr.mxu0 0.0
      %606 = vmatpush1.msra.mxu0 0.0
      %607 = vmatprep.mubr.f32.mxu0 0.0
      %608 = vmatmul.mubr.f32.gmra.mrb[0].mxu0 %v535
      %v609 = vpop.f32.mrb[0].mxu0
      %v610 = vadd.f32 %v527, %v609
      %v611 = vpop.f32.mrb[0].mxu0
      %v612 = vadd.f32 %v531, %v611
      %613 = vmatprep.mubr.f32.mxu0 0.0
      %614 = vmatmul.mubr.f32.gmra.mrb[0].mxu0 %v538
      %v615 = vpop.f32.mrb[0].mxu0
      %v616 = vadd.f32 %v527, %v615
      %v617 = vpop.f32.mrb[0].mxu0
      %v618 = vadd.f32 %v531, %v617
      %619 = vmatprep.mubr.f32.mxu0 0.0
      %620 = vmatmul.mubr.f32.gmra.mrb[0].mxu0 %v541
      %v621 = vpop.f32.mrb[0].mxu0
      %v622 = vadd.f32 %v527, %v621
      %v623 = vpop.f32.mrb[0].mxu0
      %v624 = vadd.f32 %v531, %v623
      %625 = vdwg.mxu0
      %v626 = vld [vmem:[%s5] sm:$0xff]
      %v627 = vld [vmem:[%s5 + $0x8] sm:$0xff]
      %v628 = vld [vmem:[%s5 + $0x10] sm:$0xff]
      %v629 = vld [vmem:[%s5 + $0x18] sm:$0xff]
      %v630 = vld [vmem:[%s5 + $0x20] sm:$0xff]
      %v631 = vld [vmem:[%s5 + $0x28] sm:$0xff]
      %v632 = vld [vmem:[%s5 + $0x30] sm:$0xff]
      %v633 = vld [vmem:[%s5 + $0x38] sm:$0xff]
      %v634 = vmul.f32 %v610, 0.35355338
      %v635 = vmul.f32 %v616, 0.35355338
      %v636 = vmul.f32 %v622, 0.35355338
      %640 = vrot.lane.b32.xlu0 %v610, 64
      %v641 = vpop.permute.xlu0 %640
      %642 = vrot.lane.b32.xlu0 %v616, 64
      %v643 = vpop.permute.xlu0 %642
      %644 = vrot.lane.b32.xlu0 %v622, 64
      %v645 = vpop.permute.xlu0 %644
      %vm646 = vcmask 64512
      %v648 = vsel %vm646, %v634, 0
      %v651 = vsel %vm646, %v635, 0
      %v654 = vsel %vm646, %v636, 0
      %v656 = vsel %vm646, %v641, 0
      %v658 = vsel %vm646, %v643, 0
      %v660 = vsel %vm646, %v645, 0
      %662 = vmatprep.subr.mxu0 0.0
      %663 = vmatpush1.xpose.msra.mxu0 %v656
      %664 = vmatprep.subr.mxu0 0.0
      %665 = vmatpush1.xpose.msra.mxu0 %v658
      %666 = vmatprep.subr.mxu0 0.0
      %667 = vmatpush1.xpose.msra.mxu0 %v660
      %668 = vmatprep.subr.mxu0 0.0
      %669 = vmatpush1.xpose.msra.mxu0 0.0
      %670 = vmatprep.subr.mxu0 0.0
      %671 = vmatpush1.xpose.msra.mxu0 0.0
      %672 = vmatprep.subr.mxu0 0.0
      %673 = vmatpush1.xpose.msra.mxu0 0.0
      %674 = vmatprep.subr.mxu0 0.0
      %675 = vmatpush1.xpose.msra.mxu0 0.0
      %676 = vmatprep.subr.mxu0 0.0
      %677 = vmatpush1.xpose.msra.mxu0 0.0
      %678 = vmatprep.subr.mxu0 0.0
      %679 = vmatpush1.xpose.msra.mxu0 0.0
      %680 = vmatprep.subr.mxu0 0.0
      %681 = vmatpush1.xpose.msra.mxu0 0.0
      %682 = vmatprep.subr.mxu0 0.0
      %683 = vmatpush1.xpose.msra.mxu0 0.0
      %684 = vmatprep.subr.mxu0 0.0
      %685 = vmatpush1.xpose.msra.mxu0 0.0
      %686 = vmatprep.subr.mxu0 0.0
      %687 = vmatpush1.xpose.msra.mxu0 0.0
      %688 = vmatprep.subr.mxu0 0.0
      %689 = vmatpush1.xpose.msra.mxu0 0.0
      %690 = vmatprep.subr.mxu0 0.0
      %691 = vmatpush1.xpose.msra.mxu0 0.0
      %692 = vmatprep.subr.mxu0 0.0
      %693 = vmatpush1.xpose.msra.mxu0 0.0
      %694 = vmatprep.subr.mxu0 0.0
      %695 = vmatpush1.xpose.msra.mxu0 0.0
      %696 = vmatprep.subr.mxu0 0.0
      %697 = vmatpush1.xpose.msra.mxu0 0.0
      %698 = vmatprep.subr.mxu0 0.0
      %699 = vmatpush1.xpose.msra.mxu0 0.0
      %700 = vmatprep.subr.mxu0 0.0
      %701 = vmatpush1.xpose.msra.mxu0 0.0
      %702 = vmatprep.subr.mxu0 0.0
      %703 = vmatpush1.xpose.msra.mxu0 0.0
      %704 = vmatprep.subr.mxu0 0.0
      %705 = vmatpush1.xpose.msra.mxu0 0.0
      %706 = vmatprep.subr.mxu0 0.0
      %707 = vmatpush1.xpose.msra.mxu0 0.0
      %708 = vmatprep.subr.mxu0 0.0
      %709 = vmatpush1.xpose.msra.mxu0 0.0
      %710 = vmatprep.subr.mxu0 0.0
      %711 = vmatpush1.xpose.msra.mxu0 0.0
      %712 = vmatprep.subr.mxu0 0.0
      %713 = vmatpush1.xpose.msra.mxu0 0.0
      %714 = vmatprep.subr.mxu0 0.0
      %715 = vmatpush1.xpose.msra.mxu0 0.0
      %716 = vmatprep.subr.mxu0 0.0
      %717 = vmatpush1.xpose.msra.mxu0 0.0
      %718 = vmatprep.subr.mxu0 0.0
      %719 = vmatpush1.xpose.msra.mxu0 0.0
      %720 = vmatprep.subr.mxu0 0.0
      %721 = vmatpush1.xpose.msra.mxu0 0.0
      %722 = vmatprep.subr.mxu0 0.0
      %723 = vmatpush1.xpose.msra.mxu0 0.0
      %724 = vmatprep.subr.mxu0 0.0
      %725 = vmatpush1.xpose.msra.mxu0 0.0
      %726 = vmatprep.mubr.f32.mxu0 0.0
      %727 = vmatmul.mubr.f32.gmra.mrb[0].mxu0 %v648
      %v728 = vpop.f32.mrb[0].mxu0
      %v729 = vadd.f32 0.0, %v728
      %v730 = vpop.f32.mrb[0].mxu0
      %731 = vmatprep.mubr.f32.mxu0 0.0
      %732 = vmatmul.mubr.f32.gmra.mrb[0].mxu0 %v651
      %v733 = vpop.f32.mrb[0].mxu0
      %v734 = vadd.f32 0.0, %v733
      %v735 = vpop.f32.mrb[0].mxu0
      %736 = vmatprep.mubr.f32.mxu0 0.0
      %737 = vmatmul.mubr.f32.gmra.mrb[0].mxu0 %v654
      %v738 = vpop.f32.mrb[0].mxu0
      %v739 = vadd.f32 0.0, %v738
      %v740 = vpop.f32.mrb[0].mxu0
      %741 = vdwg.mxu0
      %vm742 = vcmask 146432
      %v743 = vsel %vm742, %v729, -inf
      %744 = vmax.xlane.f32.xlu0 %v743
      %v745 = vpop.xlane.xlu0 %744
      %v746 = vsel %vm742, %v734, -inf
      %747 = vmax.xlane.f32.xlu0 %v746
      %v748 = vpop.xlane.xlu0 %747
      %vm749 = vcmask 140288
      %v750 = vsel %vm749, %v739, -inf
      %751 = vmax.xlane.f32.xlu0 %v750
      %v752 = vpop.xlane.xlu0 %751
      %v753 = vsub.f32 %v729, %v745
      %v754 = vsub.f32 %v734, %v748
      %v755 = vsub.f32 %v739, %v752
      %v756 = vmul.f32 %v753, 1.442695
      %v757 = vpow.pop %v756
      %v758 = vmul.f32 %v754, 1.442695
      %v759 = vpow.pop %v758
      %v760 = vmul.f32 %v755, 1.442695
      %v761 = vpow.pop %v760
      %v762 = vsel %vm742, %v757, 0.0
      %763 = vadd.xlane.f32.xlu0 %v762
      %v764 = vpop.xlane.xlu0 %763
      %v765 = vsel %vm742, %v759, 0.0
      %766 = vadd.xlane.f32.xlu0 %v765
      %v767 = vpop.xlane.xlu0 %766
      %v768 = vsel %vm749, %v761, 0.0
      %769 = vadd.xlane.f32.xlu0 %v768
      %v770 = vpop.xlane.xlu0 %769
      %v771 = vrcp.pop %v764
      %v772 = vrcp.pop %v767
      %v773 = vrcp.pop %v770
      %v774 = vmul.f32 %v757, %v771
      %v775 = vmul.f32 %v759, %v772
      %v776 = vmul.f32 %v761, %v773
      %v778 = vsel %vm742, %v774, 0
      %v781 = vsel %vm742, %v775, 0
      %v784 = vsel %vm742, %v776, 0
      %vm786 = vcmask 1041408
      %v788 = vsel %vm786, %v624, 0
      %790 = vmatprep.subr.mxu0 0.0
      %791 = vmatpush1.msra.mxu0 %v612
      %792 = vmatprep.subr.mxu0 0.0
      %793 = vmatpush1.msra.mxu0 %v618
      %794 = vmatprep.subr.mxu0 0.0
      %795 = vmatpush1.msra.mxu0 %v788
      %796 = vmatprep.subr.mxu0 0.0
      %797 = vmatpush1.msra.mxu0 0.0
      %798 = vmatprep.subr.mxu0 0.0
      %799 = vmatpush1.msra.mxu0 0.0
      %800 = vmatprep.subr.mxu0 0.0
      %801 = vmatpush1.msra.mxu0 0.0
      %802 = vmatprep.subr.mxu0 0.0
      %803 = vmatpush1.msra.mxu0 0.0
      %804 = vmatprep.subr.mxu0 0.0
      %805 = vmatpush1.msra.mxu0 0.0
      %806 = vmatprep.subr.mxu0 0.0
      %807 = vmatpush1.msra.mxu0 0.0
      %808 = vmatprep.subr.mxu0 0.0
      %809 = vmatpush1.msra.mxu0 0.0
      %810 = vmatprep.subr.mxu0 0.0
      %811 = vmatpush1.msra.mxu0 0.0
      %812 = vmatprep.subr.mxu0 0.0
      %813 = vmatpush1.msra.mxu0 0.0
      %814 = vmatprep.subr.mxu0 0.0
      %815 = vmatpush1.msra.mxu0 0.0
      %816 = vmatprep.subr.mxu0 0.0
      %817 = vmatpush1.msra.mxu0 0.0
      %818 = vmatprep.subr.mxu0 0.0
      %819 = vmatpush1.msra.mxu0 0.0
      %820 = vmatprep.subr.mxu0 0.0
      %821 = vmatpush1.msra.mxu0 0.0
      %822 = vmatprep.subr.mxu0 0.0
      %823 = vmatpush1.msra.mxu0 0.0
      %824 = vmatprep.subr.mxu0 0.0
      %825 = vmatpush1.msra.mxu0 0.0
      %826 = vmatprep.subr.mxu0 0.0
      %827 = vmatpush1.msra.mxu0 0.0
      %828 = vmatprep.subr.mxu0 0.0
      %829 = vmatpush1.msra.mxu0 0.0
      %830 = vmatprep.subr.mxu0 0.0
      %831 = vmatpush1.msra.mxu0 0.0
      %832 = vmatprep.subr.mxu0 0.0
      %833 = vmatpush1.msra.mxu0 0.0
      %834 = vmatprep.subr.mxu0 0.0
      %835 = vmatpush1.msra.mxu0 0.0
      %836 = vmatprep.subr.mxu0 0.0
      %837 = vmatpush1.msra.mxu0 0.0
      %838 = vmatprep.subr.mxu0 0.0
      %839 = vmatpush1.msra.mxu0 0.0
      %840 = vmatprep.subr.mxu0 0.0
      %841 = vmatpush1.msra.mxu0 0.0
      %842 = vmatprep.subr.mxu0 0.0
      %843 = vmatpush1.msra.mxu0 0.0
      %844 = vmatprep.subr.mxu0 0.0
      %845 = vmatpush1.msra.mxu0 0.0
      %846 = vmatprep.subr.mxu0 0.0
      %847 = vmatpush1.msra.mxu0 0.0
      %848 = vmatprep.subr.mxu0 0.0
      %849 = vmatpush1.msra.mxu0 0.0
      %850 = vmatprep.subr.mxu0 0.0
      %851 = vmatpush1.msra.mxu0 0.0
      %852 = vmatprep.subr.mxu0 0.0
      %853 = vmatpush1.msra.mxu0 0.0
      %854 = vmatprep.mubr.f32.mxu0 0.0
      %855 = vmatmul.mubr.f32.gmra.mrb[0].mxu0 %v778
      %v856 = vpop.f32.mrb[0].mxu0
      %v857 = vadd.f32 0.0, %v856
      %v858 = vpop.f32.mrb[0].mxu0
      %859 = vmatprep.mubr.f32.mxu0 0.0
      %860 = vmatmul.mubr.f32.gmra.mrb[0].mxu0 %v781
      %v861 = vpop.f32.mrb[0].mxu0
      %v862 = vadd.f32 0.0, %v861
      %v863 = vpop.f32.mrb[0].mxu0
      %864 = vmatprep.mubr.f32.mxu0 0.0
      %865 = vmatmul.mubr.f32.gmra.mrb[0].mxu0 %v784
      %v866 = vpop.f32.mrb[0].mxu0
      %v867 = vadd.f32 0.0, %v866
      %v868 = vpop.f32.mrb[0].mxu0
      %869 = vdwg.mxu0
      %870 = vrot.lane.b32.xlu0 %v634, 120
      %v871 = vpop.permute.xlu0 %870
      %872 = vrot.lane.b32.xlu0 %v635, 120
      %v873 = vpop.permute.xlu0 %872
      %874 = vrot.lane.b32.xlu0 %v636, 120
      %v875 = vpop.permute.xlu0 %874
      %876 = vrot.lane.b32.xlu0 %v610, 56
      %v877 = vpop.permute.xlu0 %876
      %878 = vrot.lane.b32.xlu0 %v616, 56
      %v879 = vpop.permute.xlu0 %878
      %880 = vrot.lane.b32.xlu0 %v622, 56
      %v881 = vpop.permute.xlu0 %880
      %v882 = vsel %vm646, %v871, 0
      %v884 = vsel %vm646, %v873, 0
      %v886 = vsel %vm646, %v875, 0
      %v888 = vsel %vm646, %v877, 0
      %v890 = vsel %vm646, %v879, 0
      %v892 = vsel %vm646, %v881, 0
      %894 = vmatprep.subr.mxu0 0.0
      %895 = vmatpush1.xpose.msra.mxu0 %v888
      %896 = vmatprep.subr.mxu0 0.0
      %897 = vmatpush1.xpose.msra.mxu0 %v890
      %898 = vmatprep.subr.mxu0 0.0
      %899 = vmatpush1.xpose.msra.mxu0 %v892
      %900 = vmatprep.subr.mxu0 0.0
      %901 = vmatpush1.xpose.msra.mxu0 0.0
      %902 = vmatprep.subr.mxu0 0.0
      %903 = vmatpush1.xpose.msra.mxu0 0.0
      %904 = vmatprep.subr.mxu0 0.0
      %905 = vmatpush1.xpose.msra.mxu0 0.0
      %906 = vmatprep.subr.mxu0 0.0
      %907 = vmatpush1.xpose.msra.mxu0 0.0
      %908 = vmatprep.subr.mxu0 0.0
      %909 = vmatpush1.xpose.msra.mxu0 0.0
      %910 = vmatprep.subr.mxu0 0.0
      %911 = vmatpush1.xpose.msra.mxu0 0.0
      %912 = vmatprep.subr.mxu0 0.0
      %913 = vmatpush1.xpose.msra.mxu0 0.0
      %914 = vmatprep.subr.mxu0 0.0
      %915 = vmatpush1.xpose.msra.mxu0 0.0
      %916 = vmatprep.subr.mxu0 0.0
      %917 = vmatpush1.xpose.msra.mxu0 0.0
      %918 = vmatprep.subr.mxu0 0.0
      %919 = vmatpush1.xpose.msra.mxu0 0.0
      %920 = vmatprep.subr.mxu0 0.0
      %921 = vmatpush1.xpose.msra.mxu0 0.0
      %922 = vmatprep.subr.mxu0 0.0
      %923 = vmatpush1.xpose.msra.mxu0 0.0
      %924 = vmatprep.subr.mxu0 0.0
      %925 = vmatpush1.xpose.msra.mxu0 0.0
      %926 = vmatprep.subr.mxu0 0.0
      %927 = vmatpush1.xpose.msra.mxu0 0.0
      %928 = vmatprep.subr.mxu0 0.0
      %929 = vmatpush1.xpose.msra.mxu0 0.0
      %930 = vmatprep.subr.mxu0 0.0
      %931 = vmatpush1.xpose.msra.mxu0 0.0
      %932 = vmatprep.subr.mxu0 0.0
      %933 = vmatpush1.xpose.msra.mxu0 0.0
      %934 = vmatprep.subr.mxu0 0.0
      %935 = vmatpush1.xpose.msra.mxu0 0.0
      %936 = vmatprep.subr.mxu0 0.0
      %937 = vmatpush1.xpose.msra.mxu0 0.0
      %938 = vmatprep.subr.mxu0 0.0
      %939 = vmatpush1.xpose.msra.mxu0 0.0
      %940 = vmatprep.subr.mxu0 0.0
      %941 = vmatpush1.xpose.msra.mxu0 0.0
      %942 = vmatprep.subr.mxu0 0.0
      %943 = vmatpush1.xpose.msra.mxu0 0.0
      %944 = vmatprep.subr.mxu0 0.0
      %945 = vmatpush1.xpose.msra.mxu0 0.0
      %946 = vmatprep.subr.mxu0 0.0
      %947 = vmatpush1.xpose.msra.mxu0 0.0
      %948 = vmatprep.subr.mxu0 0.0
      %949 = vmatpush1.xpose.msra.mxu0 0.0
      %950 = vmatprep.subr.mxu0 0.0
      %951 = vmatpush1.xpose.msra.mxu0 0.0
      %952 = vmatprep.subr.mxu0 0.0
      %953 = vmatpush1.xpose.msra.mxu0 0.0
      %954 = vmatprep.subr.mxu0 0.0
      %955 = vmatpush1.xpose.msra.mxu0 0.0
      %956 = vmatprep.subr.mxu0 0.0
      %957 = vmatpush1.xpose.msra.mxu0 0.0
      %958 = vmatprep.mubr.f32.mxu0 0.0
      %959 = vmatmul.mubr.f32.gmra.mrb[0].mxu0 %v882
      %v960 = vpop.f32.mrb[0].mxu0
      %v961 = vadd.f32 0.0, %v960
      %v962 = vpop.f32.mrb[0].mxu0
      %963 = vmatprep.mubr.f32.mxu0 0.0
      %964 = vmatmul.mubr.f32.gmra.mrb[0].mxu0 %v884
      %v965 = vpop.f32.mrb[0].mxu0
      %v966 = vadd.f32 0.0, %v965
      %v967 = vpop.f32.mrb[0].mxu0
      %968 = vmatprep.mubr.f32.mxu0 0.0
      %969 = vmatmul.mubr.f32.gmra.mrb[0].mxu0 %v886
      %v970 = vpop.f32.mrb[0].mxu0
      %v971 = vadd.f32 0.0, %v970
      %v972 = vpop.f32.mrb[0].mxu0
      %973 = vdwg.mxu0
      %v974 = vsel %vm742, %v961, -inf
      %975 = vmax.xlane.f32.xlu0 %v974
      %v976 = vpop.xlane.xlu0 %975
      %v977 = vsel %vm742, %v966, -inf
      %978 = vmax.xlane.f32.xlu0 %v977
      %v979 = vpop.xlane.xlu0 %978
      %v980 = vsel %vm749, %v971, -inf
      %981 = vmax.xlane.f32.xlu0 %v980
      %v982 = vpop.xlane.xlu0 %981
      %v983 = vsub.f32 %v961, %v976
      %v984 = vsub.f32 %v966, %v979
      %v985 = vsub.f32 %v971, %v982
      %v986 = vmul.f32 %v983, 1.442695
      %v987 = vpow.pop %v986
      %v988 = vmul.f32 %v984, 1.442695
      %v989 = vpow.pop %v988
      %v990 = vmul.f32 %v985, 1.442695
      %v991 = vpow.pop %v990
      %v992 = vsel %vm742, %v987, 0.0
      %993 = vadd.xlane.f32.xlu0 %v992
      %v994 = vpop.xlane.xlu0 %993
      %v995 = vsel %vm742, %v989, 0.0
      %996 = vadd.xlane.f32.xlu0 %v995
      %v997 = vpop.xlane.xlu0 %996
      %v998 = vsel %vm749, %v991, 0.0
      %999 = vadd.xlane.f32.xlu0 %v998
      %v1000 = vpop.xlane.xlu0 %999
      %v1001 = vrcp.pop %v994
      %v1002 = vrcp.pop %v997
      %v1003 = vrcp.pop %v1000
      %v1004 = vmul.f32 %v987, %v1001
      %v1005 = vmul.f32 %v989, %v1002
      %v1006 = vmul.f32 %v991, %v1003
      %1009 = vrot.lane.b32.xlu0 %v612, 120
      %v1010 = vpop.permute.xlu0 %1009
      %1011 = vrot.lane.b32.xlu0 %v618, 120
      %v1012 = vpop.permute.xlu0 %1011
      %1013 = vrot.lane.b32.xlu0 %v624, 120
      %v1014 = vpop.permute.xlu0 %1013
      %v1018 = vsel %vm742, %v1004, 0
      %v1021 = vsel %vm742, %v1005, 0
      %v1024 = vsel %vm742, %v1006, 0
      %v1026 = vsel %vm786, %v1014, 0
      %1028 = vmatprep.subr.mxu0 0.0
      %1029 = vmatpush1.msra.mxu0 %v1010
      %1030 = vmatprep.subr.mxu0 0.0
      %1031 = vmatpush1.msra.mxu0 %v1012
      %1032 = vmatprep.subr.mxu0 0.0
      %1033 = vmatpush1.msra.mxu0 %v1026
      %1034 = vmatprep.subr.mxu0 0.0
      %1035 = vmatpush1.msra.mxu0 0.0
      %1036 = vmatprep.subr.mxu0 0.0
      %1037 = vmatpush1.msra.mxu0 0.0
      %1038 = vmatprep.subr.mxu0 0.0
      %1039 = vmatpush1.msra.mxu0 0.0
      %1040 = vmatprep.subr.mxu0 0.0
      %1041 = vmatpush1.msra.mxu0 0.0
      %1042 = vmatprep.subr.mxu0 0.0
      %1043 = vmatpush1.msra.mxu0 0.0
      %1044 = vmatprep.subr.mxu0 0.0
      %1045 = vmatpush1.msra.mxu0 0.0
      %1046 = vmatprep.subr.mxu0 0.0
      %1047 = vmatpush1.msra.mxu0 0.0
      %1048 = vmatprep.subr.mxu0 0.0
      %1049 = vmatpush1.msra.mxu0 0.0
      %1050 = vmatprep.subr.mxu0 0.0
      %1051 = vmatpush1.msra.mxu0 0.0
      %1052 = vmatprep.subr.mxu0 0.0
      %1053 = vmatpush1.msra.mxu0 0.0
      %1054 = vmatprep.subr.mxu0 0.0
      %1055 = vmatpush1.msra.mxu0 0.0
      %1056 = vmatprep.subr.mxu0 0.0
      %1057 = vmatpush1.msra.mxu0 0.0
      %1058 = vmatprep.subr.mxu0 0.0
      %1059 = vmatpush1.msra.mxu0 0.0
      %1060 = vmatprep.subr.mxu0 0.0
      %1061 = vmatpush1.msra.mxu0 0.0
      %1062 = vmatprep.subr.mxu0 0.0
      %1063 = vmatpush1.msra.mxu0 0.0
      %1064 = vmatprep.subr.mxu0 0.0
      %1065 = vmatpush1.msra.mxu0 0.0
      %1066 = vmatprep.subr.mxu0 0.0
      %1067 = vmatpush1.msra.mxu0 0.0
      %1068 = vmatprep.subr.mxu0 0.0
      %1069 = vmatpush1.msra.mxu0 0.0
      %1070 = vmatprep.subr.mxu0 0.0
      %1071 = vmatpush1.msra.mxu0 0.0
      %1072 = vmatprep.subr.mxu0 0.0
      %1073 = vmatpush1.msra.mxu0 0.0
      %1074 = vmatprep.subr.mxu0 0.0
      %1075 = vmatpush1.msra.mxu0 0.0
      %1076 = vmatprep.subr.mxu0 0.0
      %1077 = vmatpush1.msra.mxu0 0.0
      %1078 = vmatprep.subr.mxu0 0.0
      %1079 = vmatpush1.msra.mxu0 0.0
      %1080 = vmatprep.subr.mxu0 0.0
      %1081 = vmatpush1.msra.mxu0 0.0
      %1082 = vmatprep.subr.mxu0 0.0
      %1083 = vmatpush1.msra.mxu0 0.0
      %1084 = vmatprep.subr.mxu0 0.0
      %1085 = vmatpush1.msra.mxu0 0.0
      %1086 = vmatprep.subr.mxu0 0.0
      %1087 = vmatpush1.msra.mxu0 0.0
      %1088 = vmatprep.subr.mxu0 0.0
      %1089 = vmatpush1.msra.mxu0 0.0
      %1090 = vmatprep.subr.mxu0 0.0
      %1091 = vmatpush1.msra.mxu0 0.0
      %1092 = vmatprep.mubr.f32.mxu0 0.0
      %1093 = vmatmul.mubr.f32.gmra.mrb[0].mxu0 %v1018
      %v1094 = vpop.f32.mrb[0].mxu0
      %v1095 = vadd.f32 0.0, %v1094
      %v1096 = vpop.f32.mrb[0].mxu0
      %1097 = vmatprep.mubr.f32.mxu0 0.0
      %1098 = vmatmul.mubr.f32.gmra.mrb[0].mxu0 %v1021
      %v1099 = vpop.f32.mrb[0].mxu0
      %v1100 = vadd.f32 0.0, %v1099
      %v1101 = vpop.f32.mrb[0].mxu0
      %1102 = vmatprep.mubr.f32.mxu0 0.0
      %1103 = vmatmul.mubr.f32.gmra.mrb[0].mxu0 %v1024
      %v1104 = vpop.f32.mrb[0].mxu0
      %v1105 = vadd.f32 0.0, %v1104
      %v1106 = vpop.f32.mrb[0].mxu0
      %1107 = vdwg.mxu0
      %v1109 = vsel %vm646, %v1095, 0
      %v1112 = vsel %vm646, %v1100, 0
      %v1115 = vsel %vm646, %v1105, 0
      %1117 = vmatprep.subr.mxu0 0.0
      %1118 = vmatpush1.msra.mxu0 %v627
      %1119 = vmatprep.subr.mxu0 0.0
      %1120 = vmatpush1.msra.mxu0 0.0
      %1121 = vmatprep.subr.mxu0 0.0
      %1122 = vmatpush1.msra.mxu0 0.0
      %1123 = vmatprep.subr.mxu0 0.0
      %1124 = vmatpush1.msra.mxu0 0.0
      %1125 = vmatprep.subr.mxu0 0.0
      %1126 = vmatpush1.msra.mxu0 0.0
      %1127 = vmatprep.subr.mxu0 0.0
      %1128 = vmatpush1.msra.mxu0 0.0
      %1129 = vmatprep.subr.mxu0 0.0
      %1130 = vmatpush1.msra.mxu0 0.0
      %1131 = vmatprep.subr.mxu0 0.0
      %1132 = vmatpush1.msra.mxu0 0.0
      %1133 = vmatprep.subr.mxu0 0.0
      %1134 = vmatpush1.msra.mxu0 0.0
      %1135 = vmatprep.subr.mxu0 0.0
      %1136 = vmatpush1.msra.mxu0 0.0
      %1137 = vmatprep.subr.mxu0 0.0
      %1138 = vmatpush1.msra.mxu0 0.0
      %1139 = vmatprep.subr.mxu0 0.0
      %1140 = vmatpush1.msra.mxu0 0.0
      %1141 = vmatprep.subr.mxu0 0.0
      %1142 = vmatpush1.msra.mxu0 0.0
      %1143 = vmatprep.subr.mxu0 0.0
      %1144 = vmatpush1.msra.mxu0 0.0
      %1145 = vmatprep.subr.mxu0 0.0
      %1146 = vmatpush1.msra.mxu0 0.0
      %1147 = vmatprep.subr.mxu0 0.0
      %1148 = vmatpush1.msra.mxu0 0.0
      %1149 = vmatprep.subr.mxu0 0.0
      %1150 = vmatpush1.msra.mxu0 0.0
      %1151 = vmatprep.subr.mxu0 0.0
      %1152 = vmatpush1.msra.mxu0 0.0
      %1153 = vmatprep.subr.mxu0 0.0
      %1154 = vmatpush1.msra.mxu0 0.0
      %1155 = vmatprep.subr.mxu0 0.0
      %1156 = vmatpush1.msra.mxu0 0.0
      %1157 = vmatprep.subr.mxu0 0.0
      %1158 = vmatpush1.msra.mxu0 0.0
      %1159 = vmatprep.subr.mxu0 0.0
      %1160 = vmatpush1.msra.mxu0 0.0
      %1161 = vmatprep.subr.mxu0 0.0
      %1162 = vmatpush1.msra.mxu0 0.0
      %1163 = vmatprep.subr.mxu0 0.0
      %1164 = vmatpush1.msra.mxu0 0.0
      %1165 = vmatprep.subr.mxu0 0.0
      %1166 = vmatpush1.msra.mxu0 0.0
      %1167 = vmatprep.subr.mxu0 0.0
      %1168 = vmatpush1.msra.mxu0 0.0
      %1169 = vmatprep.subr.mxu0 0.0
      %1170 = vmatpush1.msra.mxu0 0.0
      %1171 = vmatprep.subr.mxu0 0.0
      %1172 = vmatpush1.msra.mxu0 0.0
      %1173 = vmatprep.subr.mxu0 0.0
      %1174 = vmatpush1.msra.mxu0 0.0
      %1175 = vmatprep.subr.mxu0 0.0
      %1176 = vmatpush1.msra.mxu0 0.0
      %1177 = vmatprep.subr.mxu0 0.0
      %1178 = vmatpush1.msra.mxu0 0.0
      %1179 = vmatprep.subr.mxu0 0.0
      %1180 = vmatpush1.msra.mxu0 0.0
      %1181 = vmatprep.mubr.f32.mxu0 0.0
      %1182 = vmatmul.mubr.f32.gmra.mrb[0].mxu0 %v1109
      %v1183 = vpop.f32.mrb[0].mxu0
      %v1184 = vadd.f32 0.0, %v1183
      %v1185 = vpop.f32.mrb[0].mxu0
      %1186 = vmatprep.mubr.f32.mxu0 0.0
      %1187 = vmatmul.mubr.f32.gmra.mrb[0].mxu0 %v1112
      %v1188 = vpop.f32.mrb[0].mxu0
      %v1189 = vadd.f32 0.0, %v1188
      %v1190 = vpop.f32.mrb[0].mxu0
      %1191 = vmatprep.mubr.f32.mxu0 0.0
      %1192 = vmatmul.mubr.f32.gmra.mrb[0].mxu0 %v1115
      %v1193 = vpop.f32.mrb[0].mxu0
      %v1194 = vadd.f32 0.0, %v1193
      %v1195 = vpop.f32.mrb[0].mxu0
      %1196 = vdwg.mxu0
      %v1198 = vsel %vm646, %v857, 0
      %v1201 = vsel %vm646, %v862, 0
      %v1204 = vsel %vm646, %v867, 0
      %1206 = vmatprep.subr.mxu0 0.0
      %1207 = vmatpush1.msra.mxu0 %v626
      %1208 = vmatprep.subr.mxu0 0.0
      %1209 = vmatpush1.msra.mxu0 0.0
      %1210 = vmatprep.subr.mxu0 0.0
      %1211 = vmatpush1.msra.mxu0 0.0
      %1212 = vmatprep.subr.mxu0 0.0
      %1213 = vmatpush1.msra.mxu0 0.0
      %1214 = vmatprep.subr.mxu0 0.0
      %1215 = vmatpush1.msra.mxu0 0.0
      %1216 = vmatprep.subr.mxu0 0.0
      %1217 = vmatpush1.msra.mxu0 0.0
      %1218 = vmatprep.subr.mxu0 0.0
      %1219 = vmatpush1.msra.mxu0 0.0
      %1220 = vmatprep.subr.mxu0 0.0
      %1221 = vmatpush1.msra.mxu0 0.0
      %1222 = vmatprep.subr.mxu0 0.0
      %1223 = vmatpush1.msra.mxu0 0.0
      %1224 = vmatprep.subr.mxu0 0.0
      %1225 = vmatpush1.msra.mxu0 0.0
      %1226 = vmatprep.subr.mxu0 0.0
      %1227 = vmatpush1.msra.mxu0 0.0
      %1228 = vmatprep.subr.mxu0 0.0
      %1229 = vmatpush1.msra.mxu0 0.0
      %1230 = vmatprep.subr.mxu0 0.0
      %1231 = vmatpush1.msra.mxu0 0.0
      %1232 = vmatprep.subr.mxu0 0.0
      %1233 = vmatpush1.msra.mxu0 0.0
      %1234 = vmatprep.subr.mxu0 0.0
      %1235 = vmatpush1.msra.mxu0 0.0
      %1236 = vmatprep.subr.mxu0 0.0
      %1237 = vmatpush1.msra.mxu0 0.0
      %1238 = vmatprep.subr.mxu0 0.0
      %1239 = vmatpush1.msra.mxu0 0.0
      %1240 = vmatprep.subr.mxu0 0.0
      %1241 = vmatpush1.msra.mxu0 0.0
      %1242 = vmatprep.subr.mxu0 0.0
      %1243 = vmatpush1.msra.mxu0 0.0
      %1244 = vmatprep.subr.mxu0 0.0
      %1245 = vmatpush1.msra.mxu0 0.0
      %1246 = vmatprep.subr.mxu0 0.0
      %1247 = vmatpush1.msra.mxu0 0.0
      %1248 = vmatprep.subr.mxu0 0.0
      %1249 = vmatpush1.msra.mxu0 0.0
      %1250 = vmatprep.subr.mxu0 0.0
      %1251 = vmatpush1.msra.mxu0 0.0
      %1252 = vmatprep.subr.mxu0 0.0
      %1253 = vmatpush1.msra.mxu0 0.0
      %1254 = vmatprep.subr.mxu0 0.0
      %1255 = vmatpush1.msra.mxu0 0.0
      %1256 = vmatprep.subr.mxu0 0.0
      %1257 = vmatpush1.msra.mxu0 0.0
      %1258 = vmatprep.subr.mxu0 0.0
      %1259 = vmatpush1.msra.mxu0 0.0
      %1260 = vmatprep.subr.mxu0 0.0
      %1261 = vmatpush1.msra.mxu0 0.0
      %1262 = vmatprep.subr.mxu0 0.0
      %1263 = vmatpush1.msra.mxu0 0.0
      %1264 = vmatprep.subr.mxu0 0.0
      %1265 = vmatpush1.msra.mxu0 0.0
      %1266 = vmatprep.subr.mxu0 0.0
      %1267 = vmatpush1.msra.mxu0 0.0
      %1268 = vmatprep.subr.mxu0 0.0
      %1269 = vmatpush1.msra.mxu0 0.0
      %1270 = vmatprep.mubr.f32.mxu0 0.0
      %1271 = vmatmul.mubr.f32.gmra.mrb[0].mxu0 %v1198
      %v1272 = vpop.f32.mrb[0].mxu0
      %v1273 = vadd.f32 %v1184, %v1272
      %v1274 = vpop.f32.mrb[0].mxu0
      %1275 = vmatprep.mubr.f32.mxu0 0.0
      %1276 = vmatmul.mubr.f32.gmra.mrb[0].mxu0 %v1201
      %v1277 = vpop.f32.mrb[0].mxu0
      %v1278 = vadd.f32 %v1189, %v1277
      %v1279 = vpop.f32.mrb[0].mxu0
      %1280 = vmatprep.mubr.f32.mxu0 0.0
      %1281 = vmatmul.mubr.f32.gmra.mrb[0].mxu0 %v1204
      %v1282 = vpop.f32.mrb[0].mxu0
      %v1283 = vadd.f32 %v1194, %v1282
      %v1284 = vpop.f32.mrb[0].mxu0
      %1285 = vdwg.mxu0
      %1286 = vrot.lane.b32.xlu0 %v634, 112
      %v1287 = vpop.permute.xlu0 %1286
      %1288 = vrot.lane.b32.xlu0 %v635, 112
      %v1289 = vpop.permute.xlu0 %1288
      %1290 = vrot.lane.b32.xlu0 %v636, 112
      %v1291 = vpop.permute.xlu0 %1290
      %1292 = vrot.lane.b32.xlu0 %v610, 48
      %v1293 = vpop.permute.xlu0 %1292
      %1294 = vrot.lane.b32.xlu0 %v616, 48
      %v1295 = vpop.permute.xlu0 %1294
      %1296 = vrot.lane.b32.xlu0 %v622, 48
      %v1297 = vpop.permute.xlu0 %1296
      %v1298 = vsel %vm646, %v1287, 0
      %v1300 = vsel %vm646, %v1289, 0
      %v1302 = vsel %vm646, %v1291, 0
      %v1304 = vsel %vm646, %v1293, 0
      %v1306 = vsel %vm646, %v1295, 0
      %v1308 = vsel %vm646, %v1297, 0
      %1310 = vmatprep.subr.mxu0 0.0
      %1311 = vmatpush1.xpose.msra.mxu0 %v1304
      %1312 = vmatprep.subr.mxu0 0.0
      %1313 = vmatpush1.xpose.msra.mxu0 %v1306
      %1314 = vmatprep.subr.mxu0 0.0
      %1315 = vmatpush1.xpose.msra.mxu0 %v1308
      %1316 = vmatprep.subr.mxu0 0.0
      %1317 = vmatpush1.xpose.msra.mxu0 0.0
      %1318 = vmatprep.subr.mxu0 0.0
      %1319 = vmatpush1.xpose.msra.mxu0 0.0
      %1320 = vmatprep.subr.mxu0 0.0
      %1321 = vmatpush1.xpose.msra.mxu0 0.0
      %1322 = vmatprep.subr.mxu0 0.0
      %1323 = vmatpush1.xpose.msra.mxu0 0.0
      %1324 = vmatprep.subr.mxu0 0.0
      %1325 = vmatpush1.xpose.msra.mxu0 0.0
      %1326 = vmatprep.subr.mxu0 0.0
      %1327 = vmatpush1.xpose.msra.mxu0 0.0
      %1328 = vmatprep.subr.mxu0 0.0
      %1329 = vmatpush1.xpose.msra.mxu0 0.0
      %1330 = vmatprep.subr.mxu0 0.0
      %1331 = vmatpush1.xpose.msra.mxu0 0.0
      %1332 = vmatprep.subr.mxu0 0.0
      %1333 = vmatpush1.xpose.msra.mxu0 0.0
      %1334 = vmatprep.subr.mxu0 0.0
      %1335 = vmatpush1.xpose.msra.mxu0 0.0
      %1336 = vmatprep.subr.mxu0 0.0
      %1337 = vmatpush1.xpose.msra.mxu0 0.0
      %1338 = vmatprep.subr.mxu0 0.0
      %1339 = vmatpush1.xpose.msra.mxu0 0.0
      %1340 = vmatprep.subr.mxu0 0.0
      %1341 = vmatpush1.xpose.msra.mxu0 0.0
      %1342 = vmatprep.subr.mxu0 0.0
      %1343 = vmatpush1.xpose.msra.mxu0 0.0
      %1344 = vmatprep.subr.mxu0 0.0
      %1345 = vmatpush1.xpose.msra.mxu0 0.0
      %1346 = vmatprep.subr.mxu0 0.0
      %1347 = vmatpush1.xpose.msra.mxu0 0.0
      %1348 = vmatprep.subr.mxu0 0.0
      %1349 = vmatpush1.xpose.msra.mxu0 0.0
      %1350 = vmatprep.subr.mxu0 0.0
      %1351 = vmatpush1.xpose.msra.mxu0 0.0
      %1352 = vmatprep.subr.mxu0 0.0
      %1353 = vmatpush1.xpose.msra.mxu0 0.0
      %1354 = vmatprep.subr.mxu0 0.0
      %1355 = vmatpush1.xpose.msra.mxu0 0.0
      %1356 = vmatprep.subr.mxu0 0.0
      %1357 = vmatpush1.xpose.msra.mxu0 0.0
      %1358 = vmatprep.subr.mxu0 0.0
      %1359 = vmatpush1.xpose.msra.mxu0 0.0
      %1360 = vmatprep.subr.mxu0 0.0
      %1361 = vmatpush1.xpose.msra.mxu0 0.0
      %1362 = vmatprep.subr.mxu0 0.0
      %1363 = vmatpush1.xpose.msra.mxu0 0.0
      %1364 = vmatprep.subr.mxu0 0.0
      %1365 = vmatpush1.xpose.msra.mxu0 0.0
      %1366 = vmatprep.subr.mxu0 0.0
      %1367 = vmatpush1.xpose.msra.mxu0 0.0
      %1368 = vmatprep.subr.mxu0 0.0
      %1369 = vmatpush1.xpose.msra.mxu0 0.0
      %1370 = vmatprep.subr.mxu0 0.0
      %1371 = vmatpush1.xpose.msra.mxu0 0.0
      %1372 = vmatprep.subr.mxu0 0.0
      %1373 = vmatpush1.xpose.msra.mxu0 0.0
      %1374 = vmatprep.mubr.f32.mxu0 0.0
      %1375 = vmatmul.mubr.f32.gmra.mrb[0].mxu0 %v1298
      %v1376 = vpop.f32.mrb[0].mxu0
      %v1377 = vadd.f32 0.0, %v1376
      %v1378 = vpop.f32.mrb[0].mxu0
      %1379 = vmatprep.mubr.f32.mxu0 0.0
      %1380 = vmatmul.mubr.f32.gmra.mrb[0].mxu0 %v1300
      %v1381 = vpop.f32.mrb[0].mxu0
      %v1382 = vadd.f32 0.0, %v1381
      %v1383 = vpop.f32.mrb[0].mxu0
      %1384 = vmatprep.mubr.f32.mxu0 0.0
      %1385 = vmatmul.mubr.f32.gmra.mrb[0].mxu0 %v1302
      %v1386 = vpop.f32.mrb[0].mxu0
      %v1387 = vadd.f32 0.0, %v1386
      %v1388 = vpop.f32.mrb[0].mxu0
      %1389 = vdwg.mxu0
      %v1390 = vsel %vm742, %v1377, -inf
      %1391 = vmax.xlane.f32.xlu0 %v1390
      %v1392 = vpop.xlane.xlu0 %1391
      %v1393 = vsel %vm742, %v1382, -inf
      %1394 = vmax.xlane.f32.xlu0 %v1393
      %v1395 = vpop.xlane.xlu0 %1394
      %v1396 = vsel %vm749, %v1387, -inf
      %1397 = vmax.xlane.f32.xlu0 %v1396
      %v1398 = vpop.xlane.xlu0 %1397
      %v1399 = vsub.f32 %v1377, %v1392
      %v1400 = vsub.f32 %v1382, %v1395
      %v1401 = vsub.f32 %v1387, %v1398
      %v1402 = vmul.f32 %v1399, 1.442695
      %v1403 = vpow.pop %v1402
      %v1404 = vmul.f32 %v1400, 1.442695
      %v1405 = vpow.pop %v1404
      %v1406 = vmul.f32 %v1401, 1.442695
      %v1407 = vpow.pop %v1406
      %v1408 = vsel %vm742, %v1403, 0.0
      %1409 = vadd.xlane.f32.xlu0 %v1408
      %v1410 = vpop.xlane.xlu0 %1409
      %v1411 = vsel %vm742, %v1405, 0.0
      %1412 = vadd.xlane.f32.xlu0 %v1411
      %v1413 = vpop.xlane.xlu0 %1412
      %v1414 = vsel %vm749, %v1407, 0.0
      %1415 = vadd.xlane.f32.xlu0 %v1414
      %v1416 = vpop.xlane.xlu0 %1415
      %v1417 = vrcp.pop %v1410
      %v1418 = vrcp.pop %v1413
      %v1419 = vrcp.pop %v1416
      %v1420 = vmul.f32 %v1403, %v1417
      %v1421 = vmul.f32 %v1405, %v1418
      %v1422 = vmul.f32 %v1407, %v1419
      %1423 = vrot.lane.b32.xlu0 %v612, 112
      %v1424 = vpop.permute.xlu0 %1423
      %1425 = vrot.lane.b32.xlu0 %v618, 112
      %v1426 = vpop.permute.xlu0 %1425
      %1427 = vrot.lane.b32.xlu0 %v624, 112
      %v1428 = vpop.permute.xlu0 %1427
      %v1432 = vsel %vm742, %v1420, 0
      %v1435 = vsel %vm742, %v1421, 0
      %v1438 = vsel %vm742, %v1422, 0
      %v1440 = vsel %vm786, %v1428, 0
      %1442 = vmatprep.subr.mxu0 0.0
      %1443 = vmatpush1.msra.mxu0 %v1424
      %1444 = vmatprep.subr.mxu0 0.0
      %1445 = vmatpush1.msra.mxu0 %v1426
      %1446 = vmatprep.subr.mxu0 0.0
      %1447 = vmatpush1.msra.mxu0 %v1440
      %1448 = vmatprep.subr.mxu0 0.0
      %1449 = vmatpush1.msra.mxu0 0.0
      %1450 = vmatprep.subr.mxu0 0.0
      %1451 = vmatpush1.msra.mxu0 0.0
      %1452 = vmatprep.subr.mxu0 0.0
      %1453 = vmatpush1.msra.mxu0 0.0
      %1454 = vmatprep.subr.mxu0 0.0
      %1455 = vmatpush1.msra.mxu0 0.0
      %1456 = vmatprep.subr.mxu0 0.0
      %1457 = vmatpush1.msra.mxu0 0.0
      %1458 = vmatprep.subr.mxu0 0.0
      %1459 = vmatpush1.msra.mxu0 0.0
      %1460 = vmatprep.subr.mxu0 0.0
      %1461 = vmatpush1.msra.mxu0 0.0
      %1462 = vmatprep.subr.mxu0 0.0
      %1463 = vmatpush1.msra.mxu0 0.0
      %1464 = vmatprep.subr.mxu0 0.0
      %1465 = vmatpush1.msra.mxu0 0.0
      %1466 = vmatprep.subr.mxu0 0.0
      %1467 = vmatpush1.msra.mxu0 0.0
      %1468 = vmatprep.subr.mxu0 0.0
      %1469 = vmatpush1.msra.mxu0 0.0
      %1470 = vmatprep.subr.mxu0 0.0
      %1471 = vmatpush1.msra.mxu0 0.0
      %1472 = vmatprep.subr.mxu0 0.0
      %1473 = vmatpush1.msra.mxu0 0.0
      %1474 = vmatprep.subr.mxu0 0.0
      %1475 = vmatpush1.msra.mxu0 0.0
      %1476 = vmatprep.subr.mxu0 0.0
      %1477 = vmatpush1.msra.mxu0 0.0
      %1478 = vmatprep.subr.mxu0 0.0
      %1479 = vmatpush1.msra.mxu0 0.0
      %1480 = vmatprep.subr.mxu0 0.0
      %1481 = vmatpush1.msra.mxu0 0.0
      %1482 = vmatprep.subr.mxu0 0.0
      %1483 = vmatpush1.msra.mxu0 0.0
      %1484 = vmatprep.subr.mxu0 0.0
      %1485 = vmatpush1.msra.mxu0 0.0
      %1486 = vmatprep.subr.mxu0 0.0
      %1487 = vmatpush1.msra.mxu0 0.0
      %1488 = vmatprep.subr.mxu0 0.0
      %1489 = vmatpush1.msra.mxu0 0.0
      %1490 = vmatprep.subr.mxu0 0.0
      %1491 = vmatpush1.msra.mxu0 0.0
      %1492 = vmatprep.subr.mxu0 0.0
      %1493 = vmatpush1.msra.mxu0 0.0
      %1494 = vmatprep.subr.mxu0 0.0
      %1495 = vmatpush1.msra.mxu0 0.0
      %1496 = vmatprep.subr.mxu0 0.0
      %1497 = vmatpush1.msra.mxu0 0.0
      %1498 = vmatprep.subr.mxu0 0.0
      %1499 = vmatpush1.msra.mxu0 0.0
      %1500 = vmatprep.subr.mxu0 0.0
      %1501 = vmatpush1.msra.mxu0 0.0
      %1502 = vmatprep.subr.mxu0 0.0
      %1503 = vmatpush1.msra.mxu0 0.0
      %1504 = vmatprep.subr.mxu0 0.0
      %1505 = vmatpush1.msra.mxu0 0.0
      %1506 = vmatprep.mubr.f32.mxu0 0.0
      %1507 = vmatmul.mubr.f32.gmra.mrb[0].mxu0 %v1432
      %v1508 = vpop.f32.mrb[0].mxu0
      %v1509 = vadd.f32 0.0, %v1508
      %v1510 = vpop.f32.mrb[0].mxu0
      %1511 = vmatprep.mubr.f32.mxu0 0.0
      %1512 = vmatmul.mubr.f32.gmra.mrb[0].mxu0 %v1435
      %v1513 = vpop.f32.mrb[0].mxu0
      %v1514 = vadd.f32 0.0, %v1513
      %v1515 = vpop.f32.mrb[0].mxu0
      %1516 = vmatprep.mubr.f32.mxu0 0.0
      %1517 = vmatmul.mubr.f32.gmra.mrb[0].mxu0 %v1438
      %v1518 = vpop.f32.mrb[0].mxu0
      %v1519 = vadd.f32 0.0, %v1518
      %v1520 = vpop.f32.mrb[0].mxu0
      %1521 = vdwg.mxu0
      %v1523 = vsel %vm646, %v1509, 0
      %v1526 = vsel %vm646, %v1514, 0
      %v1529 = vsel %vm646, %v1519, 0
      %1531 = vmatprep.subr.mxu0 0.0
      %1532 = vmatpush1.msra.mxu0 %v628
      %1533 = vmatprep.subr.mxu0 0.0
      %1534 = vmatpush1.msra.mxu0 0.0
      %1535 = vmatprep.subr.mxu0 0.0
      %1536 = vmatpush1.msra.mxu0 0.0
      %1537 = vmatprep.subr.mxu0 0.0
      %1538 = vmatpush1.msra.mxu0 0.0
      %1539 = vmatprep.subr.mxu0 0.0
      %1540 = vmatpush1.msra.mxu0 0.0
      %1541 = vmatprep.subr.mxu0 0.0
      %1542 = vmatpush1.msra.mxu0 0.0
      %1543 = vmatprep.subr.mxu0 0.0
      %1544 = vmatpush1.msra.mxu0 0.0
      %1545 = vmatprep.subr.mxu0 0.0
      %1546 = vmatpush1.msra.mxu0 0.0
      %1547 = vmatprep.subr.mxu0 0.0
      %1548 = vmatpush1.msra.mxu0 0.0
      %1549 = vmatprep.subr.mxu0 0.0
      %1550 = vmatpush1.msra.mxu0 0.0
      %1551 = vmatprep.subr.mxu0 0.0
      %1552 = vmatpush1.msra.mxu0 0.0
      %1553 = vmatprep.subr.mxu0 0.0
      %1554 = vmatpush1.msra.mxu0 0.0
      %1555 = vmatprep.subr.mxu0 0.0
      %1556 = vmatpush1.msra.mxu0 0.0
      %1557 = vmatprep.subr.mxu0 0.0
      %1558 = vmatpush1.msra.mxu0 0.0
      %1559 = vmatprep.subr.mxu0 0.0
      %1560 = vmatpush1.msra.mxu0 0.0
      %1561 = vmatprep.subr.mxu0 0.0
      %1562 = vmatpush1.msra.mxu0 0.0
      %1563 = vmatprep.subr.mxu0 0.0
      %1564 = vmatpush1.msra.mxu0 0.0
      %1565 = vmatprep.subr.mxu0 0.0
      %1566 = vmatpush1.msra.mxu0 0.0
      %1567 = vmatprep.subr.mxu0 0.0
      %1568 = vmatpush1.msra.mxu0 0.0
      %1569 = vmatprep.subr.mxu0 0.0
      %1570 = vmatpush1.msra.mxu0 0.0
      %1571 = vmatprep.subr.mxu0 0.0
      %1572 = vmatpush1.msra.mxu0 0.0
      %1573 = vmatprep.subr.mxu0 0.0
      %1574 = vmatpush1.msra.mxu0 0.0
      %1575 = vmatprep.subr.mxu0 0.0
      %1576 = vmatpush1.msra.mxu0 0.0
      %1577 = vmatprep.subr.mxu0 0.0
      %1578 = vmatpush1.msra.mxu0 0.0
      %1579 = vmatprep.subr.mxu0 0.0
      %1580 = vmatpush1.msra.mxu0 0.0
      %1581 = vmatprep.subr.mxu0 0.0
      %1582 = vmatpush1.msra.mxu0 0.0
      %1583 = vmatprep.subr.mxu0 0.0
      %1584 = vmatpush1.msra.mxu0 0.0
      %1585 = vmatprep.subr.mxu0 0.0
      %1586 = vmatpush1.msra.mxu0 0.0
      %1587 = vmatprep.subr.mxu0 0.0
      %1588 = vmatpush1.msra.mxu0 0.0
      %1589 = vmatprep.subr.mxu0 0.0
      %1590 = vmatpush1.msra.mxu0 0.0
      %1591 = vmatprep.subr.mxu0 0.0
      %1592 = vmatpush1.msra.mxu0 0.0
      %1593 = vmatprep.subr.mxu0 0.0
      %1594 = vmatpush1.msra.mxu0 0.0
      %1595 = vmatprep.mubr.f32.mxu0 0.0
      %1596 = vmatmul.mubr.f32.gmra.mrb[0].mxu0 %v1523
      %v1597 = vpop.f32.mrb[0].mxu0
      %v1598 = vadd.f32 0.0, %v1597
      %v1599 = vpop.f32.mrb[0].mxu0
      %1600 = vmatprep.mubr.f32.mxu0 0.0
      %1601 = vmatmul.mubr.f32.gmra.mrb[0].mxu0 %v1526
      %v1602 = vpop.f32.mrb[0].mxu0
      %v1603 = vadd.f32 0.0, %v1602
      %v1604 = vpop.f32.mrb[0].mxu0
      %1605 = vmatprep.mubr.f32.mxu0 0.0
      %1606 = vmatmul.mubr.f32.gmra.mrb[0].mxu0 %v1529
      %v1607 = vpop.f32.mrb[0].mxu0
      %v1608 = vadd.f32 0.0, %v1607
      %v1609 = vpop.f32.mrb[0].mxu0
      %1610 = vdwg.mxu0
      %v1611 = vadd.f32 %v1273, %v1598
      %v1612 = vadd.f32 %v1278, %v1603
      %v1613 = vadd.f32 %v1283, %v1608
      %1614 = vrot.lane.b32.xlu0 %v634, 104
      %v1615 = vpop.permute.xlu0 %1614
      %1616 = vrot.lane.b32.xlu0 %v635, 104
      %v1617 = vpop.permute.xlu0 %1616
      %1618 = vrot.lane.b32.xlu0 %v636, 104
      %v1619 = vpop.permute.xlu0 %1618
      %1620 = vrot.lane.b32.xlu0 %v610, 40
      %v1621 = vpop.permute.xlu0 %1620
      %1622 = vrot.lane.b32.xlu0 %v616, 40
      %v1623 = vpop.permute.xlu0 %1622
      %1624 = vrot.lane.b32.xlu0 %v622, 40
      %v1625 = vpop.permute.xlu0 %1624
      %v1626 = vsel %vm646, %v1615, 0
      %v1628 = vsel %vm646, %v1617, 0
      %v1630 = vsel %vm646, %v1619, 0
      %v1632 = vsel %vm646, %v1621, 0
      %v1634 = vsel %vm646, %v1623, 0
      %v1636 = vsel %vm646, %v1625, 0
      %1638 = vmatprep.subr.mxu0 0.0
      %1639 = vmatpush1.xpose.msra.mxu0 %v1632
      %1640 = vmatprep.subr.mxu0 0.0
      %1641 = vmatpush1.xpose.msra.mxu0 %v1634
      %1642 = vmatprep.subr.mxu0 0.0
      %1643 = vmatpush1.xpose.msra.mxu0 %v1636
      %1644 = vmatprep.subr.mxu0 0.0
      %1645 = vmatpush1.xpose.msra.mxu0 0.0
      %1646 = vmatprep.subr.mxu0 0.0
      %1647 = vmatpush1.xpose.msra.mxu0 0.0
      %1648 = vmatprep.subr.mxu0 0.0
      %1649 = vmatpush1.xpose.msra.mxu0 0.0
      %1650 = vmatprep.subr.mxu0 0.0
      %1651 = vmatpush1.xpose.msra.mxu0 0.0
      %1652 = vmatprep.subr.mxu0 0.0
      %1653 = vmatpush1.xpose.msra.mxu0 0.0
      %1654 = vmatprep.subr.mxu0 0.0
      %1655 = vmatpush1.xpose.msra.mxu0 0.0
      %1656 = vmatprep.subr.mxu0 0.0
      %1657 = vmatpush1.xpose.msra.mxu0 0.0
      %1658 = vmatprep.subr.mxu0 0.0
      %1659 = vmatpush1.xpose.msra.mxu0 0.0
      %1660 = vmatprep.subr.mxu0 0.0
      %1661 = vmatpush1.xpose.msra.mxu0 0.0
      %1662 = vmatprep.subr.mxu0 0.0
      %1663 = vmatpush1.xpose.msra.mxu0 0.0
      %1664 = vmatprep.subr.mxu0 0.0
      %1665 = vmatpush1.xpose.msra.mxu0 0.0
      %1666 = vmatprep.subr.mxu0 0.0
      %1667 = vmatpush1.xpose.msra.mxu0 0.0
      %1668 = vmatprep.subr.mxu0 0.0
      %1669 = vmatpush1.xpose.msra.mxu0 0.0
      %1670 = vmatprep.subr.mxu0 0.0
      %1671 = vmatpush1.xpose.msra.mxu0 0.0
      %1672 = vmatprep.subr.mxu0 0.0
      %1673 = vmatpush1.xpose.msra.mxu0 0.0
      %1674 = vmatprep.subr.mxu0 0.0
      %1675 = vmatpush1.xpose.msra.mxu0 0.0
      %1676 = vmatprep.subr.mxu0 0.0
      %1677 = vmatpush1.xpose.msra.mxu0 0.0
      %1678 = vmatprep.subr.mxu0 0.0
      %1679 = vmatpush1.xpose.msra.mxu0 0.0
      %1680 = vmatprep.subr.mxu0 0.0
      %1681 = vmatpush1.xpose.msra.mxu0 0.0
      %1682 = vmatprep.subr.mxu0 0.0
      %1683 = vmatpush1.xpose.msra.mxu0 0.0
      %1684 = vmatprep.subr.mxu0 0.0
      %1685 = vmatpush1.xpose.msra.mxu0 0.0
      %1686 = vmatprep.subr.mxu0 0.0
      %1687 = vmatpush1.xpose.msra.mxu0 0.0
      %1688 = vmatprep.subr.mxu0 0.0
      %1689 = vmatpush1.xpose.msra.mxu0 0.0
      %1690 = vmatprep.subr.mxu0 0.0
      %1691 = vmatpush1.xpose.msra.mxu0 0.0
      %1692 = vmatprep.subr.mxu0 0.0
      %1693 = vmatpush1.xpose.msra.mxu0 0.0
      %1694 = vmatprep.subr.mxu0 0.0
      %1695 = vmatpush1.xpose.msra.mxu0 0.0
      %1696 = vmatprep.subr.mxu0 0.0
      %1697 = vmatpush1.xpose.msra.mxu0 0.0
      %1698 = vmatprep.subr.mxu0 0.0
      %1699 = vmatpush1.xpose.msra.mxu0 0.0
      %1700 = vmatprep.subr.mxu0 0.0
      %1701 = vmatpush1.xpose.msra.mxu0 0.0
      %1702 = vmatprep.mubr.f32.mxu0 0.0
      %1703 = vmatmul.mubr.f32.gmra.mrb[0].mxu0 %v1626
      %v1704 = vpop.f32.mrb[0].mxu0
      %v1705 = vadd.f32 0.0, %v1704
      %v1706 = vpop.f32.mrb[0].mxu0
      %1707 = vmatprep.mubr.f32.mxu0 0.0
      %1708 = vmatmul.mubr.f32.gmra.mrb[0].mxu0 %v1628
      %v1709 = vpop.f32.mrb[0].mxu0
      %v1710 = vadd.f32 0.0, %v1709
      %v1711 = vpop.f32.mrb[0].mxu0
      %1712 = vmatprep.mubr.f32.mxu0 0.0
      %1713 = vmatmul.mubr.f32.gmra.mrb[0].mxu0 %v1630
      %v1714 = vpop.f32.mrb[0].mxu0
      %v1715 = vadd.f32 0.0, %v1714
      %v1716 = vpop.f32.mrb[0].mxu0
      %1717 = vdwg.mxu0
      %v1718 = vsel %vm742, %v1705, -inf
      %1719 = vmax.xlane.f32.xlu0 %v1718
      %v1720 = vpop.xlane.xlu0 %1719
      %v1721 = vsel %vm742, %v1710, -inf
      %1722 = vmax.xlane.f32.xlu0 %v1721
      %v1723 = vpop.xlane.xlu0 %1722
      %v1724 = vsel %vm749, %v1715, -inf
      %1725 = vmax.xlane.f32.xlu0 %v1724
      %v1726 = vpop.xlane.xlu0 %1725
      %v1727 = vsub.f32 %v1705, %v1720
      %v1728 = vsub.f32 %v1710, %v1723
      %v1729 = vsub.f32 %v1715, %v1726
      %v1730 = vmul.f32 %v1727, 1.442695
      %v1731 = vpow.pop %v1730
      %v1732 = vmul.f32 %v1728, 1.442695
      %v1733 = vpow.pop %v1732
      %v1734 = vmul.f32 %v1729, 1.442695
      %v1735 = vpow.pop %v1734
      %v1736 = vsel %vm742, %v1731, 0.0
      %1737 = vadd.xlane.f32.xlu0 %v1736
      %v1738 = vpop.xlane.xlu0 %1737
      %v1739 = vsel %vm742, %v1733, 0.0
      %1740 = vadd.xlane.f32.xlu0 %v1739
      %v1741 = vpop.xlane.xlu0 %1740
      %v1742 = vsel %vm749, %v1735, 0.0
      %1743 = vadd.xlane.f32.xlu0 %v1742
      %v1744 = vpop.xlane.xlu0 %1743
      %v1745 = vrcp.pop %v1738
      %v1746 = vrcp.pop %v1741
      %v1747 = vrcp.pop %v1744
      %v1748 = vmul.f32 %v1731, %v1745
      %v1749 = vmul.f32 %v1733, %v1746
      %v1750 = vmul.f32 %v1735, %v1747
      %1751 = vrot.lane.b32.xlu0 %v612, 104
      %v1752 = vpop.permute.xlu0 %1751
      %1753 = vrot.lane.b32.xlu0 %v618, 104
      %v1754 = vpop.permute.xlu0 %1753
      %1755 = vrot.lane.b32.xlu0 %v624, 104
      %v1756 = vpop.permute.xlu0 %1755
      %v1760 = vsel %vm742, %v1748, 0
      %v1763 = vsel %vm742, %v1749, 0
      %v1766 = vsel %vm742, %v1750, 0
      %v1768 = vsel %vm786, %v1756, 0
      %1770 = vmatprep.subr.mxu0 0.0
      %1771 = vmatpush1.msra.mxu0 %v1752
      %1772 = vmatprep.subr.mxu0 0.0
      %1773 = vmatpush1.msra.mxu0 %v1754
      %1774 = vmatprep.subr.mxu0 0.0
      %1775 = vmatpush1.msra.mxu0 %v1768
      %1776 = vmatprep.subr.mxu0 0.0
      %1777 = vmatpush1.msra.mxu0 0.0
      %1778 = vmatprep.subr.mxu0 0.0
      %1779 = vmatpush1.msra.mxu0 0.0
      %1780 = vmatprep.subr.mxu0 0.0
      %1781 = vmatpush1.msra.mxu0 0.0
      %1782 = vmatprep.subr.mxu0 0.0
      %1783 = vmatpush1.msra.mxu0 0.0
      %1784 = vmatprep.subr.mxu0 0.0
      %1785 = vmatpush1.msra.mxu0 0.0
      %1786 = vmatprep.subr.mxu0 0.0
      %1787 = vmatpush1.msra.mxu0 0.0
      %1788 = vmatprep.subr.mxu0 0.0
      %1789 = vmatpush1.msra.mxu0 0.0
      %1790 = vmatprep.subr.mxu0 0.0
      %1791 = vmatpush1.msra.mxu0 0.0
      %1792 = vmatprep.subr.mxu0 0.0
      %1793 = vmatpush1.msra.mxu0 0.0
      %1794 = vmatprep.subr.mxu0 0.0
      %1795 = vmatpush1.msra.mxu0 0.0
      %1796 = vmatprep.subr.mxu0 0.0
      %1797 = vmatpush1.msra.mxu0 0.0
      %1798 = vmatprep.subr.mxu0 0.0
      %1799 = vmatpush1.msra.mxu0 0.0
      %1800 = vmatprep.subr.mxu0 0.0
      %1801 = vmatpush1.msra.mxu0 0.0
      %1802 = vmatprep.subr.mxu0 0.0
      %1803 = vmatpush1.msra.mxu0 0.0
      %1804 = vmatprep.subr.mxu0 0.0
      %1805 = vmatpush1.msra.mxu0 0.0
      %1806 = vmatprep.subr.mxu0 0.0
      %1807 = vmatpush1.msra.mxu0 0.0
      %1808 = vmatprep.subr.mxu0 0.0
      %1809 = vmatpush1.msra.mxu0 0.0
      %1810 = vmatprep.subr.mxu0 0.0
      %1811 = vmatpush1.msra.mxu0 0.0
      %1812 = vmatprep.subr.mxu0 0.0
      %1813 = vmatpush1.msra.mxu0 0.0
      %1814 = vmatprep.subr.mxu0 0.0
      %1815 = vmatpush1.msra.mxu0 0.0
      %1816 = vmatprep.subr.mxu0 0.0
      %1817 = vmatpush1.msra.mxu0 0.0
      %1818 = vmatprep.subr.mxu0 0.0
      %1819 = vmatpush1.msra.mxu0 0.0
      %1820 = vmatprep.subr.mxu0 0.0
      %1821 = vmatpush1.msra.mxu0 0.0
      %1822 = vmatprep.subr.mxu0 0.0
      %1823 = vmatpush1.msra.mxu0 0.0
      %1824 = vmatprep.subr.mxu0 0.0
      %1825 = vmatpush1.msra.mxu0 0.0
      %1826 = vmatprep.subr.mxu0 0.0
      %1827 = vmatpush1.msra.mxu0 0.0
      %1828 = vmatprep.subr.mxu0 0.0
      %1829 = vmatpush1.msra.mxu0 0.0
      %1830 = vmatprep.subr.mxu0 0.0
      %1831 = vmatpush1.msra.mxu0 0.0
      %1832 = vmatprep.subr.mxu0 0.0
      %1833 = vmatpush1.msra.mxu0 0.0
      %1834 = vmatprep.mubr.f32.mxu0 0.0
      %1835 = vmatmul.mubr.f32.gmra.mrb[0].mxu0 %v1760
      %v1836 = vpop.f32.mrb[0].mxu0
      %v1837 = vadd.f32 0.0, %v1836
      %v1838 = vpop.f32.mrb[0].mxu0
      %1839 = vmatprep.mubr.f32.mxu0 0.0
      %1840 = vmatmul.mubr.f32.gmra.mrb[0].mxu0 %v1763
      %v1841 = vpop.f32.mrb[0].mxu0
      %v1842 = vadd.f32 0.0, %v1841
      %v1843 = vpop.f32.mrb[0].mxu0
      %1844 = vmatprep.mubr.f32.mxu0 0.0
      %1845 = vmatmul.mubr.f32.gmra.mrb[0].mxu0 %v1766
      %v1846 = vpop.f32.mrb[0].mxu0
      %v1847 = vadd.f32 0.0, %v1846
      %v1848 = vpop.f32.mrb[0].mxu0
      %1849 = vdwg.mxu0
      %v1851 = vsel %vm646, %v1837, 0
      %v1854 = vsel %vm646, %v1842, 0
      %v1857 = vsel %vm646, %v1847, 0
      %1859 = vmatprep.subr.mxu0 0.0
      %1860 = vmatpush1.msra.mxu0 %v629
      %1861 = vmatprep.subr.mxu0 0.0
      %1862 = vmatpush1.msra.mxu0 0.0
      %1863 = vmatprep.subr.mxu0 0.0
      %1864 = vmatpush1.msra.mxu0 0.0
      %1865 = vmatprep.subr.mxu0 0.0
      %1866 = vmatpush1.msra.mxu0 0.0
      %1867 = vmatprep.subr.mxu0 0.0
      %1868 = vmatpush1.msra.mxu0 0.0
      %1869 = vmatprep.subr.mxu0 0.0
      %1870 = vmatpush1.msra.mxu0 0.0
      %1871 = vmatprep.subr.mxu0 0.0
      %1872 = vmatpush1.msra.mxu0 0.0
      %1873 = vmatprep.subr.mxu0 0.0
      %1874 = vmatpush1.msra.mxu0 0.0
      %1875 = vmatprep.subr.mxu0 0.0
      %1876 = vmatpush1.msra.mxu0 0.0
      %1877 = vmatprep.subr.mxu0 0.0
      %1878 = vmatpush1.msra.mxu0 0.0
      %1879 = vmatprep.subr.mxu0 0.0
      %1880 = vmatpush1.msra.mxu0 0.0
      %1881 = vmatprep.subr.mxu0 0.0
      %1882 = vmatpush1.msra.mxu0 0.0
      %1883 = vmatprep.subr.mxu0 0.0
      %1884 = vmatpush1.msra.mxu0 0.0
      %1885 = vmatprep.subr.mxu0 0.0
      %1886 = vmatpush1.msra.mxu0 0.0
      %1887 = vmatprep.subr.mxu0 0.0
      %1888 = vmatpush1.msra.mxu0 0.0
      %1889 = vmatprep.subr.mxu0 0.0
      %1890 = vmatpush1.msra.mxu0 0.0
      %1891 = vmatprep.subr.mxu0 0.0
      %1892 = vmatpush1.msra.mxu0 0.0
      %1893 = vmatprep.subr.mxu0 0.0
      %1894 = vmatpush1.msra.mxu0 0.0
      %1895 = vmatprep.subr.mxu0 0.0
      %1896 = vmatpush1.msra.mxu0 0.0
      %1897 = vmatprep.subr.mxu0 0.0
      %1898 = vmatpush1.msra.mxu0 0.0
      %1899 = vmatprep.subr.mxu0 0.0
      %1900 = vmatpush1.msra.mxu0 0.0
      %1901 = vmatprep.subr.mxu0 0.0
      %1902 = vmatpush1.msra.mxu0 0.0
      %1903 = vmatprep.subr.mxu0 0.0
      %1904 = vmatpush1.msra.mxu0 0.0
      %1905 = vmatprep.subr.mxu0 0.0
      %1906 = vmatpush1.msra.mxu0 0.0
      %1907 = vmatprep.subr.mxu0 0.0
      %1908 = vmatpush1.msra.mxu0 0.0
      %1909 = vmatprep.subr.mxu0 0.0
      %1910 = vmatpush1.msra.mxu0 0.0
      %1911 = vmatprep.subr.mxu0 0.0
      %1912 = vmatpush1.msra.mxu0 0.0
      %1913 = vmatprep.subr.mxu0 0.0
      %1914 = vmatpush1.msra.mxu0 0.0
      %1915 = vmatprep.subr.mxu0 0.0
      %1916 = vmatpush1.msra.mxu0 0.0
      %1917 = vmatprep.subr.mxu0 0.0
      %1918 = vmatpush1.msra.mxu0 0.0
      %1919 = vmatprep.subr.mxu0 0.0
      %1920 = vmatpush1.msra.mxu0 0.0
      %1921 = vmatprep.subr.mxu0 0.0
      %1922 = vmatpush1.msra.mxu0 0.0
      %1923 = vmatprep.mubr.f32.mxu0 0.0
      %1924 = vmatmul.mubr.f32.gmra.mrb[0].mxu0 %v1851
      %v1925 = vpop.f32.mrb[0].mxu0
      %v1926 = vadd.f32 0.0, %v1925
      %v1927 = vpop.f32.mrb[0].mxu0
      %1928 = vmatprep.mubr.f32.mxu0 0.0
      %1929 = vmatmul.mubr.f32.gmra.mrb[0].mxu0 %v1854
      %v1930 = vpop.f32.mrb[0].mxu0
      %v1931 = vadd.f32 0.0, %v1930
      %v1932 = vpop.f32.mrb[0].mxu0
      %1933 = vmatprep.mubr.f32.mxu0 0.0
      %1934 = vmatmul.mubr.f32.gmra.mrb[0].mxu0 %v1857
      %v1935 = vpop.f32.mrb[0].mxu0
      %v1936 = vadd.f32 0.0, %v1935
      %v1937 = vpop.f32.mrb[0].mxu0
      %1938 = vdwg.mxu0
      %v1939 = vadd.f32 %v1611, %v1926
      %v1940 = vadd.f32 %v1612, %v1931
      %v1941 = vadd.f32 %v1613, %v1936
      %1942 = vrot.lane.b32.xlu0 %v634, 96
      %v1943 = vpop.permute.xlu0 %1942
      %1944 = vrot.lane.b32.xlu0 %v635, 96
      %v1945 = vpop.permute.xlu0 %1944
      %1946 = vrot.lane.b32.xlu0 %v636, 96
      %v1947 = vpop.permute.xlu0 %1946
      %1948 = vrot.lane.b32.xlu0 %v610, 32
      %v1949 = vpop.permute.xlu0 %1948
      %1950 = vrot.lane.b32.xlu0 %v616, 32
      %v1951 = vpop.permute.xlu0 %1950
      %1952 = vrot.lane.b32.xlu0 %v622, 32
      %v1953 = vpop.permute.xlu0 %1952
      %v1954 = vsel %vm646, %v1943, 0
      %v1956 = vsel %vm646, %v1945, 0
      %v1958 = vsel %vm646, %v1947, 0
      %v1960 = vsel %vm646, %v1949, 0
      %v1962 = vsel %vm646, %v1951, 0
      %v1964 = vsel %vm646, %v1953, 0
      %1966 = vmatprep.subr.mxu0 0.0
      %1967 = vmatpush1.xpose.msra.mxu0 %v1960
      %1968 = vmatprep.subr.mxu0 0.0
      %1969 = vmatpush1.xpose.msra.mxu0 %v1962
      %1970 = vmatprep.subr.mxu0 0.0
      %1971 = vmatpush1.xpose.msra.mxu0 %v1964
      %1972 = vmatprep.subr.mxu0 0.0
      %1973 = vmatpush1.xpose.msra.mxu0 0.0
      %1974 = vmatprep.subr.mxu0 0.0
      %1975 = vmatpush1.xpose.msra.mxu0 0.0
      %1976 = vmatprep.subr.mxu0 0.0
      %1977 = vmatpush1.xpose.msra.mxu0 0.0
      %1978 = vmatprep.subr.mxu0 0.0
      %1979 = vmatpush1.xpose.msra.mxu0 0.0
      %1980 = vmatprep.subr.mxu0 0.0
      %1981 = vmatpush1.xpose.msra.mxu0 0.0
      %1982 = vmatprep.subr.mxu0 0.0
      %1983 = vmatpush1.xpose.msra.mxu0 0.0
      %1984 = vmatprep.subr.mxu0 0.0
      %1985 = vmatpush1.xpose.msra.mxu0 0.0
      %1986 = vmatprep.subr.mxu0 0.0
      %1987 = vmatpush1.xpose.msra.mxu0 0.0
      %1988 = vmatprep.subr.mxu0 0.0
      %1989 = vmatpush1.xpose.msra.mxu0 0.0
      %1990 = vmatprep.subr.mxu0 0.0
      %1991 = vmatpush1.xpose.msra.mxu0 0.0
      %1992 = vmatprep.subr.mxu0 0.0
      %1993 = vmatpush1.xpose.msra.mxu0 0.0
      %1994 = vmatprep.subr.mxu0 0.0
      %1995 = vmatpush1.xpose.msra.mxu0 0.0
      %1996 = vmatprep.subr.mxu0 0.0
      %1997 = vmatpush1.xpose.msra.mxu0 0.0
      %1998 = vmatprep.subr.mxu0 0.0
      %1999 = vmatpush1.xpose.msra.mxu0 0.0
      %2000 = vmatprep.subr.mxu0 0.0
      %2001 = vmatpush1.xpose.msra.mxu0 0.0
      %2002 = vmatprep.subr.mxu0 0.0
      %2003 = vmatpush1.xpose.msra.mxu0 0.0
      %2004 = vmatprep.subr.mxu0 0.0
      %2005 = vmatpush1.xpose.msra.mxu0 0.0
      %2006 = vmatprep.subr.mxu0 0.0
      %2007 = vmatpush1.xpose.msra.mxu0 0.0
      %2008 = vmatprep.subr.mxu0 0.0
      %2009 = vmatpush1.xpose.msra.mxu0 0.0
      %2010 = vmatprep.subr.mxu0 0.0
      %2011 = vmatpush1.xpose.msra.mxu0 0.0
      %2012 = vmatprep.subr.mxu0 0.0
      %2013 = vmatpush1.xpose.msra.mxu0 0.0
      %2014 = vmatprep.subr.mxu0 0.0
      %2015 = vmatpush1.xpose.msra.mxu0 0.0
      %2016 = vmatprep.subr.mxu0 0.0
      %2017 = vmatpush1.xpose.msra.mxu0 0.0
      %2018 = vmatprep.subr.mxu0 0.0
      %2019 = vmatpush1.xpose.msra.mxu0 0.0
      %2020 = vmatprep.subr.mxu0 0.0
      %2021 = vmatpush1.xpose.msra.mxu0 0.0
      %2022 = vmatprep.subr.mxu0 0.0
      %2023 = vmatpush1.xpose.msra.mxu0 0.0
      %2024 = vmatprep.subr.mxu0 0.0
      %2025 = vmatpush1.xpose.msra.mxu0 0.0
      %2026 = vmatprep.subr.mxu0 0.0
      %2027 = vmatpush1.xpose.msra.mxu0 0.0
      %2028 = vmatprep.subr.mxu0 0.0
      %2029 = vmatpush1.xpose.msra.mxu0 0.0
      %2030 = vmatprep.mubr.f32.mxu0 0.0
      %2031 = vmatmul.mubr.f32.gmra.mrb[0].mxu0 %v1954
      %v2032 = vpop.f32.mrb[0].mxu0
      %v2033 = vadd.f32 0.0, %v2032
      %v2034 = vpop.f32.mrb[0].mxu0
      %2035 = vmatprep.mubr.f32.mxu0 0.0
      %2036 = vmatmul.mubr.f32.gmra.mrb[0].mxu0 %v1956
      %v2037 = vpop.f32.mrb[0].mxu0
      %v2038 = vadd.f32 0.0, %v2037
      %v2039 = vpop.f32.mrb[0].mxu0
      %2040 = vmatprep.mubr.f32.mxu0 0.0
      %2041 = vmatmul.mubr.f32.gmra.mrb[0].mxu0 %v1958
      %v2042 = vpop.f32.mrb[0].mxu0
      %v2043 = vadd.f32 0.0, %v2042
      %v2044 = vpop.f32.mrb[0].mxu0
      %2045 = vdwg.mxu0
      %v2046 = vsel %vm742, %v2033, -inf
      %2047 = vmax.xlane.f32.xlu0 %v2046
      %v2048 = vpop.xlane.xlu0 %2047
      %v2049 = vsel %vm742, %v2038, -inf
      %2050 = vmax.xlane.f32.xlu0 %v2049
      %v2051 = vpop.xlane.xlu0 %2050
      %v2052 = vsel %vm749, %v2043, -inf
      %2053 = vmax.xlane.f32.xlu0 %v2052
      %v2054 = vpop.xlane.xlu0 %2053
      %v2055 = vsub.f32 %v2033, %v2048
      %v2056 = vsub.f32 %v2038, %v2051
      %v2057 = vsub.f32 %v2043, %v2054
      %v2058 = vmul.f32 %v2055, 1.442695
      %v2059 = vpow.pop %v2058
      %v2060 = vmul.f32 %v2056, 1.442695
      %v2061 = vpow.pop %v2060
      %v2062 = vmul.f32 %v2057, 1.442695
      %v2063 = vpow.pop %v2062
      %v2064 = vsel %vm742, %v2059, 0.0
      %2065 = vadd.xlane.f32.xlu0 %v2064
      %v2066 = vpop.xlane.xlu0 %2065
      %v2067 = vsel %vm742, %v2061, 0.0
      %2068 = vadd.xlane.f32.xlu0 %v2067
      %v2069 = vpop.xlane.xlu0 %2068
      %v2070 = vsel %vm749, %v2063, 0.0
      %2071 = vadd.xlane.f32.xlu0 %v2070
      %v2072 = vpop.xlane.xlu0 %2071
      %v2073 = vrcp.pop %v2066
      %v2074 = vrcp.pop %v2069
      %v2075 = vrcp.pop %v2072
      %v2076 = vmul.f32 %v2059, %v2073
      %v2077 = vmul.f32 %v2061, %v2074
      %v2078 = vmul.f32 %v2063, %v2075
      %2079 = vrot.lane.b32.xlu0 %v612, 96
      %v2080 = vpop.permute.xlu0 %2079
      %2081 = vrot.lane.b32.xlu0 %v618, 96
      %v2082 = vpop.permute.xlu0 %2081
      %2083 = vrot.lane.b32.xlu0 %v624, 96
      %v2084 = vpop.permute.xlu0 %2083
      %v2088 = vsel %vm742, %v2076, 0
      %v2091 = vsel %vm742, %v2077, 0
      %v2094 = vsel %vm742, %v2078, 0
      %v2096 = vsel %vm786, %v2084, 0
      %2098 = vmatprep.subr.mxu0 0.0
      %2099 = vmatpush1.msra.mxu0 %v2080
      %2100 = vmatprep.subr.mxu0 0.0
      %2101 = vmatpush1.msra.mxu0 %v2082
      %2102 = vmatprep.subr.mxu0 0.0
      %2103 = vmatpush1.msra.mxu0 %v2096
      %2104 = vmatprep.subr.mxu0 0.0
      %2105 = vmatpush1.msra.mxu0 0.0
      %2106 = vmatprep.subr.mxu0 0.0
      %2107 = vmatpush1.msra.mxu0 0.0
      %2108 = vmatprep.subr.mxu0 0.0
      %2109 = vmatpush1.msra.mxu0 0.0
      %2110 = vmatprep.subr.mxu0 0.0
      %2111 = vmatpush1.msra.mxu0 0.0
      %2112 = vmatprep.subr.mxu0 0.0
      %2113 = vmatpush1.msra.mxu0 0.0
      %2114 = vmatprep.subr.mxu0 0.0
      %2115 = vmatpush1.msra.mxu0 0.0
      %2116 = vmatprep.subr.mxu0 0.0
      %2117 = vmatpush1.msra.mxu0 0.0
      %2118 = vmatprep.subr.mxu0 0.0
      %2119 = vmatpush1.msra.mxu0 0.0
      %2120 = vmatprep.subr.mxu0 0.0
      %2121 = vmatpush1.msra.mxu0 0.0
      %2122 = vmatprep.subr.mxu0 0.0
      %2123 = vmatpush1.msra.mxu0 0.0
      %2124 = vmatprep.subr.mxu0 0.0
      %2125 = vmatpush1.msra.mxu0 0.0
      %2126 = vmatprep.subr.mxu0 0.0
      %2127 = vmatpush1.msra.mxu0 0.0
      %2128 = vmatprep.subr.mxu0 0.0
      %2129 = vmatpush1.msra.mxu0 0.0
      %2130 = vmatprep.subr.mxu0 0.0
      %2131 = vmatpush1.msra.mxu0 0.0
      %2132 = vmatprep.subr.mxu0 0.0
      %2133 = vmatpush1.msra.mxu0 0.0
      %2134 = vmatprep.subr.mxu0 0.0
      %2135 = vmatpush1.msra.mxu0 0.0
      %2136 = vmatprep.subr.mxu0 0.0
      %2137 = vmatpush1.msra.mxu0 0.0
      %2138 = vmatprep.subr.mxu0 0.0
      %2139 = vmatpush1.msra.mxu0 0.0
      %2140 = vmatprep.subr.mxu0 0.0
      %2141 = vmatpush1.msra.mxu0 0.0
      %2142 = vmatprep.subr.mxu0 0.0
      %2143 = vmatpush1.msra.mxu0 0.0
      %2144 = vmatprep.subr.mxu0 0.0
      %2145 = vmatpush1.msra.mxu0 0.0
      %2146 = vmatprep.subr.mxu0 0.0
      %2147 = vmatpush1.msra.mxu0 0.0
      %2148 = vmatprep.subr.mxu0 0.0
      %2149 = vmatpush1.msra.mxu0 0.0
      %2150 = vmatprep.subr.mxu0 0.0
      %2151 = vmatpush1.msra.mxu0 0.0
      %2152 = vmatprep.subr.mxu0 0.0
      %2153 = vmatpush1.msra.mxu0 0.0
      %2154 = vmatprep.subr.mxu0 0.0
      %2155 = vmatpush1.msra.mxu0 0.0
      %2156 = vmatprep.subr.mxu0 0.0
      %2157 = vmatpush1.msra.mxu0 0.0
      %2158 = vmatprep.subr.mxu0 0.0
      %2159 = vmatpush1.msra.mxu0 0.0
      %2160 = vmatprep.subr.mxu0 0.0
      %2161 = vmatpush1.msra.mxu0 0.0
      %2162 = vmatprep.mubr.f32.mxu0 0.0
      %2163 = vmatmul.mubr.f32.gmra.mrb[0].mxu0 %v2088
      %v2164 = vpop.f32.mrb[0].mxu0
      %v2165 = vadd.f32 0.0, %v2164
      %v2166 = vpop.f32.mrb[0].mxu0
      %2167 = vmatprep.mubr.f32.mxu0 0.0
      %2168 = vmatmul.mubr.f32.gmra.mrb[0].mxu0 %v2091
      %v2169 = vpop.f32.mrb[0].mxu0
      %v2170 = vadd.f32 0.0, %v2169
      %v2171 = vpop.f32.mrb[0].mxu0
      %2172 = vmatprep.mubr.f32.mxu0 0.0
      %2173 = vmatmul.mubr.f32.gmra.mrb[0].mxu0 %v2094
      %v2174 = vpop.f32.mrb[0].mxu0
      %v2175 = vadd.f32 0.0, %v2174
      %v2176 = vpop.f32.mrb[0].mxu0
      %2177 = vdwg.mxu0
      %v2179 = vsel %vm646, %v2165, 0
      %v2182 = vsel %vm646, %v2170, 0
      %v2185 = vsel %vm646, %v2175, 0
      %2187 = vmatprep.subr.mxu0 0.0
      %2188 = vmatpush1.msra.mxu0 %v630
      %2189 = vmatprep.subr.mxu0 0.0
      %2190 = vmatpush1.msra.mxu0 0.0
      %2191 = vmatprep.subr.mxu0 0.0
      %2192 = vmatpush1.msra.mxu0 0.0
      %2193 = vmatprep.subr.mxu0 0.0
      %2194 = vmatpush1.msra.mxu0 0.0
      %2195 = vmatprep.subr.mxu0 0.0
      %2196 = vmatpush1.msra.mxu0 0.0
      %2197 = vmatprep.subr.mxu0 0.0
      %2198 = vmatpush1.msra.mxu0 0.0
      %2199 = vmatprep.subr.mxu0 0.0
      %2200 = vmatpush1.msra.mxu0 0.0
      %2201 = vmatprep.subr.mxu0 0.0
      %2202 = vmatpush1.msra.mxu0 0.0
      %2203 = vmatprep.subr.mxu0 0.0
      %2204 = vmatpush1.msra.mxu0 0.0
      %2205 = vmatprep.subr.mxu0 0.0
      %2206 = vmatpush1.msra.mxu0 0.0
      %2207 = vmatprep.subr.mxu0 0.0
      %2208 = vmatpush1.msra.mxu0 0.0
      %2209 = vmatprep.subr.mxu0 0.0
      %2210 = vmatpush1.msra.mxu0 0.0
      %2211 = vmatprep.subr.mxu0 0.0
      %2212 = vmatpush1.msra.mxu0 0.0
      %2213 = vmatprep.subr.mxu0 0.0
      %2214 = vmatpush1.msra.mxu0 0.0
      %2215 = vmatprep.subr.mxu0 0.0
      %2216 = vmatpush1.msra.mxu0 0.0
      %2217 = vmatprep.subr.mxu0 0.0
      %2218 = vmatpush1.msra.mxu0 0.0
      %2219 = vmatprep.subr.mxu0 0.0
      %2220 = vmatpush1.msra.mxu0 0.0
      %2221 = vmatprep.subr.mxu0 0.0
      %2222 = vmatpush1.msra.mxu0 0.0
      %2223 = vmatprep.subr.mxu0 0.0
      %2224 = vmatpush1.msra.mxu0 0.0
      %2225 = vmatprep.subr.mxu0 0.0
      %2226 = vmatpush1.msra.mxu0 0.0
      %2227 = vmatprep.subr.mxu0 0.0
      %2228 = vmatpush1.msra.mxu0 0.0
      %2229 = vmatprep.subr.mxu0 0.0
      %2230 = vmatpush1.msra.mxu0 0.0
      %2231 = vmatprep.subr.mxu0 0.0
      %2232 = vmatpush1.msra.mxu0 0.0
      %2233 = vmatprep.subr.mxu0 0.0
      %2234 = vmatpush1.msra.mxu0 0.0
      %2235 = vmatprep.subr.mxu0 0.0
      %2236 = vmatpush1.msra.mxu0 0.0
      %2237 = vmatprep.subr.mxu0 0.0
      %2238 = vmatpush1.msra.mxu0 0.0
      %2239 = vmatprep.subr.mxu0 0.0
      %2240 = vmatpush1.msra.mxu0 0.0
      %2241 = vmatprep.subr.mxu0 0.0
      %2242 = vmatpush1.msra.mxu0 0.0
      %2243 = vmatprep.subr.mxu0 0.0
      %2244 = vmatpush1.msra.mxu0 0.0
      %2245 = vmatprep.subr.mxu0 0.0
      %2246 = vmatpush1.msra.mxu0 0.0
      %2247 = vmatprep.subr.mxu0 0.0
      %2248 = vmatpush1.msra.mxu0 0.0
      %2249 = vmatprep.subr.mxu0 0.0
      %2250 = vmatpush1.msra.mxu0 0.0
      %2251 = vmatprep.mubr.f32.mxu0 0.0
      %2252 = vmatmul.mubr.f32.gmra.mrb[0].mxu0 %v2179
      %v2253 = vpop.f32.mrb[0].mxu0
      %v2254 = vadd.f32 0.0, %v2253
      %v2255 = vpop.f32.mrb[0].mxu0
      %2256 = vmatprep.mubr.f32.mxu0 0.0
      %2257 = vmatmul.mubr.f32.gmra.mrb[0].mxu0 %v2182
      %v2258 = vpop.f32.mrb[0].mxu0
      %v2259 = vadd.f32 0.0, %v2258
      %v2260 = vpop.f32.mrb[0].mxu0
      %2261 = vmatprep.mubr.f32.mxu0 0.0
      %2262 = vmatmul.mubr.f32.gmra.mrb[0].mxu0 %v2185
      %v2263 = vpop.f32.mrb[0].mxu0
      %v2264 = vadd.f32 0.0, %v2263
      %v2265 = vpop.f32.mrb[0].mxu0
      %2266 = vdwg.mxu0
      %v2267 = vadd.f32 %v1939, %v2254
      %v2268 = vadd.f32 %v1940, %v2259
      %v2269 = vadd.f32 %v1941, %v2264
      %2270 = vrot.lane.b32.xlu0 %v634, 88
      %v2271 = vpop.permute.xlu0 %2270
      %2272 = vrot.lane.b32.xlu0 %v635, 88
      %v2273 = vpop.permute.xlu0 %2272
      %2274 = vrot.lane.b32.xlu0 %v636, 88
      %v2275 = vpop.permute.xlu0 %2274
      %2276 = vrot.lane.b32.xlu0 %v610, 24
      %v2277 = vpop.permute.xlu0 %2276
      %2278 = vrot.lane.b32.xlu0 %v616, 24
      %v2279 = vpop.permute.xlu0 %2278
      %2280 = vrot.lane.b32.xlu0 %v622, 24
      %v2281 = vpop.permute.xlu0 %2280
      %v2282 = vsel %vm646, %v2271, 0
      %v2284 = vsel %vm646, %v2273, 0
      %v2286 = vsel %vm646, %v2275, 0
      %v2288 = vsel %vm646, %v2277, 0
      %v2290 = vsel %vm646, %v2279, 0
      %v2292 = vsel %vm646, %v2281, 0
      %2294 = vmatprep.subr.mxu0 0.0
      %2295 = vmatpush1.xpose.msra.mxu0 %v2288
      %2296 = vmatprep.subr.mxu0 0.0
      %2297 = vmatpush1.xpose.msra.mxu0 %v2290
      %2298 = vmatprep.subr.mxu0 0.0
      %2299 = vmatpush1.xpose.msra.mxu0 %v2292
      %2300 = vmatprep.subr.mxu0 0.0
      %2301 = vmatpush1.xpose.msra.mxu0 0.0
      %2302 = vmatprep.subr.mxu0 0.0
      %2303 = vmatpush1.xpose.msra.mxu0 0.0
      %2304 = vmatprep.subr.mxu0 0.0
      %2305 = vmatpush1.xpose.msra.mxu0 0.0
      %2306 = vmatprep.subr.mxu0 0.0
      %2307 = vmatpush1.xpose.msra.mxu0 0.0
      %2308 = vmatprep.subr.mxu0 0.0
      %2309 = vmatpush1.xpose.msra.mxu0 0.0
      %2310 = vmatprep.subr.mxu0 0.0
      %2311 = vmatpush1.xpose.msra.mxu0 0.0
      %2312 = vmatprep.subr.mxu0 0.0
      %2313 = vmatpush1.xpose.msra.mxu0 0.0
      %2314 = vmatprep.subr.mxu0 0.0
      %2315 = vmatpush1.xpose.msra.mxu0 0.0
      %2316 = vmatprep.subr.mxu0 0.0
      %2317 = vmatpush1.xpose.msra.mxu0 0.0
      %2318 = vmatprep.subr.mxu0 0.0
      %2319 = vmatpush1.xpose.msra.mxu0 0.0
      %2320 = vmatprep.subr.mxu0 0.0
      %2321 = vmatpush1.xpose.msra.mxu0 0.0
      %2322 = vmatprep.subr.mxu0 0.0
      %2323 = vmatpush1.xpose.msra.mxu0 0.0
      %2324 = vmatprep.subr.mxu0 0.0
      %2325 = vmatpush1.xpose.msra.mxu0 0.0
      %2326 = vmatprep.subr.mxu0 0.0
      %2327 = vmatpush1.xpose.msra.mxu0 0.0
      %2328 = vmatprep.subr.mxu0 0.0
      %2329 = vmatpush1.xpose.msra.mxu0 0.0
      %2330 = vmatprep.subr.mxu0 0.0
      %2331 = vmatpush1.xpose.msra.mxu0 0.0
      %2332 = vmatprep.subr.mxu0 0.0
      %2333 = vmatpush1.xpose.msra.mxu0 0.0
      %2334 = vmatprep.subr.mxu0 0.0
      %2335 = vmatpush1.xpose.msra.mxu0 0.0
      %2336 = vmatprep.subr.mxu0 0.0
      %2337 = vmatpush1.xpose.msra.mxu0 0.0
      %2338 = vmatprep.subr.mxu0 0.0
      %2339 = vmatpush1.xpose.msra.mxu0 0.0
      %2340 = vmatprep.subr.mxu0 0.0
      %2341 = vmatpush1.xpose.msra.mxu0 0.0
      %2342 = vmatprep.subr.mxu0 0.0
      %2343 = vmatpush1.xpose.msra.mxu0 0.0
      %2344 = vmatprep.subr.mxu0 0.0
      %2345 = vmatpush1.xpose.msra.mxu0 0.0
      %2346 = vmatprep.subr.mxu0 0.0
      %2347 = vmatpush1.xpose.msra.mxu0 0.0
      %2348 = vmatprep.subr.mxu0 0.0
      %2349 = vmatpush1.xpose.msra.mxu0 0.0
      %2350 = vmatprep.subr.mxu0 0.0
      %2351 = vmatpush1.xpose.msra.mxu0 0.0
      %2352 = vmatprep.subr.mxu0 0.0
      %2353 = vmatpush1.xpose.msra.mxu0 0.0
      %2354 = vmatprep.subr.mxu0 0.0
      %2355 = vmatpush1.xpose.msra.mxu0 0.0
      %2356 = vmatprep.subr.mxu0 0.0
      %2357 = vmatpush1.xpose.msra.mxu0 0.0
      %2358 = vmatprep.mubr.f32.mxu0 0.0
      %2359 = vmatmul.mubr.f32.gmra.mrb[0].mxu0 %v2282
      %v2360 = vpop.f32.mrb[0].mxu0
      %v2361 = vadd.f32 0.0, %v2360
      %v2362 = vpop.f32.mrb[0].mxu0
      %2363 = vmatprep.mubr.f32.mxu0 0.0
      %2364 = vmatmul.mubr.f32.gmra.mrb[0].mxu0 %v2284
      %v2365 = vpop.f32.mrb[0].mxu0
      %v2366 = vadd.f32 0.0, %v2365
      %v2367 = vpop.f32.mrb[0].mxu0
      %2368 = vmatprep.mubr.f32.mxu0 0.0
      %2369 = vmatmul.mubr.f32.gmra.mrb[0].mxu0 %v2286
      %v2370 = vpop.f32.mrb[0].mxu0
      %v2371 = vadd.f32 0.0, %v2370
      %v2372 = vpop.f32.mrb[0].mxu0
      %2373 = vdwg.mxu0
      %v2374 = vsel %vm742, %v2361, -inf
      %2375 = vmax.xlane.f32.xlu0 %v2374
      %v2376 = vpop.xlane.xlu0 %2375
      %v2377 = vsel %vm742, %v2366, -inf
      %2378 = vmax.xlane.f32.xlu0 %v2377
      %v2379 = vpop.xlane.xlu0 %2378
      %v2380 = vsel %vm749, %v2371, -inf
      %2381 = vmax.xlane.f32.xlu0 %v2380
      %v2382 = vpop.xlane.xlu0 %2381
      %v2383 = vsub.f32 %v2361, %v2376
      %v2384 = vsub.f32 %v2366, %v2379
      %v2385 = vsub.f32 %v2371, %v2382
      %v2386 = vmul.f32 %v2383, 1.442695
      %v2387 = vpow.pop %v2386
      %v2388 = vmul.f32 %v2384, 1.442695
      %v2389 = vpow.pop %v2388
      %v2390 = vmul.f32 %v2385, 1.442695
      %v2391 = vpow.pop %v2390
      %v2392 = vsel %vm742, %v2387, 0.0
      %2393 = vadd.xlane.f32.xlu0 %v2392
      %v2394 = vpop.xlane.xlu0 %2393
      %v2395 = vsel %vm742, %v2389, 0.0
      %2396 = vadd.xlane.f32.xlu0 %v2395
      %v2397 = vpop.xlane.xlu0 %2396
      %v2398 = vsel %vm749, %v2391, 0.0
      %2399 = vadd.xlane.f32.xlu0 %v2398
      %v2400 = vpop.xlane.xlu0 %2399
      %v2401 = vrcp.pop %v2394
      %v2402 = vrcp.pop %v2397
      %v2403 = vrcp.pop %v2400
      %v2404 = vmul.f32 %v2387, %v2401
      %v2405 = vmul.f32 %v2389, %v2402
      %v2406 = vmul.f32 %v2391, %v2403
      %2407 = vrot.lane.b32.xlu0 %v612, 88
      %v2408 = vpop.permute.xlu0 %2407
      %2409 = vrot.lane.b32.xlu0 %v618, 88
      %v2410 = vpop.permute.xlu0 %2409
      %2411 = vrot.lane.b32.xlu0 %v624, 88
      %v2412 = vpop.permute.xlu0 %2411
      %v2416 = vsel %vm742, %v2404, 0
      %v2419 = vsel %vm742, %v2405, 0
      %v2422 = vsel %vm742, %v2406, 0
      %v2424 = vsel %vm786, %v2412, 0
      %2426 = vmatprep.subr.mxu0 0.0
      %2427 = vmatpush1.msra.mxu0 %v2408
      %2428 = vmatprep.subr.mxu0 0.0
      %2429 = vmatpush1.msra.mxu0 %v2410
      %2430 = vmatprep.subr.mxu0 0.0
      %2431 = vmatpush1.msra.mxu0 %v2424
      %2432 = vmatprep.subr.mxu0 0.0
      %2433 = vmatpush1.msra.mxu0 0.0
      %2434 = vmatprep.subr.mxu0 0.0
      %2435 = vmatpush1.msra.mxu0 0.0
      %2436 = vmatprep.subr.mxu0 0.0
      %2437 = vmatpush1.msra.mxu0 0.0
      %2438 = vmatprep.subr.mxu0 0.0
      %2439 = vmatpush1.msra.mxu0 0.0
      %2440 = vmatprep.subr.mxu0 0.0
      %2441 = vmatpush1.msra.mxu0 0.0
      %2442 = vmatprep.subr.mxu0 0.0
      %2443 = vmatpush1.msra.mxu0 0.0
      %2444 = vmatprep.subr.mxu0 0.0
      %2445 = vmatpush1.msra.mxu0 0.0
      %2446 = vmatprep.subr.mxu0 0.0
      %2447 = vmatpush1.msra.mxu0 0.0
      %2448 = vmatprep.subr.mxu0 0.0
      %2449 = vmatpush1.msra.mxu0 0.0
      %2450 = vmatprep.subr.mxu0 0.0
      %2451 = vmatpush1.msra.mxu0 0.0
      %2452 = vmatprep.subr.mxu0 0.0
      %2453 = vmatpush1.msra.mxu0 0.0
      %2454 = vmatprep.subr.mxu0 0.0
      %2455 = vmatpush1.msra.mxu0 0.0
      %2456 = vmatprep.subr.mxu0 0.0
      %2457 = vmatpush1.msra.mxu0 0.0
      %2458 = vmatprep.subr.mxu0 0.0
      %2459 = vmatpush1.msra.mxu0 0.0
      %2460 = vmatprep.subr.mxu0 0.0
      %2461 = vmatpush1.msra.mxu0 0.0
      %2462 = vmatprep.subr.mxu0 0.0
      %2463 = vmatpush1.msra.mxu0 0.0
      %2464 = vmatprep.subr.mxu0 0.0
      %2465 = vmatpush1.msra.mxu0 0.0
      %2466 = vmatprep.subr.mxu0 0.0
      %2467 = vmatpush1.msra.mxu0 0.0
      %2468 = vmatprep.subr.mxu0 0.0
      %2469 = vmatpush1.msra.mxu0 0.0
      %2470 = vmatprep.subr.mxu0 0.0
      %2471 = vmatpush1.msra.mxu0 0.0
      %2472 = vmatprep.subr.mxu0 0.0
      %2473 = vmatpush1.msra.mxu0 0.0
      %2474 = vmatprep.subr.mxu0 0.0
      %2475 = vmatpush1.msra.mxu0 0.0
      %2476 = vmatprep.subr.mxu0 0.0
      %2477 = vmatpush1.msra.mxu0 0.0
      %2478 = vmatprep.subr.mxu0 0.0
      %2479 = vmatpush1.msra.mxu0 0.0
      %2480 = vmatprep.subr.mxu0 0.0
      %2481 = vmatpush1.msra.mxu0 0.0
      %2482 = vmatprep.subr.mxu0 0.0
      %2483 = vmatpush1.msra.mxu0 0.0
      %2484 = vmatprep.subr.mxu0 0.0
      %2485 = vmatpush1.msra.mxu0 0.0
      %2486 = vmatprep.subr.mxu0 0.0
      %2487 = vmatpush1.msra.mxu0 0.0
      %2488 = vmatprep.subr.mxu0 0.0
      %2489 = vmatpush1.msra.mxu0 0.0
      %2490 = vmatprep.mubr.f32.mxu0 0.0
      %2491 = vmatmul.mubr.f32.gmra.mrb[0].mxu0 %v2416
      %v2492 = vpop.f32.mrb[0].mxu0
      %v2493 = vadd.f32 0.0, %v2492
      %v2494 = vpop.f32.mrb[0].mxu0
      %2495 = vmatprep.mubr.f32.mxu0 0.0
      %2496 = vmatmul.mubr.f32.gmra.mrb[0].mxu0 %v2419
      %v2497 = vpop.f32.mrb[0].mxu0
      %v2498 = vadd.f32 0.0, %v2497
      %v2499 = vpop.f32.mrb[0].mxu0
      %2500 = vmatprep.mubr.f32.mxu0 0.0
      %2501 = vmatmul.mubr.f32.gmra.mrb[0].mxu0 %v2422
      %v2502 = vpop.f32.mrb[0].mxu0
      %v2503 = vadd.f32 0.0, %v2502
      %v2504 = vpop.f32.mrb[0].mxu0
      %2505 = vdwg.mxu0
      %v2507 = vsel %vm646, %v2493, 0
      %v2510 = vsel %vm646, %v2498, 0
      %v2513 = vsel %vm646, %v2503, 0
      %2515 = vmatprep.subr.mxu0 0.0
      %2516 = vmatpush1.msra.mxu0 %v631
      %2517 = vmatprep.subr.mxu0 0.0
      %2518 = vmatpush1.msra.mxu0 0.0
      %2519 = vmatprep.subr.mxu0 0.0
      %2520 = vmatpush1.msra.mxu0 0.0
      %2521 = vmatprep.subr.mxu0 0.0
      %2522 = vmatpush1.msra.mxu0 0.0
      %2523 = vmatprep.subr.mxu0 0.0
      %2524 = vmatpush1.msra.mxu0 0.0
      %2525 = vmatprep.subr.mxu0 0.0
      %2526 = vmatpush1.msra.mxu0 0.0
      %2527 = vmatprep.subr.mxu0 0.0
      %2528 = vmatpush1.msra.mxu0 0.0
      %2529 = vmatprep.subr.mxu0 0.0
      %2530 = vmatpush1.msra.mxu0 0.0
      %2531 = vmatprep.subr.mxu0 0.0
      %2532 = vmatpush1.msra.mxu0 0.0
      %2533 = vmatprep.subr.mxu0 0.0
      %2534 = vmatpush1.msra.mxu0 0.0
      %2535 = vmatprep.subr.mxu0 0.0
      %2536 = vmatpush1.msra.mxu0 0.0
      %2537 = vmatprep.subr.mxu0 0.0
      %2538 = vmatpush1.msra.mxu0 0.0
      %2539 = vmatprep.subr.mxu0 0.0
      %2540 = vmatpush1.msra.mxu0 0.0
      %2541 = vmatprep.subr.mxu0 0.0
      %2542 = vmatpush1.msra.mxu0 0.0
      %2543 = vmatprep.subr.mxu0 0.0
      %2544 = vmatpush1.msra.mxu0 0.0
      %2545 = vmatprep.subr.mxu0 0.0
      %2546 = vmatpush1.msra.mxu0 0.0
      %2547 = vmatprep.subr.mxu0 0.0
      %2548 = vmatpush1.msra.mxu0 0.0
      %2549 = vmatprep.subr.mxu0 0.0
      %2550 = vmatpush1.msra.mxu0 0.0
      %2551 = vmatprep.subr.mxu0 0.0
      %2552 = vmatpush1.msra.mxu0 0.0
      %2553 = vmatprep.subr.mxu0 0.0
      %2554 = vmatpush1.msra.mxu0 0.0
      %2555 = vmatprep.subr.mxu0 0.0
      %2556 = vmatpush1.msra.mxu0 0.0
      %2557 = vmatprep.subr.mxu0 0.0
      %2558 = vmatpush1.msra.mxu0 0.0
      %2559 = vmatprep.subr.mxu0 0.0
      %2560 = vmatpush1.msra.mxu0 0.0
      %2561 = vmatprep.subr.mxu0 0.0
      %2562 = vmatpush1.msra.mxu0 0.0
      %2563 = vmatprep.subr.mxu0 0.0
      %2564 = vmatpush1.msra.mxu0 0.0
      %2565 = vmatprep.subr.mxu0 0.0
      %2566 = vmatpush1.msra.mxu0 0.0
      %2567 = vmatprep.subr.mxu0 0.0
      %2568 = vmatpush1.msra.mxu0 0.0
      %2569 = vmatprep.subr.mxu0 0.0
      %2570 = vmatpush1.msra.mxu0 0.0
      %2571 = vmatprep.subr.mxu0 0.0
      %2572 = vmatpush1.msra.mxu0 0.0
      %2573 = vmatprep.subr.mxu0 0.0
      %2574 = vmatpush1.msra.mxu0 0.0
      %2575 = vmatprep.subr.mxu0 0.0
      %2576 = vmatpush1.msra.mxu0 0.0
      %2577 = vmatprep.subr.mxu0 0.0
      %2578 = vmatpush1.msra.mxu0 0.0
      %2579 = vmatprep.mubr.f32.mxu0 0.0
      %2580 = vmatmul.mubr.f32.gmra.mrb[0].mxu0 %v2507
      %v2581 = vpop.f32.mrb[0].mxu0
      %v2582 = vadd.f32 0.0, %v2581
      %v2583 = vpop.f32.mrb[0].mxu0
      %2584 = vmatprep.mubr.f32.mxu0 0.0
      %2585 = vmatmul.mubr.f32.gmra.mrb[0].mxu0 %v2510
      %v2586 = vpop.f32.mrb[0].mxu0
      %v2587 = vadd.f32 0.0, %v2586
      %v2588 = vpop.f32.mrb[0].mxu0
      %2589 = vmatprep.mubr.f32.mxu0 0.0
      %2590 = vmatmul.mubr.f32.gmra.mrb[0].mxu0 %v2513
      %v2591 = vpop.f32.mrb[0].mxu0
      %v2592 = vadd.f32 0.0, %v2591
      %v2593 = vpop.f32.mrb[0].mxu0
      %2594 = vdwg.mxu0
      %v2595 = vadd.f32 %v2267, %v2582
      %v2596 = vadd.f32 %v2268, %v2587
      %v2597 = vadd.f32 %v2269, %v2592
      %2598 = vrot.lane.b32.xlu0 %v634, 80
      %v2599 = vpop.permute.xlu0 %2598
      %2600 = vrot.lane.b32.xlu0 %v635, 80
      %v2601 = vpop.permute.xlu0 %2600
      %2602 = vrot.lane.b32.xlu0 %v636, 80
      %v2603 = vpop.permute.xlu0 %2602
      %2604 = vrot.lane.b32.xlu0 %v610, 16
      %v2605 = vpop.permute.xlu0 %2604
      %2606 = vrot.lane.b32.xlu0 %v616, 16
      %v2607 = vpop.permute.xlu0 %2606
      %2608 = vrot.lane.b32.xlu0 %v622, 16
      %v2609 = vpop.permute.xlu0 %2608
      %v2610 = vsel %vm646, %v2599, 0
      %v2612 = vsel %vm646, %v2601, 0
      %v2614 = vsel %vm646, %v2603, 0
      %v2616 = vsel %vm646, %v2605, 0
      %v2618 = vsel %vm646, %v2607, 0
      %v2620 = vsel %vm646, %v2609, 0
      %2622 = vmatprep.subr.mxu0 0.0
      %2623 = vmatpush1.xpose.msra.mxu0 %v2616
      %2624 = vmatprep.subr.mxu0 0.0
      %2625 = vmatpush1.xpose.msra.mxu0 %v2618
      %2626 = vmatprep.subr.mxu0 0.0
      %2627 = vmatpush1.xpose.msra.mxu0 %v2620
      %2628 = vmatprep.subr.mxu0 0.0
      %2629 = vmatpush1.xpose.msra.mxu0 0.0
      %2630 = vmatprep.subr.mxu0 0.0
      %2631 = vmatpush1.xpose.msra.mxu0 0.0
      %2632 = vmatprep.subr.mxu0 0.0
      %2633 = vmatpush1.xpose.msra.mxu0 0.0
      %2634 = vmatprep.subr.mxu0 0.0
      %2635 = vmatpush1.xpose.msra.mxu0 0.0
      %2636 = vmatprep.subr.mxu0 0.0
      %2637 = vmatpush1.xpose.msra.mxu0 0.0
      %2638 = vmatprep.subr.mxu0 0.0
      %2639 = vmatpush1.xpose.msra.mxu0 0.0
      %2640 = vmatprep.subr.mxu0 0.0
      %2641 = vmatpush1.xpose.msra.mxu0 0.0
      %2642 = vmatprep.subr.mxu0 0.0
      %2643 = vmatpush1.xpose.msra.mxu0 0.0
      %2644 = vmatprep.subr.mxu0 0.0
      %2645 = vmatpush1.xpose.msra.mxu0 0.0
      %2646 = vmatprep.subr.mxu0 0.0
      %2647 = vmatpush1.xpose.msra.mxu0 0.0
      %2648 = vmatprep.subr.mxu0 0.0
      %2649 = vmatpush1.xpose.msra.mxu0 0.0
      %2650 = vmatprep.subr.mxu0 0.0
      %2651 = vmatpush1.xpose.msra.mxu0 0.0
      %2652 = vmatprep.subr.mxu0 0.0
      %2653 = vmatpush1.xpose.msra.mxu0 0.0
      %2654 = vmatprep.subr.mxu0 0.0
      %2655 = vmatpush1.xpose.msra.mxu0 0.0
      %2656 = vmatprep.subr.mxu0 0.0
      %2657 = vmatpush1.xpose.msra.mxu0 0.0
      %2658 = vmatprep.subr.mxu0 0.0
      %2659 = vmatpush1.xpose.msra.mxu0 0.0
      %2660 = vmatprep.subr.mxu0 0.0
      %2661 = vmatpush1.xpose.msra.mxu0 0.0
      %2662 = vmatprep.subr.mxu0 0.0
      %2663 = vmatpush1.xpose.msra.mxu0 0.0
      %2664 = vmatprep.subr.mxu0 0.0
      %2665 = vmatpush1.xpose.msra.mxu0 0.0
      %2666 = vmatprep.subr.mxu0 0.0
      %2667 = vmatpush1.xpose.msra.mxu0 0.0
      %2668 = vmatprep.subr.mxu0 0.0
      %2669 = vmatpush1.xpose.msra.mxu0 0.0
      %2670 = vmatprep.subr.mxu0 0.0
      %2671 = vmatpush1.xpose.msra.mxu0 0.0
      %2672 = vmatprep.subr.mxu0 0.0
      %2673 = vmatpush1.xpose.msra.mxu0 0.0
      %2674 = vmatprep.subr.mxu0 0.0
      %2675 = vmatpush1.xpose.msra.mxu0 0.0
      %2676 = vmatprep.subr.mxu0 0.0
      %2677 = vmatpush1.xpose.msra.mxu0 0.0
      %2678 = vmatprep.subr.mxu0 0.0
      %2679 = vmatpush1.xpose.msra.mxu0 0.0
      %2680 = vmatprep.subr.mxu0 0.0
      %2681 = vmatpush1.xpose.msra.mxu0 0.0
      %2682 = vmatprep.subr.mxu0 0.0
      %2683 = vmatpush1.xpose.msra.mxu0 0.0
      %2684 = vmatprep.subr.mxu0 0.0
      %2685 = vmatpush1.xpose.msra.mxu0 0.0
      %2686 = vmatprep.mubr.f32.mxu0 0.0
      %2687 = vmatmul.mubr.f32.gmra.mrb[0].mxu0 %v2610
      %v2688 = vpop.f32.mrb[0].mxu0
      %v2689 = vadd.f32 0.0, %v2688
      %v2690 = vpop.f32.mrb[0].mxu0
      %2691 = vmatprep.mubr.f32.mxu0 0.0
      %2692 = vmatmul.mubr.f32.gmra.mrb[0].mxu0 %v2612
      %v2693 = vpop.f32.mrb[0].mxu0
      %v2694 = vadd.f32 0.0, %v2693
      %v2695 = vpop.f32.mrb[0].mxu0
      %2696 = vmatprep.mubr.f32.mxu0 0.0
      %2697 = vmatmul.mubr.f32.gmra.mrb[0].mxu0 %v2614
      %v2698 = vpop.f32.mrb[0].mxu0
      %v2699 = vadd.f32 0.0, %v2698
      %v2700 = vpop.f32.mrb[0].mxu0
      %2701 = vdwg.mxu0
      %v2702 = vsel %vm742, %v2689, -inf
      %2703 = vmax.xlane.f32.xlu0 %v2702
      %v2704 = vpop.xlane.xlu0 %2703
      %v2705 = vsel %vm742, %v2694, -inf
      %2706 = vmax.xlane.f32.xlu0 %v2705
      %v2707 = vpop.xlane.xlu0 %2706
      %v2708 = vsel %vm749, %v2699, -inf
      %2709 = vmax.xlane.f32.xlu0 %v2708
      %v2710 = vpop.xlane.xlu0 %2709
      %v2711 = vsub.f32 %v2689, %v2704
      %v2712 = vsub.f32 %v2694, %v2707
      %v2713 = vsub.f32 %v2699, %v2710
      %v2714 = vmul.f32 %v2711, 1.442695
      %v2715 = vpow.pop %v2714
      %v2716 = vmul.f32 %v2712, 1.442695
      %v2717 = vpow.pop %v2716
      %v2718 = vmul.f32 %v2713, 1.442695
      %v2719 = vpow.pop %v2718
      %v2720 = vsel %vm742, %v2715, 0.0
      %2721 = vadd.xlane.f32.xlu0 %v2720
      %v2722 = vpop.xlane.xlu0 %2721
      %v2723 = vsel %vm742, %v2717, 0.0
      %2724 = vadd.xlane.f32.xlu0 %v2723
      %v2725 = vpop.xlane.xlu0 %2724
      %v2726 = vsel %vm749, %v2719, 0.0
      %2727 = vadd.xlane.f32.xlu0 %v2726
      %v2728 = vpop.xlane.xlu0 %2727
      %v2729 = vrcp.pop %v2722
      %v2730 = vrcp.pop %v2725
      %v2731 = vrcp.pop %v2728
      %v2732 = vmul.f32 %v2715, %v2729
      %v2733 = vmul.f32 %v2717, %v2730
      %v2734 = vmul.f32 %v2719, %v2731
      %2735 = vrot.lane.b32.xlu0 %v612, 80
      %v2736 = vpop.permute.xlu0 %2735
      %2737 = vrot.lane.b32.xlu0 %v618, 80
      %v2738 = vpop.permute.xlu0 %2737
      %2739 = vrot.lane.b32.xlu0 %v624, 80
      %v2740 = vpop.permute.xlu0 %2739
      %v2744 = vsel %vm742, %v2732, 0
      %v2747 = vsel %vm742, %v2733, 0
      %v2750 = vsel %vm742, %v2734, 0
      %v2752 = vsel %vm786, %v2740, 0
      %2754 = vmatprep.subr.mxu0 0.0
      %2755 = vmatpush1.msra.mxu0 %v2736
      %2756 = vmatprep.subr.mxu0 0.0
      %2757 = vmatpush1.msra.mxu0 %v2738
      %2758 = vmatprep.subr.mxu0 0.0
      %2759 = vmatpush1.msra.mxu0 %v2752
      %2760 = vmatprep.subr.mxu0 0.0
      %2761 = vmatpush1.msra.mxu0 0.0
      %2762 = vmatprep.subr.mxu0 0.0
      %2763 = vmatpush1.msra.mxu0 0.0
      %2764 = vmatprep.subr.mxu0 0.0
      %2765 = vmatpush1.msra.mxu0 0.0
      %2766 = vmatprep.subr.mxu0 0.0
      %2767 = vmatpush1.msra.mxu0 0.0
      %2768 = vmatprep.subr.mxu0 0.0
      %2769 = vmatpush1.msra.mxu0 0.0
      %2770 = vmatprep.subr.mxu0 0.0
      %2771 = vmatpush1.msra.mxu0 0.0
      %2772 = vmatprep.subr.mxu0 0.0
      %2773 = vmatpush1.msra.mxu0 0.0
      %2774 = vmatprep.subr.mxu0 0.0
      %2775 = vmatpush1.msra.mxu0 0.0
      %2776 = vmatprep.subr.mxu0 0.0
      %2777 = vmatpush1.msra.mxu0 0.0
      %2778 = vmatprep.subr.mxu0 0.0
      %2779 = vmatpush1.msra.mxu0 0.0
      %2780 = vmatprep.subr.mxu0 0.0
      %2781 = vmatpush1.msra.mxu0 0.0
      %2782 = vmatprep.subr.mxu0 0.0
      %2783 = vmatpush1.msra.mxu0 0.0
      %2784 = vmatprep.subr.mxu0 0.0
      %2785 = vmatpush1.msra.mxu0 0.0
      %2786 = vmatprep.subr.mxu0 0.0
      %2787 = vmatpush1.msra.mxu0 0.0
      %2788 = vmatprep.subr.mxu0 0.0
      %2789 = vmatpush1.msra.mxu0 0.0
      %2790 = vmatprep.subr.mxu0 0.0
      %2791 = vmatpush1.msra.mxu0 0.0
      %2792 = vmatprep.subr.mxu0 0.0
      %2793 = vmatpush1.msra.mxu0 0.0
      %2794 = vmatprep.subr.mxu0 0.0
      %2795 = vmatpush1.msra.mxu0 0.0
      %2796 = vmatprep.subr.mxu0 0.0
      %2797 = vmatpush1.msra.mxu0 0.0
      %2798 = vmatprep.subr.mxu0 0.0
      %2799 = vmatpush1.msra.mxu0 0.0
      %2800 = vmatprep.subr.mxu0 0.0
      %2801 = vmatpush1.msra.mxu0 0.0
      %2802 = vmatprep.subr.mxu0 0.0
      %2803 = vmatpush1.msra.mxu0 0.0
      %2804 = vmatprep.subr.mxu0 0.0
      %2805 = vmatpush1.msra.mxu0 0.0
      %2806 = vmatprep.subr.mxu0 0.0
      %2807 = vmatpush1.msra.mxu0 0.0
      %2808 = vmatprep.subr.mxu0 0.0
      %2809 = vmatpush1.msra.mxu0 0.0
      %2810 = vmatprep.subr.mxu0 0.0
      %2811 = vmatpush1.msra.mxu0 0.0
      %2812 = vmatprep.subr.mxu0 0.0
      %2813 = vmatpush1.msra.mxu0 0.0
      %2814 = vmatprep.subr.mxu0 0.0
      %2815 = vmatpush1.msra.mxu0 0.0
      %2816 = vmatprep.subr.mxu0 0.0
      %2817 = vmatpush1.msra.mxu0 0.0
      %2818 = vmatprep.mubr.f32.mxu0 0.0
      %2819 = vmatmul.mubr.f32.gmra.mrb[0].mxu0 %v2744
      %v2820 = vpop.f32.mrb[0].mxu0
      %v2821 = vadd.f32 0.0, %v2820
      %v2822 = vpop.f32.mrb[0].mxu0
      %2823 = vmatprep.mubr.f32.mxu0 0.0
      %2824 = vmatmul.mubr.f32.gmra.mrb[0].mxu0 %v2747
      %v2825 = vpop.f32.mrb[0].mxu0
      %v2826 = vadd.f32 0.0, %v2825
      %v2827 = vpop.f32.mrb[0].mxu0
      %2828 = vmatprep.mubr.f32.mxu0 0.0
      %2829 = vmatmul.mubr.f32.gmra.mrb[0].mxu0 %v2750
      %v2830 = vpop.f32.mrb[0].mxu0
      %v2831 = vadd.f32 0.0, %v2830
      %v2832 = vpop.f32.mrb[0].mxu0
      %2833 = vdwg.mxu0
      %v2835 = vsel %vm646, %v2821, 0
      %v2838 = vsel %vm646, %v2826, 0
      %v2841 = vsel %vm646, %v2831, 0
      %2843 = vmatprep.subr.mxu0 0.0
      %2844 = vmatpush1.msra.mxu0 %v632
      %2845 = vmatprep.subr.mxu0 0.0
      %2846 = vmatpush1.msra.mxu0 0.0
      %2847 = vmatprep.subr.mxu0 0.0
      %2848 = vmatpush1.msra.mxu0 0.0
      %2849 = vmatprep.subr.mxu0 0.0
      %2850 = vmatpush1.msra.mxu0 0.0
      %2851 = vmatprep.subr.mxu0 0.0
      %2852 = vmatpush1.msra.mxu0 0.0
      %2853 = vmatprep.subr.mxu0 0.0
      %2854 = vmatpush1.msra.mxu0 0.0
      %2855 = vmatprep.subr.mxu0 0.0
      %2856 = vmatpush1.msra.mxu0 0.0
      %2857 = vmatprep.subr.mxu0 0.0
      %2858 = vmatpush1.msra.mxu0 0.0
      %2859 = vmatprep.subr.mxu0 0.0
      %2860 = vmatpush1.msra.mxu0 0.0
      %2861 = vmatprep.subr.mxu0 0.0
      %2862 = vmatpush1.msra.mxu0 0.0
      %2863 = vmatprep.subr.mxu0 0.0
      %2864 = vmatpush1.msra.mxu0 0.0
      %2865 = vmatprep.subr.mxu0 0.0
      %2866 = vmatpush1.msra.mxu0 0.0
      %2867 = vmatprep.subr.mxu0 0.0
      %2868 = vmatpush1.msra.mxu0 0.0
      %2869 = vmatprep.subr.mxu0 0.0
      %2870 = vmatpush1.msra.mxu0 0.0
      %2871 = vmatprep.subr.mxu0 0.0
      %2872 = vmatpush1.msra.mxu0 0.0
      %2873 = vmatprep.subr.mxu0 0.0
      %2874 = vmatpush1.msra.mxu0 0.0
      %2875 = vmatprep.subr.mxu0 0.0
      %2876 = vmatpush1.msra.mxu0 0.0
      %2877 = vmatprep.subr.mxu0 0.0
      %2878 = vmatpush1.msra.mxu0 0.0
      %2879 = vmatprep.subr.mxu0 0.0
      %2880 = vmatpush1.msra.mxu0 0.0
      %2881 = vmatprep.subr.mxu0 0.0
      %2882 = vmatpush1.msra.mxu0 0.0
      %2883 = vmatprep.subr.mxu0 0.0
      %2884 = vmatpush1.msra.mxu0 0.0
      %2885 = vmatprep.subr.mxu0 0.0
      %2886 = vmatpush1.msra.mxu0 0.0
      %2887 = vmatprep.subr.mxu0 0.0
      %2888 = vmatpush1.msra.mxu0 0.0
      %2889 = vmatprep.subr.mxu0 0.0
      %2890 = vmatpush1.msra.mxu0 0.0
      %2891 = vmatprep.subr.mxu0 0.0
      %2892 = vmatpush1.msra.mxu0 0.0
      %2893 = vmatprep.subr.mxu0 0.0
      %2894 = vmatpush1.msra.mxu0 0.0
      %2895 = vmatprep.subr.mxu0 0.0
      %2896 = vmatpush1.msra.mxu0 0.0
      %2897 = vmatprep.subr.mxu0 0.0
      %2898 = vmatpush1.msra.mxu0 0.0
      %2899 = vmatprep.subr.mxu0 0.0
      %2900 = vmatpush1.msra.mxu0 0.0
      %2901 = vmatprep.subr.mxu0 0.0
      %2902 = vmatpush1.msra.mxu0 0.0
      %2903 = vmatprep.subr.mxu0 0.0
      %2904 = vmatpush1.msra.mxu0 0.0
      %2905 = vmatprep.subr.mxu0 0.0
      %2906 = vmatpush1.msra.mxu0 0.0
      %2907 = vmatprep.mubr.f32.mxu0 0.0
      %2908 = vmatmul.mubr.f32.gmra.mrb[0].mxu0 %v2835
      %v2909 = vpop.f32.mrb[0].mxu0
      %v2910 = vadd.f32 0.0, %v2909
      %v2911 = vpop.f32.mrb[0].mxu0
      %2912 = vmatprep.mubr.f32.mxu0 0.0
      %2913 = vmatmul.mubr.f32.gmra.mrb[0].mxu0 %v2838
      %v2914 = vpop.f32.mrb[0].mxu0
      %v2915 = vadd.f32 0.0, %v2914
      %v2916 = vpop.f32.mrb[0].mxu0
      %2917 = vmatprep.mubr.f32.mxu0 0.0
      %2918 = vmatmul.mubr.f32.gmra.mrb[0].mxu0 %v2841
      %v2919 = vpop.f32.mrb[0].mxu0
      %v2920 = vadd.f32 0.0, %v2919
      %v2921 = vpop.f32.mrb[0].mxu0
      %2922 = vdwg.mxu0
      %v2923 = vadd.f32 %v2595, %v2910
      %v2924 = vadd.f32 %v2596, %v2915
      %v2925 = vadd.f32 %v2597, %v2920
      %2926 = vrot.lane.b32.xlu0 %v634, 72
      %v2927 = vpop.permute.xlu0 %2926
      %2928 = vrot.lane.b32.xlu0 %v635, 72
      %v2929 = vpop.permute.xlu0 %2928
      %2930 = vrot.lane.b32.xlu0 %v636, 72
      %v2931 = vpop.permute.xlu0 %2930
      %2932 = vrot.lane.b32.xlu0 %v610, 8
      %v2933 = vpop.permute.xlu0 %2932
      %2934 = vrot.lane.b32.xlu0 %v616, 8
      %v2935 = vpop.permute.xlu0 %2934
      %2936 = vrot.lane.b32.xlu0 %v622, 8
      %v2937 = vpop.permute.xlu0 %2936
      %v2938 = vsel %vm646, %v2927, 0
      %v2940 = vsel %vm646, %v2929, 0
      %v2942 = vsel %vm646, %v2931, 0
      %v2944 = vsel %vm646, %v2933, 0
      %v2946 = vsel %vm646, %v2935, 0
      %v2948 = vsel %vm646, %v2937, 0
      %2950 = vmatprep.subr.mxu0 0.0
      %2951 = vmatpush1.xpose.msra.mxu0 %v2944
      %2952 = vmatprep.subr.mxu0 0.0
      %2953 = vmatpush1.xpose.msra.mxu0 %v2946
      %2954 = vmatprep.subr.mxu0 0.0
      %2955 = vmatpush1.xpose.msra.mxu0 %v2948
      %2956 = vmatprep.subr.mxu0 0.0
      %2957 = vmatpush1.xpose.msra.mxu0 0.0
      %2958 = vmatprep.subr.mxu0 0.0
      %2959 = vmatpush1.xpose.msra.mxu0 0.0
      %2960 = vmatprep.subr.mxu0 0.0
      %2961 = vmatpush1.xpose.msra.mxu0 0.0
      %2962 = vmatprep.subr.mxu0 0.0
      %2963 = vmatpush1.xpose.msra.mxu0 0.0
      %2964 = vmatprep.subr.mxu0 0.0
      %2965 = vmatpush1.xpose.msra.mxu0 0.0
      %2966 = vmatprep.subr.mxu0 0.0
      %2967 = vmatpush1.xpose.msra.mxu0 0.0
      %2968 = vmatprep.subr.mxu0 0.0
      %2969 = vmatpush1.xpose.msra.mxu0 0.0
      %2970 = vmatprep.subr.mxu0 0.0
      %2971 = vmatpush1.xpose.msra.mxu0 0.0
      %2972 = vmatprep.subr.mxu0 0.0
      %2973 = vmatpush1.xpose.msra.mxu0 0.0
      %2974 = vmatprep.subr.mxu0 0.0
      %2975 = vmatpush1.xpose.msra.mxu0 0.0
      %2976 = vmatprep.subr.mxu0 0.0
      %2977 = vmatpush1.xpose.msra.mxu0 0.0
      %2978 = vmatprep.subr.mxu0 0.0
      %2979 = vmatpush1.xpose.msra.mxu0 0.0
      %2980 = vmatprep.subr.mxu0 0.0
      %2981 = vmatpush1.xpose.msra.mxu0 0.0
      %2982 = vmatprep.subr.mxu0 0.0
      %2983 = vmatpush1.xpose.msra.mxu0 0.0
      %2984 = vmatprep.subr.mxu0 0.0
      %2985 = vmatpush1.xpose.msra.mxu0 0.0
      %2986 = vmatprep.subr.mxu0 0.0
      %2987 = vmatpush1.xpose.msra.mxu0 0.0
      %2988 = vmatprep.subr.mxu0 0.0
      %2989 = vmatpush1.xpose.msra.mxu0 0.0
      %2990 = vmatprep.subr.mxu0 0.0
      %2991 = vmatpush1.xpose.msra.mxu0 0.0
      %2992 = vmatprep.subr.mxu0 0.0
      %2993 = vmatpush1.xpose.msra.mxu0 0.0
      %2994 = vmatprep.subr.mxu0 0.0
      %2995 = vmatpush1.xpose.msra.mxu0 0.0
      %2996 = vmatprep.subr.mxu0 0.0
      %2997 = vmatpush1.xpose.msra.mxu0 0.0
      %2998 = vmatprep.subr.mxu0 0.0
      %2999 = vmatpush1.xpose.msra.mxu0 0.0
      %3000 = vmatprep.subr.mxu0 0.0
      %3001 = vmatpush1.xpose.msra.mxu0 0.0
      %3002 = vmatprep.subr.mxu0 0.0
      %3003 = vmatpush1.xpose.msra.mxu0 0.0
      %3004 = vmatprep.subr.mxu0 0.0
      %3005 = vmatpush1.xpose.msra.mxu0 0.0
      %3006 = vmatprep.subr.mxu0 0.0
      %3007 = vmatpush1.xpose.msra.mxu0 0.0
      %3008 = vmatprep.subr.mxu0 0.0
      %3009 = vmatpush1.xpose.msra.mxu0 0.0
      %3010 = vmatprep.subr.mxu0 0.0
      %3011 = vmatpush1.xpose.msra.mxu0 0.0
      %3012 = vmatprep.subr.mxu0 0.0
      %3013 = vmatpush1.xpose.msra.mxu0 0.0
      %3014 = vmatprep.mubr.f32.mxu0 0.0
      %3015 = vmatmul.mubr.f32.gmra.mrb[0].mxu0 %v2938
      %v3016 = vpop.f32.mrb[0].mxu0
      %v3017 = vadd.f32 0.0, %v3016
      %v3018 = vpop.f32.mrb[0].mxu0
      %3019 = vmatprep.mubr.f32.mxu0 0.0
      %3020 = vmatmul.mubr.f32.gmra.mrb[0].mxu0 %v2940
      %v3021 = vpop.f32.mrb[0].mxu0
      %v3022 = vadd.f32 0.0, %v3021
      %v3023 = vpop.f32.mrb[0].mxu0
      %3024 = vmatprep.mubr.f32.mxu0 0.0
      %3025 = vmatmul.mubr.f32.gmra.mrb[0].mxu0 %v2942
      %v3026 = vpop.f32.mrb[0].mxu0
      %v3027 = vadd.f32 0.0, %v3026
      %v3028 = vpop.f32.mrb[0].mxu0
      %3029 = vdwg.mxu0
      %v3030 = vsel %vm742, %v3017, -inf
      %3031 = vmax.xlane.f32.xlu0 %v3030
      %v3032 = vpop.xlane.xlu0 %3031
      %v3033 = vsel %vm742, %v3022, -inf
      %3034 = vmax.xlane.f32.xlu0 %v3033
      %v3035 = vpop.xlane.xlu0 %3034
      %v3036 = vsel %vm749, %v3027, -inf
      %3037 = vmax.xlane.f32.xlu0 %v3036
      %v3038 = vpop.xlane.xlu0 %3037
      %v3039 = vsub.f32 %v3017, %v3032
      %v3040 = vsub.f32 %v3022, %v3035
      %v3041 = vsub.f32 %v3027, %v3038
      %v3042 = vmul.f32 %v3039, 1.442695
      %v3043 = vpow.pop %v3042
      %v3044 = vmul.f32 %v3040, 1.442695
      %v3045 = vpow.pop %v3044
      %v3046 = vmul.f32 %v3041, 1.442695
      %v3047 = vpow.pop %v3046
      %v3048 = vsel %vm742, %v3043, 0.0
      %3049 = vadd.xlane.f32.xlu0 %v3048
      %v3050 = vpop.xlane.xlu0 %3049
      %v3051 = vsel %vm742, %v3045, 0.0
      %3052 = vadd.xlane.f32.xlu0 %v3051
      %v3053 = vpop.xlane.xlu0 %3052
      %v3054 = vsel %vm749, %v3047, 0.0
      %3055 = vadd.xlane.f32.xlu0 %v3054
      %v3056 = vpop.xlane.xlu0 %3055
      %v3057 = vrcp.pop %v3050
      %v3058 = vrcp.pop %v3053
      %v3059 = vrcp.pop %v3056
      %v3060 = vmul.f32 %v3043, %v3057
      %v3061 = vmul.f32 %v3045, %v3058
      %v3062 = vmul.f32 %v3047, %v3059
      %3063 = vrot.lane.b32.xlu0 %v612, 72
      %v3064 = vpop.permute.xlu0 %3063
      %3065 = vrot.lane.b32.xlu0 %v618, 72
      %v3066 = vpop.permute.xlu0 %3065
      %3067 = vrot.lane.b32.xlu0 %v624, 72
      %v3068 = vpop.permute.xlu0 %3067
      %v3072 = vsel %vm742, %v3060, 0
      %v3075 = vsel %vm742, %v3061, 0
      %v3078 = vsel %vm742, %v3062, 0
      %v3080 = vsel %vm786, %v3068, 0
      %3082 = vmatprep.subr.mxu0 0.0
      %3083 = vmatpush1.msra.mxu0 %v3064
      %3084 = vmatprep.subr.mxu0 0.0
      %3085 = vmatpush1.msra.mxu0 %v3066
      %3086 = vmatprep.subr.mxu0 0.0
      %3087 = vmatpush1.msra.mxu0 %v3080
      %3088 = vmatprep.subr.mxu0 0.0
      %3089 = vmatpush1.msra.mxu0 0.0
      %3090 = vmatprep.subr.mxu0 0.0
      %3091 = vmatpush1.msra.mxu0 0.0
      %3092 = vmatprep.subr.mxu0 0.0
      %3093 = vmatpush1.msra.mxu0 0.0
      %3094 = vmatprep.subr.mxu0 0.0
      %3095 = vmatpush1.msra.mxu0 0.0
      %3096 = vmatprep.subr.mxu0 0.0
      %3097 = vmatpush1.msra.mxu0 0.0
      %3098 = vmatprep.subr.mxu0 0.0
      %3099 = vmatpush1.msra.mxu0 0.0
      %3100 = vmatprep.subr.mxu0 0.0
      %3101 = vmatpush1.msra.mxu0 0.0
      %3102 = vmatprep.subr.mxu0 0.0
      %3103 = vmatpush1.msra.mxu0 0.0
      %3104 = vmatprep.subr.mxu0 0.0
      %3105 = vmatpush1.msra.mxu0 0.0
      %3106 = vmatprep.subr.mxu0 0.0
      %3107 = vmatpush1.msra.mxu0 0.0
      %3108 = vmatprep.subr.mxu0 0.0
      %3109 = vmatpush1.msra.mxu0 0.0
      %3110 = vmatprep.subr.mxu0 0.0
      %3111 = vmatpush1.msra.mxu0 0.0
      %3112 = vmatprep.subr.mxu0 0.0
      %3113 = vmatpush1.msra.mxu0 0.0
      %3114 = vmatprep.subr.mxu0 0.0
      %3115 = vmatpush1.msra.mxu0 0.0
      %3116 = vmatprep.subr.mxu0 0.0
      %3117 = vmatpush1.msra.mxu0 0.0
      %3118 = vmatprep.subr.mxu0 0.0
      %3119 = vmatpush1.msra.mxu0 0.0
      %3120 = vmatprep.subr.mxu0 0.0
      %3121 = vmatpush1.msra.mxu0 0.0
      %3122 = vmatprep.subr.mxu0 0.0
      %3123 = vmatpush1.msra.mxu0 0.0
      %3124 = vmatprep.subr.mxu0 0.0
      %3125 = vmatpush1.msra.mxu0 0.0
      %3126 = vmatprep.subr.mxu0 0.0
      %3127 = vmatpush1.msra.mxu0 0.0
      %3128 = vmatprep.subr.mxu0 0.0
      %3129 = vmatpush1.msra.mxu0 0.0
      %3130 = vmatprep.subr.mxu0 0.0
      %3131 = vmatpush1.msra.mxu0 0.0
      %3132 = vmatprep.subr.mxu0 0.0
      %3133 = vmatpush1.msra.mxu0 0.0
      %3134 = vmatprep.subr.mxu0 0.0
      %3135 = vmatpush1.msra.mxu0 0.0
      %3136 = vmatprep.subr.mxu0 0.0
      %3137 = vmatpush1.msra.mxu0 0.0
      %3138 = vmatprep.subr.mxu0 0.0
      %3139 = vmatpush1.msra.mxu0 0.0
      %3140 = vmatprep.subr.mxu0 0.0
      %3141 = vmatpush1.msra.mxu0 0.0
      %3142 = vmatprep.subr.mxu0 0.0
      %3143 = vmatpush1.msra.mxu0 0.0
      %3144 = vmatprep.subr.mxu0 0.0
      %3145 = vmatpush1.msra.mxu0 0.0
      %3146 = vmatprep.mubr.f32.mxu0 0.0
      %3147 = vmatmul.mubr.f32.gmra.mrb[0].mxu0 %v3072
      %v3148 = vpop.f32.mrb[0].mxu0
      %v3149 = vadd.f32 0.0, %v3148
      %v3150 = vpop.f32.mrb[0].mxu0
      %3151 = vmatprep.mubr.f32.mxu0 0.0
      %3152 = vmatmul.mubr.f32.gmra.mrb[0].mxu0 %v3075
      %v3153 = vpop.f32.mrb[0].mxu0
      %v3154 = vadd.f32 0.0, %v3153
      %v3155 = vpop.f32.mrb[0].mxu0
      %3156 = vmatprep.mubr.f32.mxu0 0.0
      %3157 = vmatmul.mubr.f32.gmra.mrb[0].mxu0 %v3078
      %v3158 = vpop.f32.mrb[0].mxu0
      %v3159 = vadd.f32 0.0, %v3158
      %v3160 = vpop.f32.mrb[0].mxu0
      %3161 = vdwg.mxu0
      %v3163 = vsel %vm646, %v3149, 0
      %v3166 = vsel %vm646, %v3154, 0
      %v3169 = vsel %vm646, %v3159, 0
      %3171 = vmatprep.subr.mxu0 0.0
      %3172 = vmatpush1.msra.mxu0 %v633
      %3173 = vmatprep.subr.mxu0 0.0
      %3174 = vmatpush1.msra.mxu0 0.0
      %3175 = vmatprep.subr.mxu0 0.0
      %3176 = vmatpush1.msra.mxu0 0.0
      %3177 = vmatprep.subr.mxu0 0.0
      %3178 = vmatpush1.msra.mxu0 0.0
      %3179 = vmatprep.subr.mxu0 0.0
      %3180 = vmatpush1.msra.mxu0 0.0
      %3181 = vmatprep.subr.mxu0 0.0
      %3182 = vmatpush1.msra.mxu0 0.0
      %3183 = vmatprep.subr.mxu0 0.0
      %3184 = vmatpush1.msra.mxu0 0.0
      %3185 = vmatprep.subr.mxu0 0.0
      %3186 = vmatpush1.msra.mxu0 0.0
      %3187 = vmatprep.subr.mxu0 0.0
      %3188 = vmatpush1.msra.mxu0 0.0
      %3189 = vmatprep.subr.mxu0 0.0
      %3190 = vmatpush1.msra.mxu0 0.0
      %3191 = vmatprep.subr.mxu0 0.0
      %3192 = vmatpush1.msra.mxu0 0.0
      %3193 = vmatprep.subr.mxu0 0.0
      %3194 = vmatpush1.msra.mxu0 0.0
      %3195 = vmatprep.subr.mxu0 0.0
      %3196 = vmatpush1.msra.mxu0 0.0
      %3197 = vmatprep.subr.mxu0 0.0
      %3198 = vmatpush1.msra.mxu0 0.0
      %3199 = vmatprep.subr.mxu0 0.0
      %3200 = vmatpush1.msra.mxu0 0.0
      %3201 = vmatprep.subr.mxu0 0.0
      %3202 = vmatpush1.msra.mxu0 0.0
      %3203 = vmatprep.subr.mxu0 0.0
      %3204 = vmatpush1.msra.mxu0 0.0
      %3205 = vmatprep.subr.mxu0 0.0
      %3206 = vmatpush1.msra.mxu0 0.0
      %3207 = vmatprep.subr.mxu0 0.0
      %3208 = vmatpush1.msra.mxu0 0.0
      %3209 = vmatprep.subr.mxu0 0.0
      %3210 = vmatpush1.msra.mxu0 0.0
      %3211 = vmatprep.subr.mxu0 0.0
      %3212 = vmatpush1.msra.mxu0 0.0
      %3213 = vmatprep.subr.mxu0 0.0
      %3214 = vmatpush1.msra.mxu0 0.0
      %3215 = vmatprep.subr.mxu0 0.0
      %3216 = vmatpush1.msra.mxu0 0.0
      %3217 = vmatprep.subr.mxu0 0.0
      %3218 = vmatpush1.msra.mxu0 0.0
      %3219 = vmatprep.subr.mxu0 0.0
      %3220 = vmatpush1.msra.mxu0 0.0
      %3221 = vmatprep.subr.mxu0 0.0
      %3222 = vmatpush1.msra.mxu0 0.0
      %3223 = vmatprep.subr.mxu0 0.0
      %3224 = vmatpush1.msra.mxu0 0.0
      %3225 = vmatprep.subr.mxu0 0.0
      %3226 = vmatpush1.msra.mxu0 0.0
      %3227 = vmatprep.subr.mxu0 0.0
      %3228 = vmatpush1.msra.mxu0 0.0
      %3229 = vmatprep.subr.mxu0 0.0
      %3230 = vmatpush1.msra.mxu0 0.0
      %3231 = vmatprep.subr.mxu0 0.0
      %3232 = vmatpush1.msra.mxu0 0.0
      %3233 = vmatprep.subr.mxu0 0.0
      %3234 = vmatpush1.msra.mxu0 0.0
      %3235 = vmatprep.mubr.f32.mxu0 0.0
      %3236 = vmatmul.mubr.f32.gmra.mrb[0].mxu0 %v3163
      %v3237 = vpop.f32.mrb[0].mxu0
      %v3238 = vadd.f32 0.0, %v3237
      %v3239 = vpop.f32.mrb[0].mxu0
      %3240 = vmatprep.mubr.f32.mxu0 0.0
      %3241 = vmatmul.mubr.f32.gmra.mrb[0].mxu0 %v3166
      %v3242 = vpop.f32.mrb[0].mxu0
      %v3243 = vadd.f32 0.0, %v3242
      %v3244 = vpop.f32.mrb[0].mxu0
      %3245 = vmatprep.mubr.f32.mxu0 0.0
      %3246 = vmatmul.mubr.f32.gmra.mrb[0].mxu0 %v3169
      %v3247 = vpop.f32.mrb[0].mxu0
      %v3248 = vadd.f32 0.0, %v3247
      %v3249 = vpop.f32.mrb[0].mxu0
      %3250 = vdwg.mxu0
      %v3251 = vadd.f32 %v2923, %v3238
      %v3252 = vadd.f32 %v2924, %v3243
      %v3253 = vadd.f32 %v2925, %v3248
      %v3254 = vadd.f32 %v441, %v3251
      %v3255 = vadd.f32 %v442, %v3252
      %v3256 = vadd.f32 %v443, %v3253
      %v3257 = vld [vmem:[%s6] sm:$0x1]
      %v3259 = vlaneseq
      %v3260 = vshrl.u32 %v3259, 7
      %v3261 = vsub.s32 0, %v3260
      %v3262 = vrot.slane %v3257, %v3261
      %v3264 = vadd.f32 %v3254, %v3262
      %v3265 = vadd.f32 %v3255, %v3262
      %v3266 = vadd.f32 %v3256, %v3262
      %v3267 = vld [vmem:[%s7] sm:$0x1]
      %v3268 = vld [vmem:[%s8] sm:$0x1]
      %v3269 = vsel %vm446, %v3264, 0.0
      %3270 = vadd.xlane.f32.xlu0 %v3269
      %v3271 = vpop.xlane.xlu0 %3270
      %v3272 = vsel %vm446, %v3265, 0.0
      %3273 = vadd.xlane.f32.xlu0 %v3272
      %v3274 = vpop.xlane.xlu0 %3273
      %v3275 = vsel %vm453, %v3266, 0.0
      %3276 = vadd.xlane.f32.xlu0 %v3275
      %v3277 = vpop.xlane.xlu0 %3276
      %v3278 = vmul.f32 %v3271, %v457
      %v3279 = vmul.f32 %v3274, %v457
      %v3280 = vmul.f32 %v3277, %v457
      %v3281 = vsub.f32 %v3264, %v3278
      %v3282 = vsub.f32 %v3265, %v3279
      %v3283 = vsub.f32 %v3266, %v3280
      %v3284 = vmul.f32 %v3281, %v3281
      %v3285 = vmul.f32 %v3282, %v3282
      %v3286 = vmul.f32 %v3283, %v3283
      %v3287 = vsel %vm446, %v3284, 0.0
      %3288 = vadd.xlane.f32.xlu0 %v3287
      %v3289 = vpop.xlane.xlu0 %3288
      %v3290 = vsel %vm446, %v3285, 0.0
      %3291 = vadd.xlane.f32.xlu0 %v3290
      %v3292 = vpop.xlane.xlu0 %3291
      %v3293 = vsel %vm453, %v3286, 0.0
      %3294 = vadd.xlane.f32.xlu0 %v3293
      %v3295 = vpop.xlane.xlu0 %3294
      %v3296 = vmul.f32 %v3289, %v457
      %v3297 = vmul.f32 %v3292, %v457
      %v3298 = vmul.f32 %v3295, %v457
      %v3299 = vadd.f32 %v3296, 1e-05
      %v3300 = vadd.f32 %v3297, 1e-05
      %v3301 = vadd.f32 %v3298, 1e-05
      %v3302 = vrsqrt.pop %v3299
      %v3303 = vrsqrt.pop %v3300
      %v3304 = vrsqrt.pop %v3301
      %v3305 = vmul.f32 %v3281, %v3302
      %v3306 = vmul.f32 %v3282, %v3303
      %v3307 = vmul.f32 %v3283, %v3304
      %v3309 = vlaneseq
      %v3310 = vshrl.u32 %v3309, 7
      %v3311 = vsub.s32 0, %v3310
      %v3312 = vrot.slane %v3267, %v3311
      %v3314 = vmul.f32 %v3305, %v3312
      %v3315 = vmul.f32 %v3306, %v3312
      %v3316 = vmul.f32 %v3307, %v3312
      %v3318 = vlaneseq
      %v3319 = vshrl.u32 %v3318, 7
      %v3320 = vsub.s32 0, %v3319
      %v3321 = vrot.slane %v3268, %v3320
      %v3323 = vadd.f32 %v3314, %v3321
      %v3324 = vadd.f32 %v3315, %v3321
      %v3325 = vadd.f32 %v3316, %v3321
      %v3326 = vld [vmem:[%s9] sm:$0xff]
      %v3327 = vld [vmem:[%s9 + $0x8] sm:$0xff]
      %v3328 = vld [vmem:[%s9 + $0x10] sm:$0xff]
      %v3329 = vld [vmem:[%s9 + $0x18] sm:$0xff]
      %v3330 = vld [vmem:[%s9 + $0x20] sm:$0xff]
      %v3331 = vld [vmem:[%s9 + $0x28] sm:$0xff]
      %v3332 = vld [vmem:[%s9 + $0x30] sm:$0xff]
      %v3333 = vld [vmem:[%s9 + $0x38] sm:$0xff]
      %v3334 = vld [vmem:[%s9 + $0x40] sm:$0xff]
      %v3335 = vld [vmem:[%s9 + $0x48] sm:$0xff]
      %v3336 = vld [vmem:[%s9 + $0x50] sm:$0xff]
      %v3337 = vld [vmem:[%s9 + $0x58] sm:$0xff]
      %v3338 = vld [vmem:[%s9 + $0x60] sm:$0xff]
      %v3339 = vld [vmem:[%s9 + $0x68] sm:$0xff]
      %v3340 = vld [vmem:[%s9 + $0x70] sm:$0xff]
      %v3341 = vld [vmem:[%s9 + $0x78] sm:$0xff]
      %v3342 = vld [vmem:[%s10] sm:$0x3]
      %v3344 = vlaneseq
      %v3345 = vshrl.u32 %v3344, 7
      %v3346 = vsub.s32 0, %v3345
      %v3347 = vrot.slane %v3342, %v3346
      %v3348 = vlaneseq
      %v3349 = vshrl.u32 %v3348, 7
      %v3350 = vsub.s32 1, %v3349
      %v3351 = vrot.slane %v3342, %v3350
      %v3355 = vsel %vm446, %v3323, 0
      %v3358 = vsel %vm446, %v3324, 0
      %v3361 = vsel %vm446, %v3325, 0
      %3363 = vmatprep.subr.mxu0 %v3327
      %3364 = vmatpush1.msra.mxu0 %v3326
      %3365 = vmatprep.subr.mxu0 %v3329
      %3366 = vmatpush1.msra.mxu0 %v3328
      %3367 = vmatprep.subr.mxu0 %v3331
      %3368 = vmatpush1.msra.mxu0 %v3330
      %3369 = vmatprep.subr.mxu0 %v3333
      %3370 = vmatpush1.msra.mxu0 %v3332
      %3371 = vmatprep.subr.mxu0 %v3335
      %3372 = vmatpush1.msra.mxu0 %v3334
      %3373 = vmatprep.subr.mxu0 %v3337
      %3374 = vmatpush1.msra.mxu0 %v3336
      %3375 = vmatprep.subr.mxu0 %v3339
      %3376 = vmatpush1.msra.mxu0 %v3338
      %3377 = vmatprep.subr.mxu0 %v3341
      %3378 = vmatpush1.msra.mxu0 %v3340
      %3379 = vmatprep.subr.mxu0 0.0
      %3380 = vmatpush1.msra.mxu0 0.0
      %3381 = vmatprep.subr.mxu0 0.0
      %3382 = vmatpush1.msra.mxu0 0.0
      %3383 = vmatprep.subr.mxu0 0.0
      %3384 = vmatpush1.msra.mxu0 0.0
      %3385 = vmatprep.subr.mxu0 0.0
      %3386 = vmatpush1.msra.mxu0 0.0
      %3387 = vmatprep.subr.mxu0 0.0
      %3388 = vmatpush1.msra.mxu0 0.0
      %3389 = vmatprep.subr.mxu0 0.0
      %3390 = vmatpush1.msra.mxu0 0.0
      %3391 = vmatprep.subr.mxu0 0.0
      %3392 = vmatpush1.msra.mxu0 0.0
      %3393 = vmatprep.subr.mxu0 0.0
      %3394 = vmatpush1.msra.mxu0 0.0
      %3395 = vmatprep.subr.mxu0 0.0
      %3396 = vmatpush1.msra.mxu0 0.0
      %3397 = vmatprep.subr.mxu0 0.0
      %3398 = vmatpush1.msra.mxu0 0.0
      %3399 = vmatprep.subr.mxu0 0.0
      %3400 = vmatpush1.msra.mxu0 0.0
      %3401 = vmatprep.subr.mxu0 0.0
      %3402 = vmatpush1.msra.mxu0 0.0
      %3403 = vmatprep.subr.mxu0 0.0
      %3404 = vmatpush1.msra.mxu0 0.0
      %3405 = vmatprep.subr.mxu0 0.0
      %3406 = vmatpush1.msra.mxu0 0.0
      %3407 = vmatprep.subr.mxu0 0.0
      %3408 = vmatpush1.msra.mxu0 0.0
      %3409 = vmatprep.subr.mxu0 0.0
      %3410 = vmatpush1.msra.mxu0 0.0
      %3411 = vmatprep.subr.mxu0 0.0
      %3412 = vmatpush1.msra.mxu0 0.0
      %3413 = vmatprep.subr.mxu0 0.0
      %3414 = vmatpush1.msra.mxu0 0.0
      %3415 = vmatprep.subr.mxu0 0.0
      %3416 = vmatpush1.msra.mxu0 0.0
      %3417 = vmatprep.subr.mxu0 0.0
      %3418 = vmatpush1.msra.mxu0 0.0
      %3419 = vmatprep.subr.mxu0 0.0
      %3420 = vmatpush1.msra.mxu0 0.0
      %3421 = vmatprep.subr.mxu0 0.0
      %3422 = vmatpush1.msra.mxu0 0.0
      %3423 = vmatprep.subr.mxu0 0.0
      %3424 = vmatpush1.msra.mxu0 0.0
      %3425 = vmatprep.subr.mxu0 0.0
      %3426 = vmatpush1.msra.mxu0 0.0
      %3427 = vmatprep.mubr.f32.mxu0 0.0
      %3428 = vmatmul.mubr.f32.gmra.mrb[0].mxu0 %v3355
      %v3429 = vpop.f32.mrb[0].mxu0
      %v3430 = vadd.f32 %v3347, %v3429
      %v3431 = vpop.f32.mrb[0].mxu0
      %v3432 = vadd.f32 %v3351, %v3431
      %3433 = vmatprep.mubr.f32.mxu0 0.0
      %3434 = vmatmul.mubr.f32.gmra.mrb[0].mxu0 %v3358
      %v3435 = vpop.f32.mrb[0].mxu0
      %v3436 = vadd.f32 %v3347, %v3435
      %v3437 = vpop.f32.mrb[0].mxu0
      %v3438 = vadd.f32 %v3351, %v3437
      %3439 = vmatprep.mubr.f32.mxu0 0.0
      %3440 = vmatmul.mubr.f32.gmra.mrb[0].mxu0 %v3361
      %v3441 = vpop.f32.mrb[0].mxu0
      %v3442 = vadd.f32 %v3347, %v3441
      %v3443 = vpop.f32.mrb[0].mxu0
      %v3444 = vadd.f32 %v3351, %v3443
      %3445 = vdwg.mxu0
      %v3446 = vxor.u32 %v3430, 2147483648
      %v3447 = vxor.u32 %v3436, 2147483648
      %v3448 = vxor.u32 %v3442, 2147483648
      %v3449 = vmul.f32 %v3446, 1.442695
      %v3450 = vpow.pop %v3449
      %v3451 = vmul.f32 %v3447, 1.442695
      %v3452 = vpow.pop %v3451
      %v3453 = vmul.f32 %v3448, 1.442695
      %v3454 = vpow.pop %v3453
      %v3455 = vadd.f32 %v3450, 1.0
      %v3456 = vadd.f32 %v3452, 1.0
      %v3457 = vadd.f32 %v3454, 1.0
      %v3458 = vrcp.pop %v3455
      %v3459 = vmul.f32 1.0, %v3458
      %v3460 = vrcp.pop %v3456
      %v3461 = vmul.f32 1.0, %v3460
      %v3462 = vrcp.pop %v3457
      %v3463 = vmul.f32 1.0, %v3462
      %v3464 = vmul.f32 %v3430, %v3459
      %v3465 = vmul.f32 %v3436, %v3461
      %v3466 = vmul.f32 %v3442, %v3463
      %v3467 = vmul.f32 %v3464, %v3432
      %v3468 = vmul.f32 %v3465, %v3438
      %v3469 = vmul.f32 %v3466, %v3444
      %v3470 = vld [vmem:[%s11] sm:$0xff]
      %v3471 = vld [vmem:[%s11 + $0x8] sm:$0xff]
      %v3472 = vld [vmem:[%s11 + $0x10] sm:$0xff]
      %v3473 = vld [vmem:[%s11 + $0x18] sm:$0xff]
      %v3474 = vld [vmem:[%s11 + $0x20] sm:$0xff]
      %v3475 = vld [vmem:[%s11 + $0x28] sm:$0xff]
      %v3476 = vld [vmem:[%s11 + $0x30] sm:$0xff]
      %v3477 = vld [vmem:[%s11 + $0x38] sm:$0xff]
      %v3478 = vld [vmem:[%s11 + $0x40] sm:$0xff]
      %v3479 = vld [vmem:[%s11 + $0x48] sm:$0xff]
      %v3480 = vld [vmem:[%s11 + $0x50] sm:$0xff]
      %v3481 = vld [vmem:[%s11 + $0x58] sm:$0xff]
      %v3482 = vld [vmem:[%s11 + $0x60] sm:$0xff]
      %v3483 = vld [vmem:[%s11 + $0x68] sm:$0xff]
      %v3484 = vld [vmem:[%s11 + $0x70] sm:$0xff]
      %v3485 = vld [vmem:[%s11 + $0x78] sm:$0xff]
      %v3486 = vld [vmem:[%s12] sm:$0x1]
      %v3488 = vlaneseq
      %v3489 = vshrl.u32 %v3488, 7
      %v3490 = vsub.s32 0, %v3489
      %v3491 = vrot.slane %v3486, %v3490
      %3493 = vmatprep.subr.mxu0 0.0
      %3494 = vmatpush1.msra.mxu0 %v3470
      %3495 = vmatprep.subr.mxu0 0.0
      %3496 = vmatpush1.msra.mxu0 %v3471
      %3497 = vmatprep.subr.mxu0 0.0
      %3498 = vmatpush1.msra.mxu0 %v3472
      %3499 = vmatprep.subr.mxu0 0.0
      %3500 = vmatpush1.msra.mxu0 %v3473
      %3501 = vmatprep.subr.mxu0 0.0
      %3502 = vmatpush1.msra.mxu0 %v3474
      %3503 = vmatprep.subr.mxu0 0.0
      %3504 = vmatpush1.msra.mxu0 %v3475
      %3505 = vmatprep.subr.mxu0 0.0
      %3506 = vmatpush1.msra.mxu0 %v3476
      %3507 = vmatprep.subr.mxu0 0.0
      %3508 = vmatpush1.msra.mxu0 %v3477
      %3509 = vmatprep.subr.mxu0 0.0
      %3510 = vmatpush1.msra.mxu0 %v3478
      %3511 = vmatprep.subr.mxu0 0.0
      %3512 = vmatpush1.msra.mxu0 %v3479
      %3513 = vmatprep.subr.mxu0 0.0
      %3514 = vmatpush1.msra.mxu0 %v3480
      %3515 = vmatprep.subr.mxu0 0.0
      %3516 = vmatpush1.msra.mxu0 %v3481
      %3517 = vmatprep.subr.mxu0 0.0
      %3518 = vmatpush1.msra.mxu0 %v3482
      %3519 = vmatprep.subr.mxu0 0.0
      %3520 = vmatpush1.msra.mxu0 %v3483
      %3521 = vmatprep.subr.mxu0 0.0
      %3522 = vmatpush1.msra.mxu0 %v3484
      %3523 = vmatprep.subr.mxu0 0.0
      %3524 = vmatpush1.msra.mxu0 %v3485
      %3525 = vmatprep.subr.mxu0 0.0
      %3526 = vmatpush1.msra.mxu0 0.0
      %3527 = vmatprep.subr.mxu0 0.0
      %3528 = vmatpush1.msra.mxu0 0.0
      %3529 = vmatprep.subr.mxu0 0.0
      %3530 = vmatpush1.msra.mxu0 0.0
      %3531 = vmatprep.subr.mxu0 0.0
      %3532 = vmatpush1.msra.mxu0 0.0
      %3533 = vmatprep.subr.mxu0 0.0
      %3534 = vmatpush1.msra.mxu0 0.0
      %3535 = vmatprep.subr.mxu0 0.0
      %3536 = vmatpush1.msra.mxu0 0.0
      %3537 = vmatprep.subr.mxu0 0.0
      %3538 = vmatpush1.msra.mxu0 0.0
      %3539 = vmatprep.subr.mxu0 0.0
      %3540 = vmatpush1.msra.mxu0 0.0
      %3541 = vmatprep.subr.mxu0 0.0
      %3542 = vmatpush1.msra.mxu0 0.0
      %3543 = vmatprep.subr.mxu0 0.0
      %3544 = vmatpush1.msra.mxu0 0.0
      %3545 = vmatprep.subr.mxu0 0.0
      %3546 = vmatpush1.msra.mxu0 0.0
      %3547 = vmatprep.subr.mxu0 0.0
      %3548 = vmatpush1.msra.mxu0 0.0
      %3549 = vmatprep.subr.mxu0 0.0
      %3550 = vmatpush1.msra.mxu0 0.0
      %3551 = vmatprep.subr.mxu0 0.0
      %3552 = vmatpush1.msra.mxu0 0.0
      %3553 = vmatprep.subr.mxu0 0.0
      %3554 = vmatpush1.msra.mxu0 0.0
      %3555 = vmatprep.subr.mxu0 0.0
      %3556 = vmatpush1.msra.mxu0 0.0
      %3557 = vmatprep.mubr.f32.mxu0 0.0
      %3558 = vmatmul.mubr.f32.gmra.mrb[0].mxu0 %v3467
      %v3559 = vpop.f32.mrb[0].mxu0
      %v3560 = vadd.f32 %v3491, %v3559
      %v3561 = vpop.f32.mrb[0].mxu0
      %3562 = vmatprep.mubr.f32.mxu0 0.0
      %3563 = vmatmul.mubr.f32.gmra.mrb[0].mxu0 %v3468
      %v3564 = vpop.f32.mrb[0].mxu0
      %v3565 = vadd.f32 %v3491, %v3564
      %v3566 = vpop.f32.mrb[0].mxu0
      %3567 = vmatprep.mubr.f32.mxu0 0.0
      %3568 = vmatmul.mubr.f32.gmra.mrb[0].mxu0 %v3469
      %v3569 = vpop.f32.mrb[0].mxu0
      %v3570 = vadd.f32 %v3491, %v3569
      %v3571 = vpop.f32.mrb[0].mxu0
      %3572 = vdwg.mxu0
      %v3573 = vadd.f32 %v3264, %v3560
      %v3574 = vadd.f32 %v3265, %v3565
      %v3575 = vadd.f32 %v3266, %v3570
      %3576 = vst.msk [vmem:[%s440] sm:$0xff] %vm446, %v3573
      %3577 = vst.msk [vmem:[%s440 + $0x8] sm:$0xff] %vm446, %v3574
      %3578 = vst.msk [vmem:[%s440 + $0x10] sm:$0x3] %vm453, %v3575
      %p3579 = scmp.lt.s32.totalorder %s24, 1
      %s3580 = scalar_select %p3579, %s24, 1
      %s3581 = smul.addr %s3580, 3
      %s3582 = smul.addr %s3581, 8
      %s3583 = scalar_lea.vmem %s13, %s3582
      // Predicated region
      $region73: #{deep_msn_forward.9} parent=71 // pred_check
        %p3584 = pneg %p320
      $region74: #{deep_msn_forward.9} parent=71 // pred_check_branch
        %3586 = sbr.rel (%p3584) target = $region76
      $region75: #{deep_msn_forward.9} parent=71 // pred_region
        _
      $region76: #{deep_msn_forward.9} parent=71 // pred_fallthru
        _
    $region72: #{deep_msn_forward.9} parent=5 // pred_fallthru
      _
    %p3587 = scmp.le.s32.totalorder 2, %s19
    // Predicated region
    $region77: #{deep_msn_forward.9} parent=5 // pred_check
      %p3588 = pneg %p3587
    $region78: #{deep_msn_forward.9} parent=5 // pred_check_branch
      %3590 = sbr.rel (%p3588) target = $region80
    $region79: #{deep_msn_forward.9} parent=5 // pred_region
      %s3591 = ssub.s32 %s19, 2
      // Predicated region
      $region81: #{deep_msn_forward.9} parent=79 // pred_check
        %p3592 = pneg %p326
      $region82: #{deep_msn_forward.9} parent=79 // pred_check_branch
        %3594 = sbr.rel (%p3592) target = $region84
      $region83: #{deep_msn_forward.9} parent=79 // pred_region
        %p3595 = scmp.lt.s32.totalorder %s25, 1
        %s3596 = scalar_select %p3595, %s25, 1
        %s3597 = smul.addr %s3596, 3
        %s3598 = smul.addr %s3597, 8
        %s3599 = scalar_lea.vmem %s13, %s3598
      $region84: #{deep_msn_forward.9} parent=79 // pred_fallthru
        _
    $region80: #{deep_msn_forward.9} parent=5 // pred_fallthru
      _
  $region6: #{deep_msn_forward.9} parent=0 // loop_footer
    %s23 = sadd.s32 1, %s19
  $region7: #{deep_msn_forward.9} parent=0 // loop_footer_branch
    %18 = sbr.rel target = $region3
  $region8: #{deep_msn_forward.9} parent=0 // loop_exit
    _

// kernel: deep_msn_forward.6
$region0: #{deep_msn_forward.6}
  #allocation0 [shape = 'u32[]', space=smem, size = 0x4, offset = 0x4, fixed_abs, tag = 'smem constant byte address 0x4 - core index']
  #allocation1 [shape = 'u32[144,128]{1,0:T(1,128)}', space=vmem, size = 0x12000, scoped, tag = 'internal scratch']
  %s0 = inlined_call_operand.vmem [shape: f32[2,30,4], index: 0, kind: input, shape index: {}]
  %s1 = inlined_call_operand.vmem [shape: f32[2,30,4], index: 1, kind: input, shape index: {}]
  %s2 = inlined_call_operand.vmem [shape: f32[15,4,64], index: 2, kind: input, shape index: {}]
  %s3 = inlined_call_operand.vmem [shape: f32[1,64], index: 3, kind: input, shape index: {}]
  %s4 = inlined_call_operand.vmem [shape: f32[4,64], index: 4, kind: input, shape index: {}]
  %s5 = inlined_call_operand.vmem [shape: f32[1,64], index: 5, kind: input, shape index: {}]
  %s6 = inlined_call_operand.vmem [shape: f32[128,64], index: 6, kind: input, shape index: {}]
  %s7 = inlined_call_operand.vmem [shape: f32[1,64], index: 7, kind: input, shape index: {}]
  %s8 = inlined_call_operand.vmem [shape: f32[2,16,64], index: 8, kind: output, shape index: {}]
  %s9 = sld [smem:[#allocation0]]
  $region65: #{deep_msn_forward.6} parent=0
    _
  %s11 = ssub.s32 1, %s9
  %s12 = scalar_select 0, %s11, %s9
  loop: start=0, step=1, limit=4
  $region2: #{deep_msn_forward.6} parent=0 // loop_pre_header
    _
  $region3: #{deep_msn_forward.6} parent=0 // loop_header
    %s14 = sphi 0, %s18
    %p15 = scmp.ge.s32.totalorder %s14, 4
    %s24 = sphi 0, %s26
    %s27 = sphi 0, %s24
    %s28 = sphi 0, %s27
    %s44 = sphi 0, %s28
    %s50 = sphi 0, %s52
    %s53 = sphi 0, %s50
    %s54 = sphi 0, %s53
    %s70 = sphi 0, %s54
    %s74 = sphi 0, %s74
    %s76 = sphi 0, %s74
    %s77 = sphi 0, %s76
    %s91 = sphi 0, %s77
    %s95 = sphi 0, %s95
    %s97 = sphi 0, %s95
    %s98 = sphi 0, %s97
    %s112 = sphi 0, %s98
    %s116 = sphi 0, %s116
    %s118 = sphi 0, %s116
    %s119 = sphi 0, %s118
    %s133 = sphi 0, %s119
    %s137 = sphi 0, %s137
    %s139 = sphi 0, %s137
    %s140 = sphi 0, %s139
    %s154 = sphi 0, %s140
    %s158 = sphi 0, %s158
    %s160 = sphi 0, %s158
    %s161 = sphi 0, %s160
    %s175 = sphi 0, %s161
    %s179 = sphi 0, %s179
    %s181 = sphi 0, %s179
    %s182 = sphi 0, %s181
    %s196 = sphi 0, %s182
    %s202 = sphi 0, %s204
    %s205 = sphi 0, %s202
    %s206 = sphi 0, %s205
    %s222 = sphi 0, %s206
  $region4: #{deep_msn_forward.6} parent=0 // loop_header_branch
    %17 = sbr.rel (%p15) target = $region8
  $region5: #{deep_msn_forward.6} parent=0 // loop_body
    %s19 = ssub.s32 %s14, 1
    %s20 = ssub.s32 %s14, 2
    %s21 = sadd.s32 %s14, 1
    %s22 = ssub.s32 %s14, %s21
    %p23 = scmp.eq.s32.totalorder %s22, 0
    %s25 = sadd.s32 %s24, 1
    %s26 = scalar_select %p23, %s24, %s25
    %p29 = pneg %p23
    %p30 = scmp.eq.s32.totalorder %s14, 1
    %p31 = por %p29, %p30
    %p32 = scmp.ne.s32.totalorder %s24, %s27
    %p33 = scmp.eq.s32.totalorder %s14, 0
    %p34 = por %p32, %p33
    %p35 = scmp.ne.s32.totalorder %s24, %s27
    %p36 = scmp.eq.s32.totalorder %s19, 1
    %p37 = por %p35, %p36
    %p38 = scmp.ne.s32.totalorder %s27, %s28
    %p39 = scmp.eq.s32.totalorder %s19, 0
    %p40 = por %p38, %p39
    %p41 = scmp.ne.s32.totalorder %s27, %s28
    %p42 = scmp.eq.s32.totalorder %s20, 1
    %p43 = por %p41, %p42
    %p45 = scmp.ne.s32.totalorder %s28, %s44
    %p46 = scmp.eq.s32.totalorder %s20, 0
    %p47 = por %p45, %p46
    %s48 = ssub.s32 %s14, %s21
    %p49 = scmp.eq.s32.totalorder %s48, 0
    %s51 = sadd.s32 %s50, 1
    %s52 = scalar_select %p49, %s50, %s51
    %p55 = pneg %p49
    %p56 = scmp.eq.s32.totalorder %s14, 1
    %p57 = por %p55, %p56
    %p58 = scmp.ne.s32.totalorder %s50, %s53
    %p59 = scmp.eq.s32.totalorder %s14, 0
    %p60 = por %p58, %p59
    %p61 = scmp.ne.s32.totalorder %s50, %s53
    %p62 = scmp.eq.s32.totalorder %s19, 1
    %p63 = por %p61, %p62
    %p64 = scmp.ne.s32.totalorder %s53, %s54
    %p65 = scmp.eq.s32.totalorder %s19, 0
    %p66 = por %p64, %p65
    %p67 = scmp.ne.s32.totalorder %s53, %s54
    %p68 = scmp.eq.s32.totalorder %s20, 1
    %p69 = por %p67, %p68
    %p71 = scmp.ne.s32.totalorder %s54, %s70
    %p72 = scmp.eq.s32.totalorder %s20, 0
    %p73 = por %p71, %p72
    %s75 = sadd.s32 %s74, 1
    %p78 = scmp.eq.s32.totalorder %s14, 1
    %p79 = scmp.ne.s32.totalorder %s74, %s76
    %p80 = scmp.eq.s32.totalorder %s14, 0
    %p81 = por %p79, %p80
    %p82 = scmp.ne.s32.totalorder %s74, %s76
    %p83 = scmp.eq.s32.totalorder %s19, 1
    %p84 = por %p82, %p83
    %p85 = scmp.ne.s32.totalorder %s76, %s77
    %p86 = scmp.eq.s32.totalorder %s19, 0
    %p87 = por %p85, %p86
    %p88 = scmp.ne.s32.totalorder %s76, %s77
    %p89 = scmp.eq.s32.totalorder %s20, 1
    %p90 = por %p88, %p89
    %p92 = scmp.ne.s32.totalorder %s77, %s91
    %p93 = scmp.eq.s32.totalorder %s20, 0
    %p94 = por %p92, %p93
    %s96 = sadd.s32 %s95, 1
    %p99 = scmp.eq.s32.totalorder %s14, 1
    %p100 = scmp.ne.s32.totalorder %s95, %s97
    %p101 = scmp.eq.s32.totalorder %s14, 0
    %p102 = por %p100, %p101
    %p103 = scmp.ne.s32.totalorder %s95, %s97
    %p104 = scmp.eq.s32.totalorder %s19, 1
    %p105 = por %p103, %p104
    %p106 = scmp.ne.s32.totalorder %s97, %s98
    %p107 = scmp.eq.s32.totalorder %s19, 0
    %p108 = por %p106, %p107
    %p109 = scmp.ne.s32.totalorder %s97, %s98
    %p110 = scmp.eq.s32.totalorder %s20, 1
    %p111 = por %p109, %p110
    %p113 = scmp.ne.s32.totalorder %s98, %s112
    %p114 = scmp.eq.s32.totalorder %s20, 0
    %p115 = por %p113, %p114
    %s117 = sadd.s32 %s116, 1
    %p120 = scmp.eq.s32.totalorder %s14, 1
    %p121 = scmp.ne.s32.totalorder %s116, %s118
    %p122 = scmp.eq.s32.totalorder %s14, 0
    %p123 = por %p121, %p122
    %p124 = scmp.ne.s32.totalorder %s116, %s118
    %p125 = scmp.eq.s32.totalorder %s19, 1
    %p126 = por %p124, %p125
    %p127 = scmp.ne.s32.totalorder %s118, %s119
    %p128 = scmp.eq.s32.totalorder %s19, 0
    %p129 = por %p127, %p128
    %p130 = scmp.ne.s32.totalorder %s118, %s119
    %p131 = scmp.eq.s32.totalorder %s20, 1
    %p132 = por %p130, %p131
    %p134 = scmp.ne.s32.totalorder %s119, %s133
    %p135 = scmp.eq.s32.totalorder %s20, 0
    %p136 = por %p134, %p135
    %s138 = sadd.s32 %s137, 1
    %p141 = scmp.eq.s32.totalorder %s14, 1
    %p142 = scmp.ne.s32.totalorder %s137, %s139
    %p143 = scmp.eq.s32.totalorder %s14, 0
    %p144 = por %p142, %p143
    %p145 = scmp.ne.s32.totalorder %s137, %s139
    %p146 = scmp.eq.s32.totalorder %s19, 1
    %p147 = por %p145, %p146
    %p148 = scmp.ne.s32.totalorder %s139, %s140
    %p149 = scmp.eq.s32.totalorder %s19, 0
    %p150 = por %p148, %p149
    %p151 = scmp.ne.s32.totalorder %s139, %s140
    %p152 = scmp.eq.s32.totalorder %s20, 1
    %p153 = por %p151, %p152
    %p155 = scmp.ne.s32.totalorder %s140, %s154
    %p156 = scmp.eq.s32.totalorder %s20, 0
    %p157 = por %p155, %p156
    %s159 = sadd.s32 %s158, 1
    %p162 = scmp.eq.s32.totalorder %s14, 1
    %p163 = scmp.ne.s32.totalorder %s158, %s160
    %p164 = scmp.eq.s32.totalorder %s14, 0
    %p165 = por %p163, %p164
    %p166 = scmp.ne.s32.totalorder %s158, %s160
    %p167 = scmp.eq.s32.totalorder %s19, 1
    %p168 = por %p166, %p167
    %p169 = scmp.ne.s32.totalorder %s160, %s161
    %p170 = scmp.eq.s32.totalorder %s19, 0
    %p171 = por %p169, %p170
    %p172 = scmp.ne.s32.totalorder %s160, %s161
    %p173 = scmp.eq.s32.totalorder %s20, 1
    %p174 = por %p172, %p173
    %p176 = scmp.ne.s32.totalorder %s161, %s175
    %p177 = scmp.eq.s32.totalorder %s20, 0
    %p178 = por %p176, %p177
    %s180 = sadd.s32 %s179, 1
    %p183 = scmp.eq.s32.totalorder %s14, 1
    %p184 = scmp.ne.s32.totalorder %s179, %s181
    %p185 = scmp.eq.s32.totalorder %s14, 0
    %p186 = por %p184, %p185
    %p187 = scmp.ne.s32.totalorder %s179, %s181
    %p188 = scmp.eq.s32.totalorder %s19, 1
    %p189 = por %p187, %p188
    %p190 = scmp.ne.s32.totalorder %s181, %s182
    %p191 = scmp.eq.s32.totalorder %s19, 0
    %p192 = por %p190, %p191
    %p193 = scmp.ne.s32.totalorder %s181, %s182
    %p194 = scmp.eq.s32.totalorder %s20, 1
    %p195 = por %p193, %p194
    %p197 = scmp.ne.s32.totalorder %s182, %s196
    %p198 = scmp.eq.s32.totalorder %s20, 0
    %p199 = por %p197, %p198
    %s200 = ssub.s32 %s14, %s21
    %p201 = scmp.eq.s32.totalorder %s200, 0
    %s203 = sadd.s32 %s202, 1
    %s204 = scalar_select %p201, %s202, %s203
    %p207 = pneg %p201
    %p208 = scmp.eq.s32.totalorder %s14, 1
    %p209 = por %p207, %p208
    %p210 = scmp.ne.s32.totalorder %s202, %s205
    %p211 = scmp.eq.s32.totalorder %s14, 0
    %p212 = por %p210, %p211
    %p213 = scmp.ne.s32.totalorder %s202, %s205
    %p214 = scmp.eq.s32.totalorder %s19, 1
    %p215 = por %p213, %p214
    %p216 = scmp.ne.s32.totalorder %s205, %s206
    %p217 = scmp.eq.s32.totalorder %s19, 0
    %p218 = por %p216, %p217
    %p219 = scmp.ne.s32.totalorder %s205, %s206
    %p220 = scmp.eq.s32.totalorder %s20, 1
    %p221 = por %p219, %p220
    %p223 = scmp.ne.s32.totalorder %s206, %s222
    %p224 = scmp.eq.s32.totalorder %s20, 0
    %p225 = por %p223, %p224
    %p226 = scmp.le.s32.totalorder 1, %s14
    %p227 = scmp.lt.s32.totalorder %s14, 3
    %p228 = pnand %p226, %p227
    %p229 = pneg %p228
    // Predicated region
    $region9: #{deep_msn_forward.6} parent=5 // pred_check
      _
    $region10: #{deep_msn_forward.6} parent=5 // pred_check_branch
      %231 = sbr.rel (%p228) target = $region12
    $region11: #{deep_msn_forward.6} parent=5 // pred_region
      %s232 = ssub.s32 %s14, 1
      // Predicated region
      $region13: #{deep_msn_forward.6} parent=11 // pred_check
        %p233 = pneg %p87
      $region14: #{deep_msn_forward.6} parent=11 // pred_check_branch
        %235 = sbr.rel (%p233) target = $region16
      $region15: #{deep_msn_forward.6} parent=11 // pred_region
        _
      $region16: #{deep_msn_forward.6} parent=11 // pred_fallthru
        _
      // Predicated region
      $region17: #{deep_msn_forward.6} parent=11 // pred_check
        %p236 = pneg %p108
      $region18: #{deep_msn_forward.6} parent=11 // pred_check_branch
        %238 = sbr.rel (%p236) target = $region20
      $region19: #{deep_msn_forward.6} parent=11 // pred_region
        _
      $region20: #{deep_msn_forward.6} parent=11 // pred_fallthru
        _
      // Predicated region
      $region21: #{deep_msn_forward.6} parent=11 // pred_check
        %p239 = pneg %p129
      $region22: #{deep_msn_forward.6} parent=11 // pred_check_branch
        %241 = sbr.rel (%p239) target = $region24
      $region23: #{deep_msn_forward.6} parent=11 // pred_region
        _
      $region24: #{deep_msn_forward.6} parent=11 // pred_fallthru
        _
      // Predicated region
      $region25: #{deep_msn_forward.6} parent=11 // pred_check
        %p242 = pneg %p150
      $region26: #{deep_msn_forward.6} parent=11 // pred_check_branch
        %244 = sbr.rel (%p242) target = $region28
      $region27: #{deep_msn_forward.6} parent=11 // pred_region
        _
      $region28: #{deep_msn_forward.6} parent=11 // pred_fallthru
        _
      // Predicated region
      $region29: #{deep_msn_forward.6} parent=11 // pred_check
        %p245 = pneg %p171
      $region30: #{deep_msn_forward.6} parent=11 // pred_check_branch
        %247 = sbr.rel (%p245) target = $region32
      $region31: #{deep_msn_forward.6} parent=11 // pred_region
        _
      $region32: #{deep_msn_forward.6} parent=11 // pred_fallthru
        _
      // Predicated region
      $region33: #{deep_msn_forward.6} parent=11 // pred_check
        %p248 = pneg %p192
      $region34: #{deep_msn_forward.6} parent=11 // pred_check_branch
        %250 = sbr.rel (%p248) target = $region36
      $region35: #{deep_msn_forward.6} parent=11 // pred_region
        _
      $region36: #{deep_msn_forward.6} parent=11 // pred_fallthru
        _
    $region12: #{deep_msn_forward.6} parent=5 // pred_fallthru
      _
    %p251 = scmp.lt.s32.totalorder %s14, 2
    // Predicated region
    $region37: #{deep_msn_forward.6} parent=5 // pred_check
      %p252 = pneg %p251
    $region38: #{deep_msn_forward.6} parent=5 // pred_check_branch
      %254 = sbr.rel (%p252) target = $region40
    $region39: #{deep_msn_forward.6} parent=5 // pred_region
      // Predicated region
      $region41: #{deep_msn_forward.6} parent=39 // pred_check
        %p255 = pneg %p34
      $region42: #{deep_msn_forward.6} parent=39 // pred_check_branch
        %257 = sbr.rel (%p255) target = $region44
      $region43: #{deep_msn_forward.6} parent=39 // pred_region
        %p258 = scmp.lt.s32.totalorder %s14, 1
        %s259 = scalar_select %p258, %s14, 1
        %s260 = smul.addr %s259, 4
        %s261 = smul.addr %s260, 8
        %s262 = scalar_lea.vmem %s0, %s261
      $region44: #{deep_msn_forward.6} parent=39 // pred_fallthru
        _
      // Predicated region
      $region45: #{deep_msn_forward.6} parent=39 // pred_check
        %p263 = pneg %p60
      $region46: #{deep_msn_forward.6} parent=39 // pred_check_branch
        %265 = sbr.rel (%p263) target = $region48
      $region47: #{deep_msn_forward.6} parent=39 // pred_region
        %p266 = scmp.lt.s32.totalorder %s14, 1
        %s267 = scalar_select %p266, %s14, 1
        %s268 = smul.addr %s267, 4
        %s269 = smul.addr %s268, 8
        %s270 = scalar_lea.vmem %s1, %s269
      $region48: #{deep_msn_forward.6} parent=39 // pred_fallthru
        _
    $region40: #{deep_msn_forward.6} parent=5 // pred_fallthru
      _
    %p271 = scmp.le.s32.totalorder 1, %s14
    %p272 = scmp.lt.s32.totalorder %s14, 3
    %p273 = pnand %p271, %p272
    %p274 = pneg %p273
    // Predicated region
    $region49: #{deep_msn_forward.6} parent=5 // pred_check
      _
    $region50: #{deep_msn_forward.6} parent=5 // pred_check_branch
      %276 = sbr.rel (%p273) target = $region52
    $region51: #{deep_msn_forward.6} parent=5 // pred_region
      %s277 = ssub.s32 %s14, 1
      %p278 = scmp.lt.s32.totalorder %s19, 1
      %s279 = scalar_select %p278, %s19, 1
      %s280 = smul.addr %s279, 4
      %s281 = smul.addr %s280, 8
      %s282 = scalar_lea.vmem %s0, %s281
      %p283 = pneg %p40
      %p284 = pneg %p37
      %p285 = scmp.lt.s32.totalorder %s19, 1
      %s286 = scalar_select %p285, %s19, 1
      %s287 = smul.addr %s286, 4
      %s288 = smul.addr %s287, 8
      %s289 = scalar_lea.vmem %s1, %s288
      %p290 = pneg %p66
      %p291 = pneg %p63
      %p292 = pneg %p87
      %p293 = pneg %p84
      %p294 = pneg %p108
      %p295 = pneg %p105
      %p296 = pneg %p129
      %p297 = pneg %p126
      %p298 = pneg %p150
      %p299 = pneg %p147
      %p300 = pneg %p171
      %p301 = pneg %p168
      %p302 = pneg %p192
      %p303 = pneg %p189
      %p304 = pneg %p218
      %p305 = pneg %p215
      %p306 = scmp.lt.s32.totalorder %s19, 1
      %s307 = scalar_select %p306, %s19, 1
      %s308 = smul.addr %s307, 2
      %s309 = smul.addr %s308, 8
      %s310 = scalar_lea.vmem %s8, %s309
      %p311 = scmp.lt.s32.totalorder %s19, 1
      %s312 = scalar_select %p311, %s19, 1
      %s313 = smul.addr %s312, 4
      %s314 = smul.addr %s313, 8
      %s315 = scalar_lea.vmem %s0, %s314
      %p316 = scmp.lt.s32.totalorder %s19, 1
      %s317 = scalar_select %p316, %s19, 1
      %s318 = smul.addr %s317, 4
      %s319 = smul.addr %s318, 8
      %s320 = scalar_lea.vmem %s1, %s319
      %p321 = scmp.lt.s32.totalorder %s19, 1
      %s322 = scalar_select %p321, %s19, 1
      %s323 = smul.addr %s322, 2
      %s324 = smul.addr %s323, 8
      %s325 = scalar_lea.vmem %s8, %s324
      %v326 = vld [vmem:[%s2] sm:$0xf]
      %v327 = vld [vmem:[%s2 + $0x4] sm:$0xf]
      %v328 = vld [vmem:[%s2 + $0x8] sm:$0xf]
      %v329 = vld [vmem:[%s2 + $0xc] sm:$0xf]
      %v330 = vld [vmem:[%s2 + $0x10] sm:$0xf]
      %v331 = vld [vmem:[%s2 + $0x14] sm:$0xf]
      %v332 = vld [vmem:[%s2 + $0x18] sm:$0xf]
      %v333 = vld [vmem:[%s2 + $0x1c] sm:$0xf]
      %v334 = vld [vmem:[%s2 + $0x20] sm:$0xf]
      %v335 = vld [vmem:[%s2 + $0x24] sm:$0xf]
      %v336 = vld [vmem:[%s2 + $0x28] sm:$0xf]
      %v337 = vld [vmem:[%s2 + $0x2c] sm:$0xf]
      %v338 = vld [vmem:[%s2 + $0x30] sm:$0xf]
      %v339 = vld [vmem:[%s2 + $0x34] sm:$0xf]
      %v340 = vld [vmem:[%s2 + $0x38] sm:$0xf]
      %v341 = vld [vmem:[%s3] sm:$0x1]
      %v342 = vld [vmem:[%s4] sm:$0xf]
      %v343 = vld [vmem:[%s5] sm:$0x1]
      %v344 = vld [vmem:[%s6] sm:$0xff]
      %v345 = vld [vmem:[%s6 + $0x8] sm:$0xff]
      %v346 = vld [vmem:[%s6 + $0x10] sm:$0xff]
      %v347 = vld [vmem:[%s6 + $0x18] sm:$0xff]
      %v348 = vld [vmem:[%s6 + $0x20] sm:$0xff]
      %v349 = vld [vmem:[%s6 + $0x28] sm:$0xff]
      %v350 = vld [vmem:[%s6 + $0x30] sm:$0xff]
      %v351 = vld [vmem:[%s6 + $0x38] sm:$0xff]
      %v352 = vld [vmem:[%s6 + $0x40] sm:$0xff]
      %v353 = vld [vmem:[%s6 + $0x48] sm:$0xff]
      %v354 = vld [vmem:[%s6 + $0x50] sm:$0xff]
      %v355 = vld [vmem:[%s6 + $0x58] sm:$0xff]
      %v356 = vld [vmem:[%s6 + $0x60] sm:$0xff]
      %v357 = vld [vmem:[%s6 + $0x68] sm:$0xff]
      %v358 = vld [vmem:[%s6 + $0x70] sm:$0xff]
      %v359 = vld [vmem:[%s6 + $0x78] sm:$0xff]
      %v360 = vld [vmem:[%s7] sm:$0x1]
      %v361 = vld [vmem:[%s315] sm:$0xff]
      %v362 = vld [vmem:[%s315 + $0x8] sm:$0xff]
      %v363 = vld [vmem:[%s315 + $0x10] sm:$0xff]
      %v364 = vld [vmem:[%s315 + $0x18] sm:$0x3f]
      %vm368 = vcmask 1046528
      %v369 = vrot.slane %v361, 1
      %v370 = vrot.slane %v362, 1
      %v371 = vsel %vm368, %v369, %v370
      %v372 = vrot.slane %v363, 1
      %v373 = vsel %vm368, %v370, %v372
      %vm374 = vcmask 31744
      %v375 = vsel %vm374, %v371, 0
      %v377 = vsel %vm374, %v373, 0
      %vm379 = vcmask 1043456
      %v381 = vsel %vm379, %v327, 0
      %383 = vmatprep.subr.mxu0 0.0
      %384 = vmatpush1.msra.mxu0 %v381
      %385 = vmatprep.subr.mxu0 0.0
      %386 = vmatpush1.msra.mxu0 0.0
      %387 = vmatprep.subr.mxu0 0.0
      %388 = vmatpush1.msra.mxu0 0.0
      %389 = vmatprep.subr.mxu0 0.0
      %390 = vmatpush1.msra.mxu0 0.0
      %391 = vmatprep.subr.mxu0 0.0
      %392 = vmatpush1.msra.mxu0 0.0
      %393 = vmatprep.subr.mxu0 0.0
      %394 = vmatpush1.msra.mxu0 0.0
      %395 = vmatprep.subr.mxu0 0.0
      %396 = vmatpush1.msra.mxu0 0.0
      %397 = vmatprep.subr.mxu0 0.0
      %398 = vmatpush1.msra.mxu0 0.0
      %399 = vmatprep.subr.mxu0 0.0
      %400 = vmatpush1.msra.mxu0 0.0
      %401 = vmatprep.subr.mxu0 0.0
      %402 = vmatpush1.msra.mxu0 0.0
      %403 = vmatprep.subr.mxu0 0.0
      %404 = vmatpush1.msra.mxu0 0.0
      %405 = vmatprep.subr.mxu0 0.0
      %406 = vmatpush1.msra.mxu0 0.0
      %407 = vmatprep.subr.mxu0 0.0
      %408 = vmatpush1.msra.mxu0 0.0
      %409 = vmatprep.subr.mxu0 0.0
      %410 = vmatpush1.msra.mxu0 0.0
      %411 = vmatprep.subr.mxu0 0.0
      %412 = vmatpush1.msra.mxu0 0.0
      %413 = vmatprep.subr.mxu0 0.0
      %414 = vmatpush1.msra.mxu0 0.0
      %415 = vmatprep.subr.mxu0 0.0
      %416 = vmatpush1.msra.mxu0 0.0
      %417 = vmatprep.subr.mxu0 0.0
      %418 = vmatpush1.msra.mxu0 0.0
      %419 = vmatprep.subr.mxu0 0.0
      %420 = vmatpush1.msra.mxu0 0.0
      %421 = vmatprep.subr.mxu0 0.0
      %422 = vmatpush1.msra.mxu0 0.0
      %423 = vmatprep.subr.mxu0 0.0
      %424 = vmatpush1.msra.mxu0 0.0
      %425 = vmatprep.subr.mxu0 0.0
      %426 = vmatpush1.msra.mxu0 0.0
      %427 = vmatprep.subr.mxu0 0.0
      %428 = vmatpush1.msra.mxu0 0.0
      %429 = vmatprep.subr.mxu0 0.0
      %430 = vmatpush1.msra.mxu0 0.0
      %431 = vmatprep.subr.mxu0 0.0
      %432 = vmatpush1.msra.mxu0 0.0
      %433 = vmatprep.subr.mxu0 0.0
      %434 = vmatpush1.msra.mxu0 0.0
      %435 = vmatprep.subr.mxu0 0.0
      %436 = vmatpush1.msra.mxu0 0.0
      %437 = vmatprep.subr.mxu0 0.0
      %438 = vmatpush1.msra.mxu0 0.0
      %439 = vmatprep.subr.mxu0 0.0
      %440 = vmatpush1.msra.mxu0 0.0
      %441 = vmatprep.subr.mxu0 0.0
      %442 = vmatpush1.msra.mxu0 0.0
      %443 = vmatprep.subr.mxu0 0.0
      %444 = vmatpush1.msra.mxu0 0.0
      %445 = vmatprep.subr.mxu0 0.0
      %446 = vmatpush1.msra.mxu0 0.0
      %447 = vmatprep.mubr.f32.mxu0 0.0
      %448 = vmatmul.mubr.f32.gmra.mrb[0].mxu0 %v375
      %v449 = vpop.f32.mrb[0].mxu0
      %v450 = vadd.f32 0.0, %v449
      %v451 = vpop.f32.mrb[0].mxu0
      %452 = vmatprep.mubr.f32.mxu0 0.0
      %453 = vmatmul.mubr.f32.gmra.mrb[0].mxu0 %v377
      %v454 = vpop.f32.mrb[0].mxu0
      %v455 = vadd.f32 0.0, %v454
      %v456 = vpop.f32.mrb[0].mxu0
      %457 = vdwg.mxu0
      %v458 = vsel %vm374, %v361, 0
      %v460 = vsel %vm374, %v362, 0
      %v463 = vsel %vm379, %v326, 0
      %465 = vmatprep.subr.mxu0 0.0
      %466 = vmatpush1.msra.mxu0 %v463
      %467 = vmatprep.subr.mxu0 0.0
      %468 = vmatpush1.msra.mxu0 0.0
      %469 = vmatprep.subr.mxu0 0.0
      %470 = vmatpush1.msra.mxu0 0.0
      %471 = vmatprep.subr.mxu0 0.0
      %472 = vmatpush1.msra.mxu0 0.0
      %473 = vmatprep.subr.mxu0 0.0
      %474 = vmatpush1.msra.mxu0 0.0
      %475 = vmatprep.subr.mxu0 0.0
      %476 = vmatpush1.msra.mxu0 0.0
      %477 = vmatprep.subr.mxu0 0.0
      %478 = vmatpush1.msra.mxu0 0.0
      %479 = vmatprep.subr.mxu0 0.0
      %480 = vmatpush1.msra.mxu0 0.0
      %481 = vmatprep.subr.mxu0 0.0
      %482 = vmatpush1.msra.mxu0 0.0
      %483 = vmatprep.subr.mxu0 0.0
      %484 = vmatpush1.msra.mxu0 0.0
      %485 = vmatprep.subr.mxu0 0.0
      %486 = vmatpush1.msra.mxu0 0.0
      %487 = vmatprep.subr.mxu0 0.0
      %488 = vmatpush1.msra.mxu0 0.0
      %489 = vmatprep.subr.mxu0 0.0
      %490 = vmatpush1.msra.mxu0 0.0
      %491 = vmatprep.subr.mxu0 0.0
      %492 = vmatpush1.msra.mxu0 0.0
      %493 = vmatprep.subr.mxu0 0.0
      %494 = vmatpush1.msra.mxu0 0.0
      %495 = vmatprep.subr.mxu0 0.0
      %496 = vmatpush1.msra.mxu0 0.0
      %497 = vmatprep.subr.mxu0 0.0
      %498 = vmatpush1.msra.mxu0 0.0
      %499 = vmatprep.subr.mxu0 0.0
      %500 = vmatpush1.msra.mxu0 0.0
      %501 = vmatprep.subr.mxu0 0.0
      %502 = vmatpush1.msra.mxu0 0.0
      %503 = vmatprep.subr.mxu0 0.0
      %504 = vmatpush1.msra.mxu0 0.0
      %505 = vmatprep.subr.mxu0 0.0
      %506 = vmatpush1.msra.mxu0 0.0
      %507 = vmatprep.subr.mxu0 0.0
      %508 = vmatpush1.msra.mxu0 0.0
      %509 = vmatprep.subr.mxu0 0.0
      %510 = vmatpush1.msra.mxu0 0.0
      %511 = vmatprep.subr.mxu0 0.0
      %512 = vmatpush1.msra.mxu0 0.0
      %513 = vmatprep.subr.mxu0 0.0
      %514 = vmatpush1.msra.mxu0 0.0
      %515 = vmatprep.subr.mxu0 0.0
      %516 = vmatpush1.msra.mxu0 0.0
      %517 = vmatprep.subr.mxu0 0.0
      %518 = vmatpush1.msra.mxu0 0.0
      %519 = vmatprep.subr.mxu0 0.0
      %520 = vmatpush1.msra.mxu0 0.0
      %521 = vmatprep.subr.mxu0 0.0
      %522 = vmatpush1.msra.mxu0 0.0
      %523 = vmatprep.subr.mxu0 0.0
      %524 = vmatpush1.msra.mxu0 0.0
      %525 = vmatprep.subr.mxu0 0.0
      %526 = vmatpush1.msra.mxu0 0.0
      %527 = vmatprep.subr.mxu0 0.0
      %528 = vmatpush1.msra.mxu0 0.0
      %529 = vmatprep.mubr.f32.mxu0 0.0
      %530 = vmatmul.mubr.f32.gmra.mrb[0].mxu0 %v458
      %v531 = vpop.f32.mrb[0].mxu0
      %v532 = vadd.f32 %v450, %v531
      %v533 = vpop.f32.mrb[0].mxu0
      %534 = vmatprep.mubr.f32.mxu0 0.0
      %535 = vmatmul.mubr.f32.gmra.mrb[0].mxu0 %v460
      %v536 = vpop.f32.mrb[0].mxu0
      %v537 = vadd.f32 %v455, %v536
      %v538 = vpop.f32.mrb[0].mxu0
      %539 = vdwg.mxu0
      %vm540 = vcmask 1045504
      %v541 = vrot.slane %v361, 2
      %v542 = vrot.slane %v362, 2
      %v543 = vsel %vm540, %v541, %v542
      %v544 = vrot.slane %v363, 2
      %v545 = vsel %vm540, %v542, %v544
      %v546 = vsel %vm374, %v543, 0
      %v548 = vsel %vm374, %v545, 0
      %v551 = vsel %vm379, %v328, 0
      %553 = vmatprep.subr.mxu0 0.0
      %554 = vmatpush1.msra.mxu0 %v551
      %555 = vmatprep.subr.mxu0 0.0
      %556 = vmatpush1.msra.mxu0 0.0
      %557 = vmatprep.subr.mxu0 0.0
      %558 = vmatpush1.msra.mxu0 0.0
      %559 = vmatprep.subr.mxu0 0.0
      %560 = vmatpush1.msra.mxu0 0.0
      %561 = vmatprep.subr.mxu0 0.0
      %562 = vmatpush1.msra.mxu0 0.0
      %563 = vmatprep.subr.mxu0 0.0
      %564 = vmatpush1.msra.mxu0 0.0
      %565 = vmatprep.subr.mxu0 0.0
      %566 = vmatpush1.msra.mxu0 0.0
      %567 = vmatprep.subr.mxu0 0.0
      %568 = vmatpush1.msra.mxu0 0.0
      %569 = vmatprep.subr.mxu0 0.0
      %570 = vmatpush1.msra.mxu0 0.0
      %571 = vmatprep.subr.mxu0 0.0
      %572 = vmatpush1.msra.mxu0 0.0
      %573 = vmatprep.subr.mxu0 0.0
      %574 = vmatpush1.msra.mxu0 0.0
      %575 = vmatprep.subr.mxu0 0.0
      %576 = vmatpush1.msra.mxu0 0.0
      %577 = vmatprep.subr.mxu0 0.0
      %578 = vmatpush1.msra.mxu0 0.0
      %579 = vmatprep.subr.mxu0 0.0
      %580 = vmatpush1.msra.mxu0 0.0
      %581 = vmatprep.subr.mxu0 0.0
      %582 = vmatpush1.msra.mxu0 0.0
      %583 = vmatprep.subr.mxu0 0.0
      %584 = vmatpush1.msra.mxu0 0.0
      %585 = vmatprep.subr.mxu0 0.0
      %586 = vmatpush1.msra.mxu0 0.0
      %587 = vmatprep.subr.mxu0 0.0
      %588 = vmatpush1.msra.mxu0 0.0
      %589 = vmatprep.subr.mxu0 0.0
      %590 = vmatpush1.msra.mxu0 0.0
      %591 = vmatprep.subr.mxu0 0.0
      %592 = vmatpush1.msra.mxu0 0.0
      %593 = vmatprep.subr.mxu0 0.0
      %594 = vmatpush1.msra.mxu0 0.0
      %595 = vmatprep.subr.mxu0 0.0
      %596 = vmatpush1.msra.mxu0 0.0
      %597 = vmatprep.subr.mxu0 0.0
      %598 = vmatpush1.msra.mxu0 0.0
      %599 = vmatprep.subr.mxu0 0.0
      %600 = vmatpush1.msra.mxu0 0.0
      %601 = vmatprep.subr.mxu0 0.0
      %602 = vmatpush1.msra.mxu0 0.0
      %603 = vmatprep.subr.mxu0 0.0
      %604 = vmatpush1.msra.mxu0 0.0
      %605 = vmatprep.subr.mxu0 0.0
      %606 = vmatpush1.msra.mxu0 0.0
      %607 = vmatprep.subr.mxu0 0.0
      %608 = vmatpush1.msra.mxu0 0.0
      %609 = vmatprep.subr.mxu0 0.0
      %610 = vmatpush1.msra.mxu0 0.0
      %611 = vmatprep.subr.mxu0 0.0
      %612 = vmatpush1.msra.mxu0 0.0
      %613 = vmatprep.subr.mxu0 0.0
      %614 = vmatpush1.msra.mxu0 0.0
      %615 = vmatprep.subr.mxu0 0.0
      %616 = vmatpush1.msra.mxu0 0.0
      %617 = vmatprep.mubr.f32.mxu0 0.0
      %618 = vmatmul.mubr.f32.gmra.mrb[0].mxu0 %v546
      %v619 = vpop.f32.mrb[0].mxu0
      %v620 = vadd.f32 0.0, %v619
      %v621 = vpop.f32.mrb[0].mxu0
      %622 = vmatprep.mubr.f32.mxu0 0.0
      %623 = vmatmul.mubr.f32.gmra.mrb[0].mxu0 %v548
      %v624 = vpop.f32.mrb[0].mxu0
      %v625 = vadd.f32 0.0, %v624
      %v626 = vpop.f32.mrb[0].mxu0
      %627 = vdwg.mxu0
      %v628 = vadd.f32 %v532, %v620
      %v629 = vadd.f32 %v537, %v625
      %vm630 = vcmask 1044480
      %v631 = vrot.slane %v361, 3
      %v632 = vrot.slane %v362, 3
      %v633 = vsel %vm630, %v631, %v632
      %v634 = vrot.slane %v363, 3
      %v635 = vsel %vm630, %v632, %v634
      %v636 = vsel %vm374, %v633, 0
      %v638 = vsel %vm374, %v635, 0
      %v641 = vsel %vm379, %v329, 0
      %643 = vmatprep.subr.mxu0 0.0
      %644 = vmatpush1.msra.mxu0 %v641
      %645 = vmatprep.subr.mxu0 0.0
      %646 = vmatpush1.msra.mxu0 0.0
      %647 = vmatprep.subr.mxu0 0.0
      %648 = vmatpush1.msra.mxu0 0.0
      %649 = vmatprep.subr.mxu0 0.0
      %650 = vmatpush1.msra.mxu0 0.0
      %651 = vmatprep.subr.mxu0 0.0
      %652 = vmatpush1.msra.mxu0 0.0
      %653 = vmatprep.subr.mxu0 0.0
      %654 = vmatpush1.msra.mxu0 0.0
      %655 = vmatprep.subr.mxu0 0.0
      %656 = vmatpush1.msra.mxu0 0.0
      %657 = vmatprep.subr.mxu0 0.0
      %658 = vmatpush1.msra.mxu0 0.0
      %659 = vmatprep.subr.mxu0 0.0
      %660 = vmatpush1.msra.mxu0 0.0
      %661 = vmatprep.subr.mxu0 0.0
      %662 = vmatpush1.msra.mxu0 0.0
      %663 = vmatprep.subr.mxu0 0.0
      %664 = vmatpush1.msra.mxu0 0.0
      %665 = vmatprep.subr.mxu0 0.0
      %666 = vmatpush1.msra.mxu0 0.0
      %667 = vmatprep.subr.mxu0 0.0
      %668 = vmatpush1.msra.mxu0 0.0
      %669 = vmatprep.subr.mxu0 0.0
      %670 = vmatpush1.msra.mxu0 0.0
      %671 = vmatprep.subr.mxu0 0.0
      %672 = vmatpush1.msra.mxu0 0.0
      %673 = vmatprep.subr.mxu0 0.0
      %674 = vmatpush1.msra.mxu0 0.0
      %675 = vmatprep.subr.mxu0 0.0
      %676 = vmatpush1.msra.mxu0 0.0
      %677 = vmatprep.subr.mxu0 0.0
      %678 = vmatpush1.msra.mxu0 0.0
      %679 = vmatprep.subr.mxu0 0.0
      %680 = vmatpush1.msra.mxu0 0.0
      %681 = vmatprep.subr.mxu0 0.0
      %682 = vmatpush1.msra.mxu0 0.0
      %683 = vmatprep.subr.mxu0 0.0
      %684 = vmatpush1.msra.mxu0 0.0
      %685 = vmatprep.subr.mxu0 0.0
      %686 = vmatpush1.msra.mxu0 0.0
      %687 = vmatprep.subr.mxu0 0.0
      %688 = vmatpush1.msra.mxu0 0.0
      %689 = vmatprep.subr.mxu0 0.0
      %690 = vmatpush1.msra.mxu0 0.0
      %691 = vmatprep.subr.mxu0 0.0
      %692 = vmatpush1.msra.mxu0 0.0
      %693 = vmatprep.subr.mxu0 0.0
      %694 = vmatpush1.msra.mxu0 0.0
      %695 = vmatprep.subr.mxu0 0.0
      %696 = vmatpush1.msra.mxu0 0.0
      %697 = vmatprep.subr.mxu0 0.0
      %698 = vmatpush1.msra.mxu0 0.0
      %699 = vmatprep.subr.mxu0 0.0
      %700 = vmatpush1.msra.mxu0 0.0
      %701 = vmatprep.subr.mxu0 0.0
      %702 = vmatpush1.msra.mxu0 0.0
      %703 = vmatprep.subr.mxu0 0.0
      %704 = vmatpush1.msra.mxu0 0.0
      %705 = vmatprep.subr.mxu0 0.0
      %706 = vmatpush1.msra.mxu0 0.0
      %707 = vmatprep.mubr.f32.mxu0 0.0
      %708 = vmatmul.mubr.f32.gmra.mrb[0].mxu0 %v636
      %v709 = vpop.f32.mrb[0].mxu0
      %v710 = vadd.f32 0.0, %v709
      %v711 = vpop.f32.mrb[0].mxu0
      %712 = vmatprep.mubr.f32.mxu0 0.0
      %713 = vmatmul.mubr.f32.gmra.mrb[0].mxu0 %v638
      %v714 = vpop.f32.mrb[0].mxu0
      %v715 = vadd.f32 0.0, %v714
      %v716 = vpop.f32.mrb[0].mxu0
      %717 = vdwg.mxu0
      %v718 = vadd.f32 %v628, %v710
      %v719 = vadd.f32 %v629, %v715
      %v720 = vrot.slane %v361, 4
      %v721 = vrot.slane %v362, 4
      %v722 = vsel %vm379, %v720, %v721
      %v723 = vrot.slane %v363, 4
      %v724 = vsel %vm379, %v721, %v723
      %v725 = vsel %vm374, %v722, 0
      %v727 = vsel %vm374, %v724, 0
      %v730 = vsel %vm379, %v330, 0
      %732 = vmatprep.subr.mxu0 0.0
      %733 = vmatpush1.msra.mxu0 %v730
      %734 = vmatprep.subr.mxu0 0.0
      %735 = vmatpush1.msra.mxu0 0.0
      %736 = vmatprep.subr.mxu0 0.0
      %737 = vmatpush1.msra.mxu0 0.0
      %738 = vmatprep.subr.mxu0 0.0
      %739 = vmatpush1.msra.mxu0 0.0
      %740 = vmatprep.subr.mxu0 0.0
      %741 = vmatpush1.msra.mxu0 0.0
      %742 = vmatprep.subr.mxu0 0.0
      %743 = vmatpush1.msra.mxu0 0.0
      %744 = vmatprep.subr.mxu0 0.0
      %745 = vmatpush1.msra.mxu0 0.0
      %746 = vmatprep.subr.mxu0 0.0
      %747 = vmatpush1.msra.mxu0 0.0
      %748 = vmatprep.subr.mxu0 0.0
      %749 = vmatpush1.msra.mxu0 0.0
      %750 = vmatprep.subr.mxu0 0.0
      %751 = vmatpush1.msra.mxu0 0.0
      %752 = vmatprep.subr.mxu0 0.0
      %753 = vmatpush1.msra.mxu0 0.0
      %754 = vmatprep.subr.mxu0 0.0
      %755 = vmatpush1.msra.mxu0 0.0
      %756 = vmatprep.subr.mxu0 0.0
      %757 = vmatpush1.msra.mxu0 0.0
      %758 = vmatprep.subr.mxu0 0.0
      %759 = vmatpush1.msra.mxu0 0.0
      %760 = vmatprep.subr.mxu0 0.0
      %761 = vmatpush1.msra.mxu0 0.0
      %762 = vmatprep.subr.mxu0 0.0
      %763 = vmatpush1.msra.mxu0 0.0
      %764 = vmatprep.subr.mxu0 0.0
      %765 = vmatpush1.msra.mxu0 0.0
      %766 = vmatprep.subr.mxu0 0.0
      %767 = vmatpush1.msra.mxu0 0.0
      %768 = vmatprep.subr.mxu0 0.0
      %769 = vmatpush1.msra.mxu0 0.0
      %770 = vmatprep.subr.mxu0 0.0
      %771 = vmatpush1.msra.mxu0 0.0
      %772 = vmatprep.subr.mxu0 0.0
      %773 = vmatpush1.msra.mxu0 0.0
      %774 = vmatprep.subr.mxu0 0.0
      %775 = vmatpush1.msra.mxu0 0.0
      %776 = vmatprep.subr.mxu0 0.0
      %777 = vmatpush1.msra.mxu0 0.0
      %778 = vmatprep.subr.mxu0 0.0
      %779 = vmatpush1.msra.mxu0 0.0
      %780 = vmatprep.subr.mxu0 0.0
      %781 = vmatpush1.msra.mxu0 0.0
      %782 = vmatprep.subr.mxu0 0.0
      %783 = vmatpush1.msra.mxu0 0.0
      %784 = vmatprep.subr.mxu0 0.0
      %785 = vmatpush1.msra.mxu0 0.0
      %786 = vmatprep.subr.mxu0 0.0
      %787 = vmatpush1.msra.mxu0 0.0
      %788 = vmatprep.subr.mxu0 0.0
      %789 = vmatpush1.msra.mxu0 0.0
      %790 = vmatprep.subr.mxu0 0.0
      %791 = vmatpush1.msra.mxu0 0.0
      %792 = vmatprep.subr.mxu0 0.0
      %793 = vmatpush1.msra.mxu0 0.0
      %794 = vmatprep.subr.mxu0 0.0
      %795 = vmatpush1.msra.mxu0 0.0
      %796 = vmatprep.mubr.f32.mxu0 0.0
      %797 = vmatmul.mubr.f32.gmra.mrb[0].mxu0 %v725
      %v798 = vpop.f32.mrb[0].mxu0
      %v799 = vadd.f32 0.0, %v798
      %v800 = vpop.f32.mrb[0].mxu0
      %801 = vmatprep.mubr.f32.mxu0 0.0
      %802 = vmatmul.mubr.f32.gmra.mrb[0].mxu0 %v727
      %v803 = vpop.f32.mrb[0].mxu0
      %v804 = vadd.f32 0.0, %v803
      %v805 = vpop.f32.mrb[0].mxu0
      %806 = vdwg.mxu0
      %v807 = vadd.f32 %v718, %v799
      %v808 = vadd.f32 %v719, %v804
      %vm809 = vcmask 1042432
      %v810 = vrot.slane %v361, 5
      %v811 = vrot.slane %v362, 5
      %v812 = vsel %vm809, %v810, %v811
      %v813 = vrot.slane %v363, 5
      %v814 = vsel %vm809, %v811, %v813
      %v815 = vsel %vm374, %v812, 0
      %v817 = vsel %vm374, %v814, 0
      %v820 = vsel %vm379, %v331, 0
      %822 = vmatprep.subr.mxu0 0.0
      %823 = vmatpush1.msra.mxu0 %v820
      %824 = vmatprep.subr.mxu0 0.0
      %825 = vmatpush1.msra.mxu0 0.0
      %826 = vmatprep.subr.mxu0 0.0
      %827 = vmatpush1.msra.mxu0 0.0
      %828 = vmatprep.subr.mxu0 0.0
      %829 = vmatpush1.msra.mxu0 0.0
      %830 = vmatprep.subr.mxu0 0.0
      %831 = vmatpush1.msra.mxu0 0.0
      %832 = vmatprep.subr.mxu0 0.0
      %833 = vmatpush1.msra.mxu0 0.0
      %834 = vmatprep.subr.mxu0 0.0
      %835 = vmatpush1.msra.mxu0 0.0
      %836 = vmatprep.subr.mxu0 0.0
      %837 = vmatpush1.msra.mxu0 0.0
      %838 = vmatprep.subr.mxu0 0.0
      %839 = vmatpush1.msra.mxu0 0.0
      %840 = vmatprep.subr.mxu0 0.0
      %841 = vmatpush1.msra.mxu0 0.0
      %842 = vmatprep.subr.mxu0 0.0
      %843 = vmatpush1.msra.mxu0 0.0
      %844 = vmatprep.subr.mxu0 0.0
      %845 = vmatpush1.msra.mxu0 0.0
      %846 = vmatprep.subr.mxu0 0.0
      %847 = vmatpush1.msra.mxu0 0.0
      %848 = vmatprep.subr.mxu0 0.0
      %849 = vmatpush1.msra.mxu0 0.0
      %850 = vmatprep.subr.mxu0 0.0
      %851 = vmatpush1.msra.mxu0 0.0
      %852 = vmatprep.subr.mxu0 0.0
      %853 = vmatpush1.msra.mxu0 0.0
      %854 = vmatprep.subr.mxu0 0.0
      %855 = vmatpush1.msra.mxu0 0.0
      %856 = vmatprep.subr.mxu0 0.0
      %857 = vmatpush1.msra.mxu0 0.0
      %858 = vmatprep.subr.mxu0 0.0
      %859 = vmatpush1.msra.mxu0 0.0
      %860 = vmatprep.subr.mxu0 0.0
      %861 = vmatpush1.msra.mxu0 0.0
      %862 = vmatprep.subr.mxu0 0.0
      %863 = vmatpush1.msra.mxu0 0.0
      %864 = vmatprep.subr.mxu0 0.0
      %865 = vmatpush1.msra.mxu0 0.0
      %866 = vmatprep.subr.mxu0 0.0
      %867 = vmatpush1.msra.mxu0 0.0
      %868 = vmatprep.subr.mxu0 0.0
      %869 = vmatpush1.msra.mxu0 0.0
      %870 = vmatprep.subr.mxu0 0.0
      %871 = vmatpush1.msra.mxu0 0.0
      %872 = vmatprep.subr.mxu0 0.0
      %873 = vmatpush1.msra.mxu0 0.0
      %874 = vmatprep.subr.mxu0 0.0
      %875 = vmatpush1.msra.mxu0 0.0
      %876 = vmatprep.subr.mxu0 0.0
      %877 = vmatpush1.msra.mxu0 0.0
      %878 = vmatprep.subr.mxu0 0.0
      %879 = vmatpush1.msra.mxu0 0.0
      %880 = vmatprep.subr.mxu0 0.0
      %881 = vmatpush1.msra.mxu0 0.0
      %882 = vmatprep.subr.mxu0 0.0
      %883 = vmatpush1.msra.mxu0 0.0
      %884 = vmatprep.subr.mxu0 0.0
      %885 = vmatpush1.msra.mxu0 0.0
      %886 = vmatprep.mubr.f32.mxu0 0.0
      %887 = vmatmul.mubr.f32.gmra.mrb[0].mxu0 %v815
      %v888 = vpop.f32.mrb[0].mxu0
      %v889 = vadd.f32 0.0, %v888
      %v890 = vpop.f32.mrb[0].mxu0
      %891 = vmatprep.mubr.f32.mxu0 0.0
      %892 = vmatmul.mubr.f32.gmra.mrb[0].mxu0 %v817
      %v893 = vpop.f32.mrb[0].mxu0
      %v894 = vadd.f32 0.0, %v893
      %v895 = vpop.f32.mrb[0].mxu0
      %896 = vdwg.mxu0
      %v897 = vadd.f32 %v807, %v889
      %v898 = vadd.f32 %v808, %v894
      %vm899 = vcmask 1041408
      %v900 = vrot.slane %v361, 6
      %v901 = vrot.slane %v362, 6
      %v902 = vsel %vm899, %v900, %v901
      %v903 = vrot.slane %v363, 6
      %v904 = vsel %vm899, %v901, %v903
      %v905 = vsel %vm374, %v902, 0
      %v907 = vsel %vm374, %v904, 0
      %v910 = vsel %vm379, %v332, 0
      %912 = vmatprep.subr.mxu0 0.0
      %913 = vmatpush1.msra.mxu0 %v910
      %914 = vmatprep.subr.mxu0 0.0
      %915 = vmatpush1.msra.mxu0 0.0
      %916 = vmatprep.subr.mxu0 0.0
      %917 = vmatpush1.msra.mxu0 0.0
      %918 = vmatprep.subr.mxu0 0.0
      %919 = vmatpush1.msra.mxu0 0.0
      %920 = vmatprep.subr.mxu0 0.0
      %921 = vmatpush1.msra.mxu0 0.0
      %922 = vmatprep.subr.mxu0 0.0
      %923 = vmatpush1.msra.mxu0 0.0
      %924 = vmatprep.subr.mxu0 0.0
      %925 = vmatpush1.msra.mxu0 0.0
      %926 = vmatprep.subr.mxu0 0.0
      %927 = vmatpush1.msra.mxu0 0.0
      %928 = vmatprep.subr.mxu0 0.0
      %929 = vmatpush1.msra.mxu0 0.0
      %930 = vmatprep.subr.mxu0 0.0
      %931 = vmatpush1.msra.mxu0 0.0
      %932 = vmatprep.subr.mxu0 0.0
      %933 = vmatpush1.msra.mxu0 0.0
      %934 = vmatprep.subr.mxu0 0.0
      %935 = vmatpush1.msra.mxu0 0.0
      %936 = vmatprep.subr.mxu0 0.0
      %937 = vmatpush1.msra.mxu0 0.0
      %938 = vmatprep.subr.mxu0 0.0
      %939 = vmatpush1.msra.mxu0 0.0
      %940 = vmatprep.subr.mxu0 0.0
      %941 = vmatpush1.msra.mxu0 0.0
      %942 = vmatprep.subr.mxu0 0.0
      %943 = vmatpush1.msra.mxu0 0.0
      %944 = vmatprep.subr.mxu0 0.0
      %945 = vmatpush1.msra.mxu0 0.0
      %946 = vmatprep.subr.mxu0 0.0
      %947 = vmatpush1.msra.mxu0 0.0
      %948 = vmatprep.subr.mxu0 0.0
      %949 = vmatpush1.msra.mxu0 0.0
      %950 = vmatprep.subr.mxu0 0.0
      %951 = vmatpush1.msra.mxu0 0.0
      %952 = vmatprep.subr.mxu0 0.0
      %953 = vmatpush1.msra.mxu0 0.0
      %954 = vmatprep.subr.mxu0 0.0
      %955 = vmatpush1.msra.mxu0 0.0
      %956 = vmatprep.subr.mxu0 0.0
      %957 = vmatpush1.msra.mxu0 0.0
      %958 = vmatprep.subr.mxu0 0.0
      %959 = vmatpush1.msra.mxu0 0.0
      %960 = vmatprep.subr.mxu0 0.0
      %961 = vmatpush1.msra.mxu0 0.0
      %962 = vmatprep.subr.mxu0 0.0
      %963 = vmatpush1.msra.mxu0 0.0
      %964 = vmatprep.subr.mxu0 0.0
      %965 = vmatpush1.msra.mxu0 0.0
      %966 = vmatprep.subr.mxu0 0.0
      %967 = vmatpush1.msra.mxu0 0.0
      %968 = vmatprep.subr.mxu0 0.0
      %969 = vmatpush1.msra.mxu0 0.0
      %970 = vmatprep.subr.mxu0 0.0
      %971 = vmatpush1.msra.mxu0 0.0
      %972 = vmatprep.subr.mxu0 0.0
      %973 = vmatpush1.msra.mxu0 0.0
      %974 = vmatprep.subr.mxu0 0.0
      %975 = vmatpush1.msra.mxu0 0.0
      %976 = vmatprep.mubr.f32.mxu0 0.0
      %977 = vmatmul.mubr.f32.gmra.mrb[0].mxu0 %v905
      %v978 = vpop.f32.mrb[0].mxu0
      %v979 = vadd.f32 0.0, %v978
      %v980 = vpop.f32.mrb[0].mxu0
      %981 = vmatprep.mubr.f32.mxu0 0.0
      %982 = vmatmul.mubr.f32.gmra.mrb[0].mxu0 %v907
      %v983 = vpop.f32.mrb[0].mxu0
      %v984 = vadd.f32 0.0, %v983
      %v985 = vpop.f32.mrb[0].mxu0
      %986 = vdwg.mxu0
      %v987 = vadd.f32 %v897, %v979
      %v988 = vadd.f32 %v898, %v984
      %vm989 = vcmask 1040384
      %v990 = vrot.slane %v361, 7
      %v991 = vrot.slane %v362, 7
      %v992 = vsel %vm989, %v990, %v991
      %v993 = vrot.slane %v363, 7
      %v994 = vsel %vm989, %v991, %v993
      %v995 = vsel %vm374, %v992, 0
      %v997 = vsel %vm374, %v994, 0
      %v1000 = vsel %vm379, %v333, 0
      %1002 = vmatprep.subr.mxu0 0.0
      %1003 = vmatpush1.msra.mxu0 %v1000
      %1004 = vmatprep.subr.mxu0 0.0
      %1005 = vmatpush1.msra.mxu0 0.0
      %1006 = vmatprep.subr.mxu0 0.0
      %1007 = vmatpush1.msra.mxu0 0.0
      %1008 = vmatprep.subr.mxu0 0.0
      %1009 = vmatpush1.msra.mxu0 0.0
      %1010 = vmatprep.subr.mxu0 0.0
      %1011 = vmatpush1.msra.mxu0 0.0
      %1012 = vmatprep.subr.mxu0 0.0
      %1013 = vmatpush1.msra.mxu0 0.0
      %1014 = vmatprep.subr.mxu0 0.0
      %1015 = vmatpush1.msra.mxu0 0.0
      %1016 = vmatprep.subr.mxu0 0.0
      %1017 = vmatpush1.msra.mxu0 0.0
      %1018 = vmatprep.subr.mxu0 0.0
      %1019 = vmatpush1.msra.mxu0 0.0
      %1020 = vmatprep.subr.mxu0 0.0
      %1021 = vmatpush1.msra.mxu0 0.0
      %1022 = vmatprep.subr.mxu0 0.0
      %1023 = vmatpush1.msra.mxu0 0.0
      %1024 = vmatprep.subr.mxu0 0.0
      %1025 = vmatpush1.msra.mxu0 0.0
      %1026 = vmatprep.subr.mxu0 0.0
      %1027 = vmatpush1.msra.mxu0 0.0
      %1028 = vmatprep.subr.mxu0 0.0
      %1029 = vmatpush1.msra.mxu0 0.0
      %1030 = vmatprep.subr.mxu0 0.0
      %1031 = vmatpush1.msra.mxu0 0.0
      %1032 = vmatprep.subr.mxu0 0.0
      %1033 = vmatpush1.msra.mxu0 0.0
      %1034 = vmatprep.subr.mxu0 0.0
      %1035 = vmatpush1.msra.mxu0 0.0
      %1036 = vmatprep.subr.mxu0 0.0
      %1037 = vmatpush1.msra.mxu0 0.0
      %1038 = vmatprep.subr.mxu0 0.0
      %1039 = vmatpush1.msra.mxu0 0.0
      %1040 = vmatprep.subr.mxu0 0.0
      %1041 = vmatpush1.msra.mxu0 0.0
      %1042 = vmatprep.subr.mxu0 0.0
      %1043 = vmatpush1.msra.mxu0 0.0
      %1044 = vmatprep.subr.mxu0 0.0
      %1045 = vmatpush1.msra.mxu0 0.0
      %1046 = vmatprep.subr.mxu0 0.0
      %1047 = vmatpush1.msra.mxu0 0.0
      %1048 = vmatprep.subr.mxu0 0.0
      %1049 = vmatpush1.msra.mxu0 0.0
      %1050 = vmatprep.subr.mxu0 0.0
      %1051 = vmatpush1.msra.mxu0 0.0
      %1052 = vmatprep.subr.mxu0 0.0
      %1053 = vmatpush1.msra.mxu0 0.0
      %1054 = vmatprep.subr.mxu0 0.0
      %1055 = vmatpush1.msra.mxu0 0.0
      %1056 = vmatprep.subr.mxu0 0.0
      %1057 = vmatpush1.msra.mxu0 0.0
      %1058 = vmatprep.subr.mxu0 0.0
      %1059 = vmatpush1.msra.mxu0 0.0
      %1060 = vmatprep.subr.mxu0 0.0
      %1061 = vmatpush1.msra.mxu0 0.0
      %1062 = vmatprep.subr.mxu0 0.0
      %1063 = vmatpush1.msra.mxu0 0.0
      %1064 = vmatprep.subr.mxu0 0.0
      %1065 = vmatpush1.msra.mxu0 0.0
      %1066 = vmatprep.mubr.f32.mxu0 0.0
      %1067 = vmatmul.mubr.f32.gmra.mrb[0].mxu0 %v995
      %v1068 = vpop.f32.mrb[0].mxu0
      %v1069 = vadd.f32 0.0, %v1068
      %v1070 = vpop.f32.mrb[0].mxu0
      %1071 = vmatprep.mubr.f32.mxu0 0.0
      %1072 = vmatmul.mubr.f32.gmra.mrb[0].mxu0 %v997
      %v1073 = vpop.f32.mrb[0].mxu0
      %v1074 = vadd.f32 0.0, %v1073
      %v1075 = vpop.f32.mrb[0].mxu0
      %1076 = vdwg.mxu0
      %v1077 = vadd.f32 %v987, %v1069
      %v1078 = vadd.f32 %v988, %v1074
      %v1079 = vsel %vm374, %v363, 0
      %v1082 = vsel %vm379, %v334, 0
      %1084 = vmatprep.subr.mxu0 0.0
      %1085 = vmatpush1.msra.mxu0 %v1082
      %1086 = vmatprep.subr.mxu0 0.0
      %1087 = vmatpush1.msra.mxu0 0.0
      %1088 = vmatprep.subr.mxu0 0.0
      %1089 = vmatpush1.msra.mxu0 0.0
      %1090 = vmatprep.subr.mxu0 0.0
      %1091 = vmatpush1.msra.mxu0 0.0
      %1092 = vmatprep.subr.mxu0 0.0
      %1093 = vmatpush1.msra.mxu0 0.0
      %1094 = vmatprep.subr.mxu0 0.0
      %1095 = vmatpush1.msra.mxu0 0.0
      %1096 = vmatprep.subr.mxu0 0.0
      %1097 = vmatpush1.msra.mxu0 0.0
      %1098 = vmatprep.subr.mxu0 0.0
      %1099 = vmatpush1.msra.mxu0 0.0
      %1100 = vmatprep.subr.mxu0 0.0
      %1101 = vmatpush1.msra.mxu0 0.0
      %1102 = vmatprep.subr.mxu0 0.0
      %1103 = vmatpush1.msra.mxu0 0.0
      %1104 = vmatprep.subr.mxu0 0.0
      %1105 = vmatpush1.msra.mxu0 0.0
      %1106 = vmatprep.subr.mxu0 0.0
      %1107 = vmatpush1.msra.mxu0 0.0
      %1108 = vmatprep.subr.mxu0 0.0
      %1109 = vmatpush1.msra.mxu0 0.0
      %1110 = vmatprep.subr.mxu0 0.0
      %1111 = vmatpush1.msra.mxu0 0.0
      %1112 = vmatprep.subr.mxu0 0.0
      %1113 = vmatpush1.msra.mxu0 0.0
      %1114 = vmatprep.subr.mxu0 0.0
      %1115 = vmatpush1.msra.mxu0 0.0
      %1116 = vmatprep.subr.mxu0 0.0
      %1117 = vmatpush1.msra.mxu0 0.0
      %1118 = vmatprep.subr.mxu0 0.0
      %1119 = vmatpush1.msra.mxu0 0.0
      %1120 = vmatprep.subr.mxu0 0.0
      %1121 = vmatpush1.msra.mxu0 0.0
      %1122 = vmatprep.subr.mxu0 0.0
      %1123 = vmatpush1.msra.mxu0 0.0
      %1124 = vmatprep.subr.mxu0 0.0
      %1125 = vmatpush1.msra.mxu0 0.0
      %1126 = vmatprep.subr.mxu0 0.0
      %1127 = vmatpush1.msra.mxu0 0.0
      %1128 = vmatprep.subr.mxu0 0.0
      %1129 = vmatpush1.msra.mxu0 0.0
      %1130 = vmatprep.subr.mxu0 0.0
      %1131 = vmatpush1.msra.mxu0 0.0
      %1132 = vmatprep.subr.mxu0 0.0
      %1133 = vmatpush1.msra.mxu0 0.0
      %1134 = vmatprep.subr.mxu0 0.0
      %1135 = vmatpush1.msra.mxu0 0.0
      %1136 = vmatprep.subr.mxu0 0.0
      %1137 = vmatpush1.msra.mxu0 0.0
      %1138 = vmatprep.subr.mxu0 0.0
      %1139 = vmatpush1.msra.mxu0 0.0
      %1140 = vmatprep.subr.mxu0 0.0
      %1141 = vmatpush1.msra.mxu0 0.0
      %1142 = vmatprep.subr.mxu0 0.0
      %1143 = vmatpush1.msra.mxu0 0.0
      %1144 = vmatprep.subr.mxu0 0.0
      %1145 = vmatpush1.msra.mxu0 0.0
      %1146 = vmatprep.subr.mxu0 0.0
      %1147 = vmatpush1.msra.mxu0 0.0
      %1148 = vmatprep.mubr.f32.mxu0 0.0
      %1149 = vmatmul.mubr.f32.gmra.mrb[0].mxu0 %v460
      %v1150 = vpop.f32.mrb[0].mxu0
      %v1151 = vadd.f32 0.0, %v1150
      %v1152 = vpop.f32.mrb[0].mxu0
      %1153 = vmatprep.mubr.f32.mxu0 0.0
      %1154 = vmatmul.mubr.f32.gmra.mrb[0].mxu0 %v1079
      %v1155 = vpop.f32.mrb[0].mxu0
      %v1156 = vadd.f32 0.0, %v1155
      %v1157 = vpop.f32.mrb[0].mxu0
      %1158 = vdwg.mxu0
      %v1159 = vadd.f32 %v1077, %v1151
      %v1160 = vadd.f32 %v1078, %v1156
      %v1162 = vrot.slane %v364, 1
      %v1163 = vsel %vm368, %v372, %v1162
      %v1164 = vsel %vm374, %v1163, 0
      %v1167 = vsel %vm379, %v335, 0
      %1169 = vmatprep.subr.mxu0 0.0
      %1170 = vmatpush1.msra.mxu0 %v1167
      %1171 = vmatprep.subr.mxu0 0.0
      %1172 = vmatpush1.msra.mxu0 0.0
      %1173 = vmatprep.subr.mxu0 0.0
      %1174 = vmatpush1.msra.mxu0 0.0
      %1175 = vmatprep.subr.mxu0 0.0
      %1176 = vmatpush1.msra.mxu0 0.0
      %1177 = vmatprep.subr.mxu0 0.0
      %1178 = vmatpush1.msra.mxu0 0.0
      %1179 = vmatprep.subr.mxu0 0.0
      %1180 = vmatpush1.msra.mxu0 0.0
      %1181 = vmatprep.subr.mxu0 0.0
      %1182 = vmatpush1.msra.mxu0 0.0
      %1183 = vmatprep.subr.mxu0 0.0
      %1184 = vmatpush1.msra.mxu0 0.0
      %1185 = vmatprep.subr.mxu0 0.0
      %1186 = vmatpush1.msra.mxu0 0.0
      %1187 = vmatprep.subr.mxu0 0.0
      %1188 = vmatpush1.msra.mxu0 0.0
      %1189 = vmatprep.subr.mxu0 0.0
      %1190 = vmatpush1.msra.mxu0 0.0
      %1191 = vmatprep.subr.mxu0 0.0
      %1192 = vmatpush1.msra.mxu0 0.0
      %1193 = vmatprep.subr.mxu0 0.0
      %1194 = vmatpush1.msra.mxu0 0.0
      %1195 = vmatprep.subr.mxu0 0.0
      %1196 = vmatpush1.msra.mxu0 0.0
      %1197 = vmatprep.subr.mxu0 0.0
      %1198 = vmatpush1.msra.mxu0 0.0
      %1199 = vmatprep.subr.mxu0 0.0
      %1200 = vmatpush1.msra.mxu0 0.0
      %1201 = vmatprep.subr.mxu0 0.0
      %1202 = vmatpush1.msra.mxu0 0.0
      %1203 = vmatprep.subr.mxu0 0.0
      %1204 = vmatpush1.msra.mxu0 0.0
      %1205 = vmatprep.subr.mxu0 0.0
      %1206 = vmatpush1.msra.mxu0 0.0
      %1207 = vmatprep.subr.mxu0 0.0
      %1208 = vmatpush1.msra.mxu0 0.0
      %1209 = vmatprep.subr.mxu0 0.0
      %1210 = vmatpush1.msra.mxu0 0.0
      %1211 = vmatprep.subr.mxu0 0.0
      %1212 = vmatpush1.msra.mxu0 0.0
      %1213 = vmatprep.subr.mxu0 0.0
      %1214 = vmatpush1.msra.mxu0 0.0
      %1215 = vmatprep.subr.mxu0 0.0
      %1216 = vmatpush1.msra.mxu0 0.0
      %1217 = vmatprep.subr.mxu0 0.0
      %1218 = vmatpush1.msra.mxu0 0.0
      %1219 = vmatprep.subr.mxu0 0.0
      %1220 = vmatpush1.msra.mxu0 0.0
      %1221 = vmatprep.subr.mxu0 0.0
      %1222 = vmatpush1.msra.mxu0 0.0
      %1223 = vmatprep.subr.mxu0 0.0
      %1224 = vmatpush1.msra.mxu0 0.0
      %1225 = vmatprep.subr.mxu0 0.0
      %1226 = vmatpush1.msra.mxu0 0.0
      %1227 = vmatprep.subr.mxu0 0.0
      %1228 = vmatpush1.msra.mxu0 0.0
      %1229 = vmatprep.subr.mxu0 0.0
      %1230 = vmatpush1.msra.mxu0 0.0
      %1231 = vmatprep.subr.mxu0 0.0
      %1232 = vmatpush1.msra.mxu0 0.0
      %1233 = vmatprep.mubr.f32.mxu0 0.0
      %1234 = vmatmul.mubr.f32.gmra.mrb[0].mxu0 %v377
      %v1235 = vpop.f32.mrb[0].mxu0
      %v1236 = vadd.f32 0.0, %v1235
      %v1237 = vpop.f32.mrb[0].mxu0
      %1238 = vmatprep.mubr.f32.mxu0 0.0
      %1239 = vmatmul.mubr.f32.gmra.mrb[0].mxu0 %v1164
      %v1240 = vpop.f32.mrb[0].mxu0
      %v1241 = vadd.f32 0.0, %v1240
      %v1242 = vpop.f32.mrb[0].mxu0
      %1243 = vdwg.mxu0
      %v1244 = vadd.f32 %v1159, %v1236
      %v1245 = vadd.f32 %v1160, %v1241
      %v1246 = vrot.slane %v364, 2
      %v1247 = vsel %vm540, %v544, %v1246
      %v1248 = vsel %vm374, %v1247, 0
      %v1251 = vsel %vm379, %v336, 0
      %1253 = vmatprep.subr.mxu0 0.0
      %1254 = vmatpush1.msra.mxu0 %v1251
      %1255 = vmatprep.subr.mxu0 0.0
      %1256 = vmatpush1.msra.mxu0 0.0
      %1257 = vmatprep.subr.mxu0 0.0
      %1258 = vmatpush1.msra.mxu0 0.0
      %1259 = vmatprep.subr.mxu0 0.0
      %1260 = vmatpush1.msra.mxu0 0.0
      %1261 = vmatprep.subr.mxu0 0.0
      %1262 = vmatpush1.msra.mxu0 0.0
      %1263 = vmatprep.subr.mxu0 0.0
      %1264 = vmatpush1.msra.mxu0 0.0
      %1265 = vmatprep.subr.mxu0 0.0
      %1266 = vmatpush1.msra.mxu0 0.0
      %1267 = vmatprep.subr.mxu0 0.0
      %1268 = vmatpush1.msra.mxu0 0.0
      %1269 = vmatprep.subr.mxu0 0.0
      %1270 = vmatpush1.msra.mxu0 0.0
      %1271 = vmatprep.subr.mxu0 0.0
      %1272 = vmatpush1.msra.mxu0 0.0
      %1273 = vmatprep.subr.mxu0 0.0
      %1274 = vmatpush1.msra.mxu0 0.0
      %1275 = vmatprep.subr.mxu0 0.0
      %1276 = vmatpush1.msra.mxu0 0.0
      %1277 = vmatprep.subr.mxu0 0.0
      %1278 = vmatpush1.msra.mxu0 0.0
      %1279 = vmatprep.subr.mxu0 0.0
      %1280 = vmatpush1.msra.mxu0 0.0
      %1281 = vmatprep.subr.mxu0 0.0
      %1282 = vmatpush1.msra.mxu0 0.0
      %1283 = vmatprep.subr.mxu0 0.0
      %1284 = vmatpush1.msra.mxu0 0.0
      %1285 = vmatprep.subr.mxu0 0.0
      %1286 = vmatpush1.msra.mxu0 0.0
      %1287 = vmatprep.subr.mxu0 0.0
      %1288 = vmatpush1.msra.mxu0 0.0
      %1289 = vmatprep.subr.mxu0 0.0
      %1290 = vmatpush1.msra.mxu0 0.0
      %1291 = vmatprep.subr.mxu0 0.0
      %1292 = vmatpush1.msra.mxu0 0.0
      %1293 = vmatprep.subr.mxu0 0.0
      %1294 = vmatpush1.msra.mxu0 0.0
      %1295 = vmatprep.subr.mxu0 0.0
      %1296 = vmatpush1.msra.mxu0 0.0
      %1297 = vmatprep.subr.mxu0 0.0
      %1298 = vmatpush1.msra.mxu0 0.0
      %1299 = vmatprep.subr.mxu0 0.0
      %1300 = vmatpush1.msra.mxu0 0.0
      %1301 = vmatprep.subr.mxu0 0.0
      %1302 = vmatpush1.msra.mxu0 0.0
      %1303 = vmatprep.subr.mxu0 0.0
      %1304 = vmatpush1.msra.mxu0 0.0
      %1305 = vmatprep.subr.mxu0 0.0
      %1306 = vmatpush1.msra.mxu0 0.0
      %1307 = vmatprep.subr.mxu0 0.0
      %1308 = vmatpush1.msra.mxu0 0.0
      %1309 = vmatprep.subr.mxu0 0.0
      %1310 = vmatpush1.msra.mxu0 0.0
      %1311 = vmatprep.subr.mxu0 0.0
      %1312 = vmatpush1.msra.mxu0 0.0
      %1313 = vmatprep.subr.mxu0 0.0
      %1314 = vmatpush1.msra.mxu0 0.0
      %1315 = vmatprep.subr.mxu0 0.0
      %1316 = vmatpush1.msra.mxu0 0.0
      %1317 = vmatprep.mubr.f32.mxu0 0.0
      %1318 = vmatmul.mubr.f32.gmra.mrb[0].mxu0 %v548
      %v1319 = vpop.f32.mrb[0].mxu0
      %v1320 = vadd.f32 0.0, %v1319
      %v1321 = vpop.f32.mrb[0].mxu0
      %1322 = vmatprep.mubr.f32.mxu0 0.0
      %1323 = vmatmul.mubr.f32.gmra.mrb[0].mxu0 %v1248
      %v1324 = vpop.f32.mrb[0].mxu0
      %v1325 = vadd.f32 0.0, %v1324
      %v1326 = vpop.f32.mrb[0].mxu0
      %1327 = vdwg.mxu0
      %v1328 = vadd.f32 %v1244, %v1320
      %v1329 = vadd.f32 %v1245, %v1325
      %v1330 = vrot.slane %v364, 3
      %v1331 = vsel %vm630, %v634, %v1330
      %v1332 = vsel %vm374, %v1331, 0
      %v1335 = vsel %vm379, %v337, 0
      %1337 = vmatprep.subr.mxu0 0.0
      %1338 = vmatpush1.msra.mxu0 %v1335
      %1339 = vmatprep.subr.mxu0 0.0
      %1340 = vmatpush1.msra.mxu0 0.0
      %1341 = vmatprep.subr.mxu0 0.0
      %1342 = vmatpush1.msra.mxu0 0.0
      %1343 = vmatprep.subr.mxu0 0.0
      %1344 = vmatpush1.msra.mxu0 0.0
      %1345 = vmatprep.subr.mxu0 0.0
      %1346 = vmatpush1.msra.mxu0 0.0
      %1347 = vmatprep.subr.mxu0 0.0
      %1348 = vmatpush1.msra.mxu0 0.0
      %1349 = vmatprep.subr.mxu0 0.0
      %1350 = vmatpush1.msra.mxu0 0.0
      %1351 = vmatprep.subr.mxu0 0.0
      %1352 = vmatpush1.msra.mxu0 0.0
      %1353 = vmatprep.subr.mxu0 0.0
      %1354 = vmatpush1.msra.mxu0 0.0
      %1355 = vmatprep.subr.mxu0 0.0
      %1356 = vmatpush1.msra.mxu0 0.0
      %1357 = vmatprep.subr.mxu0 0.0
      %1358 = vmatpush1.msra.mxu0 0.0
      %1359 = vmatprep.subr.mxu0 0.0
      %1360 = vmatpush1.msra.mxu0 0.0
      %1361 = vmatprep.subr.mxu0 0.0
      %1362 = vmatpush1.msra.mxu0 0.0
      %1363 = vmatprep.subr.mxu0 0.0
      %1364 = vmatpush1.msra.mxu0 0.0
      %1365 = vmatprep.subr.mxu0 0.0
      %1366 = vmatpush1.msra.mxu0 0.0
      %1367 = vmatprep.subr.mxu0 0.0
      %1368 = vmatpush1.msra.mxu0 0.0
      %1369 = vmatprep.subr.mxu0 0.0
      %1370 = vmatpush1.msra.mxu0 0.0
      %1371 = vmatprep.subr.mxu0 0.0
      %1372 = vmatpush1.msra.mxu0 0.0
      %1373 = vmatprep.subr.mxu0 0.0
      %1374 = vmatpush1.msra.mxu0 0.0
      %1375 = vmatprep.subr.mxu0 0.0
      %1376 = vmatpush1.msra.mxu0 0.0
      %1377 = vmatprep.subr.mxu0 0.0
      %1378 = vmatpush1.msra.mxu0 0.0
      %1379 = vmatprep.subr.mxu0 0.0
      %1380 = vmatpush1.msra.mxu0 0.0
      %1381 = vmatprep.subr.mxu0 0.0
      %1382 = vmatpush1.msra.mxu0 0.0
      %1383 = vmatprep.subr.mxu0 0.0
      %1384 = vmatpush1.msra.mxu0 0.0
      %1385 = vmatprep.subr.mxu0 0.0
      %1386 = vmatpush1.msra.mxu0 0.0
      %1387 = vmatprep.subr.mxu0 0.0
      %1388 = vmatpush1.msra.mxu0 0.0
      %1389 = vmatprep.subr.mxu0 0.0
      %1390 = vmatpush1.msra.mxu0 0.0
      %1391 = vmatprep.subr.mxu0 0.0
      %1392 = vmatpush1.msra.mxu0 0.0
      %1393 = vmatprep.subr.mxu0 0.0
      %1394 = vmatpush1.msra.mxu0 0.0
      %1395 = vmatprep.subr.mxu0 0.0
      %1396 = vmatpush1.msra.mxu0 0.0
      %1397 = vmatprep.subr.mxu0 0.0
      %1398 = vmatpush1.msra.mxu0 0.0
      %1399 = vmatprep.subr.mxu0 0.0
      %1400 = vmatpush1.msra.mxu0 0.0
      %1401 = vmatprep.mubr.f32.mxu0 0.0
      %1402 = vmatmul.mubr.f32.gmra.mrb[0].mxu0 %v638
      %v1403 = vpop.f32.mrb[0].mxu0
      %v1404 = vadd.f32 0.0, %v1403
      %v1405 = vpop.f32.mrb[0].mxu0
      %1406 = vmatprep.mubr.f32.mxu0 0.0
      %1407 = vmatmul.mubr.f32.gmra.mrb[0].mxu0 %v1332
      %v1408 = vpop.f32.mrb[0].mxu0
      %v1409 = vadd.f32 0.0, %v1408
      %v1410 = vpop.f32.mrb[0].mxu0
      %1411 = vdwg.mxu0
      %v1412 = vadd.f32 %v1328, %v1404
      %v1413 = vadd.f32 %v1329, %v1409
      %v1414 = vrot.slane %v364, 4
      %v1415 = vsel %vm379, %v723, %v1414
      %v1416 = vsel %vm374, %v1415, 0
      %v1419 = vsel %vm379, %v338, 0
      %1421 = vmatprep.subr.mxu0 0.0
      %1422 = vmatpush1.msra.mxu0 %v1419
      %1423 = vmatprep.subr.mxu0 0.0
      %1424 = vmatpush1.msra.mxu0 0.0
      %1425 = vmatprep.subr.mxu0 0.0
      %1426 = vmatpush1.msra.mxu0 0.0
      %1427 = vmatprep.subr.mxu0 0.0
      %1428 = vmatpush1.msra.mxu0 0.0
      %1429 = vmatprep.subr.mxu0 0.0
      %1430 = vmatpush1.msra.mxu0 0.0
      %1431 = vmatprep.subr.mxu0 0.0
      %1432 = vmatpush1.msra.mxu0 0.0
      %1433 = vmatprep.subr.mxu0 0.0
      %1434 = vmatpush1.msra.mxu0 0.0
      %1435 = vmatprep.subr.mxu0 0.0
      %1436 = vmatpush1.msra.mxu0 0.0
      %1437 = vmatprep.subr.mxu0 0.0
      %1438 = vmatpush1.msra.mxu0 0.0
      %1439 = vmatprep.subr.mxu0 0.0
      %1440 = vmatpush1.msra.mxu0 0.0
      %1441 = vmatprep.subr.mxu0 0.0
      %1442 = vmatpush1.msra.mxu0 0.0
      %1443 = vmatprep.subr.mxu0 0.0
      %1444 = vmatpush1.msra.mxu0 0.0
      %1445 = vmatprep.subr.mxu0 0.0
      %1446 = vmatpush1.msra.mxu0 0.0
      %1447 = vmatprep.subr.mxu0 0.0
      %1448 = vmatpush1.msra.mxu0 0.0
      %1449 = vmatprep.subr.mxu0 0.0
      %1450 = vmatpush1.msra.mxu0 0.0
      %1451 = vmatprep.subr.mxu0 0.0
      %1452 = vmatpush1.msra.mxu0 0.0
      %1453 = vmatprep.subr.mxu0 0.0
      %1454 = vmatpush1.msra.mxu0 0.0
      %1455 = vmatprep.subr.mxu0 0.0
      %1456 = vmatpush1.msra.mxu0 0.0
      %1457 = vmatprep.subr.mxu0 0.0
      %1458 = vmatpush1.msra.mxu0 0.0
      %1459 = vmatprep.subr.mxu0 0.0
      %1460 = vmatpush1.msra.mxu0 0.0
      %1461 = vmatprep.subr.mxu0 0.0
      %1462 = vmatpush1.msra.mxu0 0.0
      %1463 = vmatprep.subr.mxu0 0.0
      %1464 = vmatpush1.msra.mxu0 0.0
      %1465 = vmatprep.subr.mxu0 0.0
      %1466 = vmatpush1.msra.mxu0 0.0
      %1467 = vmatprep.subr.mxu0 0.0
      %1468 = vmatpush1.msra.mxu0 0.0
      %1469 = vmatprep.subr.mxu0 0.0
      %1470 = vmatpush1.msra.mxu0 0.0
      %1471 = vmatprep.subr.mxu0 0.0
      %1472 = vmatpush1.msra.mxu0 0.0
      %1473 = vmatprep.subr.mxu0 0.0
      %1474 = vmatpush1.msra.mxu0 0.0
      %1475 = vmatprep.subr.mxu0 0.0
      %1476 = vmatpush1.msra.mxu0 0.0
      %1477 = vmatprep.subr.mxu0 0.0
      %1478 = vmatpush1.msra.mxu0 0.0
      %1479 = vmatprep.subr.mxu0 0.0
      %1480 = vmatpush1.msra.mxu0 0.0
      %1481 = vmatprep.subr.mxu0 0.0
      %1482 = vmatpush1.msra.mxu0 0.0
      %1483 = vmatprep.subr.mxu0 0.0
      %1484 = vmatpush1.msra.mxu0 0.0
      %1485 = vmatprep.mubr.f32.mxu0 0.0
      %1486 = vmatmul.mubr.f32.gmra.mrb[0].mxu0 %v727
      %v1487 = vpop.f32.mrb[0].mxu0
      %v1488 = vadd.f32 0.0, %v1487
      %v1489 = vpop.f32.mrb[0].mxu0
      %1490 = vmatprep.mubr.f32.mxu0 0.0
      %1491 = vmatmul.mubr.f32.gmra.mrb[0].mxu0 %v1416
      %v1492 = vpop.f32.mrb[0].mxu0
      %v1493 = vadd.f32 0.0, %v1492
      %v1494 = vpop.f32.mrb[0].mxu0
      %1495 = vdwg.mxu0
      %v1496 = vadd.f32 %v1412, %v1488
      %v1497 = vadd.f32 %v1413, %v1493
      %v1498 = vrot.slane %v364, 5
      %v1499 = vsel %vm809, %v813, %v1498
      %v1500 = vsel %vm374, %v1499, 0
      %v1503 = vsel %vm379, %v339, 0
      %1505 = vmatprep.subr.mxu0 0.0
      %1506 = vmatpush1.msra.mxu0 %v1503
      %1507 = vmatprep.subr.mxu0 0.0
      %1508 = vmatpush1.msra.mxu0 0.0
      %1509 = vmatprep.subr.mxu0 0.0
      %1510 = vmatpush1.msra.mxu0 0.0
      %1511 = vmatprep.subr.mxu0 0.0
      %1512 = vmatpush1.msra.mxu0 0.0
      %1513 = vmatprep.subr.mxu0 0.0
      %1514 = vmatpush1.msra.mxu0 0.0
      %1515 = vmatprep.subr.mxu0 0.0
      %1516 = vmatpush1.msra.mxu0 0.0
      %1517 = vmatprep.subr.mxu0 0.0
      %1518 = vmatpush1.msra.mxu0 0.0
      %1519 = vmatprep.subr.mxu0 0.0
      %1520 = vmatpush1.msra.mxu0 0.0
      %1521 = vmatprep.subr.mxu0 0.0
      %1522 = vmatpush1.msra.mxu0 0.0
      %1523 = vmatprep.subr.mxu0 0.0
      %1524 = vmatpush1.msra.mxu0 0.0
      %1525 = vmatprep.subr.mxu0 0.0
      %1526 = vmatpush1.msra.mxu0 0.0
      %1527 = vmatprep.subr.mxu0 0.0
      %1528 = vmatpush1.msra.mxu0 0.0
      %1529 = vmatprep.subr.mxu0 0.0
      %1530 = vmatpush1.msra.mxu0 0.0
      %1531 = vmatprep.subr.mxu0 0.0
      %1532 = vmatpush1.msra.mxu0 0.0
      %1533 = vmatprep.subr.mxu0 0.0
      %1534 = vmatpush1.msra.mxu0 0.0
      %1535 = vmatprep.subr.mxu0 0.0
      %1536 = vmatpush1.msra.mxu0 0.0
      %1537 = vmatprep.subr.mxu0 0.0
      %1538 = vmatpush1.msra.mxu0 0.0
      %1539 = vmatprep.subr.mxu0 0.0
      %1540 = vmatpush1.msra.mxu0 0.0
      %1541 = vmatprep.subr.mxu0 0.0
      %1542 = vmatpush1.msra.mxu0 0.0
      %1543 = vmatprep.subr.mxu0 0.0
      %1544 = vmatpush1.msra.mxu0 0.0
      %1545 = vmatprep.subr.mxu0 0.0
      %1546 = vmatpush1.msra.mxu0 0.0
      %1547 = vmatprep.subr.mxu0 0.0
      %1548 = vmatpush1.msra.mxu0 0.0
      %1549 = vmatprep.subr.mxu0 0.0
      %1550 = vmatpush1.msra.mxu0 0.0
      %1551 = vmatprep.subr.mxu0 0.0
      %1552 = vmatpush1.msra.mxu0 0.0
      %1553 = vmatprep.subr.mxu0 0.0
      %1554 = vmatpush1.msra.mxu0 0.0
      %1555 = vmatprep.subr.mxu0 0.0
      %1556 = vmatpush1.msra.mxu0 0.0
      %1557 = vmatprep.subr.mxu0 0.0
      %1558 = vmatpush1.msra.mxu0 0.0
      %1559 = vmatprep.subr.mxu0 0.0
      %1560 = vmatpush1.msra.mxu0 0.0
      %1561 = vmatprep.subr.mxu0 0.0
      %1562 = vmatpush1.msra.mxu0 0.0
      %1563 = vmatprep.subr.mxu0 0.0
      %1564 = vmatpush1.msra.mxu0 0.0
      %1565 = vmatprep.subr.mxu0 0.0
      %1566 = vmatpush1.msra.mxu0 0.0
      %1567 = vmatprep.subr.mxu0 0.0
      %1568 = vmatpush1.msra.mxu0 0.0
      %1569 = vmatprep.mubr.f32.mxu0 0.0
      %1570 = vmatmul.mubr.f32.gmra.mrb[0].mxu0 %v817
      %v1571 = vpop.f32.mrb[0].mxu0
      %v1572 = vadd.f32 0.0, %v1571
      %v1573 = vpop.f32.mrb[0].mxu0
      %1574 = vmatprep.mubr.f32.mxu0 0.0
      %1575 = vmatmul.mubr.f32.gmra.mrb[0].mxu0 %v1500
      %v1576 = vpop.f32.mrb[0].mxu0
      %v1577 = vadd.f32 0.0, %v1576
      %v1578 = vpop.f32.mrb[0].mxu0
      %1579 = vdwg.mxu0
      %v1580 = vadd.f32 %v1496, %v1572
      %v1581 = vadd.f32 %v1497, %v1577
      %v1582 = vrot.slane %v364, 6
      %v1583 = vsel %vm899, %v903, %v1582
      %v1584 = vsel %vm374, %v1583, 0
      %v1587 = vsel %vm379, %v340, 0
      %1589 = vmatprep.subr.mxu0 0.0
      %1590 = vmatpush1.msra.mxu0 %v1587
      %1591 = vmatprep.subr.mxu0 0.0
      %1592 = vmatpush1.msra.mxu0 0.0
      %1593 = vmatprep.subr.mxu0 0.0
      %1594 = vmatpush1.msra.mxu0 0.0
      %1595 = vmatprep.subr.mxu0 0.0
      %1596 = vmatpush1.msra.mxu0 0.0
      %1597 = vmatprep.subr.mxu0 0.0
      %1598 = vmatpush1.msra.mxu0 0.0
      %1599 = vmatprep.subr.mxu0 0.0
      %1600 = vmatpush1.msra.mxu0 0.0
      %1601 = vmatprep.subr.mxu0 0.0
      %1602 = vmatpush1.msra.mxu0 0.0
      %1603 = vmatprep.subr.mxu0 0.0
      %1604 = vmatpush1.msra.mxu0 0.0
      %1605 = vmatprep.subr.mxu0 0.0
      %1606 = vmatpush1.msra.mxu0 0.0
      %1607 = vmatprep.subr.mxu0 0.0
      %1608 = vmatpush1.msra.mxu0 0.0
      %1609 = vmatprep.subr.mxu0 0.0
      %1610 = vmatpush1.msra.mxu0 0.0
      %1611 = vmatprep.subr.mxu0 0.0
      %1612 = vmatpush1.msra.mxu0 0.0
      %1613 = vmatprep.subr.mxu0 0.0
      %1614 = vmatpush1.msra.mxu0 0.0
      %1615 = vmatprep.subr.mxu0 0.0
      %1616 = vmatpush1.msra.mxu0 0.0
      %1617 = vmatprep.subr.mxu0 0.0
      %1618 = vmatpush1.msra.mxu0 0.0
      %1619 = vmatprep.subr.mxu0 0.0
      %1620 = vmatpush1.msra.mxu0 0.0
      %1621 = vmatprep.subr.mxu0 0.0
      %1622 = vmatpush1.msra.mxu0 0.0
      %1623 = vmatprep.subr.mxu0 0.0
      %1624 = vmatpush1.msra.mxu0 0.0
      %1625 = vmatprep.subr.mxu0 0.0
      %1626 = vmatpush1.msra.mxu0 0.0
      %1627 = vmatprep.subr.mxu0 0.0
      %1628 = vmatpush1.msra.mxu0 0.0
      %1629 = vmatprep.subr.mxu0 0.0
      %1630 = vmatpush1.msra.mxu0 0.0
      %1631 = vmatprep.subr.mxu0 0.0
      %1632 = vmatpush1.msra.mxu0 0.0
      %1633 = vmatprep.subr.mxu0 0.0
      %1634 = vmatpush1.msra.mxu0 0.0
      %1635 = vmatprep.subr.mxu0 0.0
      %1636 = vmatpush1.msra.mxu0 0.0
      %1637 = vmatprep.subr.mxu0 0.0
      %1638 = vmatpush1.msra.mxu0 0.0
      %1639 = vmatprep.subr.mxu0 0.0
      %1640 = vmatpush1.msra.mxu0 0.0
      %1641 = vmatprep.subr.mxu0 0.0
      %1642 = vmatpush1.msra.mxu0 0.0
      %1643 = vmatprep.subr.mxu0 0.0
      %1644 = vmatpush1.msra.mxu0 0.0
      %1645 = vmatprep.subr.mxu0 0.0
      %1646 = vmatpush1.msra.mxu0 0.0
      %1647 = vmatprep.subr.mxu0 0.0
      %1648 = vmatpush1.msra.mxu0 0.0
      %1649 = vmatprep.subr.mxu0 0.0
      %1650 = vmatpush1.msra.mxu0 0.0
      %1651 = vmatprep.subr.mxu0 0.0
      %1652 = vmatpush1.msra.mxu0 0.0
      %1653 = vmatprep.mubr.f32.mxu0 0.0
      %1654 = vmatmul.mubr.f32.gmra.mrb[0].mxu0 %v907
      %v1655 = vpop.f32.mrb[0].mxu0
      %v1656 = vadd.f32 0.0, %v1655
      %v1657 = vpop.f32.mrb[0].mxu0
      %1658 = vmatprep.mubr.f32.mxu0 0.0
      %1659 = vmatmul.mubr.f32.gmra.mrb[0].mxu0 %v1584
      %v1660 = vpop.f32.mrb[0].mxu0
      %v1661 = vadd.f32 0.0, %v1660
      %v1662 = vpop.f32.mrb[0].mxu0
      %1663 = vdwg.mxu0
      %v1664 = vadd.f32 %v1580, %v1656
      %v1665 = vadd.f32 %v1581, %v1661
      %v1667 = vlaneseq
      %v1668 = vshrl.u32 %v1667, 7
      %v1669 = vsub.s32 0, %v1668
      %v1670 = vrot.slane %v341, %v1669
      %v1672 = vadd.f32 %v1664, %v1670
      %v1673 = vadd.f32 %v1665, %v1670
      %v1674 = vmax.f32 %v1672, 0.0
      %v1675 = vmax.f32 %v1673, 0.0
      %v1676 = vrot.slane %v1674, 1
      %v1677 = vrot.slane %v1675, 1
      %v1678 = vlaneseq
      %v1679 = vshrl.u32 %v1678, 7
      %vm1680 = vcmp.lt.s32.totalorder %v1679, 7
      %v1681 = vsel %vm1680, %v1676, %v1677
      %v1682 = vsel %vm1680, %v1677, %v1676
      %v1683 = vrot.slane %v1674, 7
      %v1684 = vrot.slane %v1675, 7
      %vm1685 = vcmp.lt.s32.totalorder %v1679, 1
      %v1686 = vsel %vm1685, %v1683, %v1684
      %v1687 = vsel %vm1685, %v1684, %v1683
      %v1688 = vadd.s32 %v1679, 8
      %vm1689 = vcmp.eq.s32.totalorder %v1679, 15
      %vm1690 = vcmp.eq.s32.totalorder %v1688, 15
      %v1691 = vsel %vm1689, 0.0, %v1681
      %v1692 = vsel %vm1690, 0.0, %v1682
      %vm1693 = vcmp.eq.s32.totalorder %v1679, 0
      %vm1694 = vcmp.eq.s32.totalorder %v1688, 0
      %v1695 = vsel %vm1693, 0.0, %v1687
      %v1696 = vsel %vm1694, 0.0, %v1686
      %v1697 = vmax.f32 %v1674, %v1691
      %v1698 = vmax.f32 %v1675, %v1692
      %v1699 = vmax.f32 %v1697, %v1695
      %v1700 = vmax.f32 %v1698, %v1696
      %v1702 = vlaneseq
      %v1703 = vshrl.u32 %v1702, 7
      %v1704 = vsub.s32 0, %v1703
      %v1705 = vrot.slane %v343, %v1704
      %v1708 = vsel %vm379, %v342, 0
      %1710 = vmatprep.subr.mxu0 0.0
      %1711 = vmatpush1.msra.mxu0 %v1708
      %1712 = vmatprep.subr.mxu0 0.0
      %1713 = vmatpush1.msra.mxu0 0.0
      %1714 = vmatprep.subr.mxu0 0.0
      %1715 = vmatpush1.msra.mxu0 0.0
      %1716 = vmatprep.subr.mxu0 0.0
      %1717 = vmatpush1.msra.mxu0 0.0
      %1718 = vmatprep.subr.mxu0 0.0
      %1719 = vmatpush1.msra.mxu0 0.0
      %1720 = vmatprep.subr.mxu0 0.0
      %1721 = vmatpush1.msra.mxu0 0.0
      %1722 = vmatprep.subr.mxu0 0.0
      %1723 = vmatpush1.msra.mxu0 0.0
      %1724 = vmatprep.subr.mxu0 0.0
      %1725 = vmatpush1.msra.mxu0 0.0
      %1726 = vmatprep.subr.mxu0 0.0
      %1727 = vmatpush1.msra.mxu0 0.0
      %1728 = vmatprep.subr.mxu0 0.0
      %1729 = vmatpush1.msra.mxu0 0.0
      %1730 = vmatprep.subr.mxu0 0.0
      %1731 = vmatpush1.msra.mxu0 0.0
      %1732 = vmatprep.subr.mxu0 0.0
      %1733 = vmatpush1.msra.mxu0 0.0
      %1734 = vmatprep.subr.mxu0 0.0
      %1735 = vmatpush1.msra.mxu0 0.0
      %1736 = vmatprep.subr.mxu0 0.0
      %1737 = vmatpush1.msra.mxu0 0.0
      %1738 = vmatprep.subr.mxu0 0.0
      %1739 = vmatpush1.msra.mxu0 0.0
      %1740 = vmatprep.subr.mxu0 0.0
      %1741 = vmatpush1.msra.mxu0 0.0
      %1742 = vmatprep.subr.mxu0 0.0
      %1743 = vmatpush1.msra.mxu0 0.0
      %1744 = vmatprep.subr.mxu0 0.0
      %1745 = vmatpush1.msra.mxu0 0.0
      %1746 = vmatprep.subr.mxu0 0.0
      %1747 = vmatpush1.msra.mxu0 0.0
      %1748 = vmatprep.subr.mxu0 0.0
      %1749 = vmatpush1.msra.mxu0 0.0
      %1750 = vmatprep.subr.mxu0 0.0
      %1751 = vmatpush1.msra.mxu0 0.0
      %1752 = vmatprep.subr.mxu0 0.0
      %1753 = vmatpush1.msra.mxu0 0.0
      %1754 = vmatprep.subr.mxu0 0.0
      %1755 = vmatpush1.msra.mxu0 0.0
      %1756 = vmatprep.subr.mxu0 0.0
      %1757 = vmatpush1.msra.mxu0 0.0
      %1758 = vmatprep.subr.mxu0 0.0
      %1759 = vmatpush1.msra.mxu0 0.0
      %1760 = vmatprep.subr.mxu0 0.0
      %1761 = vmatpush1.msra.mxu0 0.0
      %1762 = vmatprep.subr.mxu0 0.0
      %1763 = vmatpush1.msra.mxu0 0.0
      %1764 = vmatprep.subr.mxu0 0.0
      %1765 = vmatpush1.msra.mxu0 0.0
      %1766 = vmatprep.subr.mxu0 0.0
      %1767 = vmatpush1.msra.mxu0 0.0
      %1768 = vmatprep.subr.mxu0 0.0
      %1769 = vmatpush1.msra.mxu0 0.0
      %1770 = vmatprep.subr.mxu0 0.0
      %1771 = vmatpush1.msra.mxu0 0.0
      %1772 = vmatprep.subr.mxu0 0.0
      %1773 = vmatpush1.msra.mxu0 0.0
      %1774 = vmatprep.mubr.f32.mxu0 0.0
      %1775 = vmatmul.mubr.f32.gmra.mrb[0].mxu0 %v995
      %v1776 = vpop.f32.mrb[0].mxu0
      %v1777 = vadd.f32 %v1705, %v1776
      %v1778 = vpop.f32.mrb[0].mxu0
      %1779 = vmatprep.mubr.f32.mxu0 0.0
      %1780 = vmatmul.mubr.f32.gmra.mrb[0].mxu0 %v997
      %v1781 = vpop.f32.mrb[0].mxu0
      %v1782 = vadd.f32 %v1705, %v1781
      %v1783 = vpop.f32.mrb[0].mxu0
      %1784 = vdwg.mxu0
      %v1785 = vadd.f32 %v1699, %v1777
      %v1786 = vadd.f32 %v1700, %v1782
      %v1787 = vld [vmem:[%s320] sm:$0xff]
      %v1788 = vld [vmem:[%s320 + $0x8] sm:$0xff]
      %v1789 = vld [vmem:[%s320 + $0x10] sm:$0xff]
      %v1790 = vld [vmem:[%s320 + $0x18] sm:$0x3f]
      %v1794 = vrot.slane %v1787, 1
      %v1795 = vrot.slane %v1788, 1
      %v1796 = vsel %vm368, %v1794, %v1795
      %v1797 = vrot.slane %v1789, 1
      %v1798 = vsel %vm368, %v1795, %v1797
      %v1799 = vsel %vm374, %v1796, 0
      %v1801 = vsel %vm374, %v1798, 0
      %1803 = vmatprep.subr.mxu0 0.0
      %1804 = vmatpush1.msra.mxu0 %v381
      %1805 = vmatprep.subr.mxu0 0.0
      %1806 = vmatpush1.msra.mxu0 0.0
      %1807 = vmatprep.subr.mxu0 0.0
      %1808 = vmatpush1.msra.mxu0 0.0
      %1809 = vmatprep.subr.mxu0 0.0
      %1810 = vmatpush1.msra.mxu0 0.0
      %1811 = vmatprep.subr.mxu0 0.0
      %1812 = vmatpush1.msra.mxu0 0.0
      %1813 = vmatprep.subr.mxu0 0.0
      %1814 = vmatpush1.msra.mxu0 0.0
      %1815 = vmatprep.subr.mxu0 0.0
      %1816 = vmatpush1.msra.mxu0 0.0
      %1817 = vmatprep.subr.mxu0 0.0
      %1818 = vmatpush1.msra.mxu0 0.0
      %1819 = vmatprep.subr.mxu0 0.0
      %1820 = vmatpush1.msra.mxu0 0.0
      %1821 = vmatprep.subr.mxu0 0.0
      %1822 = vmatpush1.msra.mxu0 0.0
      %1823 = vmatprep.subr.mxu0 0.0
      %1824 = vmatpush1.msra.mxu0 0.0
      %1825 = vmatprep.subr.mxu0 0.0
      %1826 = vmatpush1.msra.mxu0 0.0
      %1827 = vmatprep.subr.mxu0 0.0
      %1828 = vmatpush1.msra.mxu0 0.0
      %1829 = vmatprep.subr.mxu0 0.0
      %1830 = vmatpush1.msra.mxu0 0.0
      %1831 = vmatprep.subr.mxu0 0.0
      %1832 = vmatpush1.msra.mxu0 0.0
      %1833 = vmatprep.subr.mxu0 0.0
      %1834 = vmatpush1.msra.mxu0 0.0
      %1835 = vmatprep.subr.mxu0 0.0
      %1836 = vmatpush1.msra.mxu0 0.0
      %1837 = vmatprep.subr.mxu0 0.0
      %1838 = vmatpush1.msra.mxu0 0.0
      %1839 = vmatprep.subr.mxu0 0.0
      %1840 = vmatpush1.msra.mxu0 0.0
      %1841 = vmatprep.subr.mxu0 0.0
      %1842 = vmatpush1.msra.mxu0 0.0
      %1843 = vmatprep.subr.mxu0 0.0
      %1844 = vmatpush1.msra.mxu0 0.0
      %1845 = vmatprep.subr.mxu0 0.0
      %1846 = vmatpush1.msra.mxu0 0.0
      %1847 = vmatprep.subr.mxu0 0.0
      %1848 = vmatpush1.msra.mxu0 0.0
      %1849 = vmatprep.subr.mxu0 0.0
      %1850 = vmatpush1.msra.mxu0 0.0
      %1851 = vmatprep.subr.mxu0 0.0
      %1852 = vmatpush1.msra.mxu0 0.0
      %1853 = vmatprep.subr.mxu0 0.0
      %1854 = vmatpush1.msra.mxu0 0.0
      %1855 = vmatprep.subr.mxu0 0.0
      %1856 = vmatpush1.msra.mxu0 0.0
      %1857 = vmatprep.subr.mxu0 0.0
      %1858 = vmatpush1.msra.mxu0 0.0
      %1859 = vmatprep.subr.mxu0 0.0
      %1860 = vmatpush1.msra.mxu0 0.0
      %1861 = vmatprep.subr.mxu0 0.0
      %1862 = vmatpush1.msra.mxu0 0.0
      %1863 = vmatprep.subr.mxu0 0.0
      %1864 = vmatpush1.msra.mxu0 0.0
      %1865 = vmatprep.subr.mxu0 0.0
      %1866 = vmatpush1.msra.mxu0 0.0
      %1867 = vmatprep.mubr.f32.mxu0 0.0
      %1868 = vmatmul.mubr.f32.gmra.mrb[0].mxu0 %v1799
      %v1869 = vpop.f32.mrb[0].mxu0
      %v1870 = vadd.f32 0.0, %v1869
      %v1871 = vpop.f32.mrb[0].mxu0
      %1872 = vmatprep.mubr.f32.mxu0 0.0
      %1873 = vmatmul.mubr.f32.gmra.mrb[0].mxu0 %v1801
      %v1874 = vpop.f32.mrb[0].mxu0
      %v1875 = vadd.f32 0.0, %v1874
      %v1876 = vpop.f32.mrb[0].mxu0
      %1877 = vdwg.mxu0
      %v1878 = vsel %vm374, %v1787, 0
      %v1880 = vsel %vm374, %v1788, 0
      %1882 = vmatprep.subr.mxu0 0.0
      %1883 = vmatpush1.msra.mxu0 %v463
      %1884 = vmatprep.subr.mxu0 0.0
      %1885 = vmatpush1.msra.mxu0 0.0
      %1886 = vmatprep.subr.mxu0 0.0
      %1887 = vmatpush1.msra.mxu0 0.0
      %1888 = vmatprep.subr.mxu0 0.0
      %1889 = vmatpush1.msra.mxu0 0.0
      %1890 = vmatprep.subr.mxu0 0.0
      %1891 = vmatpush1.msra.mxu0 0.0
      %1892 = vmatprep.subr.mxu0 0.0
      %1893 = vmatpush1.msra.mxu0 0.0
      %1894 = vmatprep.subr.mxu0 0.0
      %1895 = vmatpush1.msra.mxu0 0.0
      %1896 = vmatprep.subr.mxu0 0.0
      %1897 = vmatpush1.msra.mxu0 0.0
      %1898 = vmatprep.subr.mxu0 0.0
      %1899 = vmatpush1.msra.mxu0 0.0
      %1900 = vmatprep.subr.mxu0 0.0
      %1901 = vmatpush1.msra.mxu0 0.0
      %1902 = vmatprep.subr.mxu0 0.0
      %1903 = vmatpush1.msra.mxu0 0.0
      %1904 = vmatprep.subr.mxu0 0.0
      %1905 = vmatpush1.msra.mxu0 0.0
      %1906 = vmatprep.subr.mxu0 0.0
      %1907 = vmatpush1.msra.mxu0 0.0
      %1908 = vmatprep.subr.mxu0 0.0
      %1909 = vmatpush1.msra.mxu0 0.0
      %1910 = vmatprep.subr.mxu0 0.0
      %1911 = vmatpush1.msra.mxu0 0.0
      %1912 = vmatprep.subr.mxu0 0.0
      %1913 = vmatpush1.msra.mxu0 0.0
      %1914 = vmatprep.subr.mxu0 0.0
      %1915 = vmatpush1.msra.mxu0 0.0
      %1916 = vmatprep.subr.mxu0 0.0
      %1917 = vmatpush1.msra.mxu0 0.0
      %1918 = vmatprep.subr.mxu0 0.0
      %1919 = vmatpush1.msra.mxu0 0.0
      %1920 = vmatprep.subr.mxu0 0.0
      %1921 = vmatpush1.msra.mxu0 0.0
      %1922 = vmatprep.subr.mxu0 0.0
      %1923 = vmatpush1.msra.mxu0 0.0
      %1924 = vmatprep.subr.mxu0 0.0
      %1925 = vmatpush1.msra.mxu0 0.0
      %1926 = vmatprep.subr.mxu0 0.0
      %1927 = vmatpush1.msra.mxu0 0.0
      %1928 = vmatprep.subr.mxu0 0.0
      %1929 = vmatpush1.msra.mxu0 0.0
      %1930 = vmatprep.subr.mxu0 0.0
      %1931 = vmatpush1.msra.mxu0 0.0
      %1932 = vmatprep.subr.mxu0 0.0
      %1933 = vmatpush1.msra.mxu0 0.0
      %1934 = vmatprep.subr.mxu0 0.0
      %1935 = vmatpush1.msra.mxu0 0.0
      %1936 = vmatprep.subr.mxu0 0.0
      %1937 = vmatpush1.msra.mxu0 0.0
      %1938 = vmatprep.subr.mxu0 0.0
      %1939 = vmatpush1.msra.mxu0 0.0
      %1940 = vmatprep.subr.mxu0 0.0
      %1941 = vmatpush1.msra.mxu0 0.0
      %1942 = vmatprep.subr.mxu0 0.0
      %1943 = vmatpush1.msra.mxu0 0.0
      %1944 = vmatprep.subr.mxu0 0.0
      %1945 = vmatpush1.msra.mxu0 0.0
      %1946 = vmatprep.mubr.f32.mxu0 0.0
      %1947 = vmatmul.mubr.f32.gmra.mrb[0].mxu0 %v1878
      %v1948 = vpop.f32.mrb[0].mxu0
      %v1949 = vadd.f32 %v1870, %v1948
      %v1950 = vpop.f32.mrb[0].mxu0
      %1951 = vmatprep.mubr.f32.mxu0 0.0
      %1952 = vmatmul.mubr.f32.gmra.mrb[0].mxu0 %v1880
      %v1953 = vpop.f32.mrb[0].mxu0
      %v1954 = vadd.f32 %v1875, %v1953
      %v1955 = vpop.f32.mrb[0].mxu0
      %1956 = vdwg.mxu0
      %v1957 = vrot.slane %v1787, 2
      %v1958 = vrot.slane %v1788, 2
      %v1959 = vsel %vm540, %v1957, %v1958
      %v1960 = vrot.slane %v1789, 2
      %v1961 = vsel %vm540, %v1958, %v1960
      %v1962 = vsel %vm374, %v1959, 0
      %v1964 = vsel %vm374, %v1961, 0
      %1966 = vmatprep.subr.mxu0 0.0
      %1967 = vmatpush1.msra.mxu0 %v551
      %1968 = vmatprep.subr.mxu0 0.0
      %1969 = vmatpush1.msra.mxu0 0.0
      %1970 = vmatprep.subr.mxu0 0.0
      %1971 = vmatpush1.msra.mxu0 0.0
      %1972 = vmatprep.subr.mxu0 0.0
      %1973 = vmatpush1.msra.mxu0 0.0
      %1974 = vmatprep.subr.mxu0 0.0
      %1975 = vmatpush1.msra.mxu0 0.0
      %1976 = vmatprep.subr.mxu0 0.0
      %1977 = vmatpush1.msra.mxu0 0.0
      %1978 = vmatprep.subr.mxu0 0.0
      %1979 = vmatpush1.msra.mxu0 0.0
      %1980 = vmatprep.subr.mxu0 0.0
      %1981 = vmatpush1.msra.mxu0 0.0
      %1982 = vmatprep.subr.mxu0 0.0
      %1983 = vmatpush1.msra.mxu0 0.0
      %1984 = vmatprep.subr.mxu0 0.0
      %1985 = vmatpush1.msra.mxu0 0.0
      %1986 = vmatprep.subr.mxu0 0.0
      %1987 = vmatpush1.msra.mxu0 0.0
      %1988 = vmatprep.subr.mxu0 0.0
      %1989 = vmatpush1.msra.mxu0 0.0
      %1990 = vmatprep.subr.mxu0 0.0
      %1991 = vmatpush1.msra.mxu0 0.0
      %1992 = vmatprep.subr.mxu0 0.0
      %1993 = vmatpush1.msra.mxu0 0.0
      %1994 = vmatprep.subr.mxu0 0.0
      %1995 = vmatpush1.msra.mxu0 0.0
      %1996 = vmatprep.subr.mxu0 0.0
      %1997 = vmatpush1.msra.mxu0 0.0
      %1998 = vmatprep.subr.mxu0 0.0
      %1999 = vmatpush1.msra.mxu0 0.0
      %2000 = vmatprep.subr.mxu0 0.0
      %2001 = vmatpush1.msra.mxu0 0.0
      %2002 = vmatprep.subr.mxu0 0.0
      %2003 = vmatpush1.msra.mxu0 0.0
      %2004 = vmatprep.subr.mxu0 0.0
      %2005 = vmatpush1.msra.mxu0 0.0
      %2006 = vmatprep.subr.mxu0 0.0
      %2007 = vmatpush1.msra.mxu0 0.0
      %2008 = vmatprep.subr.mxu0 0.0
      %2009 = vmatpush1.msra.mxu0 0.0
      %2010 = vmatprep.subr.mxu0 0.0
      %2011 = vmatpush1.msra.mxu0 0.0
      %2012 = vmatprep.subr.mxu0 0.0
      %2013 = vmatpush1.msra.mxu0 0.0
      %2014 = vmatprep.subr.mxu0 0.0
      %2015 = vmatpush1.msra.mxu0 0.0
      %2016 = vmatprep.subr.mxu0 0.0
      %2017 = vmatpush1.msra.mxu0 0.0
      %2018 = vmatprep.subr.mxu0 0.0
      %2019 = vmatpush1.msra.mxu0 0.0
      %2020 = vmatprep.subr.mxu0 0.0
      %2021 = vmatpush1.msra.mxu0 0.0
      %2022 = vmatprep.subr.mxu0 0.0
      %2023 = vmatpush1.msra.mxu0 0.0
      %2024 = vmatprep.subr.mxu0 0.0
      %2025 = vmatpush1.msra.mxu0 0.0
      %2026 = vmatprep.subr.mxu0 0.0
      %2027 = vmatpush1.msra.mxu0 0.0
      %2028 = vmatprep.subr.mxu0 0.0
      %2029 = vmatpush1.msra.mxu0 0.0
      %2030 = vmatprep.mubr.f32.mxu0 0.0
      %2031 = vmatmul.mubr.f32.gmra.mrb[0].mxu0 %v1962
      %v2032 = vpop.f32.mrb[0].mxu0
      %v2033 = vadd.f32 0.0, %v2032
      %v2034 = vpop.f32.mrb[0].mxu0
      %2035 = vmatprep.mubr.f32.mxu0 0.0
      %2036 = vmatmul.mubr.f32.gmra.mrb[0].mxu0 %v1964
      %v2037 = vpop.f32.mrb[0].mxu0
      %v2038 = vadd.f32 0.0, %v2037
      %v2039 = vpop.f32.mrb[0].mxu0
      %2040 = vdwg.mxu0
      %v2041 = vadd.f32 %v1949, %v2033
      %v2042 = vadd.f32 %v1954, %v2038
      %v2043 = vrot.slane %v1787, 3
      %v2044 = vrot.slane %v1788, 3
      %v2045 = vsel %vm630, %v2043, %v2044
      %v2046 = vrot.slane %v1789, 3
      %v2047 = vsel %vm630, %v2044, %v2046
      %v2048 = vsel %vm374, %v2045, 0
      %v2050 = vsel %vm374, %v2047, 0
      %2052 = vmatprep.subr.mxu0 0.0
      %2053 = vmatpush1.msra.mxu0 %v641
      %2054 = vmatprep.subr.mxu0 0.0
      %2055 = vmatpush1.msra.mxu0 0.0
      %2056 = vmatprep.subr.mxu0 0.0
      %2057 = vmatpush1.msra.mxu0 0.0
      %2058 = vmatprep.subr.mxu0 0.0
      %2059 = vmatpush1.msra.mxu0 0.0
      %2060 = vmatprep.subr.mxu0 0.0
      %2061 = vmatpush1.msra.mxu0 0.0
      %2062 = vmatprep.subr.mxu0 0.0
      %2063 = vmatpush1.msra.mxu0 0.0
      %2064 = vmatprep.subr.mxu0 0.0
      %2065 = vmatpush1.msra.mxu0 0.0
      %2066 = vmatprep.subr.mxu0 0.0
      %2067 = vmatpush1.msra.mxu0 0.0
      %2068 = vmatprep.subr.mxu0 0.0
      %2069 = vmatpush1.msra.mxu0 0.0
      %2070 = vmatprep.subr.mxu0 0.0
      %2071 = vmatpush1.msra.mxu0 0.0
      %2072 = vmatprep.subr.mxu0 0.0
      %2073 = vmatpush1.msra.mxu0 0.0
      %2074 = vmatprep.subr.mxu0 0.0
      %2075 = vmatpush1.msra.mxu0 0.0
      %2076 = vmatprep.subr.mxu0 0.0
      %2077 = vmatpush1.msra.mxu0 0.0
      %2078 = vmatprep.subr.mxu0 0.0
      %2079 = vmatpush1.msra.mxu0 0.0
      %2080 = vmatprep.subr.mxu0 0.0
      %2081 = vmatpush1.msra.mxu0 0.0
      %2082 = vmatprep.subr.mxu0 0.0
      %2083 = vmatpush1.msra.mxu0 0.0
      %2084 = vmatprep.subr.mxu0 0.0
      %2085 = vmatpush1.msra.mxu0 0.0
      %2086 = vmatprep.subr.mxu0 0.0
      %2087 = vmatpush1.msra.mxu0 0.0
      %2088 = vmatprep.subr.mxu0 0.0
      %2089 = vmatpush1.msra.mxu0 0.0
      %2090 = vmatprep.subr.mxu0 0.0
      %2091 = vmatpush1.msra.mxu0 0.0
      %2092 = vmatprep.subr.mxu0 0.0
      %2093 = vmatpush1.msra.mxu0 0.0
      %2094 = vmatprep.subr.mxu0 0.0
      %2095 = vmatpush1.msra.mxu0 0.0
      %2096 = vmatprep.subr.mxu0 0.0
      %2097 = vmatpush1.msra.mxu0 0.0
      %2098 = vmatprep.subr.mxu0 0.0
      %2099 = vmatpush1.msra.mxu0 0.0
      %2100 = vmatprep.subr.mxu0 0.0
      %2101 = vmatpush1.msra.mxu0 0.0
      %2102 = vmatprep.subr.mxu0 0.0
      %2103 = vmatpush1.msra.mxu0 0.0
      %2104 = vmatprep.subr.mxu0 0.0
      %2105 = vmatpush1.msra.mxu0 0.0
      %2106 = vmatprep.subr.mxu0 0.0
      %2107 = vmatpush1.msra.mxu0 0.0
      %2108 = vmatprep.subr.mxu0 0.0
      %2109 = vmatpush1.msra.mxu0 0.0
      %2110 = vmatprep.subr.mxu0 0.0
      %2111 = vmatpush1.msra.mxu0 0.0
      %2112 = vmatprep.subr.mxu0 0.0
      %2113 = vmatpush1.msra.mxu0 0.0
      %2114 = vmatprep.subr.mxu0 0.0
      %2115 = vmatpush1.msra.mxu0 0.0
      %2116 = vmatprep.mubr.f32.mxu0 0.0
      %2117 = vmatmul.mubr.f32.gmra.mrb[0].mxu0 %v2048
      %v2118 = vpop.f32.mrb[0].mxu0
      %v2119 = vadd.f32 0.0, %v2118
      %v2120 = vpop.f32.mrb[0].mxu0
      %2121 = vmatprep.mubr.f32.mxu0 0.0
      %2122 = vmatmul.mubr.f32.gmra.mrb[0].mxu0 %v2050
      %v2123 = vpop.f32.mrb[0].mxu0
      %v2124 = vadd.f32 0.0, %v2123
      %v2125 = vpop.f32.mrb[0].mxu0
      %2126 = vdwg.mxu0
      %v2127 = vadd.f32 %v2041, %v2119
      %v2128 = vadd.f32 %v2042, %v2124
      %v2129 = vrot.slane %v1787, 4
      %v2130 = vrot.slane %v1788, 4
      %v2131 = vsel %vm379, %v2129, %v2130
      %v2132 = vrot.slane %v1789, 4
      %v2133 = vsel %vm379, %v2130, %v2132
      %v2134 = vsel %vm374, %v2131, 0
      %v2136 = vsel %vm374, %v2133, 0
      %2138 = vmatprep.subr.mxu0 0.0
      %2139 = vmatpush1.msra.mxu0 %v730
      %2140 = vmatprep.subr.mxu0 0.0
      %2141 = vmatpush1.msra.mxu0 0.0
      %2142 = vmatprep.subr.mxu0 0.0
      %2143 = vmatpush1.msra.mxu0 0.0
      %2144 = vmatprep.subr.mxu0 0.0
      %2145 = vmatpush1.msra.mxu0 0.0
      %2146 = vmatprep.subr.mxu0 0.0
      %2147 = vmatpush1.msra.mxu0 0.0
      %2148 = vmatprep.subr.mxu0 0.0
      %2149 = vmatpush1.msra.mxu0 0.0
      %2150 = vmatprep.subr.mxu0 0.0
      %2151 = vmatpush1.msra.mxu0 0.0
      %2152 = vmatprep.subr.mxu0 0.0
      %2153 = vmatpush1.msra.mxu0 0.0
      %2154 = vmatprep.subr.mxu0 0.0
      %2155 = vmatpush1.msra.mxu0 0.0
      %2156 = vmatprep.subr.mxu0 0.0
      %2157 = vmatpush1.msra.mxu0 0.0
      %2158 = vmatprep.subr.mxu0 0.0
      %2159 = vmatpush1.msra.mxu0 0.0
      %2160 = vmatprep.subr.mxu0 0.0
      %2161 = vmatpush1.msra.mxu0 0.0
      %2162 = vmatprep.subr.mxu0 0.0
      %2163 = vmatpush1.msra.mxu0 0.0
      %2164 = vmatprep.subr.mxu0 0.0
      %2165 = vmatpush1.msra.mxu0 0.0
      %2166 = vmatprep.subr.mxu0 0.0
      %2167 = vmatpush1.msra.mxu0 0.0
      %2168 = vmatprep.subr.mxu0 0.0
      %2169 = vmatpush1.msra.mxu0 0.0
      %2170 = vmatprep.subr.mxu0 0.0
      %2171 = vmatpush1.msra.mxu0 0.0
      %2172 = vmatprep.subr.mxu0 0.0
      %2173 = vmatpush1.msra.mxu0 0.0
      %2174 = vmatprep.subr.mxu0 0.0
      %2175 = vmatpush1.msra.mxu0 0.0
      %2176 = vmatprep.subr.mxu0 0.0
      %2177 = vmatpush1.msra.mxu0 0.0
      %2178 = vmatprep.subr.mxu0 0.0
      %2179 = vmatpush1.msra.mxu0 0.0
      %2180 = vmatprep.subr.mxu0 0.0
      %2181 = vmatpush1.msra.mxu0 0.0
      %2182 = vmatprep.subr.mxu0 0.0
      %2183 = vmatpush1.msra.mxu0 0.0
      %2184 = vmatprep.subr.mxu0 0.0
      %2185 = vmatpush1.msra.mxu0 0.0
      %2186 = vmatprep.subr.mxu0 0.0
      %2187 = vmatpush1.msra.mxu0 0.0
      %2188 = vmatprep.subr.mxu0 0.0
      %2189 = vmatpush1.msra.mxu0 0.0
      %2190 = vmatprep.subr.mxu0 0.0
      %2191 = vmatpush1.msra.mxu0 0.0
      %2192 = vmatprep.subr.mxu0 0.0
      %2193 = vmatpush1.msra.mxu0 0.0
      %2194 = vmatprep.subr.mxu0 0.0
      %2195 = vmatpush1.msra.mxu0 0.0
      %2196 = vmatprep.subr.mxu0 0.0
      %2197 = vmatpush1.msra.mxu0 0.0
      %2198 = vmatprep.subr.mxu0 0.0
      %2199 = vmatpush1.msra.mxu0 0.0
      %2200 = vmatprep.subr.mxu0 0.0
      %2201 = vmatpush1.msra.mxu0 0.0
      %2202 = vmatprep.mubr.f32.mxu0 0.0
      %2203 = vmatmul.mubr.f32.gmra.mrb[0].mxu0 %v2134
      %v2204 = vpop.f32.mrb[0].mxu0
      %v2205 = vadd.f32 0.0, %v2204
      %v2206 = vpop.f32.mrb[0].mxu0
      %2207 = vmatprep.mubr.f32.mxu0 0.0
      %2208 = vmatmul.mubr.f32.gmra.mrb[0].mxu0 %v2136
      %v2209 = vpop.f32.mrb[0].mxu0
      %v2210 = vadd.f32 0.0, %v2209
      %v2211 = vpop.f32.mrb[0].mxu0
      %2212 = vdwg.mxu0
      %v2213 = vadd.f32 %v2127, %v2205
      %v2214 = vadd.f32 %v2128, %v2210
      %v2215 = vrot.slane %v1787, 5
      %v2216 = vrot.slane %v1788, 5
      %v2217 = vsel %vm809, %v2215, %v2216
      %v2218 = vrot.slane %v1789, 5
      %v2219 = vsel %vm809, %v2216, %v2218
      %v2220 = vsel %vm374, %v2217, 0
      %v2222 = vsel %vm374, %v2219, 0
      %2224 = vmatprep.subr.mxu0 0.0
      %2225 = vmatpush1.msra.mxu0 %v820
      %2226 = vmatprep.subr.mxu0 0.0
      %2227 = vmatpush1.msra.mxu0 0.0
      %2228 = vmatprep.subr.mxu0 0.0
      %2229 = vmatpush1.msra.mxu0 0.0
      %2230 = vmatprep.subr.mxu0 0.0
      %2231 = vmatpush1.msra.mxu0 0.0
      %2232 = vmatprep.subr.mxu0 0.0
      %2233 = vmatpush1.msra.mxu0 0.0
      %2234 = vmatprep.subr.mxu0 0.0
      %2235 = vmatpush1.msra.mxu0 0.0
      %2236 = vmatprep.subr.mxu0 0.0
      %2237 = vmatpush1.msra.mxu0 0.0
      %2238 = vmatprep.subr.mxu0 0.0
      %2239 = vmatpush1.msra.mxu0 0.0
      %2240 = vmatprep.subr.mxu0 0.0
      %2241 = vmatpush1.msra.mxu0 0.0
      %2242 = vmatprep.subr.mxu0 0.0
      %2243 = vmatpush1.msra.mxu0 0.0
      %2244 = vmatprep.subr.mxu0 0.0
      %2245 = vmatpush1.msra.mxu0 0.0
      %2246 = vmatprep.subr.mxu0 0.0
      %2247 = vmatpush1.msra.mxu0 0.0
      %2248 = vmatprep.subr.mxu0 0.0
      %2249 = vmatpush1.msra.mxu0 0.0
      %2250 = vmatprep.subr.mxu0 0.0
      %2251 = vmatpush1.msra.mxu0 0.0
      %2252 = vmatprep.subr.mxu0 0.0
      %2253 = vmatpush1.msra.mxu0 0.0
      %2254 = vmatprep.subr.mxu0 0.0
      %2255 = vmatpush1.msra.mxu0 0.0
      %2256 = vmatprep.subr.mxu0 0.0
      %2257 = vmatpush1.msra.mxu0 0.0
      %2258 = vmatprep.subr.mxu0 0.0
      %2259 = vmatpush1.msra.mxu0 0.0
      %2260 = vmatprep.subr.mxu0 0.0
      %2261 = vmatpush1.msra.mxu0 0.0
      %2262 = vmatprep.subr.mxu0 0.0
      %2263 = vmatpush1.msra.mxu0 0.0
      %2264 = vmatprep.subr.mxu0 0.0
      %2265 = vmatpush1.msra.mxu0 0.0
      %2266 = vmatprep.subr.mxu0 0.0
      %2267 = vmatpush1.msra.mxu0 0.0
      %2268 = vmatprep.subr.mxu0 0.0
      %2269 = vmatpush1.msra.mxu0 0.0
      %2270 = vmatprep.subr.mxu0 0.0
      %2271 = vmatpush1.msra.mxu0 0.0
      %2272 = vmatprep.subr.mxu0 0.0
      %2273 = vmatpush1.msra.mxu0 0.0
      %2274 = vmatprep.subr.mxu0 0.0
      %2275 = vmatpush1.msra.mxu0 0.0
      %2276 = vmatprep.subr.mxu0 0.0
      %2277 = vmatpush1.msra.mxu0 0.0
      %2278 = vmatprep.subr.mxu0 0.0
      %2279 = vmatpush1.msra.mxu0 0.0
      %2280 = vmatprep.subr.mxu0 0.0
      %2281 = vmatpush1.msra.mxu0 0.0
      %2282 = vmatprep.subr.mxu0 0.0
      %2283 = vmatpush1.msra.mxu0 0.0
      %2284 = vmatprep.subr.mxu0 0.0
      %2285 = vmatpush1.msra.mxu0 0.0
      %2286 = vmatprep.subr.mxu0 0.0
      %2287 = vmatpush1.msra.mxu0 0.0
      %2288 = vmatprep.mubr.f32.mxu0 0.0
      %2289 = vmatmul.mubr.f32.gmra.mrb[0].mxu0 %v2220
      %v2290 = vpop.f32.mrb[0].mxu0
      %v2291 = vadd.f32 0.0, %v2290
      %v2292 = vpop.f32.mrb[0].mxu0
      %2293 = vmatprep.mubr.f32.mxu0 0.0
      %2294 = vmatmul.mubr.f32.gmra.mrb[0].mxu0 %v2222
      %v2295 = vpop.f32.mrb[0].mxu0
      %v2296 = vadd.f32 0.0, %v2295
      %v2297 = vpop.f32.mrb[0].mxu0
      %2298 = vdwg.mxu0
      %v2299 = vadd.f32 %v2213, %v2291
      %v2300 = vadd.f32 %v2214, %v2296
      %v2301 = vrot.slane %v1787, 6
      %v2302 = vrot.slane %v1788, 6
      %v2303 = vsel %vm899, %v2301, %v2302
      %v2304 = vrot.slane %v1789, 6
      %v2305 = vsel %vm899, %v2302, %v2304
      %v2306 = vsel %vm374, %v2303, 0
      %v2308 = vsel %vm374, %v2305, 0
      %2310 = vmatprep.subr.mxu0 0.0
      %2311 = vmatpush1.msra.mxu0 %v910
      %2312 = vmatprep.subr.mxu0 0.0
      %2313 = vmatpush1.msra.mxu0 0.0
      %2314 = vmatprep.subr.mxu0 0.0
      %2315 = vmatpush1.msra.mxu0 0.0
      %2316 = vmatprep.subr.mxu0 0.0
      %2317 = vmatpush1.msra.mxu0 0.0
      %2318 = vmatprep.subr.mxu0 0.0
      %2319 = vmatpush1.msra.mxu0 0.0
      %2320 = vmatprep.subr.mxu0 0.0
      %2321 = vmatpush1.msra.mxu0 0.0
      %2322 = vmatprep.subr.mxu0 0.0
      %2323 = vmatpush1.msra.mxu0 0.0
      %2324 = vmatprep.subr.mxu0 0.0
      %2325 = vmatpush1.msra.mxu0 0.0
      %2326 = vmatprep.subr.mxu0 0.0
      %2327 = vmatpush1.msra.mxu0 0.0
      %2328 = vmatprep.subr.mxu0 0.0
      %2329 = vmatpush1.msra.mxu0 0.0
      %2330 = vmatprep.subr.mxu0 0.0
      %2331 = vmatpush1.msra.mxu0 0.0
      %2332 = vmatprep.subr.mxu0 0.0
      %2333 = vmatpush1.msra.mxu0 0.0
      %2334 = vmatprep.subr.mxu0 0.0
      %2335 = vmatpush1.msra.mxu0 0.0
      %2336 = vmatprep.subr.mxu0 0.0
      %2337 = vmatpush1.msra.mxu0 0.0
      %2338 = vmatprep.subr.mxu0 0.0
      %2339 = vmatpush1.msra.mxu0 0.0
      %2340 = vmatprep.subr.mxu0 0.0
      %2341 = vmatpush1.msra.mxu0 0.0
      %2342 = vmatprep.subr.mxu0 0.0
      %2343 = vmatpush1.msra.mxu0 0.0
      %2344 = vmatprep.subr.mxu0 0.0
      %2345 = vmatpush1.msra.mxu0 0.0
      %2346 = vmatprep.subr.mxu0 0.0
      %2347 = vmatpush1.msra.mxu0 0.0
      %2348 = vmatprep.subr.mxu0 0.0
      %2349 = vmatpush1.msra.mxu0 0.0
      %2350 = vmatprep.subr.mxu0 0.0
      %2351 = vmatpush1.msra.mxu0 0.0
      %2352 = vmatprep.subr.mxu0 0.0
      %2353 = vmatpush1.msra.mxu0 0.0
      %2354 = vmatprep.subr.mxu0 0.0
      %2355 = vmatpush1.msra.mxu0 0.0
      %2356 = vmatprep.subr.mxu0 0.0
      %2357 = vmatpush1.msra.mxu0 0.0
      %2358 = vmatprep.subr.mxu0 0.0
      %2359 = vmatpush1.msra.mxu0 0.0
      %2360 = vmatprep.subr.mxu0 0.0
      %2361 = vmatpush1.msra.mxu0 0.0
      %2362 = vmatprep.subr.mxu0 0.0
      %2363 = vmatpush1.msra.mxu0 0.0
      %2364 = vmatprep.subr.mxu0 0.0
      %2365 = vmatpush1.msra.mxu0 0.0
      %2366 = vmatprep.subr.mxu0 0.0
      %2367 = vmatpush1.msra.mxu0 0.0
      %2368 = vmatprep.subr.mxu0 0.0
      %2369 = vmatpush1.msra.mxu0 0.0
      %2370 = vmatprep.subr.mxu0 0.0
      %2371 = vmatpush1.msra.mxu0 0.0
      %2372 = vmatprep.subr.mxu0 0.0
      %2373 = vmatpush1.msra.mxu0 0.0
      %2374 = vmatprep.mubr.f32.mxu0 0.0
      %2375 = vmatmul.mubr.f32.gmra.mrb[0].mxu0 %v2306
      %v2376 = vpop.f32.mrb[0].mxu0
      %v2377 = vadd.f32 0.0, %v2376
      %v2378 = vpop.f32.mrb[0].mxu0
      %2379 = vmatprep.mubr.f32.mxu0 0.0
      %2380 = vmatmul.mubr.f32.gmra.mrb[0].mxu0 %v2308
      %v2381 = vpop.f32.mrb[0].mxu0
      %v2382 = vadd.f32 0.0, %v2381
      %v2383 = vpop.f32.mrb[0].mxu0
      %2384 = vdwg.mxu0
      %v2385 = vadd.f32 %v2299, %v2377
      %v2386 = vadd.f32 %v2300, %v2382
      %v2387 = vrot.slane %v1787, 7
      %v2388 = vrot.slane %v1788, 7
      %v2389 = vsel %vm989, %v2387, %v2388
      %v2390 = vrot.slane %v1789, 7
      %v2391 = vsel %vm989, %v2388, %v2390
      %v2392 = vsel %vm374, %v2389, 0
      %v2394 = vsel %vm374, %v2391, 0
      %2396 = vmatprep.subr.mxu0 0.0
      %2397 = vmatpush1.msra.mxu0 %v1000
      %2398 = vmatprep.subr.mxu0 0.0
      %2399 = vmatpush1.msra.mxu0 0.0
      %2400 = vmatprep.subr.mxu0 0.0
      %2401 = vmatpush1.msra.mxu0 0.0
      %2402 = vmatprep.subr.mxu0 0.0
      %2403 = vmatpush1.msra.mxu0 0.0
      %2404 = vmatprep.subr.mxu0 0.0
      %2405 = vmatpush1.msra.mxu0 0.0
      %2406 = vmatprep.subr.mxu0 0.0
      %2407 = vmatpush1.msra.mxu0 0.0
      %2408 = vmatprep.subr.mxu0 0.0
      %2409 = vmatpush1.msra.mxu0 0.0
      %2410 = vmatprep.subr.mxu0 0.0
      %2411 = vmatpush1.msra.mxu0 0.0
      %2412 = vmatprep.subr.mxu0 0.0
      %2413 = vmatpush1.msra.mxu0 0.0
      %2414 = vmatprep.subr.mxu0 0.0
      %2415 = vmatpush1.msra.mxu0 0.0
      %2416 = vmatprep.subr.mxu0 0.0
      %2417 = vmatpush1.msra.mxu0 0.0
      %2418 = vmatprep.subr.mxu0 0.0
      %2419 = vmatpush1.msra.mxu0 0.0
      %2420 = vmatprep.subr.mxu0 0.0
      %2421 = vmatpush1.msra.mxu0 0.0
      %2422 = vmatprep.subr.mxu0 0.0
      %2423 = vmatpush1.msra.mxu0 0.0
      %2424 = vmatprep.subr.mxu0 0.0
      %2425 = vmatpush1.msra.mxu0 0.0
      %2426 = vmatprep.subr.mxu0 0.0
      %2427 = vmatpush1.msra.mxu0 0.0
      %2428 = vmatprep.subr.mxu0 0.0
      %2429 = vmatpush1.msra.mxu0 0.0
      %2430 = vmatprep.subr.mxu0 0.0
      %2431 = vmatpush1.msra.mxu0 0.0
      %2432 = vmatprep.subr.mxu0 0.0
      %2433 = vmatpush1.msra.mxu0 0.0
      %2434 = vmatprep.subr.mxu0 0.0
      %2435 = vmatpush1.msra.mxu0 0.0
      %2436 = vmatprep.subr.mxu0 0.0
      %2437 = vmatpush1.msra.mxu0 0.0
      %2438 = vmatprep.subr.mxu0 0.0
      %2439 = vmatpush1.msra.mxu0 0.0
      %2440 = vmatprep.subr.mxu0 0.0
      %2441 = vmatpush1.msra.mxu0 0.0
      %2442 = vmatprep.subr.mxu0 0.0
      %2443 = vmatpush1.msra.mxu0 0.0
      %2444 = vmatprep.subr.mxu0 0.0
      %2445 = vmatpush1.msra.mxu0 0.0
      %2446 = vmatprep.subr.mxu0 0.0
      %2447 = vmatpush1.msra.mxu0 0.0
      %2448 = vmatprep.subr.mxu0 0.0
      %2449 = vmatpush1.msra.mxu0 0.0
      %2450 = vmatprep.subr.mxu0 0.0
      %2451 = vmatpush1.msra.mxu0 0.0
      %2452 = vmatprep.subr.mxu0 0.0
      %2453 = vmatpush1.msra.mxu0 0.0
      %2454 = vmatprep.subr.mxu0 0.0
      %2455 = vmatpush1.msra.mxu0 0.0
      %2456 = vmatprep.subr.mxu0 0.0
      %2457 = vmatpush1.msra.mxu0 0.0
      %2458 = vmatprep.subr.mxu0 0.0
      %2459 = vmatpush1.msra.mxu0 0.0
      %2460 = vmatprep.mubr.f32.mxu0 0.0
      %2461 = vmatmul.mubr.f32.gmra.mrb[0].mxu0 %v2392
      %v2462 = vpop.f32.mrb[0].mxu0
      %v2463 = vadd.f32 0.0, %v2462
      %v2464 = vpop.f32.mrb[0].mxu0
      %2465 = vmatprep.mubr.f32.mxu0 0.0
      %2466 = vmatmul.mubr.f32.gmra.mrb[0].mxu0 %v2394
      %v2467 = vpop.f32.mrb[0].mxu0
      %v2468 = vadd.f32 0.0, %v2467
      %v2469 = vpop.f32.mrb[0].mxu0
      %2470 = vdwg.mxu0
      %v2471 = vadd.f32 %v2385, %v2463
      %v2472 = vadd.f32 %v2386, %v2468
      %v2473 = vsel %vm374, %v1789, 0
      %2475 = vmatprep.subr.mxu0 0.0
      %2476 = vmatpush1.msra.mxu0 %v1082
      %2477 = vmatprep.subr.mxu0 0.0
      %2478 = vmatpush1.msra.mxu0 0.0
      %2479 = vmatprep.subr.mxu0 0.0
      %2480 = vmatpush1.msra.mxu0 0.0
      %2481 = vmatprep.subr.mxu0 0.0
      %2482 = vmatpush1.msra.mxu0 0.0
      %2483 = vmatprep.subr.mxu0 0.0
      %2484 = vmatpush1.msra.mxu0 0.0
      %2485 = vmatprep.subr.mxu0 0.0
      %2486 = vmatpush1.msra.mxu0 0.0
      %2487 = vmatprep.subr.mxu0 0.0
      %2488 = vmatpush1.msra.mxu0 0.0
      %2489 = vmatprep.subr.mxu0 0.0
      %2490 = vmatpush1.msra.mxu0 0.0
      %2491 = vmatprep.subr.mxu0 0.0
      %2492 = vmatpush1.msra.mxu0 0.0
      %2493 = vmatprep.subr.mxu0 0.0
      %2494 = vmatpush1.msra.mxu0 0.0
      %2495 = vmatprep.subr.mxu0 0.0
      %2496 = vmatpush1.msra.mxu0 0.0
      %2497 = vmatprep.subr.mxu0 0.0
      %2498 = vmatpush1.msra.mxu0 0.0
      %2499 = vmatprep.subr.mxu0 0.0
      %2500 = vmatpush1.msra.mxu0 0.0
      %2501 = vmatprep.subr.mxu0 0.0
      %2502 = vmatpush1.msra.mxu0 0.0
      %2503 = vmatprep.subr.mxu0 0.0
      %2504 = vmatpush1.msra.mxu0 0.0
      %2505 = vmatprep.subr.mxu0 0.0
      %2506 = vmatpush1.msra.mxu0 0.0
      %2507 = vmatprep.subr.mxu0 0.0
      %2508 = vmatpush1.msra.mxu0 0.0
      %2509 = vmatprep.subr.mxu0 0.0
      %2510 = vmatpush1.msra.mxu0 0.0
      %2511 = vmatprep.subr.mxu0 0.0
      %2512 = vmatpush1.msra.mxu0 0.0
      %2513 = vmatprep.subr.mxu0 0.0
      %2514 = vmatpush1.msra.mxu0 0.0
      %2515 = vmatprep.subr.mxu0 0.0
      %2516 = vmatpush1.msra.mxu0 0.0
      %2517 = vmatprep.subr.mxu0 0.0
      %2518 = vmatpush1.msra.mxu0 0.0
      %2519 = vmatprep.subr.mxu0 0.0
      %2520 = vmatpush1.msra.mxu0 0.0
      %2521 = vmatprep.subr.mxu0 0.0
      %2522 = vmatpush1.msra.mxu0 0.0
      %2523 = vmatprep.subr.mxu0 0.0
      %2524 = vmatpush1.msra.mxu0 0.0
      %2525 = vmatprep.subr.mxu0 0.0
      %2526 = vmatpush1.msra.mxu0 0.0
      %2527 = vmatprep.subr.mxu0 0.0
      %2528 = vmatpush1.msra.mxu0 0.0
      %2529 = vmatprep.subr.mxu0 0.0
      %2530 = vmatpush1.msra.mxu0 0.0
      %2531 = vmatprep.subr.mxu0 0.0
      %2532 = vmatpush1.msra.mxu0 0.0
      %2533 = vmatprep.subr.mxu0 0.0
      %2534 = vmatpush1.msra.mxu0 0.0
      %2535 = vmatprep.subr.mxu0 0.0
      %2536 = vmatpush1.msra.mxu0 0.0
      %2537 = vmatprep.subr.mxu0 0.0
      %2538 = vmatpush1.msra.mxu0 0.0
      %2539 = vmatprep.mubr.f32.mxu0 0.0
      %2540 = vmatmul.mubr.f32.gmra.mrb[0].mxu0 %v1880
      %v2541 = vpop.f32.mrb[0].mxu0
      %v2542 = vadd.f32 0.0, %v2541
      %v2543 = vpop.f32.mrb[0].mxu0
      %2544 = vmatprep.mubr.f32.mxu0 0.0
      %2545 = vmatmul.mubr.f32.gmra.mrb[0].mxu0 %v2473
      %v2546 = vpop.f32.mrb[0].mxu0
      %v2547 = vadd.f32 0.0, %v2546
      %v2548 = vpop.f32.mrb[0].mxu0
      %2549 = vdwg.mxu0
      %v2550 = vadd.f32 %v2471, %v2542
      %v2551 = vadd.f32 %v2472, %v2547
      %v2553 = vrot.slane %v1790, 1
      %v2554 = vsel %vm368, %v1797, %v2553
      %v2555 = vsel %vm374, %v2554, 0
      %2557 = vmatprep.subr.mxu0 0.0
      %2558 = vmatpush1.msra.mxu0 %v1167
      %2559 = vmatprep.subr.mxu0 0.0
      %2560 = vmatpush1.msra.mxu0 0.0
      %2561 = vmatprep.subr.mxu0 0.0
      %2562 = vmatpush1.msra.mxu0 0.0
      %2563 = vmatprep.subr.mxu0 0.0
      %2564 = vmatpush1.msra.mxu0 0.0
      %2565 = vmatprep.subr.mxu0 0.0
      %2566 = vmatpush1.msra.mxu0 0.0
      %2567 = vmatprep.subr.mxu0 0.0
      %2568 = vmatpush1.msra.mxu0 0.0
      %2569 = vmatprep.subr.mxu0 0.0
      %2570 = vmatpush1.msra.mxu0 0.0
      %2571 = vmatprep.subr.mxu0 0.0
      %2572 = vmatpush1.msra.mxu0 0.0
      %2573 = vmatprep.subr.mxu0 0.0
      %2574 = vmatpush1.msra.mxu0 0.0
      %2575 = vmatprep.subr.mxu0 0.0
      %2576 = vmatpush1.msra.mxu0 0.0
      %2577 = vmatprep.subr.mxu0 0.0
      %2578 = vmatpush1.msra.mxu0 0.0
      %2579 = vmatprep.subr.mxu0 0.0
      %2580 = vmatpush1.msra.mxu0 0.0
      %2581 = vmatprep.subr.mxu0 0.0
      %2582 = vmatpush1.msra.mxu0 0.0
      %2583 = vmatprep.subr.mxu0 0.0
      %2584 = vmatpush1.msra.mxu0 0.0
      %2585 = vmatprep.subr.mxu0 0.0
      %2586 = vmatpush1.msra.mxu0 0.0
      %2587 = vmatprep.subr.mxu0 0.0
      %2588 = vmatpush1.msra.mxu0 0.0
      %2589 = vmatprep.subr.mxu0 0.0
      %2590 = vmatpush1.msra.mxu0 0.0
      %2591 = vmatprep.subr.mxu0 0.0
      %2592 = vmatpush1.msra.mxu0 0.0
      %2593 = vmatprep.subr.mxu0 0.0
      %2594 = vmatpush1.msra.mxu0 0.0
      %2595 = vmatprep.subr.mxu0 0.0
      %2596 = vmatpush1.msra.mxu0 0.0
      %2597 = vmatprep.subr.mxu0 0.0
      %2598 = vmatpush1.msra.mxu0 0.0
      %2599 = vmatprep.subr.mxu0 0.0
      %2600 = vmatpush1.msra.mxu0 0.0
      %2601 = vmatprep.subr.mxu0 0.0
      %2602 = vmatpush1.msra.mxu0 0.0
      %2603 = vmatprep.subr.mxu0 0.0
      %2604 = vmatpush1.msra.mxu0 0.0
      %2605 = vmatprep.subr.mxu0 0.0
      %2606 = vmatpush1.msra.mxu0 0.0
      %2607 = vmatprep.subr.mxu0 0.0
      %2608 = vmatpush1.msra.mxu0 0.0
      %2609 = vmatprep.subr.mxu0 0.0
      %2610 = vmatpush1.msra.mxu0 0.0
      %2611 = vmatprep.subr.mxu0 0.0
      %2612 = vmatpush1.msra.mxu0 0.0
      %2613 = vmatprep.subr.mxu0 0.0
      %2614 = vmatpush1.msra.mxu0 0.0
      %2615 = vmatprep.subr.mxu0 0.0
      %2616 = vmatpush1.msra.mxu0 0.0
      %2617 = vmatprep.subr.mxu0 0.0
      %2618 = vmatpush1.msra.mxu0 0.0
      %2619 = vmatprep.subr.mxu0 0.0
      %2620 = vmatpush1.msra.mxu0 0.0
      %2621 = vmatprep.mubr.f32.mxu0 0.0
      %2622 = vmatmul.mubr.f32.gmra.mrb[0].mxu0 %v1801
      %v2623 = vpop.f32.mrb[0].mxu0
      %v2624 = vadd.f32 0.0, %v2623
      %v2625 = vpop.f32.mrb[0].mxu0
      %2626 = vmatprep.mubr.f32.mxu0 0.0
      %2627 = vmatmul.mubr.f32.gmra.mrb[0].mxu0 %v2555
      %v2628 = vpop.f32.mrb[0].mxu0
      %v2629 = vadd.f32 0.0, %v2628
      %v2630 = vpop.f32.mrb[0].mxu0
      %2631 = vdwg.mxu0
      %v2632 = vadd.f32 %v2550, %v2624
      %v2633 = vadd.f32 %v2551, %v2629
      %v2634 = vrot.slane %v1790, 2
      %v2635 = vsel %vm540, %v1960, %v2634
      %v2636 = vsel %vm374, %v2635, 0
      %2638 = vmatprep.subr.mxu0 0.0
      %2639 = vmatpush1.msra.mxu0 %v1251
      %2640 = vmatprep.subr.mxu0 0.0
      %2641 = vmatpush1.msra.mxu0 0.0
      %2642 = vmatprep.subr.mxu0 0.0
      %2643 = vmatpush1.msra.mxu0 0.0
      %2644 = vmatprep.subr.mxu0 0.0
      %2645 = vmatpush1.msra.mxu0 0.0
      %2646 = vmatprep.subr.mxu0 0.0
      %2647 = vmatpush1.msra.mxu0 0.0
      %2648 = vmatprep.subr.mxu0 0.0
      %2649 = vmatpush1.msra.mxu0 0.0
      %2650 = vmatprep.subr.mxu0 0.0
      %2651 = vmatpush1.msra.mxu0 0.0
      %2652 = vmatprep.subr.mxu0 0.0
      %2653 = vmatpush1.msra.mxu0 0.0
      %2654 = vmatprep.subr.mxu0 0.0
      %2655 = vmatpush1.msra.mxu0 0.0
      %2656 = vmatprep.subr.mxu0 0.0
      %2657 = vmatpush1.msra.mxu0 0.0
      %2658 = vmatprep.subr.mxu0 0.0
      %2659 = vmatpush1.msra.mxu0 0.0
      %2660 = vmatprep.subr.mxu0 0.0
      %2661 = vmatpush1.msra.mxu0 0.0
      %2662 = vmatprep.subr.mxu0 0.0
      %2663 = vmatpush1.msra.mxu0 0.0
      %2664 = vmatprep.subr.mxu0 0.0
      %2665 = vmatpush1.msra.mxu0 0.0
      %2666 = vmatprep.subr.mxu0 0.0
      %2667 = vmatpush1.msra.mxu0 0.0
      %2668 = vmatprep.subr.mxu0 0.0
      %2669 = vmatpush1.msra.mxu0 0.0
      %2670 = vmatprep.subr.mxu0 0.0
      %2671 = vmatpush1.msra.mxu0 0.0
      %2672 = vmatprep.subr.mxu0 0.0
      %2673 = vmatpush1.msra.mxu0 0.0
      %2674 = vmatprep.subr.mxu0 0.0
      %2675 = vmatpush1.msra.mxu0 0.0
      %2676 = vmatprep.subr.mxu0 0.0
      %2677 = vmatpush1.msra.mxu0 0.0
      %2678 = vmatprep.subr.mxu0 0.0
      %2679 = vmatpush1.msra.mxu0 0.0
      %2680 = vmatprep.subr.mxu0 0.0
      %2681 = vmatpush1.msra.mxu0 0.0
      %2682 = vmatprep.subr.mxu0 0.0
      %2683 = vmatpush1.msra.mxu0 0.0
      %2684 = vmatprep.subr.mxu0 0.0
      %2685 = vmatpush1.msra.mxu0 0.0
      %2686 = vmatprep.subr.mxu0 0.0
      %2687 = vmatpush1.msra.mxu0 0.0
      %2688 = vmatprep.subr.mxu0 0.0
      %2689 = vmatpush1.msra.mxu0 0.0
      %2690 = vmatprep.subr.mxu0 0.0
      %2691 = vmatpush1.msra.mxu0 0.0
      %2692 = vmatprep.subr.mxu0 0.0
      %2693 = vmatpush1.msra.mxu0 0.0
      %2694 = vmatprep.subr.mxu0 0.0
      %2695 = vmatpush1.msra.mxu0 0.0
      %2696 = vmatprep.subr.mxu0 0.0
      %2697 = vmatpush1.msra.mxu0 0.0
      %2698 = vmatprep.subr.mxu0 0.0
      %2699 = vmatpush1.msra.mxu0 0.0
      %2700 = vmatprep.subr.mxu0 0.0
      %2701 = vmatpush1.msra.mxu0 0.0
      %2702 = vmatprep.mubr.f32.mxu0 0.0
      %2703 = vmatmul.mubr.f32.gmra.mrb[0].mxu0 %v1964
      %v2704 = vpop.f32.mrb[0].mxu0
      %v2705 = vadd.f32 0.0, %v2704
      %v2706 = vpop.f32.mrb[0].mxu0
      %2707 = vmatprep.mubr.f32.mxu0 0.0
      %2708 = vmatmul.mubr.f32.gmra.mrb[0].mxu0 %v2636
      %v2709 = vpop.f32.mrb[0].mxu0
      %v2710 = vadd.f32 0.0, %v2709
      %v2711 = vpop.f32.mrb[0].mxu0
      %2712 = vdwg.mxu0
      %v2713 = vadd.f32 %v2632, %v2705
      %v2714 = vadd.f32 %v2633, %v2710
      %v2715 = vrot.slane %v1790, 3
      %v2716 = vsel %vm630, %v2046, %v2715
      %v2717 = vsel %vm374, %v2716, 0
      %2719 = vmatprep.subr.mxu0 0.0
      %2720 = vmatpush1.msra.mxu0 %v1335
      %2721 = vmatprep.subr.mxu0 0.0
      %2722 = vmatpush1.msra.mxu0 0.0
      %2723 = vmatprep.subr.mxu0 0.0
      %2724 = vmatpush1.msra.mxu0 0.0
      %2725 = vmatprep.subr.mxu0 0.0
      %2726 = vmatpush1.msra.mxu0 0.0
      %2727 = vmatprep.subr.mxu0 0.0
      %2728 = vmatpush1.msra.mxu0 0.0
      %2729 = vmatprep.subr.mxu0 0.0
      %2730 = vmatpush1.msra.mxu0 0.0
      %2731 = vmatprep.subr.mxu0 0.0
      %2732 = vmatpush1.msra.mxu0 0.0
      %2733 = vmatprep.subr.mxu0 0.0
      %2734 = vmatpush1.msra.mxu0 0.0
      %2735 = vmatprep.subr.mxu0 0.0
      %2736 = vmatpush1.msra.mxu0 0.0
      %2737 = vmatprep.subr.mxu0 0.0
      %2738 = vmatpush1.msra.mxu0 0.0
      %2739 = vmatprep.subr.mxu0 0.0
      %2740 = vmatpush1.msra.mxu0 0.0
      %2741 = vmatprep.subr.mxu0 0.0
      %2742 = vmatpush1.msra.mxu0 0.0
      %2743 = vmatprep.subr.mxu0 0.0
      %2744 = vmatpush1.msra.mxu0 0.0
      %2745 = vmatprep.subr.mxu0 0.0
      %2746 = vmatpush1.msra.mxu0 0.0
      %2747 = vmatprep.subr.mxu0 0.0
      %2748 = vmatpush1.msra.mxu0 0.0
      %2749 = vmatprep.subr.mxu0 0.0
      %2750 = vmatpush1.msra.mxu0 0.0
      %2751 = vmatprep.subr.mxu0 0.0
      %2752 = vmatpush1.msra.mxu0 0.0
      %2753 = vmatprep.subr.mxu0 0.0
      %2754 = vmatpush1.msra.mxu0 0.0
      %2755 = vmatprep.subr.mxu0 0.0
      %2756 = vmatpush1.msra.mxu0 0.0
      %2757 = vmatprep.subr.mxu0 0.0
      %2758 = vmatpush1.msra.mxu0 0.0
      %2759 = vmatprep.subr.mxu0 0.0
      %2760 = vmatpush1.msra.mxu0 0.0
      %2761 = vmatprep.subr.mxu0 0.0
      %2762 = vmatpush1.msra.mxu0 0.0
      %2763 = vmatprep.subr.mxu0 0.0
      %2764 = vmatpush1.msra.mxu0 0.0
      %2765 = vmatprep.subr.mxu0 0.0
      %2766 = vmatpush1.msra.mxu0 0.0
      %2767 = vmatprep.subr.mxu0 0.0
      %2768 = vmatpush1.msra.mxu0 0.0
      %2769 = vmatprep.subr.mxu0 0.0
      %2770 = vmatpush1.msra.mxu0 0.0
      %2771 = vmatprep.subr.mxu0 0.0
      %2772 = vmatpush1.msra.mxu0 0.0
      %2773 = vmatprep.subr.mxu0 0.0
      %2774 = vmatpush1.msra.mxu0 0.0
      %2775 = vmatprep.subr.mxu0 0.0
      %2776 = vmatpush1.msra.mxu0 0.0
      %2777 = vmatprep.subr.mxu0 0.0
      %2778 = vmatpush1.msra.mxu0 0.0
      %2779 = vmatprep.subr.mxu0 0.0
      %2780 = vmatpush1.msra.mxu0 0.0
      %2781 = vmatprep.subr.mxu0 0.0
      %2782 = vmatpush1.msra.mxu0 0.0
      %2783 = vmatprep.mubr.f32.mxu0 0.0
      %2784 = vmatmul.mubr.f32.gmra.mrb[0].mxu0 %v2050
      %v2785 = vpop.f32.mrb[0].mxu0
      %v2786 = vadd.f32 0.0, %v2785
      %v2787 = vpop.f32.mrb[0].mxu0
      %2788 = vmatprep.mubr.f32.mxu0 0.0
      %2789 = vmatmul.mubr.f32.gmra.mrb[0].mxu0 %v2717
      %v2790 = vpop.f32.mrb[0].mxu0
      %v2791 = vadd.f32 0.0, %v2790
      %v2792 = vpop.f32.mrb[0].mxu0
      %2793 = vdwg.mxu0
      %v2794 = vadd.f32 %v2713, %v2786
      %v2795 = vadd.f32 %v2714, %v2791
      %v2796 = vrot.slane %v1790, 4
      %v2797 = vsel %vm379, %v2132, %v2796
      %v2798 = vsel %vm374, %v2797, 0
      %2800 = vmatprep.subr.mxu0 0.0
      %2801 = vmatpush1.msra.mxu0 %v1419
      %2802 = vmatprep.subr.mxu0 0.0
      %2803 = vmatpush1.msra.mxu0 0.0
      %2804 = vmatprep.subr.mxu0 0.0
      %2805 = vmatpush1.msra.mxu0 0.0
      %2806 = vmatprep.subr.mxu0 0.0
      %2807 = vmatpush1.msra.mxu0 0.0
      %2808 = vmatprep.subr.mxu0 0.0
      %2809 = vmatpush1.msra.mxu0 0.0
      %2810 = vmatprep.subr.mxu0 0.0
      %2811 = vmatpush1.msra.mxu0 0.0
      %2812 = vmatprep.subr.mxu0 0.0
      %2813 = vmatpush1.msra.mxu0 0.0
      %2814 = vmatprep.subr.mxu0 0.0
      %2815 = vmatpush1.msra.mxu0 0.0
      %2816 = vmatprep.subr.mxu0 0.0
      %2817 = vmatpush1.msra.mxu0 0.0
      %2818 = vmatprep.subr.mxu0 0.0
      %2819 = vmatpush1.msra.mxu0 0.0
      %2820 = vmatprep.subr.mxu0 0.0
      %2821 = vmatpush1.msra.mxu0 0.0
      %2822 = vmatprep.subr.mxu0 0.0
      %2823 = vmatpush1.msra.mxu0 0.0
      %2824 = vmatprep.subr.mxu0 0.0
      %2825 = vmatpush1.msra.mxu0 0.0
      %2826 = vmatprep.subr.mxu0 0.0
      %2827 = vmatpush1.msra.mxu0 0.0
      %2828 = vmatprep.subr.mxu0 0.0
      %2829 = vmatpush1.msra.mxu0 0.0
      %2830 = vmatprep.subr.mxu0 0.0
      %2831 = vmatpush1.msra.mxu0 0.0
      %2832 = vmatprep.subr.mxu0 0.0
      %2833 = vmatpush1.msra.mxu0 0.0
      %2834 = vmatprep.subr.mxu0 0.0
      %2835 = vmatpush1.msra.mxu0 0.0
      %2836 = vmatprep.subr.mxu0 0.0
      %2837 = vmatpush1.msra.mxu0 0.0
      %2838 = vmatprep.subr.mxu0 0.0
      %2839 = vmatpush1.msra.mxu0 0.0
      %2840 = vmatprep.subr.mxu0 0.0
      %2841 = vmatpush1.msra.mxu0 0.0
      %2842 = vmatprep.subr.mxu0 0.0
      %2843 = vmatpush1.msra.mxu0 0.0
      %2844 = vmatprep.subr.mxu0 0.0
      %2845 = vmatpush1.msra.mxu0 0.0
      %2846 = vmatprep.subr.mxu0 0.0
      %2847 = vmatpush1.msra.mxu0 0.0
      %2848 = vmatprep.subr.mxu0 0.0
      %2849 = vmatpush1.msra.mxu0 0.0
      %2850 = vmatprep.subr.mxu0 0.0
      %2851 = vmatpush1.msra.mxu0 0.0
      %2852 = vmatprep.subr.mxu0 0.0
      %2853 = vmatpush1.msra.mxu0 0.0
      %2854 = vmatprep.subr.mxu0 0.0
      %2855 = vmatpush1.msra.mxu0 0.0
      %2856 = vmatprep.subr.mxu0 0.0
      %2857 = vmatpush1.msra.mxu0 0.0
      %2858 = vmatprep.subr.mxu0 0.0
      %2859 = vmatpush1.msra.mxu0 0.0
      %2860 = vmatprep.subr.mxu0 0.0
      %2861 = vmatpush1.msra.mxu0 0.0
      %2862 = vmatprep.subr.mxu0 0.0
      %2863 = vmatpush1.msra.mxu0 0.0
      %2864 = vmatprep.mubr.f32.mxu0 0.0
      %2865 = vmatmul.mubr.f32.gmra.mrb[0].mxu0 %v2136
      %v2866 = vpop.f32.mrb[0].mxu0
      %v2867 = vadd.f32 0.0, %v2866
      %v2868 = vpop.f32.mrb[0].mxu0
      %2869 = vmatprep.mubr.f32.mxu0 0.0
      %2870 = vmatmul.mubr.f32.gmra.mrb[0].mxu0 %v2798
      %v2871 = vpop.f32.mrb[0].mxu0
      %v2872 = vadd.f32 0.0, %v2871
      %v2873 = vpop.f32.mrb[0].mxu0
      %2874 = vdwg.mxu0
      %v2875 = vadd.f32 %v2794, %v2867
      %v2876 = vadd.f32 %v2795, %v2872
      %v2877 = vrot.slane %v1790, 5
      %v2878 = vsel %vm809, %v2218, %v2877
      %v2879 = vsel %vm374, %v2878, 0
      %2881 = vmatprep.subr.mxu0 0.0
      %2882 = vmatpush1.msra.mxu0 %v1503
      %2883 = vmatprep.subr.mxu0 0.0
      %2884 = vmatpush1.msra.mxu0 0.0
      %2885 = vmatprep.subr.mxu0 0.0
      %2886 = vmatpush1.msra.mxu0 0.0
      %2887 = vmatprep.subr.mxu0 0.0
      %2888 = vmatpush1.msra.mxu0 0.0
      %2889 = vmatprep.subr.mxu0 0.0
      %2890 = vmatpush1.msra.mxu0 0.0
      %2891 = vmatprep.subr.mxu0 0.0
      %2892 = vmatpush1.msra.mxu0 0.0
      %2893 = vmatprep.subr.mxu0 0.0
      %2894 = vmatpush1.msra.mxu0 0.0
      %2895 = vmatprep.subr.mxu0 0.0
      %2896 = vmatpush1.msra.mxu0 0.0
      %2897 = vmatprep.subr.mxu0 0.0
      %2898 = vmatpush1.msra.mxu0 0.0
      %2899 = vmatprep.subr.mxu0 0.0
      %2900 = vmatpush1.msra.mxu0 0.0
      %2901 = vmatprep.subr.mxu0 0.0
      %2902 = vmatpush1.msra.mxu0 0.0
      %2903 = vmatprep.subr.mxu0 0.0
      %2904 = vmatpush1.msra.mxu0 0.0
      %2905 = vmatprep.subr.mxu0 0.0
      %2906 = vmatpush1.msra.mxu0 0.0
      %2907 = vmatprep.subr.mxu0 0.0
      %2908 = vmatpush1.msra.mxu0 0.0
      %2909 = vmatprep.subr.mxu0 0.0
      %2910 = vmatpush1.msra.mxu0 0.0
      %2911 = vmatprep.subr.mxu0 0.0
      %2912 = vmatpush1.msra.mxu0 0.0
      %2913 = vmatprep.subr.mxu0 0.0
      %2914 = vmatpush1.msra.mxu0 0.0
      %2915 = vmatprep.subr.mxu0 0.0
      %2916 = vmatpush1.msra.mxu0 0.0
      %2917 = vmatprep.subr.mxu0 0.0
      %2918 = vmatpush1.msra.mxu0 0.0
      %2919 = vmatprep.subr.mxu0 0.0
      %2920 = vmatpush1.msra.mxu0 0.0
      %2921 = vmatprep.subr.mxu0 0.0
      %2922 = vmatpush1.msra.mxu0 0.0
      %2923 = vmatprep.subr.mxu0 0.0
      %2924 = vmatpush1.msra.mxu0 0.0
      %2925 = vmatprep.subr.mxu0 0.0
      %2926 = vmatpush1.msra.mxu0 0.0
      %2927 = vmatprep.subr.mxu0 0.0
      %2928 = vmatpush1.msra.mxu0 0.0
      %2929 = vmatprep.subr.mxu0 0.0
      %2930 = vmatpush1.msra.mxu0 0.0
      %2931 = vmatprep.subr.mxu0 0.0
      %2932 = vmatpush1.msra.mxu0 0.0
      %2933 = vmatprep.subr.mxu0 0.0
      %2934 = vmatpush1.msra.mxu0 0.0
      %2935 = vmatprep.subr.mxu0 0.0
      %2936 = vmatpush1.msra.mxu0 0.0
      %2937 = vmatprep.subr.mxu0 0.0
      %2938 = vmatpush1.msra.mxu0 0.0
      %2939 = vmatprep.subr.mxu0 0.0
      %2940 = vmatpush1.msra.mxu0 0.0
      %2941 = vmatprep.subr.mxu0 0.0
      %2942 = vmatpush1.msra.mxu0 0.0
      %2943 = vmatprep.subr.mxu0 0.0
      %2944 = vmatpush1.msra.mxu0 0.0
      %2945 = vmatprep.mubr.f32.mxu0 0.0
      %2946 = vmatmul.mubr.f32.gmra.mrb[0].mxu0 %v2222
      %v2947 = vpop.f32.mrb[0].mxu0
      %v2948 = vadd.f32 0.0, %v2947
      %v2949 = vpop.f32.mrb[0].mxu0
      %2950 = vmatprep.mubr.f32.mxu0 0.0
      %2951 = vmatmul.mubr.f32.gmra.mrb[0].mxu0 %v2879
      %v2952 = vpop.f32.mrb[0].mxu0
      %v2953 = vadd.f32 0.0, %v2952
      %v2954 = vpop.f32.mrb[0].mxu0
      %2955 = vdwg.mxu0
      %v2956 = vadd.f32 %v2875, %v2948
      %v2957 = vadd.f32 %v2876, %v2953
      %v2958 = vrot.slane %v1790, 6
      %v2959 = vsel %vm899, %v2304, %v2958
      %v2960 = vsel %vm374, %v2959, 0
      %2962 = vmatprep.subr.mxu0 0.0
      %2963 = vmatpush1.msra.mxu0 %v1587
      %2964 = vmatprep.subr.mxu0 0.0
      %2965 = vmatpush1.msra.mxu0 0.0
      %2966 = vmatprep.subr.mxu0 0.0
      %2967 = vmatpush1.msra.mxu0 0.0
      %2968 = vmatprep.subr.mxu0 0.0
      %2969 = vmatpush1.msra.mxu0 0.0
      %2970 = vmatprep.subr.mxu0 0.0
      %2971 = vmatpush1.msra.mxu0 0.0
      %2972 = vmatprep.subr.mxu0 0.0
      %2973 = vmatpush1.msra.mxu0 0.0
      %2974 = vmatprep.subr.mxu0 0.0
      %2975 = vmatpush1.msra.mxu0 0.0
      %2976 = vmatprep.subr.mxu0 0.0
      %2977 = vmatpush1.msra.mxu0 0.0
      %2978 = vmatprep.subr.mxu0 0.0
      %2979 = vmatpush1.msra.mxu0 0.0
      %2980 = vmatprep.subr.mxu0 0.0
      %2981 = vmatpush1.msra.mxu0 0.0
      %2982 = vmatprep.subr.mxu0 0.0
      %2983 = vmatpush1.msra.mxu0 0.0
      %2984 = vmatprep.subr.mxu0 0.0
      %2985 = vmatpush1.msra.mxu0 0.0
      %2986 = vmatprep.subr.mxu0 0.0
      %2987 = vmatpush1.msra.mxu0 0.0
      %2988 = vmatprep.subr.mxu0 0.0
      %2989 = vmatpush1.msra.mxu0 0.0
      %2990 = vmatprep.subr.mxu0 0.0
      %2991 = vmatpush1.msra.mxu0 0.0
      %2992 = vmatprep.subr.mxu0 0.0
      %2993 = vmatpush1.msra.mxu0 0.0
      %2994 = vmatprep.subr.mxu0 0.0
      %2995 = vmatpush1.msra.mxu0 0.0
      %2996 = vmatprep.subr.mxu0 0.0
      %2997 = vmatpush1.msra.mxu0 0.0
      %2998 = vmatprep.subr.mxu0 0.0
      %2999 = vmatpush1.msra.mxu0 0.0
      %3000 = vmatprep.subr.mxu0 0.0
      %3001 = vmatpush1.msra.mxu0 0.0
      %3002 = vmatprep.subr.mxu0 0.0
      %3003 = vmatpush1.msra.mxu0 0.0
      %3004 = vmatprep.subr.mxu0 0.0
      %3005 = vmatpush1.msra.mxu0 0.0
      %3006 = vmatprep.subr.mxu0 0.0
      %3007 = vmatpush1.msra.mxu0 0.0
      %3008 = vmatprep.subr.mxu0 0.0
      %3009 = vmatpush1.msra.mxu0 0.0
      %3010 = vmatprep.subr.mxu0 0.0
      %3011 = vmatpush1.msra.mxu0 0.0
      %3012 = vmatprep.subr.mxu0 0.0
      %3013 = vmatpush1.msra.mxu0 0.0
      %3014 = vmatprep.subr.mxu0 0.0
      %3015 = vmatpush1.msra.mxu0 0.0
      %3016 = vmatprep.subr.mxu0 0.0
      %3017 = vmatpush1.msra.mxu0 0.0
      %3018 = vmatprep.subr.mxu0 0.0
      %3019 = vmatpush1.msra.mxu0 0.0
      %3020 = vmatprep.subr.mxu0 0.0
      %3021 = vmatpush1.msra.mxu0 0.0
      %3022 = vmatprep.subr.mxu0 0.0
      %3023 = vmatpush1.msra.mxu0 0.0
      %3024 = vmatprep.subr.mxu0 0.0
      %3025 = vmatpush1.msra.mxu0 0.0
      %3026 = vmatprep.mubr.f32.mxu0 0.0
      %3027 = vmatmul.mubr.f32.gmra.mrb[0].mxu0 %v2308
      %v3028 = vpop.f32.mrb[0].mxu0
      %v3029 = vadd.f32 0.0, %v3028
      %v3030 = vpop.f32.mrb[0].mxu0
      %3031 = vmatprep.mubr.f32.mxu0 0.0
      %3032 = vmatmul.mubr.f32.gmra.mrb[0].mxu0 %v2960
      %v3033 = vpop.f32.mrb[0].mxu0
      %v3034 = vadd.f32 0.0, %v3033
      %v3035 = vpop.f32.mrb[0].mxu0
      %3036 = vdwg.mxu0
      %v3037 = vadd.f32 %v2956, %v3029
      %v3038 = vadd.f32 %v2957, %v3034
      %v3039 = vadd.f32 %v3037, %v1670
      %v3040 = vadd.f32 %v3038, %v1670
      %v3041 = vmax.f32 %v3039, 0.0
      %v3042 = vmax.f32 %v3040, 0.0
      %v3043 = vrot.slane %v3041, 1
      %v3044 = vrot.slane %v3042, 1
      %v3045 = vsel %vm1680, %v3043, %v3044
      %v3046 = vsel %vm1680, %v3044, %v3043
      %v3047 = vrot.slane %v3041, 7
      %v3048 = vrot.slane %v3042, 7
      %v3049 = vsel %vm1685, %v3047, %v3048
      %v3050 = vsel %vm1685, %v3048, %v3047
      %v3051 = vsel %vm1689, 0.0, %v3045
      %v3052 = vsel %vm1690, 0.0, %v3046
      %v3053 = vsel %vm1693, 0.0, %v3050
      %v3054 = vsel %vm1694, 0.0, %v3049
      %v3055 = vmax.f32 %v3041, %v3051
      %v3056 = vmax.f32 %v3042, %v3052
      %v3057 = vmax.f32 %v3055, %v3053
      %v3058 = vmax.f32 %v3056, %v3054
      %3059 = vmatprep.subr.mxu0 0.0
      %3060 = vmatpush1.msra.mxu0 %v1708
      %3061 = vmatprep.subr.mxu0 0.0
      %3062 = vmatpush1.msra.mxu0 0.0
      %3063 = vmatprep.subr.mxu0 0.0
      %3064 = vmatpush1.msra.mxu0 0.0
      %3065 = vmatprep.subr.mxu0 0.0
      %3066 = vmatpush1.msra.mxu0 0.0
      %3067 = vmatprep.subr.mxu0 0.0
      %3068 = vmatpush1.msra.mxu0 0.0
      %3069 = vmatprep.subr.mxu0 0.0
      %3070 = vmatpush1.msra.mxu0 0.0
      %3071 = vmatprep.subr.mxu0 0.0
      %3072 = vmatpush1.msra.mxu0 0.0
      %3073 = vmatprep.subr.mxu0 0.0
      %3074 = vmatpush1.msra.mxu0 0.0
      %3075 = vmatprep.subr.mxu0 0.0
      %3076 = vmatpush1.msra.mxu0 0.0
      %3077 = vmatprep.subr.mxu0 0.0
      %3078 = vmatpush1.msra.mxu0 0.0
      %3079 = vmatprep.subr.mxu0 0.0
      %3080 = vmatpush1.msra.mxu0 0.0
      %3081 = vmatprep.subr.mxu0 0.0
      %3082 = vmatpush1.msra.mxu0 0.0
      %3083 = vmatprep.subr.mxu0 0.0
      %3084 = vmatpush1.msra.mxu0 0.0
      %3085 = vmatprep.subr.mxu0 0.0
      %3086 = vmatpush1.msra.mxu0 0.0
      %3087 = vmatprep.subr.mxu0 0.0
      %3088 = vmatpush1.msra.mxu0 0.0
      %3089 = vmatprep.subr.mxu0 0.0
      %3090 = vmatpush1.msra.mxu0 0.0
      %3091 = vmatprep.subr.mxu0 0.0
      %3092 = vmatpush1.msra.mxu0 0.0
      %3093 = vmatprep.subr.mxu0 0.0
      %3094 = vmatpush1.msra.mxu0 0.0
      %3095 = vmatprep.subr.mxu0 0.0
      %3096 = vmatpush1.msra.mxu0 0.0
      %3097 = vmatprep.subr.mxu0 0.0
      %3098 = vmatpush1.msra.mxu0 0.0
      %3099 = vmatprep.subr.mxu0 0.0
      %3100 = vmatpush1.msra.mxu0 0.0
      %3101 = vmatprep.subr.mxu0 0.0
      %3102 = vmatpush1.msra.mxu0 0.0
      %3103 = vmatprep.subr.mxu0 0.0
      %3104 = vmatpush1.msra.mxu0 0.0
      %3105 = vmatprep.subr.mxu0 0.0
      %3106 = vmatpush1.msra.mxu0 0.0
      %3107 = vmatprep.subr.mxu0 0.0
      %3108 = vmatpush1.msra.mxu0 0.0
      %3109 = vmatprep.subr.mxu0 0.0
      %3110 = vmatpush1.msra.mxu0 0.0
      %3111 = vmatprep.subr.mxu0 0.0
      %3112 = vmatpush1.msra.mxu0 0.0
      %3113 = vmatprep.subr.mxu0 0.0
      %3114 = vmatpush1.msra.mxu0 0.0
      %3115 = vmatprep.subr.mxu0 0.0
      %3116 = vmatpush1.msra.mxu0 0.0
      %3117 = vmatprep.subr.mxu0 0.0
      %3118 = vmatpush1.msra.mxu0 0.0
      %3119 = vmatprep.subr.mxu0 0.0
      %3120 = vmatpush1.msra.mxu0 0.0
      %3121 = vmatprep.subr.mxu0 0.0
      %3122 = vmatpush1.msra.mxu0 0.0
      %3123 = vmatprep.mubr.f32.mxu0 0.0
      %3124 = vmatmul.mubr.f32.gmra.mrb[0].mxu0 %v2392
      %v3125 = vpop.f32.mrb[0].mxu0
      %v3126 = vadd.f32 %v1705, %v3125
      %v3127 = vpop.f32.mrb[0].mxu0
      %3128 = vmatprep.mubr.f32.mxu0 0.0
      %3129 = vmatmul.mubr.f32.gmra.mrb[0].mxu0 %v2394
      %v3130 = vpop.f32.mrb[0].mxu0
      %v3131 = vadd.f32 %v1705, %v3130
      %v3132 = vpop.f32.mrb[0].mxu0
      %3133 = vdwg.mxu0
      %v3134 = vadd.f32 %v3057, %v3126
      %v3135 = vadd.f32 %v3058, %v3131
      %vm3136 = vcmask 523264
      %v3138 = vsel %vm3136, %v3134, 0
      %v3141 = vsel %vm3136, %v3135, 0
      %3143 = vmatprep.subr.mxu0 0.0
      %3144 = vmatpush1.msra.mxu0 %v352
      %3145 = vmatprep.subr.mxu0 0.0
      %3146 = vmatpush1.msra.mxu0 %v353
      %3147 = vmatprep.subr.mxu0 0.0
      %3148 = vmatpush1.msra.mxu0 %v354
      %3149 = vmatprep.subr.mxu0 0.0
      %3150 = vmatpush1.msra.mxu0 %v355
      %3151 = vmatprep.subr.mxu0 0.0
      %3152 = vmatpush1.msra.mxu0 %v356
      %3153 = vmatprep.subr.mxu0 0.0
      %3154 = vmatpush1.msra.mxu0 %v357
      %3155 = vmatprep.subr.mxu0 0.0
      %3156 = vmatpush1.msra.mxu0 %v358
      %3157 = vmatprep.subr.mxu0 0.0
      %3158 = vmatpush1.msra.mxu0 %v359
      %3159 = vmatprep.subr.mxu0 0.0
      %3160 = vmatpush1.msra.mxu0 0.0
      %3161 = vmatprep.subr.mxu0 0.0
      %3162 = vmatpush1.msra.mxu0 0.0
      %3163 = vmatprep.subr.mxu0 0.0
      %3164 = vmatpush1.msra.mxu0 0.0
      %3165 = vmatprep.subr.mxu0 0.0
      %3166 = vmatpush1.msra.mxu0 0.0
      %3167 = vmatprep.subr.mxu0 0.0
      %3168 = vmatpush1.msra.mxu0 0.0
      %3169 = vmatprep.subr.mxu0 0.0
      %3170 = vmatpush1.msra.mxu0 0.0
      %3171 = vmatprep.subr.mxu0 0.0
      %3172 = vmatpush1.msra.mxu0 0.0
      %3173 = vmatprep.subr.mxu0 0.0
      %3174 = vmatpush1.msra.mxu0 0.0
      %3175 = vmatprep.subr.mxu0 0.0
      %3176 = vmatpush1.msra.mxu0 0.0
      %3177 = vmatprep.subr.mxu0 0.0
      %3178 = vmatpush1.msra.mxu0 0.0
      %3179 = vmatprep.subr.mxu0 0.0
      %3180 = vmatpush1.msra.mxu0 0.0
      %3181 = vmatprep.subr.mxu0 0.0
      %3182 = vmatpush1.msra.mxu0 0.0
      %3183 = vmatprep.subr.mxu0 0.0
      %3184 = vmatpush1.msra.mxu0 0.0
      %3185 = vmatprep.subr.mxu0 0.0
      %3186 = vmatpush1.msra.mxu0 0.0
      %3187 = vmatprep.subr.mxu0 0.0
      %3188 = vmatpush1.msra.mxu0 0.0
      %3189 = vmatprep.subr.mxu0 0.0
      %3190 = vmatpush1.msra.mxu0 0.0
      %3191 = vmatprep.subr.mxu0 0.0
      %3192 = vmatpush1.msra.mxu0 0.0
      %3193 = vmatprep.subr.mxu0 0.0
      %3194 = vmatpush1.msra.mxu0 0.0
      %3195 = vmatprep.subr.mxu0 0.0
      %3196 = vmatpush1.msra.mxu0 0.0
      %3197 = vmatprep.subr.mxu0 0.0
      %3198 = vmatpush1.msra.mxu0 0.0
      %3199 = vmatprep.subr.mxu0 0.0
      %3200 = vmatpush1.msra.mxu0 0.0
      %3201 = vmatprep.subr.mxu0 0.0
      %3202 = vmatpush1.msra.mxu0 0.0
      %3203 = vmatprep.subr.mxu0 0.0
      %3204 = vmatpush1.msra.mxu0 0.0
      %3205 = vmatprep.subr.mxu0 0.0
      %3206 = vmatpush1.msra.mxu0 0.0
      %3207 = vmatprep.mubr.f32.mxu0 0.0
      %3208 = vmatmul.mubr.f32.gmra.mrb[0].mxu0 %v3138
      %v3209 = vpop.f32.mrb[0].mxu0
      %v3210 = vadd.f32 0.0, %v3209
      %v3211 = vpop.f32.mrb[0].mxu0
      %3212 = vmatprep.mubr.f32.mxu0 0.0
      %3213 = vmatmul.mubr.f32.gmra.mrb[0].mxu0 %v3141
      %v3214 = vpop.f32.mrb[0].mxu0
      %v3215 = vadd.f32 0.0, %v3214
      %v3216 = vpop.f32.mrb[0].mxu0
      %3217 = vdwg.mxu0
      %v3219 = vsel %vm3136, %v1785, 0
      %v3222 = vsel %vm3136, %v1786, 0
      %3224 = vmatprep.subr.mxu0 0.0
      %3225 = vmatpush1.msra.mxu0 %v344
      %3226 = vmatprep.subr.mxu0 0.0
      %3227 = vmatpush1.msra.mxu0 %v345
      %3228 = vmatprep.subr.mxu0 0.0
      %3229 = vmatpush1.msra.mxu0 %v346
      %3230 = vmatprep.subr.mxu0 0.0
      %3231 = vmatpush1.msra.mxu0 %v347
      %3232 = vmatprep.subr.mxu0 0.0
      %3233 = vmatpush1.msra.mxu0 %v348
      %3234 = vmatprep.subr.mxu0 0.0
      %3235 = vmatpush1.msra.mxu0 %v349
      %3236 = vmatprep.subr.mxu0 0.0
      %3237 = vmatpush1.msra.mxu0 %v350
      %3238 = vmatprep.subr.mxu0 0.0
      %3239 = vmatpush1.msra.mxu0 %v351
      %3240 = vmatprep.subr.mxu0 0.0
      %3241 = vmatpush1.msra.mxu0 0.0
      %3242 = vmatprep.subr.mxu0 0.0
      %3243 = vmatpush1.msra.mxu0 0.0
      %3244 = vmatprep.subr.mxu0 0.0
      %3245 = vmatpush1.msra.mxu0 0.0
      %3246 = vmatprep.subr.mxu0 0.0
      %3247 = vmatpush1.msra.mxu0 0.0
      %3248 = vmatprep.subr.mxu0 0.0
      %3249 = vmatpush1.msra.mxu0 0.0
      %3250 = vmatprep.subr.mxu0 0.0
      %3251 = vmatpush1.msra.mxu0 0.0
      %3252 = vmatprep.subr.mxu0 0.0
      %3253 = vmatpush1.msra.mxu0 0.0
      %3254 = vmatprep.subr.mxu0 0.0
      %3255 = vmatpush1.msra.mxu0 0.0
      %3256 = vmatprep.subr.mxu0 0.0
      %3257 = vmatpush1.msra.mxu0 0.0
      %3258 = vmatprep.subr.mxu0 0.0
      %3259 = vmatpush1.msra.mxu0 0.0
      %3260 = vmatprep.subr.mxu0 0.0
      %3261 = vmatpush1.msra.mxu0 0.0
      %3262 = vmatprep.subr.mxu0 0.0
      %3263 = vmatpush1.msra.mxu0 0.0
      %3264 = vmatprep.subr.mxu0 0.0
      %3265 = vmatpush1.msra.mxu0 0.0
      %3266 = vmatprep.subr.mxu0 0.0
      %3267 = vmatpush1.msra.mxu0 0.0
      %3268 = vmatprep.subr.mxu0 0.0
      %3269 = vmatpush1.msra.mxu0 0.0
      %3270 = vmatprep.subr.mxu0 0.0
      %3271 = vmatpush1.msra.mxu0 0.0
      %3272 = vmatprep.subr.mxu0 0.0
      %3273 = vmatpush1.msra.mxu0 0.0
      %3274 = vmatprep.subr.mxu0 0.0
      %3275 = vmatpush1.msra.mxu0 0.0
      %3276 = vmatprep.subr.mxu0 0.0
      %3277 = vmatpush1.msra.mxu0 0.0
      %3278 = vmatprep.subr.mxu0 0.0
      %3279 = vmatpush1.msra.mxu0 0.0
      %3280 = vmatprep.subr.mxu0 0.0
      %3281 = vmatpush1.msra.mxu0 0.0
      %3282 = vmatprep.subr.mxu0 0.0
      %3283 = vmatpush1.msra.mxu0 0.0
      %3284 = vmatprep.subr.mxu0 0.0
      %3285 = vmatpush1.msra.mxu0 0.0
      %3286 = vmatprep.subr.mxu0 0.0
      %3287 = vmatpush1.msra.mxu0 0.0
      %3288 = vmatprep.mubr.f32.mxu0 0.0
      %3289 = vmatmul.mubr.f32.gmra.mrb[0].mxu0 %v3219
      %v3290 = vpop.f32.mrb[0].mxu0
      %v3291 = vadd.f32 %v3210, %v3290
      %v3292 = vpop.f32.mrb[0].mxu0
      %3293 = vmatprep.mubr.f32.mxu0 0.0
      %3294 = vmatmul.mubr.f32.gmra.mrb[0].mxu0 %v3222
      %v3295 = vpop.f32.mrb[0].mxu0
      %v3296 = vadd.f32 %v3215, %v3295
      %v3297 = vpop.f32.mrb[0].mxu0
      %3298 = vdwg.mxu0
      %v3300 = vlaneseq
      %v3301 = vshrl.u32 %v3300, 7
      %v3302 = vsub.s32 0, %v3301
      %v3303 = vrot.slane %v360, %v3302
      %v3305 = vadd.f32 %v3291, %v3303
      %v3306 = vadd.f32 %v3296, %v3303
      %3307 = vst.msk [vmem:[%s325] sm:$0xff] %vm3136, %v3305
      %3308 = vst.msk [vmem:[%s325 + $0x8] sm:$0xff] %vm3136, %v3306
      %p3309 = scmp.lt.s32.totalorder %s19, 1
      %s3310 = scalar_select %p3309, %s19, 1
      %s3311 = smul.addr %s3310, 2
      %s3312 = smul.addr %s3311, 8
      %s3313 = scalar_lea.vmem %s8, %s3312
      // Predicated region
      $region53: #{deep_msn_forward.6} parent=51 // pred_check
        %p3314 = pneg %p215
      $region54: #{deep_msn_forward.6} parent=51 // pred_check_branch
        %3316 = sbr.rel (%p3314) target = $region56
      $region55: #{deep_msn_forward.6} parent=51 // pred_region
        _
      $region56: #{deep_msn_forward.6} parent=51 // pred_fallthru
        _
    $region52: #{deep_msn_forward.6} parent=5 // pred_fallthru
      _
    %p3317 = scmp.le.s32.totalorder 2, %s14
    // Predicated region
    $region57: #{deep_msn_forward.6} parent=5 // pred_check
      %p3318 = pneg %p3317
    $region58: #{deep_msn_forward.6} parent=5 // pred_check_branch
      %3320 = sbr.rel (%p3318) target = $region60
    $region59: #{deep_msn_forward.6} parent=5 // pred_region
      %s3321 = ssub.s32 %s14, 2
      // Predicated region
      $region61: #{deep_msn_forward.6} parent=59 // pred_check
        %p3322 = pneg %p221
      $region62: #{deep_msn_forward.6} parent=59 // pred_check_branch
        %3324 = sbr.rel (%p3322) target = $region64
      $region63: #{deep_msn_forward.6} parent=59 // pred_region
        %p3325 = scmp.lt.s32.totalorder %s20, 1
        %s3326 = scalar_select %p3325, %s20, 1
        %s3327 = smul.addr %s3326, 2
        %s3328 = smul.addr %s3327, 8
        %s3329 = scalar_lea.vmem %s8, %s3328
      $region64: #{deep_msn_forward.6} parent=59 // pred_fallthru
        _
    $region60: #{deep_msn_forward.6} parent=5 // pred_fallthru
      _
  $region6: #{deep_msn_forward.6} parent=0 // loop_footer
    %s18 = sadd.s32 1, %s14
  $region7: #{deep_msn_forward.6} parent=0 // loop_footer_branch
    %13 = sbr.rel target = $region3
  $region8: #{deep_msn_forward.6} parent=0 // loop_exit
    _

</llo_original>
